<compile_context>
chip_gen: v5e
topology: v5e:2x2
jax: 0.10.0
libtpu: 0.0.40
codegen_flags: <defaults>
</compile_context>

<pallas_src>
import jax
import jax.numpy as jnp
from jax import lax
from jax.experimental import pallas as pl
from jax.experimental.pallas import tpu as pltpu

EPS = 1e-5
K = 3  # conv kernel size (3x3, padding=1 -> SAME)


def _make_kernel(H, W, C):
    Wp = W + 2                       # padded row width
    Hp = H * Wp                      # rows of the flat "padded-width" pixel space
    padrows = (H + 3) * Wp           # >= (H+2)*Wp + 2 (end of the (2,2) tap) + slack
    inner = Wp + 1                   # flat offset of padded pixel (row 1, col 1)
    n_valid = H * W
    taps = [(dy, dx) for dy in range(K) for dx in range(K)]

    def kernel(x_ref,                                  # (1, Hp, C) bf16
               w1_ref, g1_ref, be1_ref,                # (9,C,C) bf16, (1,C) f32 x2
               w2_ref, g2_ref, be2_ref,
               o_ref,                                  # (1, Hp, C) bf16
               pad_ref,                                # (padrows, C) bf16 scratch
               acc_ref):                               # (Hp, C) f32 scratch
        # Valid-pixel mask over the flat padded-width row space: row r is a real
        # pixel iff (r mod Wp) < W; the other rows are the halo columns (which
        # double as the zero padding between consecutive image rows).
        r = lax.broadcasted_iota(jnp.int32, (Hp, 1), 0)
        valid = (r % Wp) < W                           # (Hp, 1) bool

        # Zero only the halo bytes the interior writes never touch (top padding
        # row + left halo of the first interior row; bottom padding row + slack).
        # The remaining halo columns stay zero because the interior writes carry
        # zeroed junk columns.
        pad_ref[0:inner, :] = jnp.zeros((inner, C), pad_ref.dtype)
        tail = (H + 1) * Wp + 1
        pad_ref[tail:padrows, :] = jnp.zeros((padrows - tail, C), pad_ref.dtype)

        def conv3x3(w_ref):
            # 9 shifted, fully contiguous taps; one bf16 MXU matmul each, f32
            # accumulation in the VMEM accumulator (no im2col buffer).
            for t, (dy, dx) in enumerate(taps):
                s = dy * Wp + dx
                part = jnp.dot(pad_ref[s:s + Hp, :], w_ref[t],
                               preferred_element_type=jnp.float32)
                if t == 0:
                    acc_ref[...] = part
                else:
                    acc_ref[...] += part
            return acc_ref[...]                         # (Hp, C) f32

        def inorm(h, g_ref, be_ref):
            # Folded InstanceNorm; stats in f32; junk rows masked out of stats.
            hm = jnp.where(valid, h, 0.0)
            mean = jnp.sum(hm, axis=0, keepdims=True) / n_valid
            var = jnp.sum(hm * hm, axis=0, keepdims=True) / n_valid - mean * mean
            var = jnp.maximum(var, 0.0)                 # guard E[x^2]-mean^2 cancel
            scale = g_ref[...].astype(jnp.float32) * lax.rsqrt(var + EPS)
            shift = be_ref[...].astype(jnp.float32) - mean * scale
            return hm, scale, shift

        x = x_ref[0]                                    # (Hp, C) bf16

        # --- conv1 -> InstanceNorm -> ReLU ---
        # x's junk columns are already zero (wrapper pads them), so this single
        # contiguous store also refreshes the left/right halo columns.
        pad_ref[inner:inner + Hp, :] = x
        h1m, sc1, sh1 = inorm(conv3x3(w1_ref), g1_ref, be1_ref)
        h1 = jnp.where(valid, jnp.maximum(h1m * sc1 + sh1, 0.0), 0.0)

        # --- conv2 -> InstanceNorm + residual (fused into one pass) ---
        pad_ref[inner:inner + Hp, :] = h1.astype(pad_ref.dtype)
        h2m, sc2, sh2 = inorm(conv3x3(w2_ref), g2_ref, be2_ref)
        out = h2m * sc2 + sh2 + x.astype(jnp.float32)   # junk rows: garbage, discarded
        o_ref[...] = out[None].astype(o_ref.dtype)

    return kernel, Hp, padrows


def _vmem_bytes(shape, dtype):
    """Rough per-buffer VMEM footprint with (sublane, lane) tile padding."""
    itemsize = jnp.dtype(dtype).itemsize
    shape = tuple(shape)
    if len(shape) < 2:
        shape = (1,) * (2 - len(shape)) + shape
    *lead, s, l = shape
    sub = 8 * max(1, 4 // itemsize)                     # 8 (f32) / 16 (bf16)
    sp = -(-s // sub) * sub
    lp = -(-l // 128) * 128
    n = 1
    for d in lead:
        n *= d
    return n * sp * lp * itemsize


def resnet_block_pallas(x_nhwc, params):
    """x_nhwc: (B, H, W, C) float32. Returns (B, H, W, C) float32."""
    B, H, W, C = x_nhwc.shape
    Wp = W + 2
    kernel, Hp, padrows = _make_kernel(H, W, C)

    # bf16 activations at the kernel boundary; pre-pad 2 zero columns on the right
    # and flatten (H, W+2) -> Hp so the kernel sees the flat padded-width pixel
    # space directly (junk columns pre-zeroed for the halo-maintenance trick).
    x_flat = jnp.pad(x_nhwc, ((0, 0), (0, 0), (0, 2), (0, 0)))
    x_flat = x_flat.reshape(B, Hp, C).astype(jnp.bfloat16)

    # (3,3,Cin,Cout) HWIO -> (9, Cin, Cout), bf16 MXU operands, tap-major (dy, dx).
    w1 = params["w1"].reshape(K * K, C, C).astype(jnp.bfloat16)
    w2 = params["w2"].reshape(K * K, C, C).astype(jnp.bfloat16)
    g1, be1, g2, be2 = params["g1"], params["be1"], params["g2"], params["be2"]
    # NOTE: conv biases b1/b2 intentionally NOT passed: a per-channel constant
    # before InstanceNorm cancels exactly (the pure-JAX reference keeps them).

    img_spec = pl.BlockSpec((1, Hp, C), lambda b: (b, 0, 0))
    full = lambda a: pl.BlockSpec(a.shape, lambda b: (0,) * a.ndim)

    # Explicit VMEM budget: actual footprint (in/out double-buffered) + margin,
    # clamped so it never exceeds v7x's 64 MiB physical VMEM.
    est = (4 * _vmem_bytes((1, Hp, C), jnp.bfloat16)          # in + out, x2 buffers
           + 2 * 2 * _vmem_bytes(w1.shape, jnp.bfloat16)      # w1, w2
           + 4 * 2 * _vmem_bytes(g1.shape, jnp.float32)       # g/beta
           + _vmem_bytes((padrows, C), jnp.bfloat16)          # flat padded image
           + _vmem_bytes((Hp, C), jnp.float32))               # conv accumulator
    vmem_limit = int(min(64 * 2**20, max(32 * 2**20, est * 5 // 4 + (2 << 20))))

    grid_spec = pltpu.PrefetchScalarGridSpec(
        num_scalar_prefetch=0,
        grid=(B,),   # TODO(synk): add an H-strip "arbitrary" axis for large maps.
        in_specs=[img_spec,
                  full(w1), full(g1), full(be1),
                  full(w2), full(g2), full(be2)],
        out_specs=img_spec,
        scratch_shapes=[
            pltpu.VMEM((padrows, C), jnp.bfloat16),   # flat zero-padded image
            pltpu.VMEM((Hp, C), jnp.float32),         # conv f32 accumulator
        ],
    )

    out_flat = pl.pallas_call(
        kernel,
        out_shape=jax.ShapeDtypeStruct((B, Hp, C), jnp.bfloat16),
        grid_spec=grid_spec,
        compiler_params=pltpu.CompilerParams(
            dimension_semantics=("parallel",),
            vmem_limit_bytes=vmem_limit),
    )(x_flat, w1, g1, be1, w2, g2, be2)

    # Drop the 2 junk columns and return f32 NHWC.
    out = out_flat.reshape(B, H, Wp, C)[:, :, :W, :]
    return out.astype(x_nhwc.dtype)


# ----------------------------- pure-JAX reference ---------------------------
def resnet_block_ref(x_nhwc, params):
    def conv(x, w, b):  # w: (3,3,C,C) HWIO
        y = lax.conv_general_dilated(
            x, w, window_strides=(1, 1), padding="SAME",
            dimension_numbers=("NHWC", "HWIO", "NHWC"))
        return y + b.reshape(1, 1, 1, -1)

    def inorm(h, g, be):
        mean = jnp.mean(h, axis=(1, 2), keepdims=True)
        var = jnp.mean((h - mean) ** 2, axis=(1, 2), keepdims=True)
        return (h - mean) * lax.rsqrt(var + EPS) * g.reshape(1, 1, 1, -1) \
               + be.reshape(1, 1, 1, -1)

    h = conv(x_nhwc, params["w1"], params["b1"])
    h = jnp.maximum(inorm(h, params["g1"], params["be1"]), 0.0)
    h = conv(h, params["w2"], params["b2"])
    h = inorm(h, params["g2"], params["be2"])
    return x_nhwc + h


def init_params(key, dim):
    ks = jax.random.split(key, 8)
    scale = 0.1
    return {
        "w1": scale * jax.random.normal(ks[0], (K, K, dim, dim), jnp.float32),
        "b1": scale * jax.random.normal(ks[1], (dim,), jnp.float32),
        "g1": 1.0 + scale * jax.random.normal(ks[2], (1, dim), jnp.float32),
        "be1": scale * jax.random.normal(ks[3], (1, dim), jnp.float32),
        "w2": scale * jax.random.normal(ks[4], (K, K, dim, dim), jnp.float32),
        "b2": scale * jax.random.normal(ks[5], (dim,), jnp.float32),
        "g2": 1.0 + scale * jax.random.normal(ks[6], (1, dim), jnp.float32),
        "be2": scale * jax.random.normal(ks[7], (1, dim), jnp.float32),
    }


if __name__ == "__main__":
    key = jax.random.PRNGKey(0)
    kx, kp = jax.random.split(key)

    B, C, H, W = 2, 4, 16, 16                      # matches nn.Conv2d(dim, dim, 3)
    x_nchw = jax.random.normal(kx, (B, C, H, W), jnp.float32)
    params = init_params(kp, C)

    # NCHW (PyTorch) -> NHWC (kernel layout)
    x_nhwc = jnp.transpose(x_nchw, (0, 2, 3, 1))

    out_nhwc = jax.block_until_ready(resnet_block_pallas(x_nhwc, params))
    ref_nhwc = resnet_block_ref(x_nhwc, params)

    err = jnp.abs(out_nhwc - ref_nhwc)
    max_err = float(jnp.max(err))
    mean_err = float(jnp.mean(err))
    rel_err = max_err / (float(jnp.max(jnp.abs(ref_nhwc))) + 1e-6)
    # bf16 MXU operands and bf16 activation I/O (f32 accumulation + stats):
    # tolerance is bf16-level; also check relative error so bugs can't hide.
    assert max_err < 1e-1 and mean_err < 2e-2 and rel_err < 5e-2, \
        (max_err, mean_err, rel_err)

    # back to NCHW to match the PyTorch output convention
    out_nchw = jnp.transpose(out_nhwc, (0, 3, 1, 2))
    jax.block_until_ready(out_nchw)
    print("KERNEL_OK")
</pallas_src>

<mosaic_0001>
module attributes {stable_mosaic.version = 11 : i64} {
  func.func @kernel(%arg0: i32, %arg1: memref<1x288x4xbf16, #tpu.memory_space<vmem>>, %arg2: memref<9x4x4xbf16, #tpu.memory_space<vmem>>, %arg3: memref<1x4xf32, #tpu.memory_space<vmem>>, %arg4: memref<1x4xf32, #tpu.memory_space<vmem>>, %arg5: memref<9x4x4xbf16, #tpu.memory_space<vmem>>, %arg6: memref<1x4xf32, #tpu.memory_space<vmem>>, %arg7: memref<1x4xf32, #tpu.memory_space<vmem>>, %arg8: memref<1x288x4xbf16, #tpu.memory_space<vmem>>, %arg9: memref<342x4xbf16, #tpu.memory_space<vmem>>, %arg10: memref<288x4xf32, #tpu.memory_space<vmem>>) attributes {dimension_semantics = [#tpu.dimension_semantics<parallel>], iteration_bounds = array<i64: 2>, scalar_prefetch = 0 : i64, scratch_operands = 2 : i64, tpu.core_type = #tpu.core_type<tc>, window_params = [{transform_indices = @transform_0, window_bounds = array<i64: 1, 288, 4>}, {pipeline_mode = #tpu.pipeline_mode<synchronous>, transform_indices = @transform_1, window_bounds = array<i64: 9, 4, 4>}, {pipeline_mode = #tpu.pipeline_mode<synchronous>, transform_indices = @transform_2, window_bounds = array<i64: 1, 4>}, {pipeline_mode = #tpu.pipeline_mode<synchronous>, transform_indices = @transform_3, window_bounds = array<i64: 1, 4>}, {pipeline_mode = #tpu.pipeline_mode<synchronous>, transform_indices = @transform_4, window_bounds = array<i64: 9, 4, 4>}, {pipeline_mode = #tpu.pipeline_mode<synchronous>, transform_indices = @transform_5, window_bounds = array<i64: 1, 4>}, {pipeline_mode = #tpu.pipeline_mode<synchronous>, transform_indices = @transform_6, window_bounds = array<i64: 1, 4>}, {transform_indices = @transform_7, window_bounds = array<i64: 1, 288, 4>}]} {
    %0 = tpu.iota {dimensions = array<i32: 0>} : vector<288x1xi32>
    %c18_i32 = arith.constant 18 : i32
    %c0_i32 = arith.constant 0 : i32
    %1 = arith.cmpi eq, %c18_i32, %c0_i32 : i32
    %c1_i32 = arith.constant 1 : i32
    %2 = arith.select %1, %c1_i32, %c18_i32 : i32
    %3 = vector.broadcast %2 : i32 to vector<288x1xi32>
    %4 = arith.remsi %0, %3 : vector<288x1xi32>
    %c0_i32_0 = arith.constant 0 : i32
    %5 = vector.broadcast %c0_i32_0 : i32 to vector<288x1xi32>
    %6 = arith.cmpi ne, %4, %5 : vector<288x1xi32>
    %c0_i32_1 = arith.constant 0 : i32
    %7 = vector.broadcast %c0_i32_1 : i32 to vector<288x1xi32>
    %8 = arith.cmpi slt, %4, %7 : vector<288x1xi32>
    %c0_i32_2 = arith.constant 0 : i32
    %9 = arith.cmpi slt, %2, %c0_i32_2 : i32
    %10 = vector.broadcast %9 : i1 to vector<288x1xi1>
    %11 = vector.broadcast %10 : vector<288x1xi1> to vector<288x1xi1>
    %12 = arith.xori %8, %11 : vector<288x1xi1>
    %13 = arith.andi %12, %6 : vector<288x1xi1>
    %14 = vector.broadcast %2 : i32 to vector<288x1xi32>
    %15 = arith.addi %4, %14 : vector<288x1xi32>
    %16 = arith.select %13, %15, %4 : vector<288x1xi1>, vector<288x1xi32>
    %c16_i32 = arith.constant 16 : i32
    %17 = vector.broadcast %c16_i32 : i32 to vector<288x1xi32>
    %18 = arith.cmpi slt, %16, %17 : vector<288x1xi32>
    %cst = arith.constant 0.000000e+00 : bf16
    %19 = vector.broadcast %cst : bf16 to vector<19x4xbf16>
    %c0 = arith.constant 0 : index
    %c0_3 = arith.constant 0 : index
    %20 = vector.load %arg9[%c0, %c0_3] : memref<342x4xbf16, #tpu.memory_space<vmem>>, vector<19x4xbf16>
    tpu.vector_store %arg9[%c0, %c0_3], %19 {strides = array<i32>} : memref<342x4xbf16, #tpu.memory_space<vmem>>, vector<19x4xbf16>,
    %cst_4 = arith.constant 0.000000e+00 : bf16
    %21 = vector.broadcast %cst_4 : bf16 to vector<35x4xbf16>
    %c307 = arith.constant 307 : index
    %c0_5 = arith.constant 0 : index
    %22 = vector.load %arg9[%c307, %c0_5] : memref<342x4xbf16, #tpu.memory_space<vmem>>, vector<35x4xbf16>
    tpu.vector_store %arg9[%c307, %c0_5], %21 {strides = array<i32>} : memref<342x4xbf16, #tpu.memory_space<vmem>>, vector<35x4xbf16>,
    %c0_6 = arith.constant 0 : index
    %c0_7 = arith.constant 0 : index
    %c0_8 = arith.constant 0 : index
    %23 = vector.load %arg1[%c0_6, %c0_7, %c0_8] : memref<1x288x4xbf16, #tpu.memory_space<vmem>>, vector<1x288x4xbf16>
    %24 = vector.shape_cast %23 : vector<1x288x4xbf16> to vector<288x4xbf16>
    %c19 = arith.constant 19 : index
    %c0_9 = arith.constant 0 : index
    %25 = vector.load %arg9[%c19, %c0_9] : memref<342x4xbf16, #tpu.memory_space<vmem>>, vector<288x4xbf16>
    tpu.vector_store %arg9[%c19, %c0_9], %24 {strides = array<i32>} : memref<342x4xbf16, #tpu.memory_space<vmem>>, vector<288x4xbf16>,
    %c0_10 = arith.constant 0 : index
    %c0_11 = arith.constant 0 : index
    %26 = vector.load %arg9[%c0_10, %c0_11] : memref<342x4xbf16, #tpu.memory_space<vmem>>, vector<288x4xbf16>
    %c0_12 = arith.constant 0 : index
    %c0_13 = arith.constant 0 : index
    %c0_14 = arith.constant 0 : index
    %27 = vector.load %arg2[%c0_12, %c0_13, %c0_14] : memref<9x4x4xbf16, #tpu.memory_space<vmem>>, vector<1x4x4xbf16>
    %28 = vector.shape_cast %27 : vector<1x4x4xbf16> to vector<4x4xbf16>
    %cst_15 = arith.constant dense<0.000000e+00> : vector<288x4xf32>
    %29 = tpu.matmul %26, %28, %cst_15 {dimension_numbers = #tpu.dot_dimension_numbers<[1], [0], [0], [1], [0, 0, 1, 1], [], []>} : vector<288x4xbf16>, vector<4x4xbf16>, vector<288x4xf32> -> vector<288x4xf32>
    %c0_16 = arith.constant 0 : index
    %c0_17 = arith.constant 0 : index
    %30 = vector.load %arg10[%c0_16, %c0_17] : memref<288x4xf32, #tpu.memory_space<vmem>>, vector<288x4xf32>
    tpu.vector_store %arg10[%c0_16, %c0_17], %29 {strides = array<i32>} : memref<288x4xf32, #tpu.memory_space<vmem>>, vector<288x4xf32>,
    %c1 = arith.constant 1 : index
    %c0_18 = arith.constant 0 : index
    %31 = vector.load %arg9[%c1, %c0_18] : memref<342x4xbf16, #tpu.memory_space<vmem>>, vector<288x4xbf16>
    %c1_19 = arith.constant 1 : index
    %c0_20 = arith.constant 0 : index
    %c0_21 = arith.constant 0 : index
    %32 = vector.load %arg2[%c1_19, %c0_20, %c0_21] : memref<9x4x4xbf16, #tpu.memory_space<vmem>>, vector<1x4x4xbf16>
    %33 = vector.shape_cast %32 : vector<1x4x4xbf16> to vector<4x4xbf16>
    %cst_22 = arith.constant dense<0.000000e+00> : vector<288x4xf32>
    %34 = tpu.matmul %31, %33, %cst_22 {dimension_numbers = #tpu.dot_dimension_numbers<[1], [0], [0], [1], [0, 0, 1, 1], [], []>} : vector<288x4xbf16>, vector<4x4xbf16>, vector<288x4xf32> -> vector<288x4xf32>
    %c0_23 = arith.constant 0 : index
    %c0_24 = arith.constant 0 : index
    %35 = vector.load %arg10[%c0_23, %c0_24] : memref<288x4xf32, #tpu.memory_space<vmem>>, vector<288x4xf32>
    %36 = arith.addf %35, %34 : vector<288x4xf32>
    %c0_25 = arith.constant 0 : index
    %c0_26 = arith.constant 0 : index
    %37 = vector.load %arg10[%c0_25, %c0_26] : memref<288x4xf32, #tpu.memory_space<vmem>>, vector<288x4xf32>
    tpu.vector_store %arg10[%c0_25, %c0_26], %36 {strides = array<i32>} : memref<288x4xf32, #tpu.memory_space<vmem>>, vector<288x4xf32>,
    %c2 = arith.constant 2 : index
    %c0_27 = arith.constant 0 : index
    %38 = vector.load %arg9[%c2, %c0_27] : memref<342x4xbf16, #tpu.memory_space<vmem>>, vector<288x4xbf16>
    %c2_28 = arith.constant 2 : index
    %c0_29 = arith.constant 0 : index
    %c0_30 = arith.constant 0 : index
    %39 = vector.load %arg2[%c2_28, %c0_29, %c0_30] : memref<9x4x4xbf16, #tpu.memory_space<vmem>>, vector<1x4x4xbf16>
    %40 = vector.shape_cast %39 : vector<1x4x4xbf16> to vector<4x4xbf16>
    %cst_31 = arith.constant dense<0.000000e+00> : vector<288x4xf32>
    %41 = tpu.matmul %38, %40, %cst_31 {dimension_numbers = #tpu.dot_dimension_numbers<[1], [0], [0], [1], [0, 0, 1, 1], [], []>} : vector<288x4xbf16>, vector<4x4xbf16>, vector<288x4xf32> -> vector<288x4xf32>
    %c0_32 = arith.constant 0 : index
    %c0_33 = arith.constant 0 : index
    %42 = vector.load %arg10[%c0_32, %c0_33] : memref<288x4xf32, #tpu.memory_space<vmem>>, vector<288x4xf32>
    %43 = arith.addf %42, %41 : vector<288x4xf32>
    %c0_34 = arith.constant 0 : index
    %c0_35 = arith.constant 0 : index
    %44 = vector.load %arg10[%c0_34, %c0_35] : memref<288x4xf32, #tpu.memory_space<vmem>>, vector<288x4xf32>
    tpu.vector_store %arg10[%c0_34, %c0_35], %43 {strides = array<i32>} : memref<288x4xf32, #tpu.memory_space<vmem>>, vector<288x4xf32>,
    %c18 = arith.constant 18 : index
    %c0_36 = arith.constant 0 : index
    %45 = vector.load %arg9[%c18, %c0_36] : memref<342x4xbf16, #tpu.memory_space<vmem>>, vector<288x4xbf16>
    %c3 = arith.constant 3 : index
    %c0_37 = arith.constant 0 : index
    %c0_38 = arith.constant 0 : index
    %46 = vector.load %arg2[%c3, %c0_37, %c0_38] : memref<9x4x4xbf16, #tpu.memory_space<vmem>>, vector<1x4x4xbf16>
    %47 = vector.shape_cast %46 : vector<1x4x4xbf16> to vector<4x4xbf16>
    %cst_39 = arith.constant dense<0.000000e+00> : vector<288x4xf32>
    %48 = tpu.matmul %45, %47, %cst_39 {dimension_numbers = #tpu.dot_dimension_numbers<[1], [0], [0], [1], [0, 0, 1, 1], [], []>} : vector<288x4xbf16>, vector<4x4xbf16>, vector<288x4xf32> -> vector<288x4xf32>
    %c0_40 = arith.constant 0 : index
    %c0_41 = arith.constant 0 : index
    %49 = vector.load %arg10[%c0_40, %c0_41] : memref<288x4xf32, #tpu.memory_space<vmem>>, vector<288x4xf32>
    %50 = arith.addf %49, %48 : vector<288x4xf32>
    %c0_42 = arith.constant 0 : index
    %c0_43 = arith.constant 0 : index
    %51 = vector.load %arg10[%c0_42, %c0_43] : memref<288x4xf32, #tpu.memory_space<vmem>>, vector<288x4xf32>
    tpu.vector_store %arg10[%c0_42, %c0_43], %50 {strides = array<i32>} : memref<288x4xf32, #tpu.memory_space<vmem>>, vector<288x4xf32>,
    %c19_44 = arith.constant 19 : index
    %c0_45 = arith.constant 0 : index
    %52 = vector.load %arg9[%c19_44, %c0_45] : memref<342x4xbf16, #tpu.memory_space<vmem>>, vector<288x4xbf16>
    %c4 = arith.constant 4 : index
    %c0_46 = arith.constant 0 : index
    %c0_47 = arith.constant 0 : index
    %53 = vector.load %arg2[%c4, %c0_46, %c0_47] : memref<9x4x4xbf16, #tpu.memory_space<vmem>>, vector<1x4x4xbf16>
    %54 = vector.shape_cast %53 : vector<1x4x4xbf16> to vector<4x4xbf16>
    %cst_48 = arith.constant dense<0.000000e+00> : vector<288x4xf32>
    %55 = tpu.matmul %52, %54, %cst_48 {dimension_numbers = #tpu.dot_dimension_numbers<[1], [0], [0], [1], [0, 0, 1, 1], [], []>} : vector<288x4xbf16>, vector<4x4xbf16>, vector<288x4xf32> -> vector<288x4xf32>
    %c0_49 = arith.constant 0 : index
    %c0_50 = arith.constant 0 : index
    %56 = vector.load %arg10[%c0_49, %c0_50] : memref<288x4xf32, #tpu.memory_space<vmem>>, vector<288x4xf32>
    %57 = arith.addf %56, %55 : vector<288x4xf32>
    %c0_51 = arith.constant 0 : index
    %c0_52 = arith.constant 0 : index
    %58 = vector.load %arg10[%c0_51, %c0_52] : memref<288x4xf32, #tpu.memory_space<vmem>>, vector<288x4xf32>
    tpu.vector_store %arg10[%c0_51, %c0_52], %57 {strides = array<i32>} : memref<288x4xf32, #tpu.memory_space<vmem>>, vector<288x4xf32>,
    %c20 = arith.constant 20 : index
    %c0_53 = arith.constant 0 : index
    %59 = vector.load %arg9[%c20, %c0_53] : memref<342x4xbf16, #tpu.memory_space<vmem>>, vector<288x4xbf16>
    %c5 = arith.constant 5 : index
    %c0_54 = arith.constant 0 : index
    %c0_55 = arith.constant 0 : index
    %60 = vector.load %arg2[%c5, %c0_54, %c0_55] : memref<9x4x4xbf16, #tpu.memory_space<vmem>>, vector<1x4x4xbf16>
    %61 = vector.shape_cast %60 : vector<1x4x4xbf16> to vector<4x4xbf16>
    %cst_56 = arith.constant dense<0.000000e+00> : vector<288x4xf32>
    %62 = tpu.matmul %59, %61, %cst_56 {dimension_numbers = #tpu.dot_dimension_numbers<[1], [0], [0], [1], [0, 0, 1, 1], [], []>} : vector<288x4xbf16>, vector<4x4xbf16>, vector<288x4xf32> -> vector<288x4xf32>
    %c0_57 = arith.constant 0 : index
    %c0_58 = arith.constant 0 : index
    %63 = vector.load %arg10[%c0_57, %c0_58] : memref<288x4xf32, #tpu.memory_space<vmem>>, vector<288x4xf32>
    %64 = arith.addf %63, %62 : vector<288x4xf32>
    %c0_59 = arith.constant 0 : index
    %c0_60 = arith.constant 0 : index
    %65 = vector.load %arg10[%c0_59, %c0_60] : memref<288x4xf32, #tpu.memory_space<vmem>>, vector<288x4xf32>
    tpu.vector_store %arg10[%c0_59, %c0_60], %64 {strides = array<i32>} : memref<288x4xf32, #tpu.memory_space<vmem>>, vector<288x4xf32>,
    %c36 = arith.constant 36 : index
    %c0_61 = arith.constant 0 : index
    %66 = vector.load %arg9[%c36, %c0_61] : memref<342x4xbf16, #tpu.memory_space<vmem>>, vector<288x4xbf16>
    %c6 = arith.constant 6 : index
    %c0_62 = arith.constant 0 : index
    %c0_63 = arith.constant 0 : index
    %67 = vector.load %arg2[%c6, %c0_62, %c0_63] : memref<9x4x4xbf16, #tpu.memory_space<vmem>>, vector<1x4x4xbf16>
    %68 = vector.shape_cast %67 : vector<1x4x4xbf16> to vector<4x4xbf16>
    %cst_64 = arith.constant dense<0.000000e+00> : vector<288x4xf32>
    %69 = tpu.matmul %66, %68, %cst_64 {dimension_numbers = #tpu.dot_dimension_numbers<[1], [0], [0], [1], [0, 0, 1, 1], [], []>} : vector<288x4xbf16>, vector<4x4xbf16>, vector<288x4xf32> -> vector<288x4xf32>
    %c0_65 = arith.constant 0 : index
    %c0_66 = arith.constant 0 : index
    %70 = vector.load %arg10[%c0_65, %c0_66] : memref<288x4xf32, #tpu.memory_space<vmem>>, vector<288x4xf32>
    %71 = arith.addf %70, %69 : vector<288x4xf32>
    %c0_67 = arith.constant 0 : index
    %c0_68 = arith.constant 0 : index
    %72 = vector.load %arg10[%c0_67, %c0_68] : memref<288x4xf32, #tpu.memory_space<vmem>>, vector<288x4xf32>
    tpu.vector_store %arg10[%c0_67, %c0_68], %71 {strides = array<i32>} : memref<288x4xf32, #tpu.memory_space<vmem>>, vector<288x4xf32>,
    %c37 = arith.constant 37 : index
    %c0_69 = arith.constant 0 : index
    %73 = vector.load %arg9[%c37, %c0_69] : memref<342x4xbf16, #tpu.memory_space<vmem>>, vector<288x4xbf16>
    %c7 = arith.constant 7 : index
    %c0_70 = arith.constant 0 : index
    %c0_71 = arith.constant 0 : index
    %74 = vector.load %arg2[%c7, %c0_70, %c0_71] : memref<9x4x4xbf16, #tpu.memory_space<vmem>>, vector<1x4x4xbf16>
    %75 = vector.shape_cast %74 : vector<1x4x4xbf16> to vector<4x4xbf16>
    %cst_72 = arith.constant dense<0.000000e+00> : vector<288x4xf32>
    %76 = tpu.matmul %73, %75, %cst_72 {dimension_numbers = #tpu.dot_dimension_numbers<[1], [0], [0], [1], [0, 0, 1, 1], [], []>} : vector<288x4xbf16>, vector<4x4xbf16>, vector<288x4xf32> -> vector<288x4xf32>
    %c0_73 = arith.constant 0 : index
    %c0_74 = arith.constant 0 : index
    %77 = vector.load %arg10[%c0_73, %c0_74] : memref<288x4xf32, #tpu.memory_space<vmem>>, vector<288x4xf32>
    %78 = arith.addf %77, %76 : vector<288x4xf32>
    %c0_75 = arith.constant 0 : index
    %c0_76 = arith.constant 0 : index
    %79 = vector.load %arg10[%c0_75, %c0_76] : memref<288x4xf32, #tpu.memory_space<vmem>>, vector<288x4xf32>
    tpu.vector_store %arg10[%c0_75, %c0_76], %78 {strides = array<i32>} : memref<288x4xf32, #tpu.memory_space<vmem>>, vector<288x4xf32>,
    %c38 = arith.constant 38 : index
    %c0_77 = arith.constant 0 : index
    %80 = vector.load %arg9[%c38, %c0_77] : memref<342x4xbf16, #tpu.memory_space<vmem>>, vector<288x4xbf16>
    %c8 = arith.constant 8 : index
    %c0_78 = arith.constant 0 : index
    %c0_79 = arith.constant 0 : index
    %81 = vector.load %arg2[%c8, %c0_78, %c0_79] : memref<9x4x4xbf16, #tpu.memory_space<vmem>>, vector<1x4x4xbf16>
    %82 = vector.shape_cast %81 : vector<1x4x4xbf16> to vector<4x4xbf16>
    %cst_80 = arith.constant dense<0.000000e+00> : vector<288x4xf32>
    %83 = tpu.matmul %80, %82, %cst_80 {dimension_numbers = #tpu.dot_dimension_numbers<[1], [0], [0], [1], [0, 0, 1, 1], [], []>} : vector<288x4xbf16>, vector<4x4xbf16>, vector<288x4xf32> -> vector<288x4xf32>
    %c0_81 = arith.constant 0 : index
    %c0_82 = arith.constant 0 : index
    %84 = vector.load %arg10[%c0_81, %c0_82] : memref<288x4xf32, #tpu.memory_space<vmem>>, vector<288x4xf32>
    %85 = arith.addf %84, %83 : vector<288x4xf32>
    %c0_83 = arith.constant 0 : index
    %c0_84 = arith.constant 0 : index
    %86 = vector.load %arg10[%c0_83, %c0_84] : memref<288x4xf32, #tpu.memory_space<vmem>>, vector<288x4xf32>
    tpu.vector_store %arg10[%c0_83, %c0_84], %85 {strides = array<i32>} : memref<288x4xf32, #tpu.memory_space<vmem>>, vector<288x4xf32>,
    %c0_85 = arith.constant 0 : index
    %c0_86 = arith.constant 0 : index
    %87 = vector.load %arg10[%c0_85, %c0_86] : memref<288x4xf32, #tpu.memory_space<vmem>>, vector<288x4xf32>
    %cst_87 = arith.constant 0.000000e+00 : f32
    %88 = vector.shape_cast %18 : vector<288x1xi1> to vector<288x1xi1>
    %89 = vector.broadcast %88 : vector<288x1xi1> to vector<288x4xi1>
    %90 = vector.broadcast %cst_87 : f32 to vector<288x4xf32>
    %91 = arith.select %89, %87, %90 : vector<288x4xi1>, vector<288x4xf32>
    %cst_88 = arith.constant dense<0.000000e+00> : vector<4xf32>
    %92 = vector.multi_reduction <add>, %91, %cst_88 [0] : vector<288x4xf32> to vector<4xf32>
    %93 = vector.shape_cast %92 : vector<4xf32> to vector<1x4xf32>
    %cst_89 = arith.constant 2.560000e+02 : f32
    %94 = vector.broadcast %cst_89 : f32 to vector<1x4xf32>
    %95 = arith.divf %93, %94 : vector<1x4xf32>
    %96 = arith.mulf %91, %91 : vector<288x4xf32>
    %cst_90 = arith.constant dense<0.000000e+00> : vector<4xf32>
    %97 = vector.multi_reduction <add>, %96, %cst_90 [0] : vector<288x4xf32> to vector<4xf32>
    %98 = vector.shape_cast %97 : vector<4xf32> to vector<1x4xf32>
    %cst_91 = arith.constant 2.560000e+02 : f32
    %99 = vector.broadcast %cst_91 : f32 to vector<1x4xf32>
    %100 = arith.divf %98, %99 : vector<1x4xf32>
    %101 = arith.mulf %95, %95 : vector<1x4xf32>
    %102 = arith.subf %100, %101 : vector<1x4xf32>
    %cst_92 = arith.constant 0.000000e+00 : f32
    %103 = vector.broadcast %cst_92 : f32 to vector<1x4xf32>
    %104 = arith.maximumf %102, %103 : vector<1x4xf32>
    %c0_93 = arith.constant 0 : index
    %c0_94 = arith.constant 0 : index
    %105 = vector.load %arg3[%c0_93, %c0_94] : memref<1x4xf32, #tpu.memory_space<vmem>>, vector<1x4xf32>
    %cst_95 = arith.constant 9.99999974E-6 : f32
    %106 = vector.broadcast %cst_95 : f32 to vector<1x4xf32>
    %107 = arith.addf %104, %106 : vector<1x4xf32>
    %108 = math.rsqrt %107 : vector<1x4xf32>
    %109 = arith.mulf %105, %108 : vector<1x4xf32>
    %c0_96 = arith.constant 0 : index
    %c0_97 = arith.constant 0 : index
    %110 = vector.load %arg4[%c0_96, %c0_97] : memref<1x4xf32, #tpu.memory_space<vmem>>, vector<1x4xf32>
    %111 = arith.mulf %95, %109 : vector<1x4xf32>
    %112 = arith.subf %110, %111 : vector<1x4xf32>
    %113 = vector.broadcast %109 : vector<1x4xf32> to vector<288x4xf32>
    %114 = arith.mulf %91, %113 : vector<288x4xf32>
    %115 = vector.broadcast %112 : vector<1x4xf32> to vector<288x4xf32>
    %116 = arith.addf %114, %115 : vector<288x4xf32>
    %cst_98 = arith.constant 0.000000e+00 : f32
    %117 = vector.broadcast %cst_98 : f32 to vector<288x4xf32>
    %118 = arith.maximumf %116, %117 : vector<288x4xf32>
    %cst_99 = arith.constant 0.000000e+00 : f32
    %119 = vector.shape_cast %18 : vector<288x1xi1> to vector<288x1xi1>
    %120 = vector.broadcast %119 : vector<288x1xi1> to vector<288x4xi1>
    %121 = vector.broadcast %cst_99 : f32 to vector<288x4xf32>
    %122 = arith.select %120, %118, %121 : vector<288x4xi1>, vector<288x4xf32>
    %123 = arith.truncf %122 : vector<288x4xf32> to vector<288x4xbf16>
    %c19_100 = arith.constant 19 : index
    %c0_101 = arith.constant 0 : index
    %124 = vector.load %arg9[%c19_100, %c0_101] : memref<342x4xbf16, #tpu.memory_space<vmem>>, vector<288x4xbf16>
    tpu.vector_store %arg9[%c19_100, %c0_101], %123 {strides = array<i32>} : memref<342x4xbf16, #tpu.memory_space<vmem>>, vector<288x4xbf16>,
    %c0_102 = arith.constant 0 : index
    %c0_103 = arith.constant 0 : index
    %125 = vector.load %arg9[%c0_102, %c0_103] : memref<342x4xbf16, #tpu.memory_space<vmem>>, vector<288x4xbf16>
    %c0_104 = arith.constant 0 : index
    %c0_105 = arith.constant 0 : index
    %c0_106 = arith.constant 0 : index
    %126 = vector.load %arg5[%c0_104, %c0_105, %c0_106] : memref<9x4x4xbf16, #tpu.memory_space<vmem>>, vector<1x4x4xbf16>
    %127 = vector.shape_cast %126 : vector<1x4x4xbf16> to vector<4x4xbf16>
    %cst_107 = arith.constant dense<0.000000e+00> : vector<288x4xf32>
    %128 = tpu.matmul %125, %127, %cst_107 {dimension_numbers = #tpu.dot_dimension_numbers<[1], [0], [0], [1], [0, 0, 1, 1], [], []>} : vector<288x4xbf16>, vector<4x4xbf16>, vector<288x4xf32> -> vector<288x4xf32>
    %c0_108 = arith.constant 0 : index
    %c0_109 = arith.constant 0 : index
    %129 = vector.load %arg10[%c0_108, %c0_109] : memref<288x4xf32, #tpu.memory_space<vmem>>, vector<288x4xf32>
    tpu.vector_store %arg10[%c0_108, %c0_109], %128 {strides = array<i32>} : memref<288x4xf32, #tpu.memory_space<vmem>>, vector<288x4xf32>,
    %c1_110 = arith.constant 1 : index
    %c0_111 = arith.constant 0 : index
    %130 = vector.load %arg9[%c1_110, %c0_111] : memref<342x4xbf16, #tpu.memory_space<vmem>>, vector<288x4xbf16>
    %c1_112 = arith.constant 1 : index
    %c0_113 = arith.constant 0 : index
    %c0_114 = arith.constant 0 : index
    %131 = vector.load %arg5[%c1_112, %c0_113, %c0_114] : memref<9x4x4xbf16, #tpu.memory_space<vmem>>, vector<1x4x4xbf16>
    %132 = vector.shape_cast %131 : vector<1x4x4xbf16> to vector<4x4xbf16>
    %cst_115 = arith.constant dense<0.000000e+00> : vector<288x4xf32>
    %133 = tpu.matmul %130, %132, %cst_115 {dimension_numbers = #tpu.dot_dimension_numbers<[1], [0], [0], [1], [0, 0, 1, 1], [], []>} : vector<288x4xbf16>, vector<4x4xbf16>, vector<288x4xf32> -> vector<288x4xf32>
    %c0_116 = arith.constant 0 : index
    %c0_117 = arith.constant 0 : index
    %134 = vector.load %arg10[%c0_116, %c0_117] : memref<288x4xf32, #tpu.memory_space<vmem>>, vector<288x4xf32>
    %135 = arith.addf %134, %133 : vector<288x4xf32>
    %c0_118 = arith.constant 0 : index
    %c0_119 = arith.constant 0 : index
    %136 = vector.load %arg10[%c0_118, %c0_119] : memref<288x4xf32, #tpu.memory_space<vmem>>, vector<288x4xf32>
    tpu.vector_store %arg10[%c0_118, %c0_119], %135 {strides = array<i32>} : memref<288x4xf32, #tpu.memory_space<vmem>>, vector<288x4xf32>,
    %c2_120 = arith.constant 2 : index
    %c0_121 = arith.constant 0 : index
    %137 = vector.load %arg9[%c2_120, %c0_121] : memref<342x4xbf16, #tpu.memory_space<vmem>>, vector<288x4xbf16>
    %c2_122 = arith.constant 2 : index
    %c0_123 = arith.constant 0 : index
    %c0_124 = arith.constant 0 : index
    %138 = vector.load %arg5[%c2_122, %c0_123, %c0_124] : memref<9x4x4xbf16, #tpu.memory_space<vmem>>, vector<1x4x4xbf16>
    %139 = vector.shape_cast %138 : vector<1x4x4xbf16> to vector<4x4xbf16>
    %cst_125 = arith.constant dense<0.000000e+00> : vector<288x4xf32>
    %140 = tpu.matmul %137, %139, %cst_125 {dimension_numbers = #tpu.dot_dimension_numbers<[1], [0], [0], [1], [0, 0, 1, 1], [], []>} : vector<288x4xbf16>, vector<4x4xbf16>, vector<288x4xf32> -> vector<288x4xf32>
    %c0_126 = arith.constant 0 : index
    %c0_127 = arith.constant 0 : index
    %141 = vector.load %arg10[%c0_126, %c0_127] : memref<288x4xf32, #tpu.memory_space<vmem>>, vector<288x4xf32>
    %142 = arith.addf %141, %140 : vector<288x4xf32>
    %c0_128 = arith.constant 0 : index
    %c0_129 = arith.constant 0 : index
    %143 = vector.load %arg10[%c0_128, %c0_129] : memref<288x4xf32, #tpu.memory_space<vmem>>, vector<288x4xf32>
    tpu.vector_store %arg10[%c0_128, %c0_129], %142 {strides = array<i32>} : memref<288x4xf32, #tpu.memory_space<vmem>>, vector<288x4xf32>,
    %c18_130 = arith.constant 18 : index
    %c0_131 = arith.constant 0 : index
    %144 = vector.load %arg9[%c18_130, %c0_131] : memref<342x4xbf16, #tpu.memory_space<vmem>>, vector<288x4xbf16>
    %c3_132 = arith.constant 3 : index
    %c0_133 = arith.constant 0 : index
    %c0_134 = arith.constant 0 : index
    %145 = vector.load %arg5[%c3_132, %c0_133, %c0_134] : memref<9x4x4xbf16, #tpu.memory_space<vmem>>, vector<1x4x4xbf16>
    %146 = vector.shape_cast %145 : vector<1x4x4xbf16> to vector<4x4xbf16>
    %cst_135 = arith.constant dense<0.000000e+00> : vector<288x4xf32>
    %147 = tpu.matmul %144, %146, %cst_135 {dimension_numbers = #tpu.dot_dimension_numbers<[1], [0], [0], [1], [0, 0, 1, 1], [], []>} : vector<288x4xbf16>, vector<4x4xbf16>, vector<288x4xf32> -> vector<288x4xf32>
    %c0_136 = arith.constant 0 : index
    %c0_137 = arith.constant 0 : index
    %148 = vector.load %arg10[%c0_136, %c0_137] : memref<288x4xf32, #tpu.memory_space<vmem>>, vector<288x4xf32>
    %149 = arith.addf %148, %147 : vector<288x4xf32>
    %c0_138 = arith.constant 0 : index
    %c0_139 = arith.constant 0 : index
    %150 = vector.load %arg10[%c0_138, %c0_139] : memref<288x4xf32, #tpu.memory_space<vmem>>, vector<288x4xf32>
    tpu.vector_store %arg10[%c0_138, %c0_139], %149 {strides = array<i32>} : memref<288x4xf32, #tpu.memory_space<vmem>>, vector<288x4xf32>,
    %c19_140 = arith.constant 19 : index
    %c0_141 = arith.constant 0 : index
    %151 = vector.load %arg9[%c19_140, %c0_141] : memref<342x4xbf16, #tpu.memory_space<vmem>>, vector<288x4xbf16>
    %c4_142 = arith.constant 4 : index
    %c0_143 = arith.constant 0 : index
    %c0_144 = arith.constant 0 : index
    %152 = vector.load %arg5[%c4_142, %c0_143, %c0_144] : memref<9x4x4xbf16, #tpu.memory_space<vmem>>, vector<1x4x4xbf16>
    %153 = vector.shape_cast %152 : vector<1x4x4xbf16> to vector<4x4xbf16>
    %cst_145 = arith.constant dense<0.000000e+00> : vector<288x4xf32>
    %154 = tpu.matmul %151, %153, %cst_145 {dimension_numbers = #tpu.dot_dimension_numbers<[1], [0], [0], [1], [0, 0, 1, 1], [], []>} : vector<288x4xbf16>, vector<4x4xbf16>, vector<288x4xf32> -> vector<288x4xf32>
    %c0_146 = arith.constant 0 : index
    %c0_147 = arith.constant 0 : index
    %155 = vector.load %arg10[%c0_146, %c0_147] : memref<288x4xf32, #tpu.memory_space<vmem>>, vector<288x4xf32>
    %156 = arith.addf %155, %154 : vector<288x4xf32>
    %c0_148 = arith.constant 0 : index
    %c0_149 = arith.constant 0 : index
    %157 = vector.load %arg10[%c0_148, %c0_149] : memref<288x4xf32, #tpu.memory_space<vmem>>, vector<288x4xf32>
    tpu.vector_store %arg10[%c0_148, %c0_149], %156 {strides = array<i32>} : memref<288x4xf32, #tpu.memory_space<vmem>>, vector<288x4xf32>,
    %c20_150 = arith.constant 20 : index
    %c0_151 = arith.constant 0 : index
    %158 = vector.load %arg9[%c20_150, %c0_151] : memref<342x4xbf16, #tpu.memory_space<vmem>>, vector<288x4xbf16>
    %c5_152 = arith.constant 5 : index
    %c0_153 = arith.constant 0 : index
    %c0_154 = arith.constant 0 : index
    %159 = vector.load %arg5[%c5_152, %c0_153, %c0_154] : memref<9x4x4xbf16, #tpu.memory_space<vmem>>, vector<1x4x4xbf16>
    %160 = vector.shape_cast %159 : vector<1x4x4xbf16> to vector<4x4xbf16>
    %cst_155 = arith.constant dense<0.000000e+00> : vector<288x4xf32>
    %161 = tpu.matmul %158, %160, %cst_155 {dimension_numbers = #tpu.dot_dimension_numbers<[1], [0], [0], [1], [0, 0, 1, 1], [], []>} : vector<288x4xbf16>, vector<4x4xbf16>, vector<288x4xf32> -> vector<288x4xf32>
    %c0_156 = arith.constant 0 : index
    %c0_157 = arith.constant 0 : index
    %162 = vector.load %arg10[%c0_156, %c0_157] : memref<288x4xf32, #tpu.memory_space<vmem>>, vector<288x4xf32>
    %163 = arith.addf %162, %161 : vector<288x4xf32>
    %c0_158 = arith.constant 0 : index
    %c0_159 = arith.constant 0 : index
    %164 = vector.load %arg10[%c0_158, %c0_159] : memref<288x4xf32, #tpu.memory_space<vmem>>, vector<288x4xf32>
    tpu.vector_store %arg10[%c0_158, %c0_159], %163 {strides = array<i32>} : memref<288x4xf32, #tpu.memory_space<vmem>>, vector<288x4xf32>,
    %c36_160 = arith.constant 36 : index
    %c0_161 = arith.constant 0 : index
    %165 = vector.load %arg9[%c36_160, %c0_161] : memref<342x4xbf16, #tpu.memory_space<vmem>>, vector<288x4xbf16>
    %c6_162 = arith.constant 6 : index
    %c0_163 = arith.constant 0 : index
    %c0_164 = arith.constant 0 : index
    %166 = vector.load %arg5[%c6_162, %c0_163, %c0_164] : memref<9x4x4xbf16, #tpu.memory_space<vmem>>, vector<1x4x4xbf16>
    %167 = vector.shape_cast %166 : vector<1x4x4xbf16> to vector<4x4xbf16>
    %cst_165 = arith.constant dense<0.000000e+00> : vector<288x4xf32>
    %168 = tpu.matmul %165, %167, %cst_165 {dimension_numbers = #tpu.dot_dimension_numbers<[1], [0], [0], [1], [0, 0, 1, 1], [], []>} : vector<288x4xbf16>, vector<4x4xbf16>, vector<288x4xf32> -> vector<288x4xf32>
    %c0_166 = arith.constant 0 : index
    %c0_167 = arith.constant 0 : index
    %169 = vector.load %arg10[%c0_166, %c0_167] : memref<288x4xf32, #tpu.memory_space<vmem>>, vector<288x4xf32>
    %170 = arith.addf %169, %168 : vector<288x4xf32>
    %c0_168 = arith.constant 0 : index
    %c0_169 = arith.constant 0 : index
    %171 = vector.load %arg10[%c0_168, %c0_169] : memref<288x4xf32, #tpu.memory_space<vmem>>, vector<288x4xf32>
    tpu.vector_store %arg10[%c0_168, %c0_169], %170 {strides = array<i32>} : memref<288x4xf32, #tpu.memory_space<vmem>>, vector<288x4xf32>,
    %c37_170 = arith.constant 37 : index
    %c0_171 = arith.constant 0 : index
    %172 = vector.load %arg9[%c37_170, %c0_171] : memref<342x4xbf16, #tpu.memory_space<vmem>>, vector<288x4xbf16>
    %c7_172 = arith.constant 7 : index
    %c0_173 = arith.constant 0 : index
    %c0_174 = arith.constant 0 : index
    %173 = vector.load %arg5[%c7_172, %c0_173, %c0_174] : memref<9x4x4xbf16, #tpu.memory_space<vmem>>, vector<1x4x4xbf16>
    %174 = vector.shape_cast %173 : vector<1x4x4xbf16> to vector<4x4xbf16>
    %cst_175 = arith.constant dense<0.000000e+00> : vector<288x4xf32>
    %175 = tpu.matmul %172, %174, %cst_175 {dimension_numbers = #tpu.dot_dimension_numbers<[1], [0], [0], [1], [0, 0, 1, 1], [], []>} : vector<288x4xbf16>, vector<4x4xbf16>, vector<288x4xf32> -> vector<288x4xf32>
    %c0_176 = arith.constant 0 : index
    %c0_177 = arith.constant 0 : index
    %176 = vector.load %arg10[%c0_176, %c0_177] : memref<288x4xf32, #tpu.memory_space<vmem>>, vector<288x4xf32>
    %177 = arith.addf %176, %175 : vector<288x4xf32>
    %c0_178 = arith.constant 0 : index
    %c0_179 = arith.constant 0 : index
    %178 = vector.load %arg10[%c0_178, %c0_179] : memref<288x4xf32, #tpu.memory_space<vmem>>, vector<288x4xf32>
    tpu.vector_store %arg10[%c0_178, %c0_179], %177 {strides = array<i32>} : memref<288x4xf32, #tpu.memory_space<vmem>>, vector<288x4xf32>,
    %c38_180 = arith.constant 38 : index
    %c0_181 = arith.constant 0 : index
    %179 = vector.load %arg9[%c38_180, %c0_181] : memref<342x4xbf16, #tpu.memory_space<vmem>>, vector<288x4xbf16>
    %c8_182 = arith.constant 8 : index
    %c0_183 = arith.constant 0 : index
    %c0_184 = arith.constant 0 : index
    %180 = vector.load %arg5[%c8_182, %c0_183, %c0_184] : memref<9x4x4xbf16, #tpu.memory_space<vmem>>, vector<1x4x4xbf16>
    %181 = vector.shape_cast %180 : vector<1x4x4xbf16> to vector<4x4xbf16>
    %cst_185 = arith.constant dense<0.000000e+00> : vector<288x4xf32>
    %182 = tpu.matmul %179, %181, %cst_185 {dimension_numbers = #tpu.dot_dimension_numbers<[1], [0], [0], [1], [0, 0, 1, 1], [], []>} : vector<288x4xbf16>, vector<4x4xbf16>, vector<288x4xf32> -> vector<288x4xf32>
    %c0_186 = arith.constant 0 : index
    %c0_187 = arith.constant 0 : index
    %183 = vector.load %arg10[%c0_186, %c0_187] : memref<288x4xf32, #tpu.memory_space<vmem>>, vector<288x4xf32>
    %184 = arith.addf %183, %182 : vector<288x4xf32>
    %c0_188 = arith.constant 0 : index
    %c0_189 = arith.constant 0 : index
    %185 = vector.load %arg10[%c0_188, %c0_189] : memref<288x4xf32, #tpu.memory_space<vmem>>, vector<288x4xf32>
    tpu.vector_store %arg10[%c0_188, %c0_189], %184 {strides = array<i32>} : memref<288x4xf32, #tpu.memory_space<vmem>>, vector<288x4xf32>,
    %c0_190 = arith.constant 0 : index
    %c0_191 = arith.constant 0 : index
    %186 = vector.load %arg10[%c0_190, %c0_191] : memref<288x4xf32, #tpu.memory_space<vmem>>, vector<288x4xf32>
    %cst_192 = arith.constant 0.000000e+00 : f32
    %187 = vector.shape_cast %18 : vector<288x1xi1> to vector<288x1xi1>
    %188 = vector.broadcast %187 : vector<288x1xi1> to vector<288x4xi1>
    %189 = vector.broadcast %cst_192 : f32 to vector<288x4xf32>
    %190 = arith.select %188, %186, %189 : vector<288x4xi1>, vector<288x4xf32>
    %cst_193 = arith.constant dense<0.000000e+00> : vector<4xf32>
    %191 = vector.multi_reduction <add>, %190, %cst_193 [0] : vector<288x4xf32> to vector<4xf32>
    %192 = vector.shape_cast %191 : vector<4xf32> to vector<1x4xf32>
    %cst_194 = arith.constant 2.560000e+02 : f32
    %193 = vector.broadcast %cst_194 : f32 to vector<1x4xf32>
    %194 = arith.divf %192, %193 : vector<1x4xf32>
    %195 = arith.mulf %190, %190 : vector<288x4xf32>
    %cst_195 = arith.constant dense<0.000000e+00> : vector<4xf32>
    %196 = vector.multi_reduction <add>, %195, %cst_195 [0] : vector<288x4xf32> to vector<4xf32>
    %197 = vector.shape_cast %196 : vector<4xf32> to vector<1x4xf32>
    %cst_196 = arith.constant 2.560000e+02 : f32
    %198 = vector.broadcast %cst_196 : f32 to vector<1x4xf32>
    %199 = arith.divf %197, %198 : vector<1x4xf32>
    %200 = arith.mulf %194, %194 : vector<1x4xf32>
    %201 = arith.subf %199, %200 : vector<1x4xf32>
    %cst_197 = arith.constant 0.000000e+00 : f32
    %202 = vector.broadcast %cst_197 : f32 to vector<1x4xf32>
    %203 = arith.maximumf %201, %202 : vector<1x4xf32>
    %c0_198 = arith.constant 0 : index
    %c0_199 = arith.constant 0 : index
    %204 = vector.load %arg6[%c0_198, %c0_199] : memref<1x4xf32, #tpu.memory_space<vmem>>, vector<1x4xf32>
    %cst_200 = arith.constant 9.99999974E-6 : f32
    %205 = vector.broadcast %cst_200 : f32 to vector<1x4xf32>
    %206 = arith.addf %203, %205 : vector<1x4xf32>
    %207 = math.rsqrt %206 : vector<1x4xf32>
    %208 = arith.mulf %204, %207 : vector<1x4xf32>
    %c0_201 = arith.constant 0 : index
    %c0_202 = arith.constant 0 : index
    %209 = vector.load %arg7[%c0_201, %c0_202] : memref<1x4xf32, #tpu.memory_space<vmem>>, vector<1x4xf32>
    %210 = arith.mulf %194, %208 : vector<1x4xf32>
    %211 = arith.subf %209, %210 : vector<1x4xf32>
    %212 = vector.broadcast %208 : vector<1x4xf32> to vector<288x4xf32>
    %213 = arith.mulf %190, %212 : vector<288x4xf32>
    %214 = vector.broadcast %211 : vector<1x4xf32> to vector<288x4xf32>
    %215 = arith.addf %213, %214 : vector<288x4xf32>
    %216 = arith.extf %24 : vector<288x4xbf16> to vector<288x4xf32>
    %217 = arith.addf %215, %216 : vector<288x4xf32>
    %218 = vector.shape_cast %217 : vector<288x4xf32> to vector<1x288x4xf32>
    %219 = arith.truncf %218 : vector<1x288x4xf32> to vector<1x288x4xbf16>
    %c0_203 = arith.constant 0 : index
    %c0_204 = arith.constant 0 : index
    %c0_205 = arith.constant 0 : index
    %220 = vector.load %arg8[%c0_203, %c0_204, %c0_205] : memref<1x288x4xbf16, #tpu.memory_space<vmem>>, vector<1x288x4xbf16>
    tpu.vector_store %arg8[%c0_203, %c0_204, %c0_205], %219 {strides = array<i32>} : memref<1x288x4xbf16, #tpu.memory_space<vmem>>, vector<1x288x4xbf16>,
    return
  }
  func.func @transform_0(%arg0: i32) -> (i32, i32, i32) {
    %c0_i32 = arith.constant 0 : i32
    %c0_i32_0 = arith.constant 0 : i32
    %c0_i32_1 = arith.constant 0 : i32
    return %arg0, %c0_i32, %c0_i32_0 : i32, i32, i32
  }
  func.func @transform_1(%arg0: i32) -> (i32, i32, i32) {
    %c0_i32 = arith.constant 0 : i32
    %c0_i32_0 = arith.constant 0 : i32
    %c0_i32_1 = arith.constant 0 : i32
    %c0_i32_2 = arith.constant 0 : i32
    return %c0_i32, %c0_i32_0, %c0_i32_1 : i32, i32, i32
  }
  func.func @transform_2(%arg0: i32) -> (i32, i32) {
    %c0_i32 = arith.constant 0 : i32
    %c0_i32_0 = arith.constant 0 : i32
    %c0_i32_1 = arith.constant 0 : i32
    return %c0_i32, %c0_i32_0 : i32, i32
  }
  func.func @transform_3(%arg0: i32) -> (i32, i32) {
    %c0_i32 = arith.constant 0 : i32
    %c0_i32_0 = arith.constant 0 : i32
    %c0_i32_1 = arith.constant 0 : i32
    return %c0_i32, %c0_i32_0 : i32, i32
  }
  func.func @transform_4(%arg0: i32) -> (i32, i32, i32) {
    %c0_i32 = arith.constant 0 : i32
    %c0_i32_0 = arith.constant 0 : i32
    %c0_i32_1 = arith.constant 0 : i32
    %c0_i32_2 = arith.constant 0 : i32
    return %c0_i32, %c0_i32_0, %c0_i32_1 : i32, i32, i32
  }
  func.func @transform_5(%arg0: i32) -> (i32, i32) {
    %c0_i32 = arith.constant 0 : i32
    %c0_i32_0 = arith.constant 0 : i32
    %c0_i32_1 = arith.constant 0 : i32
    return %c0_i32, %c0_i32_0 : i32, i32
  }
  func.func @transform_6(%arg0: i32) -> (i32, i32) {
    %c0_i32 = arith.constant 0 : i32
    %c0_i32_0 = arith.constant 0 : i32
    %c0_i32_1 = arith.constant 0 : i32
    return %c0_i32, %c0_i32_0 : i32, i32
  }
  func.func @transform_7(%arg0: i32) -> (i32, i32, i32) {
    %c0_i32 = arith.constant 0 : i32
    %c0_i32_0 = arith.constant 0 : i32
    %c0_i32_1 = arith.constant 0 : i32
    return %arg0, %c0_i32, %c0_i32_0 : i32, i32, i32
  }
}

</mosaic_0001>

<llo_original>
// kernel: tpu_custom_call.1
$region0: #{tpu_custom_call.1}
  #allocation0 [shape = 'u32[]', space=smem, size = 0x4, offset = 0x4, fixed_abs, tag = 'smem constant byte address 0x4 - core index']
  #allocation1 [shape = 'u32[72,128]{1,0:T(1,128)}', space=vmem, size = 0x9000, scoped, tag = 'internal scratch']
  #allocation2 [shape = 'bf16[342,4]{1,0:T(8,128)(2,1)}', space=vmem, size = 0x15800, scoped, tag = 'scratch operand']
  #allocation3 [shape = 'f32[288,4]{1,0:T(8,128)}', space=vmem, size = 0x24000, scoped, tag = 'scratch operand']
  %s0 = inlined_call_operand.vmem [shape: bf16[2,288,4], index: 0, kind: input, shape index: {}]
  %s1 = inlined_call_operand.vmem [shape: bf16[9,4,4], index: 1, kind: input, shape index: {}]
  %s2 = inlined_call_operand.vmem [shape: f32[1,4], index: 2, kind: input, shape index: {}]
  %s3 = inlined_call_operand.vmem [shape: f32[1,4], index: 3, kind: input, shape index: {}]
  %s4 = inlined_call_operand.vmem [shape: bf16[9,4,4], index: 4, kind: input, shape index: {}]
  %s5 = inlined_call_operand.vmem [shape: f32[1,4], index: 5, kind: input, shape index: {}]
  %s6 = inlined_call_operand.vmem [shape: f32[1,4], index: 6, kind: input, shape index: {}]
  %s7 = inlined_call_operand.vmem [shape: bf16[2,288,4], index: 7, kind: output, shape index: {}]
  %s8 = sld [smem:[#allocation0]]
  $region61: #{tpu_custom_call.1} parent=0
    _
  %s10 = ssub.s32 1, %s8
  %s11 = scalar_select 0, %s10, %s8
  loop: start=0, step=1, limit=4
  $region2: #{tpu_custom_call.1} parent=0 // loop_pre_header
    _
  $region3: #{tpu_custom_call.1} parent=0 // loop_header
    %s13 = sphi 0, %s17
    %p14 = scmp.ge.s32.totalorder %s13, 4
    %s23 = sphi 0, %s25
    %s26 = sphi 0, %s23
    %s27 = sphi 0, %s26
    %s43 = sphi 0, %s27
    %s47 = sphi 0, %s47
    %s49 = sphi 0, %s47
    %s50 = sphi 0, %s49
    %s64 = sphi 0, %s50
    %s68 = sphi 0, %s68
    %s70 = sphi 0, %s68
    %s71 = sphi 0, %s70
    %s85 = sphi 0, %s71
    %s89 = sphi 0, %s89
    %s91 = sphi 0, %s89
    %s92 = sphi 0, %s91
    %s106 = sphi 0, %s92
    %s110 = sphi 0, %s110
    %s112 = sphi 0, %s110
    %s113 = sphi 0, %s112
    %s127 = sphi 0, %s113
    %s131 = sphi 0, %s131
    %s133 = sphi 0, %s131
    %s134 = sphi 0, %s133
    %s148 = sphi 0, %s134
    %s152 = sphi 0, %s152
    %s154 = sphi 0, %s152
    %s155 = sphi 0, %s154
    %s169 = sphi 0, %s155
    %s175 = sphi 0, %s177
    %s178 = sphi 0, %s175
    %s179 = sphi 0, %s178
    %s195 = sphi 0, %s179
  $region4: #{tpu_custom_call.1} parent=0 // loop_header_branch
    %16 = sbr.rel (%p14) target = $region8
  $region5: #{tpu_custom_call.1} parent=0 // loop_body
    %s18 = ssub.s32 %s13, 1
    %s19 = ssub.s32 %s13, 2
    %s20 = sadd.s32 %s13, 1
    %s21 = ssub.s32 %s13, %s20
    %p22 = scmp.eq.s32.totalorder %s21, 0
    %s24 = sadd.s32 %s23, 1
    %s25 = scalar_select %p22, %s23, %s24
    %p28 = pneg %p22
    %p29 = scmp.eq.s32.totalorder %s13, 1
    %p30 = por %p28, %p29
    %p31 = scmp.ne.s32.totalorder %s23, %s26
    %p32 = scmp.eq.s32.totalorder %s13, 0
    %p33 = por %p31, %p32
    %p34 = scmp.ne.s32.totalorder %s23, %s26
    %p35 = scmp.eq.s32.totalorder %s18, 1
    %p36 = por %p34, %p35
    %p37 = scmp.ne.s32.totalorder %s26, %s27
    %p38 = scmp.eq.s32.totalorder %s18, 0
    %p39 = por %p37, %p38
    %p40 = scmp.ne.s32.totalorder %s26, %s27
    %p41 = scmp.eq.s32.totalorder %s19, 1
    %p42 = por %p40, %p41
    %p44 = scmp.ne.s32.totalorder %s27, %s43
    %p45 = scmp.eq.s32.totalorder %s19, 0
    %p46 = por %p44, %p45
    %s48 = sadd.s32 %s47, 1
    %p51 = scmp.eq.s32.totalorder %s13, 1
    %p52 = scmp.ne.s32.totalorder %s47, %s49
    %p53 = scmp.eq.s32.totalorder %s13, 0
    %p54 = por %p52, %p53
    %p55 = scmp.ne.s32.totalorder %s47, %s49
    %p56 = scmp.eq.s32.totalorder %s18, 1
    %p57 = por %p55, %p56
    %p58 = scmp.ne.s32.totalorder %s49, %s50
    %p59 = scmp.eq.s32.totalorder %s18, 0
    %p60 = por %p58, %p59
    %p61 = scmp.ne.s32.totalorder %s49, %s50
    %p62 = scmp.eq.s32.totalorder %s19, 1
    %p63 = por %p61, %p62
    %p65 = scmp.ne.s32.totalorder %s50, %s64
    %p66 = scmp.eq.s32.totalorder %s19, 0
    %p67 = por %p65, %p66
    %s69 = sadd.s32 %s68, 1
    %p72 = scmp.eq.s32.totalorder %s13, 1
    %p73 = scmp.ne.s32.totalorder %s68, %s70
    %p74 = scmp.eq.s32.totalorder %s13, 0
    %p75 = por %p73, %p74
    %p76 = scmp.ne.s32.totalorder %s68, %s70
    %p77 = scmp.eq.s32.totalorder %s18, 1
    %p78 = por %p76, %p77
    %p79 = scmp.ne.s32.totalorder %s70, %s71
    %p80 = scmp.eq.s32.totalorder %s18, 0
    %p81 = por %p79, %p80
    %p82 = scmp.ne.s32.totalorder %s70, %s71
    %p83 = scmp.eq.s32.totalorder %s19, 1
    %p84 = por %p82, %p83
    %p86 = scmp.ne.s32.totalorder %s71, %s85
    %p87 = scmp.eq.s32.totalorder %s19, 0
    %p88 = por %p86, %p87
    %s90 = sadd.s32 %s89, 1
    %p93 = scmp.eq.s32.totalorder %s13, 1
    %p94 = scmp.ne.s32.totalorder %s89, %s91
    %p95 = scmp.eq.s32.totalorder %s13, 0
    %p96 = por %p94, %p95
    %p97 = scmp.ne.s32.totalorder %s89, %s91
    %p98 = scmp.eq.s32.totalorder %s18, 1
    %p99 = por %p97, %p98
    %p100 = scmp.ne.s32.totalorder %s91, %s92
    %p101 = scmp.eq.s32.totalorder %s18, 0
    %p102 = por %p100, %p101
    %p103 = scmp.ne.s32.totalorder %s91, %s92
    %p104 = scmp.eq.s32.totalorder %s19, 1
    %p105 = por %p103, %p104
    %p107 = scmp.ne.s32.totalorder %s92, %s106
    %p108 = scmp.eq.s32.totalorder %s19, 0
    %p109 = por %p107, %p108
    %s111 = sadd.s32 %s110, 1
    %p114 = scmp.eq.s32.totalorder %s13, 1
    %p115 = scmp.ne.s32.totalorder %s110, %s112
    %p116 = scmp.eq.s32.totalorder %s13, 0
    %p117 = por %p115, %p116
    %p118 = scmp.ne.s32.totalorder %s110, %s112
    %p119 = scmp.eq.s32.totalorder %s18, 1
    %p120 = por %p118, %p119
    %p121 = scmp.ne.s32.totalorder %s112, %s113
    %p122 = scmp.eq.s32.totalorder %s18, 0
    %p123 = por %p121, %p122
    %p124 = scmp.ne.s32.totalorder %s112, %s113
    %p125 = scmp.eq.s32.totalorder %s19, 1
    %p126 = por %p124, %p125
    %p128 = scmp.ne.s32.totalorder %s113, %s127
    %p129 = scmp.eq.s32.totalorder %s19, 0
    %p130 = por %p128, %p129
    %s132 = sadd.s32 %s131, 1
    %p135 = scmp.eq.s32.totalorder %s13, 1
    %p136 = scmp.ne.s32.totalorder %s131, %s133
    %p137 = scmp.eq.s32.totalorder %s13, 0
    %p138 = por %p136, %p137
    %p139 = scmp.ne.s32.totalorder %s131, %s133
    %p140 = scmp.eq.s32.totalorder %s18, 1
    %p141 = por %p139, %p140
    %p142 = scmp.ne.s32.totalorder %s133, %s134
    %p143 = scmp.eq.s32.totalorder %s18, 0
    %p144 = por %p142, %p143
    %p145 = scmp.ne.s32.totalorder %s133, %s134
    %p146 = scmp.eq.s32.totalorder %s19, 1
    %p147 = por %p145, %p146
    %p149 = scmp.ne.s32.totalorder %s134, %s148
    %p150 = scmp.eq.s32.totalorder %s19, 0
    %p151 = por %p149, %p150
    %s153 = sadd.s32 %s152, 1
    %p156 = scmp.eq.s32.totalorder %s13, 1
    %p157 = scmp.ne.s32.totalorder %s152, %s154
    %p158 = scmp.eq.s32.totalorder %s13, 0
    %p159 = por %p157, %p158
    %p160 = scmp.ne.s32.totalorder %s152, %s154
    %p161 = scmp.eq.s32.totalorder %s18, 1
    %p162 = por %p160, %p161
    %p163 = scmp.ne.s32.totalorder %s154, %s155
    %p164 = scmp.eq.s32.totalorder %s18, 0
    %p165 = por %p163, %p164
    %p166 = scmp.ne.s32.totalorder %s154, %s155
    %p167 = scmp.eq.s32.totalorder %s19, 1
    %p168 = por %p166, %p167
    %p170 = scmp.ne.s32.totalorder %s155, %s169
    %p171 = scmp.eq.s32.totalorder %s19, 0
    %p172 = por %p170, %p171
    %s173 = ssub.s32 %s13, %s20
    %p174 = scmp.eq.s32.totalorder %s173, 0
    %s176 = sadd.s32 %s175, 1
    %s177 = scalar_select %p174, %s175, %s176
    %p180 = pneg %p174
    %p181 = scmp.eq.s32.totalorder %s13, 1
    %p182 = por %p180, %p181
    %p183 = scmp.ne.s32.totalorder %s175, %s178
    %p184 = scmp.eq.s32.totalorder %s13, 0
    %p185 = por %p183, %p184
    %p186 = scmp.ne.s32.totalorder %s175, %s178
    %p187 = scmp.eq.s32.totalorder %s18, 1
    %p188 = por %p186, %p187
    %p189 = scmp.ne.s32.totalorder %s178, %s179
    %p190 = scmp.eq.s32.totalorder %s18, 0
    %p191 = por %p189, %p190
    %p192 = scmp.ne.s32.totalorder %s178, %s179
    %p193 = scmp.eq.s32.totalorder %s19, 1
    %p194 = por %p192, %p193
    %p196 = scmp.ne.s32.totalorder %s179, %s195
    %p197 = scmp.eq.s32.totalorder %s19, 0
    %p198 = por %p196, %p197
    %p199 = scmp.le.s32.totalorder 1, %s13
    %p200 = scmp.lt.s32.totalorder %s13, 3
    %p201 = pnand %p199, %p200
    %p202 = pneg %p201
    // Predicated region
    $region9: #{tpu_custom_call.1} parent=5 // pred_check
      _
    $region10: #{tpu_custom_call.1} parent=5 // pred_check_branch
      %204 = sbr.rel (%p201) target = $region12
    $region11: #{tpu_custom_call.1} parent=5 // pred_region
      %s205 = ssub.s32 %s13, 1
      // Predicated region
      $region13: #{tpu_custom_call.1} parent=11 // pred_check
        %p206 = pneg %p60
      $region14: #{tpu_custom_call.1} parent=11 // pred_check_branch
        %208 = sbr.rel (%p206) target = $region16
      $region15: #{tpu_custom_call.1} parent=11 // pred_region
        _
      $region16: #{tpu_custom_call.1} parent=11 // pred_fallthru
        _
      // Predicated region
      $region17: #{tpu_custom_call.1} parent=11 // pred_check
        %p209 = pneg %p81
      $region18: #{tpu_custom_call.1} parent=11 // pred_check_branch
        %211 = sbr.rel (%p209) target = $region20
      $region19: #{tpu_custom_call.1} parent=11 // pred_region
        _
      $region20: #{tpu_custom_call.1} parent=11 // pred_fallthru
        _
      // Predicated region
      $region21: #{tpu_custom_call.1} parent=11 // pred_check
        %p212 = pneg %p102
      $region22: #{tpu_custom_call.1} parent=11 // pred_check_branch
        %214 = sbr.rel (%p212) target = $region24
      $region23: #{tpu_custom_call.1} parent=11 // pred_region
        _
      $region24: #{tpu_custom_call.1} parent=11 // pred_fallthru
        _
      // Predicated region
      $region25: #{tpu_custom_call.1} parent=11 // pred_check
        %p215 = pneg %p123
      $region26: #{tpu_custom_call.1} parent=11 // pred_check_branch
        %217 = sbr.rel (%p215) target = $region28
      $region27: #{tpu_custom_call.1} parent=11 // pred_region
        _
      $region28: #{tpu_custom_call.1} parent=11 // pred_fallthru
        _
      // Predicated region
      $region29: #{tpu_custom_call.1} parent=11 // pred_check
        %p218 = pneg %p144
      $region30: #{tpu_custom_call.1} parent=11 // pred_check_branch
        %220 = sbr.rel (%p218) target = $region32
      $region31: #{tpu_custom_call.1} parent=11 // pred_region
        _
      $region32: #{tpu_custom_call.1} parent=11 // pred_fallthru
        _
      // Predicated region
      $region33: #{tpu_custom_call.1} parent=11 // pred_check
        %p221 = pneg %p165
      $region34: #{tpu_custom_call.1} parent=11 // pred_check_branch
        %223 = sbr.rel (%p221) target = $region36
      $region35: #{tpu_custom_call.1} parent=11 // pred_region
        _
      $region36: #{tpu_custom_call.1} parent=11 // pred_fallthru
        _
    $region12: #{tpu_custom_call.1} parent=5 // pred_fallthru
      _
    %p224 = scmp.lt.s32.totalorder %s13, 2
    // Predicated region
    $region37: #{tpu_custom_call.1} parent=5 // pred_check
      %p225 = pneg %p224
    $region38: #{tpu_custom_call.1} parent=5 // pred_check_branch
      %227 = sbr.rel (%p225) target = $region40
    $region39: #{tpu_custom_call.1} parent=5 // pred_region
      // Predicated region
      $region41: #{tpu_custom_call.1} parent=39 // pred_check
        %p228 = pneg %p33
      $region42: #{tpu_custom_call.1} parent=39 // pred_check_branch
        %230 = sbr.rel (%p228) target = $region44
      $region43: #{tpu_custom_call.1} parent=39 // pred_region
        %p231 = scmp.lt.s32.totalorder %s13, 1
        %s232 = scalar_select %p231, %s13, 1
        %s233 = smul.addr %s232, 36
        %s234 = smul.addr %s233, 4
        %s235 = scalar_lea.vmem %s0, %s234
      $region44: #{tpu_custom_call.1} parent=39 // pred_fallthru
        _
    $region40: #{tpu_custom_call.1} parent=5 // pred_fallthru
      _
    %p236 = scmp.le.s32.totalorder 1, %s13
    %p237 = scmp.lt.s32.totalorder %s13, 3
    %p238 = pnand %p236, %p237
    %p239 = pneg %p238
    // Predicated region
    $region45: #{tpu_custom_call.1} parent=5 // pred_check
      _
    $region46: #{tpu_custom_call.1} parent=5 // pred_check_branch
      %241 = sbr.rel (%p238) target = $region48
    $region47: #{tpu_custom_call.1} parent=5 // pred_region
      %s242 = ssub.s32 %s13, 1
      %p243 = scmp.lt.s32.totalorder %s18, 1
      %s244 = scalar_select %p243, %s18, 1
      %s245 = smul.addr %s244, 36
      %s246 = smul.addr %s245, 4
      %s247 = scalar_lea.vmem %s0, %s246
      %p248 = pneg %p39
      %p249 = pneg %p36
      %p250 = pneg %p60
      %p251 = pneg %p57
      %p252 = pneg %p81
      %p253 = pneg %p78
      %p254 = pneg %p102
      %p255 = pneg %p99
      %p256 = pneg %p123
      %p257 = pneg %p120
      %p258 = pneg %p144
      %p259 = pneg %p141
      %p260 = pneg %p165
      %p261 = pneg %p162
      %p262 = pneg %p191
      %p263 = pneg %p188
      %p264 = scmp.lt.s32.totalorder %s18, 1
      %s265 = scalar_select %p264, %s18, 1
      %s266 = smul.addr %s265, 36
      %s267 = smul.addr %s266, 4
      %s268 = scalar_lea.vmem %s7, %s267
      %p269 = scmp.lt.s32.totalorder %s18, 1
      %s270 = scalar_select %p269, %s18, 1
      %s271 = smul.addr %s270, 36
      %s272 = smul.addr %s271, 4
      %s273 = scalar_lea.vmem %s0, %s272
      %p274 = scmp.lt.s32.totalorder %s18, 1
      %s275 = scalar_select %p274, %s18, 1
      %s276 = smul.addr %s275, 36
      %s277 = smul.addr %s276, 4
      %s278 = scalar_lea.vmem %s7, %s277
      %v280 = vlaneseq
      %v281 = vshrl.u32 %v280, 7
      %v282 = vadd.s32 %v281, 8
      %v283 = vadd.s32 %v281, 16
      %v284 = vadd.s32 %v281, 24
      %v285 = vadd.s32 %v281, 32
      %v286 = vadd.s32 %v281, 40
      %v287 = vadd.s32 %v281, 48
      %v288 = vadd.s32 %v281, 56
      %v289 = vadd.s32 %v281, 64
      %v290 = vadd.s32 %v281, 72
      %v291 = vadd.s32 %v281, 80
      %v292 = vadd.s32 %v281, 88
      %v293 = vadd.s32 %v281, 96
      %v294 = vadd.s32 %v281, 104
      %v295 = vadd.s32 %v281, 112
      %v296 = vadd.s32 %v281, 120
      %v297 = vadd.s32 %v281, 128
      %v298 = vadd.s32 %v281, 136
      %v299 = vadd.s32 %v281, 144
      %v300 = vadd.s32 %v281, 152
      %v301 = vadd.s32 %v281, 160
      %v302 = vadd.s32 %v281, 168
      %v303 = vadd.s32 %v281, 176
      %v304 = vadd.s32 %v281, 184
      %v305 = vadd.s32 %v281, 192
      %v306 = vadd.s32 %v281, 200
      %v307 = vadd.s32 %v281, 208
      %v308 = vadd.s32 %v281, 216
      %v309 = vadd.s32 %v281, 224
      %v310 = vadd.s32 %v281, 232
      %v311 = vadd.s32 %v281, 240
      %v312 = vadd.s32 %v281, 248
      %v313 = vadd.s32 %v281, 256
      %v314 = vadd.s32 %v281, 264
      %v315 = vadd.s32 %v281, 272
      %v316 = vadd.s32 %v281, 280
      %vm317 = vcmp.lt.s32.totalorder %v281, 0
      %v318 = vsub.s32 0, %v281
      %v319 = vsel %vm317, %v318, %v281
      %v320 = vand.u32 %v319, 65535
      %v321 = vshrl.u32 %v319, 16
      %v323 = vmul.u32 %v320, 14564
      %v324 = vmul.u32 %v320, 58254
      %v325 = vmul.u32 %v321, 14564
      %v326 = vmul.u32 %v321, 58254
      %v327 = vshll.u32 %v324, 16
      %v328 = vshrl.u32 %v324, 16
      %v329 = vshll.u32 %v325, 16
      %v330 = vshrl.u32 %v325, 16
      %vm331 = vc.u32 %v323, %v327
      %v332 = vsel %vm331, 1, 0
      %v333 = vadd.s32 %v323, %v327
      %v334 = vadd.s32 %v326, %v332
      %vm335 = vc.u32 %v333, %v329
      %v336 = vsel %vm335, 1, 0
      %v337 = vadd.s32 %v333, %v329
      %v338 = vadd.s32 %v334, %v336
      %v339 = vadd.s32 %v338, %v328
      %v340 = vadd.s32 %v339, %v330
      %v341 = vshrl.u32 %v340, 4
      %v342 = vmul.u32 %v341, 18
      %v343 = vsub.s32 %v319, %v342
      %v344 = vsub.s32 0, %v343
      %v345 = vsel %vm317, %v344, %v343
      %vm346 = vcmp.lt.s32.totalorder %v282, 0
      %v347 = vsub.s32 0, %v282
      %v348 = vsel %vm346, %v347, %v282
      %v349 = vand.u32 %v348, 65535
      %v350 = vshrl.u32 %v348, 16
      %v352 = vmul.u32 %v349, 14564
      %v353 = vmul.u32 %v349, 58254
      %v354 = vmul.u32 %v350, 14564
      %v355 = vmul.u32 %v350, 58254
      %v356 = vshll.u32 %v353, 16
      %v357 = vshrl.u32 %v353, 16
      %v358 = vshll.u32 %v354, 16
      %v359 = vshrl.u32 %v354, 16
      %vm360 = vc.u32 %v352, %v356
      %v361 = vsel %vm360, 1, 0
      %v362 = vadd.s32 %v352, %v356
      %v363 = vadd.s32 %v355, %v361
      %vm364 = vc.u32 %v362, %v358
      %v365 = vsel %vm364, 1, 0
      %v366 = vadd.s32 %v362, %v358
      %v367 = vadd.s32 %v363, %v365
      %v368 = vadd.s32 %v367, %v357
      %v369 = vadd.s32 %v368, %v359
      %v370 = vshrl.u32 %v369, 4
      %v371 = vmul.u32 %v370, 18
      %v372 = vsub.s32 %v348, %v371
      %v373 = vsub.s32 0, %v372
      %v374 = vsel %vm346, %v373, %v372
      %vm375 = vcmp.lt.s32.totalorder %v283, 0
      %v376 = vsub.s32 0, %v283
      %v377 = vsel %vm375, %v376, %v283
      %v378 = vand.u32 %v377, 65535
      %v379 = vshrl.u32 %v377, 16
      %v381 = vmul.u32 %v378, 14564
      %v382 = vmul.u32 %v378, 58254
      %v383 = vmul.u32 %v379, 14564
      %v384 = vmul.u32 %v379, 58254
      %v385 = vshll.u32 %v382, 16
      %v386 = vshrl.u32 %v382, 16
      %v387 = vshll.u32 %v383, 16
      %v388 = vshrl.u32 %v383, 16
      %vm389 = vc.u32 %v381, %v385
      %v390 = vsel %vm389, 1, 0
      %v391 = vadd.s32 %v381, %v385
      %v392 = vadd.s32 %v384, %v390
      %vm393 = vc.u32 %v391, %v387
      %v394 = vsel %vm393, 1, 0
      %v395 = vadd.s32 %v391, %v387
      %v396 = vadd.s32 %v392, %v394
      %v397 = vadd.s32 %v396, %v386
      %v398 = vadd.s32 %v397, %v388
      %v399 = vshrl.u32 %v398, 4
      %v400 = vmul.u32 %v399, 18
      %v401 = vsub.s32 %v377, %v400
      %v402 = vsub.s32 0, %v401
      %v403 = vsel %vm375, %v402, %v401
      %vm404 = vcmp.lt.s32.totalorder %v284, 0
      %v405 = vsub.s32 0, %v284
      %v406 = vsel %vm404, %v405, %v284
      %v407 = vand.u32 %v406, 65535
      %v408 = vshrl.u32 %v406, 16
      %v410 = vmul.u32 %v407, 14564
      %v411 = vmul.u32 %v407, 58254
      %v412 = vmul.u32 %v408, 14564
      %v413 = vmul.u32 %v408, 58254
      %v414 = vshll.u32 %v411, 16
      %v415 = vshrl.u32 %v411, 16
      %v416 = vshll.u32 %v412, 16
      %v417 = vshrl.u32 %v412, 16
      %vm418 = vc.u32 %v410, %v414
      %v419 = vsel %vm418, 1, 0
      %v420 = vadd.s32 %v410, %v414
      %v421 = vadd.s32 %v413, %v419
      %vm422 = vc.u32 %v420, %v416
      %v423 = vsel %vm422, 1, 0
      %v424 = vadd.s32 %v420, %v416
      %v425 = vadd.s32 %v421, %v423
      %v426 = vadd.s32 %v425, %v415
      %v427 = vadd.s32 %v426, %v417
      %v428 = vshrl.u32 %v427, 4
      %v429 = vmul.u32 %v428, 18
      %v430 = vsub.s32 %v406, %v429
      %v431 = vsub.s32 0, %v430
      %v432 = vsel %vm404, %v431, %v430
      %vm433 = vcmp.lt.s32.totalorder %v285, 0
      %v434 = vsub.s32 0, %v285
      %v435 = vsel %vm433, %v434, %v285
      %v436 = vand.u32 %v435, 65535
      %v437 = vshrl.u32 %v435, 16
      %v439 = vmul.u32 %v436, 14564
      %v440 = vmul.u32 %v436, 58254
      %v441 = vmul.u32 %v437, 14564
      %v442 = vmul.u32 %v437, 58254
      %v443 = vshll.u32 %v440, 16
      %v444 = vshrl.u32 %v440, 16
      %v445 = vshll.u32 %v441, 16
      %v446 = vshrl.u32 %v441, 16
      %vm447 = vc.u32 %v439, %v443
      %v448 = vsel %vm447, 1, 0
      %v449 = vadd.s32 %v439, %v443
      %v450 = vadd.s32 %v442, %v448
      %vm451 = vc.u32 %v449, %v445
      %v452 = vsel %vm451, 1, 0
      %v453 = vadd.s32 %v449, %v445
      %v454 = vadd.s32 %v450, %v452
      %v455 = vadd.s32 %v454, %v444
      %v456 = vadd.s32 %v455, %v446
      %v457 = vshrl.u32 %v456, 4
      %v458 = vmul.u32 %v457, 18
      %v459 = vsub.s32 %v435, %v458
      %v460 = vsub.s32 0, %v459
      %v461 = vsel %vm433, %v460, %v459
      %vm462 = vcmp.lt.s32.totalorder %v286, 0
      %v463 = vsub.s32 0, %v286
      %v464 = vsel %vm462, %v463, %v286
      %v465 = vand.u32 %v464, 65535
      %v466 = vshrl.u32 %v464, 16
      %v468 = vmul.u32 %v465, 14564
      %v469 = vmul.u32 %v465, 58254
      %v470 = vmul.u32 %v466, 14564
      %v471 = vmul.u32 %v466, 58254
      %v472 = vshll.u32 %v469, 16
      %v473 = vshrl.u32 %v469, 16
      %v474 = vshll.u32 %v470, 16
      %v475 = vshrl.u32 %v470, 16
      %vm476 = vc.u32 %v468, %v472
      %v477 = vsel %vm476, 1, 0
      %v478 = vadd.s32 %v468, %v472
      %v479 = vadd.s32 %v471, %v477
      %vm480 = vc.u32 %v478, %v474
      %v481 = vsel %vm480, 1, 0
      %v482 = vadd.s32 %v478, %v474
      %v483 = vadd.s32 %v479, %v481
      %v484 = vadd.s32 %v483, %v473
      %v485 = vadd.s32 %v484, %v475
      %v486 = vshrl.u32 %v485, 4
      %v487 = vmul.u32 %v486, 18
      %v488 = vsub.s32 %v464, %v487
      %v489 = vsub.s32 0, %v488
      %v490 = vsel %vm462, %v489, %v488
      %vm491 = vcmp.lt.s32.totalorder %v287, 0
      %v492 = vsub.s32 0, %v287
      %v493 = vsel %vm491, %v492, %v287
      %v494 = vand.u32 %v493, 65535
      %v495 = vshrl.u32 %v493, 16
      %v497 = vmul.u32 %v494, 14564
      %v498 = vmul.u32 %v494, 58254
      %v499 = vmul.u32 %v495, 14564
      %v500 = vmul.u32 %v495, 58254
      %v501 = vshll.u32 %v498, 16
      %v502 = vshrl.u32 %v498, 16
      %v503 = vshll.u32 %v499, 16
      %v504 = vshrl.u32 %v499, 16
      %vm505 = vc.u32 %v497, %v501
      %v506 = vsel %vm505, 1, 0
      %v507 = vadd.s32 %v497, %v501
      %v508 = vadd.s32 %v500, %v506
      %vm509 = vc.u32 %v507, %v503
      %v510 = vsel %vm509, 1, 0
      %v511 = vadd.s32 %v507, %v503
      %v512 = vadd.s32 %v508, %v510
      %v513 = vadd.s32 %v512, %v502
      %v514 = vadd.s32 %v513, %v504
      %v515 = vshrl.u32 %v514, 4
      %v516 = vmul.u32 %v515, 18
      %v517 = vsub.s32 %v493, %v516
      %v518 = vsub.s32 0, %v517
      %v519 = vsel %vm491, %v518, %v517
      %vm520 = vcmp.lt.s32.totalorder %v288, 0
      %v521 = vsub.s32 0, %v288
      %v522 = vsel %vm520, %v521, %v288
      %v523 = vand.u32 %v522, 65535
      %v524 = vshrl.u32 %v522, 16
      %v526 = vmul.u32 %v523, 14564
      %v527 = vmul.u32 %v523, 58254
      %v528 = vmul.u32 %v524, 14564
      %v529 = vmul.u32 %v524, 58254
      %v530 = vshll.u32 %v527, 16
      %v531 = vshrl.u32 %v527, 16
      %v532 = vshll.u32 %v528, 16
      %v533 = vshrl.u32 %v528, 16
      %vm534 = vc.u32 %v526, %v530
      %v535 = vsel %vm534, 1, 0
      %v536 = vadd.s32 %v526, %v530
      %v537 = vadd.s32 %v529, %v535
      %vm538 = vc.u32 %v536, %v532
      %v539 = vsel %vm538, 1, 0
      %v540 = vadd.s32 %v536, %v532
      %v541 = vadd.s32 %v537, %v539
      %v542 = vadd.s32 %v541, %v531
      %v543 = vadd.s32 %v542, %v533
      %v544 = vshrl.u32 %v543, 4
      %v545 = vmul.u32 %v544, 18
      %v546 = vsub.s32 %v522, %v545
      %v547 = vsub.s32 0, %v546
      %v548 = vsel %vm520, %v547, %v546
      %vm549 = vcmp.lt.s32.totalorder %v289, 0
      %v550 = vsub.s32 0, %v289
      %v551 = vsel %vm549, %v550, %v289
      %v552 = vand.u32 %v551, 65535
      %v553 = vshrl.u32 %v551, 16
      %v555 = vmul.u32 %v552, 14564
      %v556 = vmul.u32 %v552, 58254
      %v557 = vmul.u32 %v553, 14564
      %v558 = vmul.u32 %v553, 58254
      %v559 = vshll.u32 %v556, 16
      %v560 = vshrl.u32 %v556, 16
      %v561 = vshll.u32 %v557, 16
      %v562 = vshrl.u32 %v557, 16
      %vm563 = vc.u32 %v555, %v559
      %v564 = vsel %vm563, 1, 0
      %v565 = vadd.s32 %v555, %v559
      %v566 = vadd.s32 %v558, %v564
      %vm567 = vc.u32 %v565, %v561
      %v568 = vsel %vm567, 1, 0
      %v569 = vadd.s32 %v565, %v561
      %v570 = vadd.s32 %v566, %v568
      %v571 = vadd.s32 %v570, %v560
      %v572 = vadd.s32 %v571, %v562
      %v573 = vshrl.u32 %v572, 4
      %v574 = vmul.u32 %v573, 18
      %v575 = vsub.s32 %v551, %v574
      %v576 = vsub.s32 0, %v575
      %v577 = vsel %vm549, %v576, %v575
      %vm578 = vcmp.lt.s32.totalorder %v290, 0
      %v579 = vsub.s32 0, %v290
      %v580 = vsel %vm578, %v579, %v290
      %v581 = vand.u32 %v580, 65535
      %v582 = vshrl.u32 %v580, 16
      %v584 = vmul.u32 %v581, 14564
      %v585 = vmul.u32 %v581, 58254
      %v586 = vmul.u32 %v582, 14564
      %v587 = vmul.u32 %v582, 58254
      %v588 = vshll.u32 %v585, 16
      %v589 = vshrl.u32 %v585, 16
      %v590 = vshll.u32 %v586, 16
      %v591 = vshrl.u32 %v586, 16
      %vm592 = vc.u32 %v584, %v588
      %v593 = vsel %vm592, 1, 0
      %v594 = vadd.s32 %v584, %v588
      %v595 = vadd.s32 %v587, %v593
      %vm596 = vc.u32 %v594, %v590
      %v597 = vsel %vm596, 1, 0
      %v598 = vadd.s32 %v594, %v590
      %v599 = vadd.s32 %v595, %v597
      %v600 = vadd.s32 %v599, %v589
      %v601 = vadd.s32 %v600, %v591
      %v602 = vshrl.u32 %v601, 4
      %v603 = vmul.u32 %v602, 18
      %v604 = vsub.s32 %v580, %v603
      %v605 = vsub.s32 0, %v604
      %v606 = vsel %vm578, %v605, %v604
      %vm607 = vcmp.lt.s32.totalorder %v291, 0
      %v608 = vsub.s32 0, %v291
      %v609 = vsel %vm607, %v608, %v291
      %v610 = vand.u32 %v609, 65535
      %v611 = vshrl.u32 %v609, 16
      %v613 = vmul.u32 %v610, 14564
      %v614 = vmul.u32 %v610, 58254
      %v615 = vmul.u32 %v611, 14564
      %v616 = vmul.u32 %v611, 58254
      %v617 = vshll.u32 %v614, 16
      %v618 = vshrl.u32 %v614, 16
      %v619 = vshll.u32 %v615, 16
      %v620 = vshrl.u32 %v615, 16
      %vm621 = vc.u32 %v613, %v617
      %v622 = vsel %vm621, 1, 0
      %v623 = vadd.s32 %v613, %v617
      %v624 = vadd.s32 %v616, %v622
      %vm625 = vc.u32 %v623, %v619
      %v626 = vsel %vm625, 1, 0
      %v627 = vadd.s32 %v623, %v619
      %v628 = vadd.s32 %v624, %v626
      %v629 = vadd.s32 %v628, %v618
      %v630 = vadd.s32 %v629, %v620
      %v631 = vshrl.u32 %v630, 4
      %v632 = vmul.u32 %v631, 18
      %v633 = vsub.s32 %v609, %v632
      %v634 = vsub.s32 0, %v633
      %v635 = vsel %vm607, %v634, %v633
      %vm636 = vcmp.lt.s32.totalorder %v292, 0
      %v637 = vsub.s32 0, %v292
      %v638 = vsel %vm636, %v637, %v292
      %v639 = vand.u32 %v638, 65535
      %v640 = vshrl.u32 %v638, 16
      %v642 = vmul.u32 %v639, 14564
      %v643 = vmul.u32 %v639, 58254
      %v644 = vmul.u32 %v640, 14564
      %v645 = vmul.u32 %v640, 58254
      %v646 = vshll.u32 %v643, 16
      %v647 = vshrl.u32 %v643, 16
      %v648 = vshll.u32 %v644, 16
      %v649 = vshrl.u32 %v644, 16
      %vm650 = vc.u32 %v642, %v646
      %v651 = vsel %vm650, 1, 0
      %v652 = vadd.s32 %v642, %v646
      %v653 = vadd.s32 %v645, %v651
      %vm654 = vc.u32 %v652, %v648
      %v655 = vsel %vm654, 1, 0
      %v656 = vadd.s32 %v652, %v648
      %v657 = vadd.s32 %v653, %v655
      %v658 = vadd.s32 %v657, %v647
      %v659 = vadd.s32 %v658, %v649
      %v660 = vshrl.u32 %v659, 4
      %v661 = vmul.u32 %v660, 18
      %v662 = vsub.s32 %v638, %v661
      %v663 = vsub.s32 0, %v662
      %v664 = vsel %vm636, %v663, %v662
      %vm665 = vcmp.lt.s32.totalorder %v293, 0
      %v666 = vsub.s32 0, %v293
      %v667 = vsel %vm665, %v666, %v293
      %v668 = vand.u32 %v667, 65535
      %v669 = vshrl.u32 %v667, 16
      %v671 = vmul.u32 %v668, 14564
      %v672 = vmul.u32 %v668, 58254
      %v673 = vmul.u32 %v669, 14564
      %v674 = vmul.u32 %v669, 58254
      %v675 = vshll.u32 %v672, 16
      %v676 = vshrl.u32 %v672, 16
      %v677 = vshll.u32 %v673, 16
      %v678 = vshrl.u32 %v673, 16
      %vm679 = vc.u32 %v671, %v675
      %v680 = vsel %vm679, 1, 0
      %v681 = vadd.s32 %v671, %v675
      %v682 = vadd.s32 %v674, %v680
      %vm683 = vc.u32 %v681, %v677
      %v684 = vsel %vm683, 1, 0
      %v685 = vadd.s32 %v681, %v677
      %v686 = vadd.s32 %v682, %v684
      %v687 = vadd.s32 %v686, %v676
      %v688 = vadd.s32 %v687, %v678
      %v689 = vshrl.u32 %v688, 4
      %v690 = vmul.u32 %v689, 18
      %v691 = vsub.s32 %v667, %v690
      %v692 = vsub.s32 0, %v691
      %v693 = vsel %vm665, %v692, %v691
      %vm694 = vcmp.lt.s32.totalorder %v294, 0
      %v695 = vsub.s32 0, %v294
      %v696 = vsel %vm694, %v695, %v294
      %v697 = vand.u32 %v696, 65535
      %v698 = vshrl.u32 %v696, 16
      %v700 = vmul.u32 %v697, 14564
      %v701 = vmul.u32 %v697, 58254
      %v702 = vmul.u32 %v698, 14564
      %v703 = vmul.u32 %v698, 58254
      %v704 = vshll.u32 %v701, 16
      %v705 = vshrl.u32 %v701, 16
      %v706 = vshll.u32 %v702, 16
      %v707 = vshrl.u32 %v702, 16
      %vm708 = vc.u32 %v700, %v704
      %v709 = vsel %vm708, 1, 0
      %v710 = vadd.s32 %v700, %v704
      %v711 = vadd.s32 %v703, %v709
      %vm712 = vc.u32 %v710, %v706
      %v713 = vsel %vm712, 1, 0
      %v714 = vadd.s32 %v710, %v706
      %v715 = vadd.s32 %v711, %v713
      %v716 = vadd.s32 %v715, %v705
      %v717 = vadd.s32 %v716, %v707
      %v718 = vshrl.u32 %v717, 4
      %v719 = vmul.u32 %v718, 18
      %v720 = vsub.s32 %v696, %v719
      %v721 = vsub.s32 0, %v720
      %v722 = vsel %vm694, %v721, %v720
      %vm723 = vcmp.lt.s32.totalorder %v295, 0
      %v724 = vsub.s32 0, %v295
      %v725 = vsel %vm723, %v724, %v295
      %v726 = vand.u32 %v725, 65535
      %v727 = vshrl.u32 %v725, 16
      %v729 = vmul.u32 %v726, 14564
      %v730 = vmul.u32 %v726, 58254
      %v731 = vmul.u32 %v727, 14564
      %v732 = vmul.u32 %v727, 58254
      %v733 = vshll.u32 %v730, 16
      %v734 = vshrl.u32 %v730, 16
      %v735 = vshll.u32 %v731, 16
      %v736 = vshrl.u32 %v731, 16
      %vm737 = vc.u32 %v729, %v733
      %v738 = vsel %vm737, 1, 0
      %v739 = vadd.s32 %v729, %v733
      %v740 = vadd.s32 %v732, %v738
      %vm741 = vc.u32 %v739, %v735
      %v742 = vsel %vm741, 1, 0
      %v743 = vadd.s32 %v739, %v735
      %v744 = vadd.s32 %v740, %v742
      %v745 = vadd.s32 %v744, %v734
      %v746 = vadd.s32 %v745, %v736
      %v747 = vshrl.u32 %v746, 4
      %v748 = vmul.u32 %v747, 18
      %v749 = vsub.s32 %v725, %v748
      %v750 = vsub.s32 0, %v749
      %v751 = vsel %vm723, %v750, %v749
      %vm752 = vcmp.lt.s32.totalorder %v296, 0
      %v753 = vsub.s32 0, %v296
      %v754 = vsel %vm752, %v753, %v296
      %v755 = vand.u32 %v754, 65535
      %v756 = vshrl.u32 %v754, 16
      %v758 = vmul.u32 %v755, 14564
      %v759 = vmul.u32 %v755, 58254
      %v760 = vmul.u32 %v756, 14564
      %v761 = vmul.u32 %v756, 58254
      %v762 = vshll.u32 %v759, 16
      %v763 = vshrl.u32 %v759, 16
      %v764 = vshll.u32 %v760, 16
      %v765 = vshrl.u32 %v760, 16
      %vm766 = vc.u32 %v758, %v762
      %v767 = vsel %vm766, 1, 0
      %v768 = vadd.s32 %v758, %v762
      %v769 = vadd.s32 %v761, %v767
      %vm770 = vc.u32 %v768, %v764
      %v771 = vsel %vm770, 1, 0
      %v772 = vadd.s32 %v768, %v764
      %v773 = vadd.s32 %v769, %v771
      %v774 = vadd.s32 %v773, %v763
      %v775 = vadd.s32 %v774, %v765
      %v776 = vshrl.u32 %v775, 4
      %v777 = vmul.u32 %v776, 18
      %v778 = vsub.s32 %v754, %v777
      %v779 = vsub.s32 0, %v778
      %v780 = vsel %vm752, %v779, %v778
      %vm781 = vcmp.lt.s32.totalorder %v297, 0
      %v782 = vsub.s32 0, %v297
      %v783 = vsel %vm781, %v782, %v297
      %v784 = vand.u32 %v783, 65535
      %v785 = vshrl.u32 %v783, 16
      %v787 = vmul.u32 %v784, 14564
      %v788 = vmul.u32 %v784, 58254
      %v789 = vmul.u32 %v785, 14564
      %v790 = vmul.u32 %v785, 58254
      %v791 = vshll.u32 %v788, 16
      %v792 = vshrl.u32 %v788, 16
      %v793 = vshll.u32 %v789, 16
      %v794 = vshrl.u32 %v789, 16
      %vm795 = vc.u32 %v787, %v791
      %v796 = vsel %vm795, 1, 0
      %v797 = vadd.s32 %v787, %v791
      %v798 = vadd.s32 %v790, %v796
      %vm799 = vc.u32 %v797, %v793
      %v800 = vsel %vm799, 1, 0
      %v801 = vadd.s32 %v797, %v793
      %v802 = vadd.s32 %v798, %v800
      %v803 = vadd.s32 %v802, %v792
      %v804 = vadd.s32 %v803, %v794
      %v805 = vshrl.u32 %v804, 4
      %v806 = vmul.u32 %v805, 18
      %v807 = vsub.s32 %v783, %v806
      %v808 = vsub.s32 0, %v807
      %v809 = vsel %vm781, %v808, %v807
      %vm810 = vcmp.lt.s32.totalorder %v298, 0
      %v811 = vsub.s32 0, %v298
      %v812 = vsel %vm810, %v811, %v298
      %v813 = vand.u32 %v812, 65535
      %v814 = vshrl.u32 %v812, 16
      %v816 = vmul.u32 %v813, 14564
      %v817 = vmul.u32 %v813, 58254
      %v818 = vmul.u32 %v814, 14564
      %v819 = vmul.u32 %v814, 58254
      %v820 = vshll.u32 %v817, 16
      %v821 = vshrl.u32 %v817, 16
      %v822 = vshll.u32 %v818, 16
      %v823 = vshrl.u32 %v818, 16
      %vm824 = vc.u32 %v816, %v820
      %v825 = vsel %vm824, 1, 0
      %v826 = vadd.s32 %v816, %v820
      %v827 = vadd.s32 %v819, %v825
      %vm828 = vc.u32 %v826, %v822
      %v829 = vsel %vm828, 1, 0
      %v830 = vadd.s32 %v826, %v822
      %v831 = vadd.s32 %v827, %v829
      %v832 = vadd.s32 %v831, %v821
      %v833 = vadd.s32 %v832, %v823
      %v834 = vshrl.u32 %v833, 4
      %v835 = vmul.u32 %v834, 18
      %v836 = vsub.s32 %v812, %v835
      %v837 = vsub.s32 0, %v836
      %v838 = vsel %vm810, %v837, %v836
      %vm839 = vcmp.lt.s32.totalorder %v299, 0
      %v840 = vsub.s32 0, %v299
      %v841 = vsel %vm839, %v840, %v299
      %v842 = vand.u32 %v841, 65535
      %v843 = vshrl.u32 %v841, 16
      %v845 = vmul.u32 %v842, 14564
      %v846 = vmul.u32 %v842, 58254
      %v847 = vmul.u32 %v843, 14564
      %v848 = vmul.u32 %v843, 58254
      %v849 = vshll.u32 %v846, 16
      %v850 = vshrl.u32 %v846, 16
      %v851 = vshll.u32 %v847, 16
      %v852 = vshrl.u32 %v847, 16
      %vm853 = vc.u32 %v845, %v849
      %v854 = vsel %vm853, 1, 0
      %v855 = vadd.s32 %v845, %v849
      %v856 = vadd.s32 %v848, %v854
      %vm857 = vc.u32 %v855, %v851
      %v858 = vsel %vm857, 1, 0
      %v859 = vadd.s32 %v855, %v851
      %v860 = vadd.s32 %v856, %v858
      %v861 = vadd.s32 %v860, %v850
      %v862 = vadd.s32 %v861, %v852
      %v863 = vshrl.u32 %v862, 4
      %v864 = vmul.u32 %v863, 18
      %v865 = vsub.s32 %v841, %v864
      %v866 = vsub.s32 0, %v865
      %v867 = vsel %vm839, %v866, %v865
      %vm868 = vcmp.lt.s32.totalorder %v300, 0
      %v869 = vsub.s32 0, %v300
      %v870 = vsel %vm868, %v869, %v300
      %v871 = vand.u32 %v870, 65535
      %v872 = vshrl.u32 %v870, 16
      %v874 = vmul.u32 %v871, 14564
      %v875 = vmul.u32 %v871, 58254
      %v876 = vmul.u32 %v872, 14564
      %v877 = vmul.u32 %v872, 58254
      %v878 = vshll.u32 %v875, 16
      %v879 = vshrl.u32 %v875, 16
      %v880 = vshll.u32 %v876, 16
      %v881 = vshrl.u32 %v876, 16
      %vm882 = vc.u32 %v874, %v878
      %v883 = vsel %vm882, 1, 0
      %v884 = vadd.s32 %v874, %v878
      %v885 = vadd.s32 %v877, %v883
      %vm886 = vc.u32 %v884, %v880
      %v887 = vsel %vm886, 1, 0
      %v888 = vadd.s32 %v884, %v880
      %v889 = vadd.s32 %v885, %v887
      %v890 = vadd.s32 %v889, %v879
      %v891 = vadd.s32 %v890, %v881
      %v892 = vshrl.u32 %v891, 4
      %v893 = vmul.u32 %v892, 18
      %v894 = vsub.s32 %v870, %v893
      %v895 = vsub.s32 0, %v894
      %v896 = vsel %vm868, %v895, %v894
      %vm897 = vcmp.lt.s32.totalorder %v301, 0
      %v898 = vsub.s32 0, %v301
      %v899 = vsel %vm897, %v898, %v301
      %v900 = vand.u32 %v899, 65535
      %v901 = vshrl.u32 %v899, 16
      %v903 = vmul.u32 %v900, 14564
      %v904 = vmul.u32 %v900, 58254
      %v905 = vmul.u32 %v901, 14564
      %v906 = vmul.u32 %v901, 58254
      %v907 = vshll.u32 %v904, 16
      %v908 = vshrl.u32 %v904, 16
      %v909 = vshll.u32 %v905, 16
      %v910 = vshrl.u32 %v905, 16
      %vm911 = vc.u32 %v903, %v907
      %v912 = vsel %vm911, 1, 0
      %v913 = vadd.s32 %v903, %v907
      %v914 = vadd.s32 %v906, %v912
      %vm915 = vc.u32 %v913, %v909
      %v916 = vsel %vm915, 1, 0
      %v917 = vadd.s32 %v913, %v909
      %v918 = vadd.s32 %v914, %v916
      %v919 = vadd.s32 %v918, %v908
      %v920 = vadd.s32 %v919, %v910
      %v921 = vshrl.u32 %v920, 4
      %v922 = vmul.u32 %v921, 18
      %v923 = vsub.s32 %v899, %v922
      %v924 = vsub.s32 0, %v923
      %v925 = vsel %vm897, %v924, %v923
      %vm926 = vcmp.lt.s32.totalorder %v302, 0
      %v927 = vsub.s32 0, %v302
      %v928 = vsel %vm926, %v927, %v302
      %v929 = vand.u32 %v928, 65535
      %v930 = vshrl.u32 %v928, 16
      %v932 = vmul.u32 %v929, 14564
      %v933 = vmul.u32 %v929, 58254
      %v934 = vmul.u32 %v930, 14564
      %v935 = vmul.u32 %v930, 58254
      %v936 = vshll.u32 %v933, 16
      %v937 = vshrl.u32 %v933, 16
      %v938 = vshll.u32 %v934, 16
      %v939 = vshrl.u32 %v934, 16
      %vm940 = vc.u32 %v932, %v936
      %v941 = vsel %vm940, 1, 0
      %v942 = vadd.s32 %v932, %v936
      %v943 = vadd.s32 %v935, %v941
      %vm944 = vc.u32 %v942, %v938
      %v945 = vsel %vm944, 1, 0
      %v946 = vadd.s32 %v942, %v938
      %v947 = vadd.s32 %v943, %v945
      %v948 = vadd.s32 %v947, %v937
      %v949 = vadd.s32 %v948, %v939
      %v950 = vshrl.u32 %v949, 4
      %v951 = vmul.u32 %v950, 18
      %v952 = vsub.s32 %v928, %v951
      %v953 = vsub.s32 0, %v952
      %v954 = vsel %vm926, %v953, %v952
      %vm955 = vcmp.lt.s32.totalorder %v303, 0
      %v956 = vsub.s32 0, %v303
      %v957 = vsel %vm955, %v956, %v303
      %v958 = vand.u32 %v957, 65535
      %v959 = vshrl.u32 %v957, 16
      %v961 = vmul.u32 %v958, 14564
      %v962 = vmul.u32 %v958, 58254
      %v963 = vmul.u32 %v959, 14564
      %v964 = vmul.u32 %v959, 58254
      %v965 = vshll.u32 %v962, 16
      %v966 = vshrl.u32 %v962, 16
      %v967 = vshll.u32 %v963, 16
      %v968 = vshrl.u32 %v963, 16
      %vm969 = vc.u32 %v961, %v965
      %v970 = vsel %vm969, 1, 0
      %v971 = vadd.s32 %v961, %v965
      %v972 = vadd.s32 %v964, %v970
      %vm973 = vc.u32 %v971, %v967
      %v974 = vsel %vm973, 1, 0
      %v975 = vadd.s32 %v971, %v967
      %v976 = vadd.s32 %v972, %v974
      %v977 = vadd.s32 %v976, %v966
      %v978 = vadd.s32 %v977, %v968
      %v979 = vshrl.u32 %v978, 4
      %v980 = vmul.u32 %v979, 18
      %v981 = vsub.s32 %v957, %v980
      %v982 = vsub.s32 0, %v981
      %v983 = vsel %vm955, %v982, %v981
      %vm984 = vcmp.lt.s32.totalorder %v304, 0
      %v985 = vsub.s32 0, %v304
      %v986 = vsel %vm984, %v985, %v304
      %v987 = vand.u32 %v986, 65535
      %v988 = vshrl.u32 %v986, 16
      %v990 = vmul.u32 %v987, 14564
      %v991 = vmul.u32 %v987, 58254
      %v992 = vmul.u32 %v988, 14564
      %v993 = vmul.u32 %v988, 58254
      %v994 = vshll.u32 %v991, 16
      %v995 = vshrl.u32 %v991, 16
      %v996 = vshll.u32 %v992, 16
      %v997 = vshrl.u32 %v992, 16
      %vm998 = vc.u32 %v990, %v994
      %v999 = vsel %vm998, 1, 0
      %v1000 = vadd.s32 %v990, %v994
      %v1001 = vadd.s32 %v993, %v999
      %vm1002 = vc.u32 %v1000, %v996
      %v1003 = vsel %vm1002, 1, 0
      %v1004 = vadd.s32 %v1000, %v996
      %v1005 = vadd.s32 %v1001, %v1003
      %v1006 = vadd.s32 %v1005, %v995
      %v1007 = vadd.s32 %v1006, %v997
      %v1008 = vshrl.u32 %v1007, 4
      %v1009 = vmul.u32 %v1008, 18
      %v1010 = vsub.s32 %v986, %v1009
      %v1011 = vsub.s32 0, %v1010
      %v1012 = vsel %vm984, %v1011, %v1010
      %vm1013 = vcmp.lt.s32.totalorder %v305, 0
      %v1014 = vsub.s32 0, %v305
      %v1015 = vsel %vm1013, %v1014, %v305
      %v1016 = vand.u32 %v1015, 65535
      %v1017 = vshrl.u32 %v1015, 16
      %v1019 = vmul.u32 %v1016, 14564
      %v1020 = vmul.u32 %v1016, 58254
      %v1021 = vmul.u32 %v1017, 14564
      %v1022 = vmul.u32 %v1017, 58254
      %v1023 = vshll.u32 %v1020, 16
      %v1024 = vshrl.u32 %v1020, 16
      %v1025 = vshll.u32 %v1021, 16
      %v1026 = vshrl.u32 %v1021, 16
      %vm1027 = vc.u32 %v1019, %v1023
      %v1028 = vsel %vm1027, 1, 0
      %v1029 = vadd.s32 %v1019, %v1023
      %v1030 = vadd.s32 %v1022, %v1028
      %vm1031 = vc.u32 %v1029, %v1025
      %v1032 = vsel %vm1031, 1, 0
      %v1033 = vadd.s32 %v1029, %v1025
      %v1034 = vadd.s32 %v1030, %v1032
      %v1035 = vadd.s32 %v1034, %v1024
      %v1036 = vadd.s32 %v1035, %v1026
      %v1037 = vshrl.u32 %v1036, 4
      %v1038 = vmul.u32 %v1037, 18
      %v1039 = vsub.s32 %v1015, %v1038
      %v1040 = vsub.s32 0, %v1039
      %v1041 = vsel %vm1013, %v1040, %v1039
      %vm1042 = vcmp.lt.s32.totalorder %v306, 0
      %v1043 = vsub.s32 0, %v306
      %v1044 = vsel %vm1042, %v1043, %v306
      %v1045 = vand.u32 %v1044, 65535
      %v1046 = vshrl.u32 %v1044, 16
      %v1048 = vmul.u32 %v1045, 14564
      %v1049 = vmul.u32 %v1045, 58254
      %v1050 = vmul.u32 %v1046, 14564
      %v1051 = vmul.u32 %v1046, 58254
      %v1052 = vshll.u32 %v1049, 16
      %v1053 = vshrl.u32 %v1049, 16
      %v1054 = vshll.u32 %v1050, 16
      %v1055 = vshrl.u32 %v1050, 16
      %vm1056 = vc.u32 %v1048, %v1052
      %v1057 = vsel %vm1056, 1, 0
      %v1058 = vadd.s32 %v1048, %v1052
      %v1059 = vadd.s32 %v1051, %v1057
      %vm1060 = vc.u32 %v1058, %v1054
      %v1061 = vsel %vm1060, 1, 0
      %v1062 = vadd.s32 %v1058, %v1054
      %v1063 = vadd.s32 %v1059, %v1061
      %v1064 = vadd.s32 %v1063, %v1053
      %v1065 = vadd.s32 %v1064, %v1055
      %v1066 = vshrl.u32 %v1065, 4
      %v1067 = vmul.u32 %v1066, 18
      %v1068 = vsub.s32 %v1044, %v1067
      %v1069 = vsub.s32 0, %v1068
      %v1070 = vsel %vm1042, %v1069, %v1068
      %vm1071 = vcmp.lt.s32.totalorder %v307, 0
      %v1072 = vsub.s32 0, %v307
      %v1073 = vsel %vm1071, %v1072, %v307
      %v1074 = vand.u32 %v1073, 65535
      %v1075 = vshrl.u32 %v1073, 16
      %v1077 = vmul.u32 %v1074, 14564
      %v1078 = vmul.u32 %v1074, 58254
      %v1079 = vmul.u32 %v1075, 14564
      %v1080 = vmul.u32 %v1075, 58254
      %v1081 = vshll.u32 %v1078, 16
      %v1082 = vshrl.u32 %v1078, 16
      %v1083 = vshll.u32 %v1079, 16
      %v1084 = vshrl.u32 %v1079, 16
      %vm1085 = vc.u32 %v1077, %v1081
      %v1086 = vsel %vm1085, 1, 0
      %v1087 = vadd.s32 %v1077, %v1081
      %v1088 = vadd.s32 %v1080, %v1086
      %vm1089 = vc.u32 %v1087, %v1083
      %v1090 = vsel %vm1089, 1, 0
      %v1091 = vadd.s32 %v1087, %v1083
      %v1092 = vadd.s32 %v1088, %v1090
      %v1093 = vadd.s32 %v1092, %v1082
      %v1094 = vadd.s32 %v1093, %v1084
      %v1095 = vshrl.u32 %v1094, 4
      %v1096 = vmul.u32 %v1095, 18
      %v1097 = vsub.s32 %v1073, %v1096
      %v1098 = vsub.s32 0, %v1097
      %v1099 = vsel %vm1071, %v1098, %v1097
      %vm1100 = vcmp.lt.s32.totalorder %v308, 0
      %v1101 = vsub.s32 0, %v308
      %v1102 = vsel %vm1100, %v1101, %v308
      %v1103 = vand.u32 %v1102, 65535
      %v1104 = vshrl.u32 %v1102, 16
      %v1106 = vmul.u32 %v1103, 14564
      %v1107 = vmul.u32 %v1103, 58254
      %v1108 = vmul.u32 %v1104, 14564
      %v1109 = vmul.u32 %v1104, 58254
      %v1110 = vshll.u32 %v1107, 16
      %v1111 = vshrl.u32 %v1107, 16
      %v1112 = vshll.u32 %v1108, 16
      %v1113 = vshrl.u32 %v1108, 16
      %vm1114 = vc.u32 %v1106, %v1110
      %v1115 = vsel %vm1114, 1, 0
      %v1116 = vadd.s32 %v1106, %v1110
      %v1117 = vadd.s32 %v1109, %v1115
      %vm1118 = vc.u32 %v1116, %v1112
      %v1119 = vsel %vm1118, 1, 0
      %v1120 = vadd.s32 %v1116, %v1112
      %v1121 = vadd.s32 %v1117, %v1119
      %v1122 = vadd.s32 %v1121, %v1111
      %v1123 = vadd.s32 %v1122, %v1113
      %v1124 = vshrl.u32 %v1123, 4
      %v1125 = vmul.u32 %v1124, 18
      %v1126 = vsub.s32 %v1102, %v1125
      %v1127 = vsub.s32 0, %v1126
      %v1128 = vsel %vm1100, %v1127, %v1126
      %vm1129 = vcmp.lt.s32.totalorder %v309, 0
      %v1130 = vsub.s32 0, %v309
      %v1131 = vsel %vm1129, %v1130, %v309
      %v1132 = vand.u32 %v1131, 65535
      %v1133 = vshrl.u32 %v1131, 16
      %v1135 = vmul.u32 %v1132, 14564
      %v1136 = vmul.u32 %v1132, 58254
      %v1137 = vmul.u32 %v1133, 14564
      %v1138 = vmul.u32 %v1133, 58254
      %v1139 = vshll.u32 %v1136, 16
      %v1140 = vshrl.u32 %v1136, 16
      %v1141 = vshll.u32 %v1137, 16
      %v1142 = vshrl.u32 %v1137, 16
      %vm1143 = vc.u32 %v1135, %v1139
      %v1144 = vsel %vm1143, 1, 0
      %v1145 = vadd.s32 %v1135, %v1139
      %v1146 = vadd.s32 %v1138, %v1144
      %vm1147 = vc.u32 %v1145, %v1141
      %v1148 = vsel %vm1147, 1, 0
      %v1149 = vadd.s32 %v1145, %v1141
      %v1150 = vadd.s32 %v1146, %v1148
      %v1151 = vadd.s32 %v1150, %v1140
      %v1152 = vadd.s32 %v1151, %v1142
      %v1153 = vshrl.u32 %v1152, 4
      %v1154 = vmul.u32 %v1153, 18
      %v1155 = vsub.s32 %v1131, %v1154
      %v1156 = vsub.s32 0, %v1155
      %v1157 = vsel %vm1129, %v1156, %v1155
      %vm1158 = vcmp.lt.s32.totalorder %v310, 0
      %v1159 = vsub.s32 0, %v310
      %v1160 = vsel %vm1158, %v1159, %v310
      %v1161 = vand.u32 %v1160, 65535
      %v1162 = vshrl.u32 %v1160, 16
      %v1164 = vmul.u32 %v1161, 14564
      %v1165 = vmul.u32 %v1161, 58254
      %v1166 = vmul.u32 %v1162, 14564
      %v1167 = vmul.u32 %v1162, 58254
      %v1168 = vshll.u32 %v1165, 16
      %v1169 = vshrl.u32 %v1165, 16
      %v1170 = vshll.u32 %v1166, 16
      %v1171 = vshrl.u32 %v1166, 16
      %vm1172 = vc.u32 %v1164, %v1168
      %v1173 = vsel %vm1172, 1, 0
      %v1174 = vadd.s32 %v1164, %v1168
      %v1175 = vadd.s32 %v1167, %v1173
      %vm1176 = vc.u32 %v1174, %v1170
      %v1177 = vsel %vm1176, 1, 0
      %v1178 = vadd.s32 %v1174, %v1170
      %v1179 = vadd.s32 %v1175, %v1177
      %v1180 = vadd.s32 %v1179, %v1169
      %v1181 = vadd.s32 %v1180, %v1171
      %v1182 = vshrl.u32 %v1181, 4
      %v1183 = vmul.u32 %v1182, 18
      %v1184 = vsub.s32 %v1160, %v1183
      %v1185 = vsub.s32 0, %v1184
      %v1186 = vsel %vm1158, %v1185, %v1184
      %vm1187 = vcmp.lt.s32.totalorder %v311, 0
      %v1188 = vsub.s32 0, %v311
      %v1189 = vsel %vm1187, %v1188, %v311
      %v1190 = vand.u32 %v1189, 65535
      %v1191 = vshrl.u32 %v1189, 16
      %v1193 = vmul.u32 %v1190, 14564
      %v1194 = vmul.u32 %v1190, 58254
      %v1195 = vmul.u32 %v1191, 14564
      %v1196 = vmul.u32 %v1191, 58254
      %v1197 = vshll.u32 %v1194, 16
      %v1198 = vshrl.u32 %v1194, 16
      %v1199 = vshll.u32 %v1195, 16
      %v1200 = vshrl.u32 %v1195, 16
      %vm1201 = vc.u32 %v1193, %v1197
      %v1202 = vsel %vm1201, 1, 0
      %v1203 = vadd.s32 %v1193, %v1197
      %v1204 = vadd.s32 %v1196, %v1202
      %vm1205 = vc.u32 %v1203, %v1199
      %v1206 = vsel %vm1205, 1, 0
      %v1207 = vadd.s32 %v1203, %v1199
      %v1208 = vadd.s32 %v1204, %v1206
      %v1209 = vadd.s32 %v1208, %v1198
      %v1210 = vadd.s32 %v1209, %v1200
      %v1211 = vshrl.u32 %v1210, 4
      %v1212 = vmul.u32 %v1211, 18
      %v1213 = vsub.s32 %v1189, %v1212
      %v1214 = vsub.s32 0, %v1213
      %v1215 = vsel %vm1187, %v1214, %v1213
      %vm1216 = vcmp.lt.s32.totalorder %v312, 0
      %v1217 = vsub.s32 0, %v312
      %v1218 = vsel %vm1216, %v1217, %v312
      %v1219 = vand.u32 %v1218, 65535
      %v1220 = vshrl.u32 %v1218, 16
      %v1222 = vmul.u32 %v1219, 14564
      %v1223 = vmul.u32 %v1219, 58254
      %v1224 = vmul.u32 %v1220, 14564
      %v1225 = vmul.u32 %v1220, 58254
      %v1226 = vshll.u32 %v1223, 16
      %v1227 = vshrl.u32 %v1223, 16
      %v1228 = vshll.u32 %v1224, 16
      %v1229 = vshrl.u32 %v1224, 16
      %vm1230 = vc.u32 %v1222, %v1226
      %v1231 = vsel %vm1230, 1, 0
      %v1232 = vadd.s32 %v1222, %v1226
      %v1233 = vadd.s32 %v1225, %v1231
      %vm1234 = vc.u32 %v1232, %v1228
      %v1235 = vsel %vm1234, 1, 0
      %v1236 = vadd.s32 %v1232, %v1228
      %v1237 = vadd.s32 %v1233, %v1235
      %v1238 = vadd.s32 %v1237, %v1227
      %v1239 = vadd.s32 %v1238, %v1229
      %v1240 = vshrl.u32 %v1239, 4
      %v1241 = vmul.u32 %v1240, 18
      %v1242 = vsub.s32 %v1218, %v1241
      %v1243 = vsub.s32 0, %v1242
      %v1244 = vsel %vm1216, %v1243, %v1242
      %vm1245 = vcmp.lt.s32.totalorder %v313, 0
      %v1246 = vsub.s32 0, %v313
      %v1247 = vsel %vm1245, %v1246, %v313
      %v1248 = vand.u32 %v1247, 65535
      %v1249 = vshrl.u32 %v1247, 16
      %v1251 = vmul.u32 %v1248, 14564
      %v1252 = vmul.u32 %v1248, 58254
      %v1253 = vmul.u32 %v1249, 14564
      %v1254 = vmul.u32 %v1249, 58254
      %v1255 = vshll.u32 %v1252, 16
      %v1256 = vshrl.u32 %v1252, 16
      %v1257 = vshll.u32 %v1253, 16
      %v1258 = vshrl.u32 %v1253, 16
      %vm1259 = vc.u32 %v1251, %v1255
      %v1260 = vsel %vm1259, 1, 0
      %v1261 = vadd.s32 %v1251, %v1255
      %v1262 = vadd.s32 %v1254, %v1260
      %vm1263 = vc.u32 %v1261, %v1257
      %v1264 = vsel %vm1263, 1, 0
      %v1265 = vadd.s32 %v1261, %v1257
      %v1266 = vadd.s32 %v1262, %v1264
      %v1267 = vadd.s32 %v1266, %v1256
      %v1268 = vadd.s32 %v1267, %v1258
      %v1269 = vshrl.u32 %v1268, 4
      %v1270 = vmul.u32 %v1269, 18
      %v1271 = vsub.s32 %v1247, %v1270
      %v1272 = vsub.s32 0, %v1271
      %v1273 = vsel %vm1245, %v1272, %v1271
      %vm1274 = vcmp.lt.s32.totalorder %v314, 0
      %v1275 = vsub.s32 0, %v314
      %v1276 = vsel %vm1274, %v1275, %v314
      %v1277 = vand.u32 %v1276, 65535
      %v1278 = vshrl.u32 %v1276, 16
      %v1280 = vmul.u32 %v1277, 14564
      %v1281 = vmul.u32 %v1277, 58254
      %v1282 = vmul.u32 %v1278, 14564
      %v1283 = vmul.u32 %v1278, 58254
      %v1284 = vshll.u32 %v1281, 16
      %v1285 = vshrl.u32 %v1281, 16
      %v1286 = vshll.u32 %v1282, 16
      %v1287 = vshrl.u32 %v1282, 16
      %vm1288 = vc.u32 %v1280, %v1284
      %v1289 = vsel %vm1288, 1, 0
      %v1290 = vadd.s32 %v1280, %v1284
      %v1291 = vadd.s32 %v1283, %v1289
      %vm1292 = vc.u32 %v1290, %v1286
      %v1293 = vsel %vm1292, 1, 0
      %v1294 = vadd.s32 %v1290, %v1286
      %v1295 = vadd.s32 %v1291, %v1293
      %v1296 = vadd.s32 %v1295, %v1285
      %v1297 = vadd.s32 %v1296, %v1287
      %v1298 = vshrl.u32 %v1297, 4
      %v1299 = vmul.u32 %v1298, 18
      %v1300 = vsub.s32 %v1276, %v1299
      %v1301 = vsub.s32 0, %v1300
      %v1302 = vsel %vm1274, %v1301, %v1300
      %vm1303 = vcmp.lt.s32.totalorder %v315, 0
      %v1304 = vsub.s32 0, %v315
      %v1305 = vsel %vm1303, %v1304, %v315
      %v1306 = vand.u32 %v1305, 65535
      %v1307 = vshrl.u32 %v1305, 16
      %v1309 = vmul.u32 %v1306, 14564
      %v1310 = vmul.u32 %v1306, 58254
      %v1311 = vmul.u32 %v1307, 14564
      %v1312 = vmul.u32 %v1307, 58254
      %v1313 = vshll.u32 %v1310, 16
      %v1314 = vshrl.u32 %v1310, 16
      %v1315 = vshll.u32 %v1311, 16
      %v1316 = vshrl.u32 %v1311, 16
      %vm1317 = vc.u32 %v1309, %v1313
      %v1318 = vsel %vm1317, 1, 0
      %v1319 = vadd.s32 %v1309, %v1313
      %v1320 = vadd.s32 %v1312, %v1318
      %vm1321 = vc.u32 %v1319, %v1315
      %v1322 = vsel %vm1321, 1, 0
      %v1323 = vadd.s32 %v1319, %v1315
      %v1324 = vadd.s32 %v1320, %v1322
      %v1325 = vadd.s32 %v1324, %v1314
      %v1326 = vadd.s32 %v1325, %v1316
      %v1327 = vshrl.u32 %v1326, 4
      %v1328 = vmul.u32 %v1327, 18
      %v1329 = vsub.s32 %v1305, %v1328
      %v1330 = vsub.s32 0, %v1329
      %v1331 = vsel %vm1303, %v1330, %v1329
      %vm1332 = vcmp.lt.s32.totalorder %v316, 0
      %v1333 = vsub.s32 0, %v316
      %v1334 = vsel %vm1332, %v1333, %v316
      %v1335 = vand.u32 %v1334, 65535
      %v1336 = vshrl.u32 %v1334, 16
      %v1338 = vmul.u32 %v1335, 14564
      %v1339 = vmul.u32 %v1335, 58254
      %v1340 = vmul.u32 %v1336, 14564
      %v1341 = vmul.u32 %v1336, 58254
      %v1342 = vshll.u32 %v1339, 16
      %v1343 = vshrl.u32 %v1339, 16
      %v1344 = vshll.u32 %v1340, 16
      %v1345 = vshrl.u32 %v1340, 16
      %vm1346 = vc.u32 %v1338, %v1342
      %v1347 = vsel %vm1346, 1, 0
      %v1348 = vadd.s32 %v1338, %v1342
      %v1349 = vadd.s32 %v1341, %v1347
      %vm1350 = vc.u32 %v1348, %v1344
      %v1351 = vsel %vm1350, 1, 0
      %v1352 = vadd.s32 %v1348, %v1344
      %v1353 = vadd.s32 %v1349, %v1351
      %v1354 = vadd.s32 %v1353, %v1343
      %v1355 = vadd.s32 %v1354, %v1345
      %v1356 = vshrl.u32 %v1355, 4
      %v1357 = vmul.u32 %v1356, 18
      %v1358 = vsub.s32 %v1334, %v1357
      %v1359 = vsub.s32 0, %v1358
      %v1360 = vsel %vm1332, %v1359, %v1358
      %vm1361 = vcmp.ne.s32.totalorder %v345, 0
      %vm1362 = vcmp.ne.s32.totalorder %v374, 0
      %vm1363 = vcmp.ne.s32.totalorder %v403, 0
      %vm1364 = vcmp.ne.s32.totalorder %v432, 0
      %vm1365 = vcmp.ne.s32.totalorder %v461, 0
      %vm1366 = vcmp.ne.s32.totalorder %v490, 0
      %vm1367 = vcmp.ne.s32.totalorder %v519, 0
      %vm1368 = vcmp.ne.s32.totalorder %v548, 0
      %vm1369 = vcmp.ne.s32.totalorder %v577, 0
      %vm1370 = vcmp.ne.s32.totalorder %v606, 0
      %vm1371 = vcmp.ne.s32.totalorder %v635, 0
      %vm1372 = vcmp.ne.s32.totalorder %v664, 0
      %vm1373 = vcmp.ne.s32.totalorder %v693, 0
      %vm1374 = vcmp.ne.s32.totalorder %v722, 0
      %vm1375 = vcmp.ne.s32.totalorder %v751, 0
      %vm1376 = vcmp.ne.s32.totalorder %v780, 0
      %vm1377 = vcmp.ne.s32.totalorder %v809, 0
      %vm1378 = vcmp.ne.s32.totalorder %v838, 0
      %vm1379 = vcmp.ne.s32.totalorder %v867, 0
      %vm1380 = vcmp.ne.s32.totalorder %v896, 0
      %vm1381 = vcmp.ne.s32.totalorder %v925, 0
      %vm1382 = vcmp.ne.s32.totalorder %v954, 0
      %vm1383 = vcmp.ne.s32.totalorder %v983, 0
      %vm1384 = vcmp.ne.s32.totalorder %v1012, 0
      %vm1385 = vcmp.ne.s32.totalorder %v1041, 0
      %vm1386 = vcmp.ne.s32.totalorder %v1070, 0
      %vm1387 = vcmp.ne.s32.totalorder %v1099, 0
      %vm1388 = vcmp.ne.s32.totalorder %v1128, 0
      %vm1389 = vcmp.ne.s32.totalorder %v1157, 0
      %vm1390 = vcmp.ne.s32.totalorder %v1186, 0
      %vm1391 = vcmp.ne.s32.totalorder %v1215, 0
      %vm1392 = vcmp.ne.s32.totalorder %v1244, 0
      %vm1393 = vcmp.ne.s32.totalorder %v1273, 0
      %vm1394 = vcmp.ne.s32.totalorder %v1302, 0
      %vm1395 = vcmp.ne.s32.totalorder %v1331, 0
      %vm1396 = vcmp.ne.s32.totalorder %v1360, 0
      %vm1397 = vcmp.lt.s32.totalorder %v345, 0
      %vm1398 = vcmp.lt.s32.totalorder %v374, 0
      %vm1399 = vcmp.lt.s32.totalorder %v403, 0
      %vm1400 = vcmp.lt.s32.totalorder %v432, 0
      %vm1401 = vcmp.lt.s32.totalorder %v461, 0
      %vm1402 = vcmp.lt.s32.totalorder %v490, 0
      %vm1403 = vcmp.lt.s32.totalorder %v519, 0
      %vm1404 = vcmp.lt.s32.totalorder %v548, 0
      %vm1405 = vcmp.lt.s32.totalorder %v577, 0
      %vm1406 = vcmp.lt.s32.totalorder %v606, 0
      %vm1407 = vcmp.lt.s32.totalorder %v635, 0
      %vm1408 = vcmp.lt.s32.totalorder %v664, 0
      %vm1409 = vcmp.lt.s32.totalorder %v693, 0
      %vm1410 = vcmp.lt.s32.totalorder %v722, 0
      %vm1411 = vcmp.lt.s32.totalorder %v751, 0
      %vm1412 = vcmp.lt.s32.totalorder %v780, 0
      %vm1413 = vcmp.lt.s32.totalorder %v809, 0
      %vm1414 = vcmp.lt.s32.totalorder %v838, 0
      %vm1415 = vcmp.lt.s32.totalorder %v867, 0
      %vm1416 = vcmp.lt.s32.totalorder %v896, 0
      %vm1417 = vcmp.lt.s32.totalorder %v925, 0
      %vm1418 = vcmp.lt.s32.totalorder %v954, 0
      %vm1419 = vcmp.lt.s32.totalorder %v983, 0
      %vm1420 = vcmp.lt.s32.totalorder %v1012, 0
      %vm1421 = vcmp.lt.s32.totalorder %v1041, 0
      %vm1422 = vcmp.lt.s32.totalorder %v1070, 0
      %vm1423 = vcmp.lt.s32.totalorder %v1099, 0
      %vm1424 = vcmp.lt.s32.totalorder %v1128, 0
      %vm1425 = vcmp.lt.s32.totalorder %v1157, 0
      %vm1426 = vcmp.lt.s32.totalorder %v1186, 0
      %vm1427 = vcmp.lt.s32.totalorder %v1215, 0
      %vm1428 = vcmp.lt.s32.totalorder %v1244, 0
      %vm1429 = vcmp.lt.s32.totalorder %v1273, 0
      %vm1430 = vcmp.lt.s32.totalorder %v1302, 0
      %vm1431 = vcmp.lt.s32.totalorder %v1331, 0
      %vm1432 = vcmp.lt.s32.totalorder %v1360, 0
      %vm1433 = vmand %vm1397, %vm1361
      %vm1434 = vmand %vm1398, %vm1362
      %vm1435 = vmand %vm1399, %vm1363
      %vm1436 = vmand %vm1400, %vm1364
      %vm1437 = vmand %vm1401, %vm1365
      %vm1438 = vmand %vm1402, %vm1366
      %vm1439 = vmand %vm1403, %vm1367
      %vm1440 = vmand %vm1404, %vm1368
      %vm1441 = vmand %vm1405, %vm1369
      %vm1442 = vmand %vm1406, %vm1370
      %vm1443 = vmand %vm1407, %vm1371
      %vm1444 = vmand %vm1408, %vm1372
      %vm1445 = vmand %vm1409, %vm1373
      %vm1446 = vmand %vm1410, %vm1374
      %vm1447 = vmand %vm1411, %vm1375
      %vm1448 = vmand %vm1412, %vm1376
      %vm1449 = vmand %vm1413, %vm1377
      %vm1450 = vmand %vm1414, %vm1378
      %vm1451 = vmand %vm1415, %vm1379
      %vm1452 = vmand %vm1416, %vm1380
      %vm1453 = vmand %vm1417, %vm1381
      %vm1454 = vmand %vm1418, %vm1382
      %vm1455 = vmand %vm1419, %vm1383
      %vm1456 = vmand %vm1420, %vm1384
      %vm1457 = vmand %vm1421, %vm1385
      %vm1458 = vmand %vm1422, %vm1386
      %vm1459 = vmand %vm1423, %vm1387
      %vm1460 = vmand %vm1424, %vm1388
      %vm1461 = vmand %vm1425, %vm1389
      %vm1462 = vmand %vm1426, %vm1390
      %vm1463 = vmand %vm1427, %vm1391
      %vm1464 = vmand %vm1428, %vm1392
      %vm1465 = vmand %vm1429, %vm1393
      %vm1466 = vmand %vm1430, %vm1394
      %vm1467 = vmand %vm1431, %vm1395
      %vm1468 = vmand %vm1432, %vm1396
      %v1469 = vadd.s32 %v345, 18
      %v1470 = vadd.s32 %v374, 18
      %v1471 = vadd.s32 %v403, 18
      %v1472 = vadd.s32 %v432, 18
      %v1473 = vadd.s32 %v461, 18
      %v1474 = vadd.s32 %v490, 18
      %v1475 = vadd.s32 %v519, 18
      %v1476 = vadd.s32 %v548, 18
      %v1477 = vadd.s32 %v577, 18
      %v1478 = vadd.s32 %v606, 18
      %v1479 = vadd.s32 %v635, 18
      %v1480 = vadd.s32 %v664, 18
      %v1481 = vadd.s32 %v693, 18
      %v1482 = vadd.s32 %v722, 18
      %v1483 = vadd.s32 %v751, 18
      %v1484 = vadd.s32 %v780, 18
      %v1485 = vadd.s32 %v809, 18
      %v1486 = vadd.s32 %v838, 18
      %v1487 = vadd.s32 %v867, 18
      %v1488 = vadd.s32 %v896, 18
      %v1489 = vadd.s32 %v925, 18
      %v1490 = vadd.s32 %v954, 18
      %v1491 = vadd.s32 %v983, 18
      %v1492 = vadd.s32 %v1012, 18
      %v1493 = vadd.s32 %v1041, 18
      %v1494 = vadd.s32 %v1070, 18
      %v1495 = vadd.s32 %v1099, 18
      %v1496 = vadd.s32 %v1128, 18
      %v1497 = vadd.s32 %v1157, 18
      %v1498 = vadd.s32 %v1186, 18
      %v1499 = vadd.s32 %v1215, 18
      %v1500 = vadd.s32 %v1244, 18
      %v1501 = vadd.s32 %v1273, 18
      %v1502 = vadd.s32 %v1302, 18
      %v1503 = vadd.s32 %v1331, 18
      %v1504 = vadd.s32 %v1360, 18
      %v1505 = vsel %vm1433, %v1469, %v345
      %v1506 = vsel %vm1434, %v1470, %v374
      %v1507 = vsel %vm1435, %v1471, %v403
      %v1508 = vsel %vm1436, %v1472, %v432
      %v1509 = vsel %vm1437, %v1473, %v461
      %v1510 = vsel %vm1438, %v1474, %v490
      %v1511 = vsel %vm1439, %v1475, %v519
      %v1512 = vsel %vm1440, %v1476, %v548
      %v1513 = vsel %vm1441, %v1477, %v577
      %v1514 = vsel %vm1442, %v1478, %v606
      %v1515 = vsel %vm1443, %v1479, %v635
      %v1516 = vsel %vm1444, %v1480, %v664
      %v1517 = vsel %vm1445, %v1481, %v693
      %v1518 = vsel %vm1446, %v1482, %v722
      %v1519 = vsel %vm1447, %v1483, %v751
      %v1520 = vsel %vm1448, %v1484, %v780
      %v1521 = vsel %vm1449, %v1485, %v809
      %v1522 = vsel %vm1450, %v1486, %v838
      %v1523 = vsel %vm1451, %v1487, %v867
      %v1524 = vsel %vm1452, %v1488, %v896
      %v1525 = vsel %vm1453, %v1489, %v925
      %v1526 = vsel %vm1454, %v1490, %v954
      %v1527 = vsel %vm1455, %v1491, %v983
      %v1528 = vsel %vm1456, %v1492, %v1012
      %v1529 = vsel %vm1457, %v1493, %v1041
      %v1530 = vsel %vm1458, %v1494, %v1070
      %v1531 = vsel %vm1459, %v1495, %v1099
      %v1532 = vsel %vm1460, %v1496, %v1128
      %v1533 = vsel %vm1461, %v1497, %v1157
      %v1534 = vsel %vm1462, %v1498, %v1186
      %v1535 = vsel %vm1463, %v1499, %v1215
      %v1536 = vsel %vm1464, %v1500, %v1244
      %v1537 = vsel %vm1465, %v1501, %v1273
      %v1538 = vsel %vm1466, %v1502, %v1302
      %v1539 = vsel %vm1467, %v1503, %v1331
      %v1540 = vsel %vm1468, %v1504, %v1360
      %vm1541 = vcmp.lt.s32.totalorder %v1505, 16
      %vm1542 = vcmp.lt.s32.totalorder %v1506, 16
      %vm1543 = vcmp.lt.s32.totalorder %v1507, 16
      %vm1544 = vcmp.lt.s32.totalorder %v1508, 16
      %vm1545 = vcmp.lt.s32.totalorder %v1509, 16
      %vm1546 = vcmp.lt.s32.totalorder %v1510, 16
      %vm1547 = vcmp.lt.s32.totalorder %v1511, 16
      %vm1548 = vcmp.lt.s32.totalorder %v1512, 16
      %vm1549 = vcmp.lt.s32.totalorder %v1513, 16
      %vm1550 = vcmp.lt.s32.totalorder %v1514, 16
      %vm1551 = vcmp.lt.s32.totalorder %v1515, 16
      %vm1552 = vcmp.lt.s32.totalorder %v1516, 16
      %vm1553 = vcmp.lt.s32.totalorder %v1517, 16
      %vm1554 = vcmp.lt.s32.totalorder %v1518, 16
      %vm1555 = vcmp.lt.s32.totalorder %v1519, 16
      %vm1556 = vcmp.lt.s32.totalorder %v1520, 16
      %vm1557 = vcmp.lt.s32.totalorder %v1521, 16
      %vm1558 = vcmp.lt.s32.totalorder %v1522, 16
      %vm1559 = vcmp.lt.s32.totalorder %v1523, 16
      %vm1560 = vcmp.lt.s32.totalorder %v1524, 16
      %vm1561 = vcmp.lt.s32.totalorder %v1525, 16
      %vm1562 = vcmp.lt.s32.totalorder %v1526, 16
      %vm1563 = vcmp.lt.s32.totalorder %v1527, 16
      %vm1564 = vcmp.lt.s32.totalorder %v1528, 16
      %vm1565 = vcmp.lt.s32.totalorder %v1529, 16
      %vm1566 = vcmp.lt.s32.totalorder %v1530, 16
      %vm1567 = vcmp.lt.s32.totalorder %v1531, 16
      %vm1568 = vcmp.lt.s32.totalorder %v1532, 16
      %vm1569 = vcmp.lt.s32.totalorder %v1533, 16
      %vm1570 = vcmp.lt.s32.totalorder %v1534, 16
      %vm1571 = vcmp.lt.s32.totalorder %v1535, 16
      %vm1572 = vcmp.lt.s32.totalorder %v1536, 16
      %vm1573 = vcmp.lt.s32.totalorder %v1537, 16
      %vm1574 = vcmp.lt.s32.totalorder %v1538, 16
      %vm1575 = vcmp.lt.s32.totalorder %v1539, 16
      %vm1576 = vcmp.lt.s32.totalorder %v1540, 16
      %vm1577 = vcmask 27648
      %1578 = vst.msk [vmem:[#allocation2] sm:$0xf] %vm1577, 0
      %1579 = vst.msk [vmem:[#allocation2 + $0x4] sm:$0xf] %vm1577, 0
      %vm1580 = vcmask 25600
      %vm1581 = vsmask.f32 1280
      %vm1582 = vmand %vm1580, %vm1581
      %v1583 = vld [vmem:[#allocation2 + $0x8] sm:$0x3]
      %v1584 = vsel %vm1582, 0, %v1583
      %1585 = vst [vmem:[#allocation2 + $0x8] sm:$0x3] %v1584
      %vm1586 = vcmask 27649
      %vm1587 = vsmask.f32 7942
      %vm1588 = vmand %vm1586, %vm1587
      %v1589 = vld [vmem:[#allocation2 + $0x98] sm:$0xe]
      %v1590 = vsel %vm1588, 0, %v1589
      %1591 = vst [vmem:[#allocation2 + $0x98] sm:$0xe] %v1590
      %1592 = vst.msk [vmem:[#allocation2 + $0x9c] sm:$0xf] %vm1577, 0
      %1593 = vst.msk [vmem:[#allocation2 + $0xa0] sm:$0xf] %vm1577, 0
      %1594 = vst.msk [vmem:[#allocation2 + $0xa4] sm:$0xf] %vm1577, 0
      %vm1595 = vcmask 26624
      %1596 = vst.msk [vmem:[#allocation2 + $0xa8] sm:$0x7] %vm1595, 0
      %v1597 = vld [vmem:[%s273] sm:$0xf]
      %v1598 = vld [vmem:[%s273 + $0x4] sm:$0xf]
      %v1599 = vld [vmem:[%s273 + $0x8] sm:$0xf]
      %v1600 = vld [vmem:[%s273 + $0xc] sm:$0xf]
      %v1601 = vld [vmem:[%s273 + $0x10] sm:$0xf]
      %v1602 = vld [vmem:[%s273 + $0x14] sm:$0xf]
      %v1603 = vld [vmem:[%s273 + $0x18] sm:$0xf]
      %v1604 = vld [vmem:[%s273 + $0x1c] sm:$0xf]
      %v1605 = vld [vmem:[%s273 + $0x20] sm:$0xf]
      %v1606 = vld [vmem:[%s273 + $0x24] sm:$0xf]
      %v1607 = vld [vmem:[%s273 + $0x28] sm:$0xf]
      %v1608 = vld [vmem:[%s273 + $0x2c] sm:$0xf]
      %v1609 = vld [vmem:[%s273 + $0x30] sm:$0xf]
      %v1610 = vld [vmem:[%s273 + $0x34] sm:$0xf]
      %v1611 = vld [vmem:[%s273 + $0x38] sm:$0xf]
      %v1612 = vld [vmem:[%s273 + $0x3c] sm:$0xf]
      %v1613 = vld [vmem:[%s273 + $0x40] sm:$0xf]
      %v1614 = vld [vmem:[%s273 + $0x44] sm:$0xf]
      %v1615 = vld [vmem:[%s273 + $0x48] sm:$0xf]
      %v1616 = vld [vmem:[%s273 + $0x4c] sm:$0xf]
      %v1617 = vld [vmem:[%s273 + $0x50] sm:$0xf]
      %v1618 = vld [vmem:[%s273 + $0x54] sm:$0xf]
      %v1619 = vld [vmem:[%s273 + $0x58] sm:$0xf]
      %v1620 = vld [vmem:[%s273 + $0x5c] sm:$0xf]
      %v1621 = vld [vmem:[%s273 + $0x60] sm:$0xf]
      %v1622 = vld [vmem:[%s273 + $0x64] sm:$0xf]
      %v1623 = vld [vmem:[%s273 + $0x68] sm:$0xf]
      %v1624 = vld [vmem:[%s273 + $0x6c] sm:$0xf]
      %v1625 = vld [vmem:[%s273 + $0x70] sm:$0xf]
      %v1626 = vld [vmem:[%s273 + $0x74] sm:$0xf]
      %v1627 = vld [vmem:[%s273 + $0x78] sm:$0xf]
      %v1628 = vld [vmem:[%s273 + $0x7c] sm:$0xf]
      %v1629 = vld [vmem:[%s273 + $0x80] sm:$0xf]
      %v1630 = vld [vmem:[%s273 + $0x84] sm:$0xf]
      %v1631 = vld [vmem:[%s273 + $0x88] sm:$0xf]
      %v1632 = vld [vmem:[%s273 + $0x8c] sm:$0xf]
      %vm1633 = vsmask.f32 5392
      %vm1634 = vmor %vm1581, %vm1633
      %v1636 = vshrl.u32 %v1597, 16
      %v1638 = vrot.slane %v1636, 6
      %v1639 = vshll.u32 %v1597, 16
      %v1641 = vrot.slane %v1639, 7
      %v1642 = vor.u32 %v1638, %v1641
      %v1643 = vrot.slane %v1642, 4
      %v1645 = vshrl.u32 %v1598, 16
      %v1647 = vrot.slane %v1645, 6
      %v1648 = vshll.u32 %v1598, 16
      %v1650 = vrot.slane %v1648, 7
      %v1651 = vor.u32 %v1647, %v1650
      %v1652 = vsel %vm1634, %v1643, %v1651
      %v1653 = vrot.slane %v1651, 4
      %v1655 = vshrl.u32 %v1599, 16
      %v1657 = vrot.slane %v1655, 6
      %v1658 = vshll.u32 %v1599, 16
      %v1660 = vrot.slane %v1658, 7
      %v1661 = vor.u32 %v1657, %v1660
      %v1662 = vsel %vm1634, %v1653, %v1661
      %v1663 = vrot.slane %v1661, 4
      %v1665 = vshrl.u32 %v1600, 16
      %v1667 = vrot.slane %v1665, 6
      %v1668 = vshll.u32 %v1600, 16
      %v1670 = vrot.slane %v1668, 7
      %v1671 = vor.u32 %v1667, %v1670
      %v1672 = vsel %vm1634, %v1663, %v1671
      %v1673 = vrot.slane %v1671, 4
      %v1675 = vshrl.u32 %v1601, 16
      %v1677 = vrot.slane %v1675, 6
      %v1678 = vshll.u32 %v1601, 16
      %v1680 = vrot.slane %v1678, 7
      %v1681 = vor.u32 %v1677, %v1680
      %v1682 = vsel %vm1634, %v1673, %v1681
      %v1683 = vrot.slane %v1681, 4
      %v1685 = vshrl.u32 %v1602, 16
      %v1687 = vrot.slane %v1685, 6
      %v1688 = vshll.u32 %v1602, 16
      %v1690 = vrot.slane %v1688, 7
      %v1691 = vor.u32 %v1687, %v1690
      %v1692 = vsel %vm1634, %v1683, %v1691
      %v1693 = vrot.slane %v1691, 4
      %v1695 = vshrl.u32 %v1603, 16
      %v1697 = vrot.slane %v1695, 6
      %v1698 = vshll.u32 %v1603, 16
      %v1700 = vrot.slane %v1698, 7
      %v1701 = vor.u32 %v1697, %v1700
      %v1702 = vsel %vm1634, %v1693, %v1701
      %v1703 = vrot.slane %v1701, 4
      %v1705 = vshrl.u32 %v1604, 16
      %v1707 = vrot.slane %v1705, 6
      %v1708 = vshll.u32 %v1604, 16
      %v1710 = vrot.slane %v1708, 7
      %v1711 = vor.u32 %v1707, %v1710
      %v1712 = vsel %vm1634, %v1703, %v1711
      %v1713 = vrot.slane %v1711, 4
      %v1715 = vshrl.u32 %v1605, 16
      %v1717 = vrot.slane %v1715, 6
      %v1718 = vshll.u32 %v1605, 16
      %v1720 = vrot.slane %v1718, 7
      %v1721 = vor.u32 %v1717, %v1720
      %v1722 = vsel %vm1634, %v1713, %v1721
      %v1723 = vrot.slane %v1721, 4
      %v1725 = vshrl.u32 %v1606, 16
      %v1727 = vrot.slane %v1725, 6
      %v1728 = vshll.u32 %v1606, 16
      %v1730 = vrot.slane %v1728, 7
      %v1731 = vor.u32 %v1727, %v1730
      %v1732 = vsel %vm1634, %v1723, %v1731
      %v1733 = vrot.slane %v1731, 4
      %v1735 = vshrl.u32 %v1607, 16
      %v1737 = vrot.slane %v1735, 6
      %v1738 = vshll.u32 %v1607, 16
      %v1740 = vrot.slane %v1738, 7
      %v1741 = vor.u32 %v1737, %v1740
      %v1742 = vsel %vm1634, %v1733, %v1741
      %v1743 = vrot.slane %v1741, 4
      %v1745 = vshrl.u32 %v1608, 16
      %v1747 = vrot.slane %v1745, 6
      %v1748 = vshll.u32 %v1608, 16
      %v1750 = vrot.slane %v1748, 7
      %v1751 = vor.u32 %v1747, %v1750
      %v1752 = vsel %vm1634, %v1743, %v1751
      %v1753 = vrot.slane %v1751, 4
      %v1755 = vshrl.u32 %v1609, 16
      %v1757 = vrot.slane %v1755, 6
      %v1758 = vshll.u32 %v1609, 16
      %v1760 = vrot.slane %v1758, 7
      %v1761 = vor.u32 %v1757, %v1760
      %v1762 = vsel %vm1634, %v1753, %v1761
      %v1763 = vrot.slane %v1761, 4
      %v1765 = vshrl.u32 %v1610, 16
      %v1767 = vrot.slane %v1765, 6
      %v1768 = vshll.u32 %v1610, 16
      %v1770 = vrot.slane %v1768, 7
      %v1771 = vor.u32 %v1767, %v1770
      %v1772 = vsel %vm1634, %v1763, %v1771
      %v1773 = vrot.slane %v1771, 4
      %v1775 = vshrl.u32 %v1611, 16
      %v1777 = vrot.slane %v1775, 6
      %v1778 = vshll.u32 %v1611, 16
      %v1780 = vrot.slane %v1778, 7
      %v1781 = vor.u32 %v1777, %v1780
      %v1782 = vsel %vm1634, %v1773, %v1781
      %v1783 = vrot.slane %v1781, 4
      %v1785 = vshrl.u32 %v1612, 16
      %v1787 = vrot.slane %v1785, 6
      %v1788 = vshll.u32 %v1612, 16
      %v1790 = vrot.slane %v1788, 7
      %v1791 = vor.u32 %v1787, %v1790
      %v1792 = vsel %vm1634, %v1783, %v1791
      %v1793 = vrot.slane %v1791, 4
      %v1795 = vshrl.u32 %v1613, 16
      %v1797 = vrot.slane %v1795, 6
      %v1798 = vshll.u32 %v1613, 16
      %v1800 = vrot.slane %v1798, 7
      %v1801 = vor.u32 %v1797, %v1800
      %v1802 = vsel %vm1634, %v1793, %v1801
      %v1803 = vrot.slane %v1801, 4
      %v1805 = vshrl.u32 %v1614, 16
      %v1807 = vrot.slane %v1805, 6
      %v1808 = vshll.u32 %v1614, 16
      %v1810 = vrot.slane %v1808, 7
      %v1811 = vor.u32 %v1807, %v1810
      %v1812 = vsel %vm1634, %v1803, %v1811
      %v1813 = vrot.slane %v1811, 4
      %v1815 = vshrl.u32 %v1615, 16
      %v1817 = vrot.slane %v1815, 6
      %v1818 = vshll.u32 %v1615, 16
      %v1820 = vrot.slane %v1818, 7
      %v1821 = vor.u32 %v1817, %v1820
      %v1822 = vsel %vm1634, %v1813, %v1821
      %v1823 = vrot.slane %v1821, 4
      %v1825 = vshrl.u32 %v1616, 16
      %v1827 = vrot.slane %v1825, 6
      %v1828 = vshll.u32 %v1616, 16
      %v1830 = vrot.slane %v1828, 7
      %v1831 = vor.u32 %v1827, %v1830
      %v1832 = vsel %vm1634, %v1823, %v1831
      %v1833 = vrot.slane %v1831, 4
      %v1835 = vshrl.u32 %v1617, 16
      %v1837 = vrot.slane %v1835, 6
      %v1838 = vshll.u32 %v1617, 16
      %v1840 = vrot.slane %v1838, 7
      %v1841 = vor.u32 %v1837, %v1840
      %v1842 = vsel %vm1634, %v1833, %v1841
      %v1843 = vrot.slane %v1841, 4
      %v1845 = vshrl.u32 %v1618, 16
      %v1847 = vrot.slane %v1845, 6
      %v1848 = vshll.u32 %v1618, 16
      %v1850 = vrot.slane %v1848, 7
      %v1851 = vor.u32 %v1847, %v1850
      %v1852 = vsel %vm1634, %v1843, %v1851
      %v1853 = vrot.slane %v1851, 4
      %v1855 = vshrl.u32 %v1619, 16
      %v1857 = vrot.slane %v1855, 6
      %v1858 = vshll.u32 %v1619, 16
      %v1860 = vrot.slane %v1858, 7
      %v1861 = vor.u32 %v1857, %v1860
      %v1862 = vsel %vm1634, %v1853, %v1861
      %v1863 = vrot.slane %v1861, 4
      %v1865 = vshrl.u32 %v1620, 16
      %v1867 = vrot.slane %v1865, 6
      %v1868 = vshll.u32 %v1620, 16
      %v1870 = vrot.slane %v1868, 7
      %v1871 = vor.u32 %v1867, %v1870
      %v1872 = vsel %vm1634, %v1863, %v1871
      %v1873 = vrot.slane %v1871, 4
      %v1875 = vshrl.u32 %v1621, 16
      %v1877 = vrot.slane %v1875, 6
      %v1878 = vshll.u32 %v1621, 16
      %v1880 = vrot.slane %v1878, 7
      %v1881 = vor.u32 %v1877, %v1880
      %v1882 = vsel %vm1634, %v1873, %v1881
      %v1883 = vrot.slane %v1881, 4
      %v1885 = vshrl.u32 %v1622, 16
      %v1887 = vrot.slane %v1885, 6
      %v1888 = vshll.u32 %v1622, 16
      %v1890 = vrot.slane %v1888, 7
      %v1891 = vor.u32 %v1887, %v1890
      %v1892 = vsel %vm1634, %v1883, %v1891
      %v1893 = vrot.slane %v1891, 4
      %v1895 = vshrl.u32 %v1623, 16
      %v1897 = vrot.slane %v1895, 6
      %v1898 = vshll.u32 %v1623, 16
      %v1900 = vrot.slane %v1898, 7
      %v1901 = vor.u32 %v1897, %v1900
      %v1902 = vsel %vm1634, %v1893, %v1901
      %v1903 = vrot.slane %v1901, 4
      %v1905 = vshrl.u32 %v1624, 16
      %v1907 = vrot.slane %v1905, 6
      %v1908 = vshll.u32 %v1624, 16
      %v1910 = vrot.slane %v1908, 7
      %v1911 = vor.u32 %v1907, %v1910
      %v1912 = vsel %vm1634, %v1903, %v1911
      %v1913 = vrot.slane %v1911, 4
      %v1915 = vshrl.u32 %v1625, 16
      %v1917 = vrot.slane %v1915, 6
      %v1918 = vshll.u32 %v1625, 16
      %v1920 = vrot.slane %v1918, 7
      %v1921 = vor.u32 %v1917, %v1920
      %v1922 = vsel %vm1634, %v1913, %v1921
      %v1923 = vrot.slane %v1921, 4
      %v1925 = vshrl.u32 %v1626, 16
      %v1927 = vrot.slane %v1925, 6
      %v1928 = vshll.u32 %v1626, 16
      %v1930 = vrot.slane %v1928, 7
      %v1931 = vor.u32 %v1927, %v1930
      %v1932 = vsel %vm1634, %v1923, %v1931
      %v1933 = vrot.slane %v1931, 4
      %v1935 = vshrl.u32 %v1627, 16
      %v1937 = vrot.slane %v1935, 6
      %v1938 = vshll.u32 %v1627, 16
      %v1940 = vrot.slane %v1938, 7
      %v1941 = vor.u32 %v1937, %v1940
      %v1942 = vsel %vm1634, %v1933, %v1941
      %v1943 = vrot.slane %v1941, 4
      %v1945 = vshrl.u32 %v1628, 16
      %v1947 = vrot.slane %v1945, 6
      %v1948 = vshll.u32 %v1628, 16
      %v1950 = vrot.slane %v1948, 7
      %v1951 = vor.u32 %v1947, %v1950
      %v1952 = vsel %vm1634, %v1943, %v1951
      %v1953 = vrot.slane %v1951, 4
      %v1955 = vshrl.u32 %v1629, 16
      %v1957 = vrot.slane %v1955, 6
      %v1958 = vshll.u32 %v1629, 16
      %v1960 = vrot.slane %v1958, 7
      %v1961 = vor.u32 %v1957, %v1960
      %v1962 = vsel %vm1634, %v1953, %v1961
      %v1963 = vrot.slane %v1961, 4
      %v1965 = vshrl.u32 %v1630, 16
      %v1967 = vrot.slane %v1965, 6
      %v1968 = vshll.u32 %v1630, 16
      %v1970 = vrot.slane %v1968, 7
      %v1971 = vor.u32 %v1967, %v1970
      %v1972 = vsel %vm1634, %v1963, %v1971
      %v1973 = vrot.slane %v1971, 4
      %v1975 = vshrl.u32 %v1631, 16
      %v1977 = vrot.slane %v1975, 6
      %v1978 = vshll.u32 %v1631, 16
      %v1980 = vrot.slane %v1978, 7
      %v1981 = vor.u32 %v1977, %v1980
      %v1982 = vsel %vm1634, %v1973, %v1981
      %v1983 = vrot.slane %v1981, 4
      %v1985 = vshrl.u32 %v1632, 16
      %v1987 = vrot.slane %v1985, 6
      %v1988 = vshll.u32 %v1632, 16
      %v1990 = vrot.slane %v1988, 7
      %v1991 = vor.u32 %v1987, %v1990
      %v1992 = vsel %vm1634, %v1983, %v1991
      %v1993 = vrot.slane %v1991, 4
      %v2031 = vld [vmem:[#allocation2 + $0x8] sm:$0xe]
      %v2032 = vsel %vm1588, %v1642, %v2031
      %2033 = vst [vmem:[#allocation2 + $0x8] sm:$0xe] %v2032
      %2034 = vst.msk [vmem:[#allocation2 + $0xc] sm:$0xf] %vm1577, %v1652
      %2035 = vst.msk [vmem:[#allocation2 + $0x10] sm:$0xf] %vm1577, %v1662
      %2036 = vst.msk [vmem:[#allocation2 + $0x14] sm:$0xf] %vm1577, %v1672
      %2037 = vst.msk [vmem:[#allocation2 + $0x18] sm:$0xf] %vm1577, %v1682
      %2038 = vst.msk [vmem:[#allocation2 + $0x1c] sm:$0xf] %vm1577, %v1692
      %2039 = vst.msk [vmem:[#allocation2 + $0x20] sm:$0xf] %vm1577, %v1702
      %2040 = vst.msk [vmem:[#allocation2 + $0x24] sm:$0xf] %vm1577, %v1712
      %2041 = vst.msk [vmem:[#allocation2 + $0x28] sm:$0xf] %vm1577, %v1722
      %2042 = vst.msk [vmem:[#allocation2 + $0x2c] sm:$0xf] %vm1577, %v1732
      %2043 = vst.msk [vmem:[#allocation2 + $0x30] sm:$0xf] %vm1577, %v1742
      %2044 = vst.msk [vmem:[#allocation2 + $0x34] sm:$0xf] %vm1577, %v1752
      %2045 = vst.msk [vmem:[#allocation2 + $0x38] sm:$0xf] %vm1577, %v1762
      %2046 = vst.msk [vmem:[#allocation2 + $0x3c] sm:$0xf] %vm1577, %v1772
      %2047 = vst.msk [vmem:[#allocation2 + $0x40] sm:$0xf] %vm1577, %v1782
      %2048 = vst.msk [vmem:[#allocation2 + $0x44] sm:$0xf] %vm1577, %v1792
      %2049 = vst.msk [vmem:[#allocation2 + $0x48] sm:$0xf] %vm1577, %v1802
      %2050 = vst.msk [vmem:[#allocation2 + $0x4c] sm:$0xf] %vm1577, %v1812
      %2051 = vst.msk [vmem:[#allocation2 + $0x50] sm:$0xf] %vm1577, %v1822
      %2052 = vst.msk [vmem:[#allocation2 + $0x54] sm:$0xf] %vm1577, %v1832
      %2053 = vst.msk [vmem:[#allocation2 + $0x58] sm:$0xf] %vm1577, %v1842
      %2054 = vst.msk [vmem:[#allocation2 + $0x5c] sm:$0xf] %vm1577, %v1852
      %2055 = vst.msk [vmem:[#allocation2 + $0x60] sm:$0xf] %vm1577, %v1862
      %2056 = vst.msk [vmem:[#allocation2 + $0x64] sm:$0xf] %vm1577, %v1872
      %2057 = vst.msk [vmem:[#allocation2 + $0x68] sm:$0xf] %vm1577, %v1882
      %2058 = vst.msk [vmem:[#allocation2 + $0x6c] sm:$0xf] %vm1577, %v1892
      %2059 = vst.msk [vmem:[#allocation2 + $0x70] sm:$0xf] %vm1577, %v1902
      %2060 = vst.msk [vmem:[#allocation2 + $0x74] sm:$0xf] %vm1577, %v1912
      %2061 = vst.msk [vmem:[#allocation2 + $0x78] sm:$0xf] %vm1577, %v1922
      %2062 = vst.msk [vmem:[#allocation2 + $0x7c] sm:$0xf] %vm1577, %v1932
      %2063 = vst.msk [vmem:[#allocation2 + $0x80] sm:$0xf] %vm1577, %v1942
      %2064 = vst.msk [vmem:[#allocation2 + $0x84] sm:$0xf] %vm1577, %v1952
      %2065 = vst.msk [vmem:[#allocation2 + $0x88] sm:$0xf] %vm1577, %v1962
      %2066 = vst.msk [vmem:[#allocation2 + $0x8c] sm:$0xf] %vm1577, %v1972
      %2067 = vst.msk [vmem:[#allocation2 + $0x90] sm:$0xf] %vm1577, %v1982
      %2068 = vst.msk [vmem:[#allocation2 + $0x94] sm:$0xf] %vm1577, %v1992
      %v2069 = vld [vmem:[#allocation2 + $0x98] sm:$0x3]
      %v2070 = vsel %vm1582, %v1993, %v2069
      %2071 = vst [vmem:[#allocation2 + $0x98] sm:$0x3] %v2070
      %v2072 = vld [vmem:[#allocation2] sm:$0xf]
      %v2073 = vld [vmem:[#allocation2 + $0x4] sm:$0xf]
      %v2074 = vld [vmem:[#allocation2 + $0x8] sm:$0xf]
      %v2075 = vld [vmem:[#allocation2 + $0xc] sm:$0xf]
      %v2076 = vld [vmem:[#allocation2 + $0x10] sm:$0xf]
      %v2077 = vld [vmem:[#allocation2 + $0x14] sm:$0xf]
      %v2078 = vld [vmem:[#allocation2 + $0x18] sm:$0xf]
      %v2079 = vld [vmem:[#allocation2 + $0x1c] sm:$0xf]
      %v2080 = vld [vmem:[#allocation2 + $0x20] sm:$0xf]
      %v2081 = vld [vmem:[#allocation2 + $0x24] sm:$0xf]
      %v2082 = vld [vmem:[#allocation2 + $0x28] sm:$0xf]
      %v2083 = vld [vmem:[#allocation2 + $0x2c] sm:$0xf]
      %v2084 = vld [vmem:[#allocation2 + $0x30] sm:$0xf]
      %v2085 = vld [vmem:[#allocation2 + $0x34] sm:$0xf]
      %v2086 = vld [vmem:[#allocation2 + $0x38] sm:$0xf]
      %v2087 = vld [vmem:[#allocation2 + $0x3c] sm:$0xf]
      %v2088 = vld [vmem:[#allocation2 + $0x40] sm:$0xf]
      %v2089 = vld [vmem:[#allocation2 + $0x44] sm:$0xf]
      %v2090 = vld [vmem:[#allocation2 + $0x48] sm:$0xf]
      %v2091 = vld [vmem:[#allocation2 + $0x4c] sm:$0xf]
      %v2092 = vld [vmem:[#allocation2 + $0x50] sm:$0xf]
      %v2093 = vld [vmem:[#allocation2 + $0x54] sm:$0xf]
      %v2094 = vld [vmem:[#allocation2 + $0x58] sm:$0xf]
      %v2095 = vld [vmem:[#allocation2 + $0x5c] sm:$0xf]
      %v2096 = vld [vmem:[#allocation2 + $0x60] sm:$0xf]
      %v2097 = vld [vmem:[#allocation2 + $0x64] sm:$0xf]
      %v2098 = vld [vmem:[#allocation2 + $0x68] sm:$0xf]
      %v2099 = vld [vmem:[#allocation2 + $0x6c] sm:$0xf]
      %v2100 = vld [vmem:[#allocation2 + $0x70] sm:$0xf]
      %v2101 = vld [vmem:[#allocation2 + $0x74] sm:$0xf]
      %v2102 = vld [vmem:[#allocation2 + $0x78] sm:$0xf]
      %v2103 = vld [vmem:[#allocation2 + $0x7c] sm:$0xf]
      %v2104 = vld [vmem:[#allocation2 + $0x80] sm:$0xf]
      %v2105 = vld [vmem:[#allocation2 + $0x84] sm:$0xf]
      %v2106 = vld [vmem:[#allocation2 + $0x88] sm:$0xf]
      %v2107 = vld [vmem:[#allocation2 + $0x8c] sm:$0xf]
      %v2108 = vld [vmem:[%s1] sm:$0x3]
      %v2145 = vunpack.c.l.b16 %v2072
      %v2146 = vunpack.c.l.b16 %v2073
      %v2147 = vunpack.c.l.b16 %v2074
      %v2148 = vunpack.c.l.b16 %v2075
      %v2149 = vunpack.c.l.b16 %v2076
      %v2150 = vunpack.c.l.b16 %v2077
      %v2151 = vunpack.c.l.b16 %v2078
      %v2152 = vunpack.c.l.b16 %v2079
      %v2153 = vunpack.c.l.b16 %v2080
      %v2154 = vunpack.c.l.b16 %v2081
      %v2155 = vunpack.c.l.b16 %v2082
      %v2156 = vunpack.c.l.b16 %v2083
      %v2157 = vunpack.c.l.b16 %v2084
      %v2158 = vunpack.c.l.b16 %v2085
      %v2159 = vunpack.c.l.b16 %v2086
      %v2160 = vunpack.c.l.b16 %v2087
      %v2161 = vunpack.c.l.b16 %v2088
      %v2162 = vunpack.c.l.b16 %v2089
      %v2163 = vunpack.c.l.b16 %v2090
      %v2164 = vunpack.c.l.b16 %v2091
      %v2165 = vunpack.c.l.b16 %v2092
      %v2166 = vunpack.c.l.b16 %v2093
      %v2167 = vunpack.c.l.b16 %v2094
      %v2168 = vunpack.c.l.b16 %v2095
      %v2169 = vunpack.c.l.b16 %v2096
      %v2170 = vunpack.c.l.b16 %v2097
      %v2171 = vunpack.c.l.b16 %v2098
      %v2172 = vunpack.c.l.b16 %v2099
      %v2173 = vunpack.c.l.b16 %v2100
      %v2174 = vunpack.c.l.b16 %v2101
      %v2175 = vunpack.c.l.b16 %v2102
      %v2176 = vunpack.c.l.b16 %v2103
      %v2177 = vunpack.c.l.b16 %v2104
      %v2178 = vunpack.c.l.b16 %v2105
      %v2179 = vunpack.c.l.b16 %v2106
      %v2180 = vunpack.c.l.b16 %v2107
      %v2181 = vpack.c.b16 %v2146, %v2145
      %v2182 = vpack.c.b16 %v2148, %v2147
      %v2183 = vpack.c.b16 %v2150, %v2149
      %v2184 = vpack.c.b16 %v2152, %v2151
      %v2185 = vpack.c.b16 %v2154, %v2153
      %v2186 = vpack.c.b16 %v2156, %v2155
      %v2187 = vpack.c.b16 %v2158, %v2157
      %v2188 = vpack.c.b16 %v2160, %v2159
      %v2189 = vpack.c.b16 %v2162, %v2161
      %v2190 = vpack.c.b16 %v2164, %v2163
      %v2191 = vpack.c.b16 %v2166, %v2165
      %v2192 = vpack.c.b16 %v2168, %v2167
      %v2193 = vpack.c.b16 %v2170, %v2169
      %v2194 = vpack.c.b16 %v2172, %v2171
      %v2195 = vpack.c.b16 %v2174, %v2173
      %v2196 = vpack.c.b16 %v2176, %v2175
      %v2197 = vpack.c.b16 %v2178, %v2177
      %v2198 = vpack.c.b16 %v2180, %v2179
      %vm2199 = vcmask 31744
      %v2201 = vsel %vm2199, %v2181, 0
      %v2204 = vsel %vm2199, %v2182, 0
      %v2207 = vsel %vm2199, %v2183, 0
      %v2210 = vsel %vm2199, %v2184, 0
      %v2213 = vsel %vm2199, %v2185, 0
      %v2216 = vsel %vm2199, %v2186, 0
      %v2219 = vsel %vm2199, %v2187, 0
      %v2222 = vsel %vm2199, %v2188, 0
      %v2225 = vsel %vm2199, %v2189, 0
      %v2228 = vsel %vm2199, %v2190, 0
      %v2231 = vsel %vm2199, %v2191, 0
      %v2234 = vsel %vm2199, %v2192, 0
      %v2237 = vsel %vm2199, %v2193, 0
      %v2240 = vsel %vm2199, %v2194, 0
      %v2243 = vsel %vm2199, %v2195, 0
      %v2246 = vsel %vm2199, %v2196, 0
      %v2249 = vsel %vm2199, %v2197, 0
      %v2252 = vsel %vm2199, %v2198, 0
      %vm2254 = vcmask 1041408
      %v2256 = vsel %vm2254, %v2108, 0
      %2258 = vmatpush.bf16.msra.mxu0 0
      %2259 = vmatpush.bf16.msra.mxu0 0
      %2260 = vmatpush.bf16.msra.mxu0 0
      %2261 = vmatpush.bf16.msra.mxu0 0
      %2262 = vmatpush.bf16.msra.mxu0 0
      %2263 = vmatpush.bf16.msra.mxu0 0
      %2264 = vmatpush.bf16.msra.mxu0 0
      %2265 = vmatpush.bf16.msra.mxu0 %v2256
      %2266 = vmatmul.bf16.gmra.mxu0 %v2201
      %v2267 = vpop.f32.mrf.mxu0
      %v2268 = vadd.f32 0.0, %v2267
      %v2269 = vpop.f32.mrf.mxu0
      %v2270 = vadd.f32 0.0, %v2269
      %2271 = vmatmul.bf16.gmra.mxu0 %v2204
      %v2272 = vpop.f32.mrf.mxu0
      %v2273 = vadd.f32 0.0, %v2272
      %v2274 = vpop.f32.mrf.mxu0
      %v2275 = vadd.f32 0.0, %v2274
      %2276 = vmatmul.bf16.gmra.mxu0 %v2207
      %v2277 = vpop.f32.mrf.mxu0
      %v2278 = vadd.f32 0.0, %v2277
      %v2279 = vpop.f32.mrf.mxu0
      %v2280 = vadd.f32 0.0, %v2279
      %2281 = vmatmul.bf16.gmra.mxu0 %v2210
      %v2282 = vpop.f32.mrf.mxu0
      %v2283 = vadd.f32 0.0, %v2282
      %v2284 = vpop.f32.mrf.mxu0
      %v2285 = vadd.f32 0.0, %v2284
      %2286 = vmatmul.bf16.gmra.mxu0 %v2213
      %v2287 = vpop.f32.mrf.mxu0
      %v2288 = vadd.f32 0.0, %v2287
      %v2289 = vpop.f32.mrf.mxu0
      %v2290 = vadd.f32 0.0, %v2289
      %2291 = vmatmul.bf16.gmra.mxu0 %v2216
      %v2292 = vpop.f32.mrf.mxu0
      %v2293 = vadd.f32 0.0, %v2292
      %v2294 = vpop.f32.mrf.mxu0
      %v2295 = vadd.f32 0.0, %v2294
      %2296 = vmatmul.bf16.gmra.mxu0 %v2219
      %v2297 = vpop.f32.mrf.mxu0
      %v2298 = vadd.f32 0.0, %v2297
      %v2299 = vpop.f32.mrf.mxu0
      %v2300 = vadd.f32 0.0, %v2299
      %2301 = vmatmul.bf16.gmra.mxu0 %v2222
      %v2302 = vpop.f32.mrf.mxu0
      %v2303 = vadd.f32 0.0, %v2302
      %v2304 = vpop.f32.mrf.mxu0
      %v2305 = vadd.f32 0.0, %v2304
      %2306 = vmatmul.bf16.gmra.mxu0 %v2225
      %v2307 = vpop.f32.mrf.mxu0
      %v2308 = vadd.f32 0.0, %v2307
      %v2309 = vpop.f32.mrf.mxu0
      %v2310 = vadd.f32 0.0, %v2309
      %2311 = vmatmul.bf16.gmra.mxu0 %v2228
      %v2312 = vpop.f32.mrf.mxu0
      %v2313 = vadd.f32 0.0, %v2312
      %v2314 = vpop.f32.mrf.mxu0
      %v2315 = vadd.f32 0.0, %v2314
      %2316 = vmatmul.bf16.gmra.mxu0 %v2231
      %v2317 = vpop.f32.mrf.mxu0
      %v2318 = vadd.f32 0.0, %v2317
      %v2319 = vpop.f32.mrf.mxu0
      %v2320 = vadd.f32 0.0, %v2319
      %2321 = vmatmul.bf16.gmra.mxu0 %v2234
      %v2322 = vpop.f32.mrf.mxu0
      %v2323 = vadd.f32 0.0, %v2322
      %v2324 = vpop.f32.mrf.mxu0
      %v2325 = vadd.f32 0.0, %v2324
      %2326 = vmatmul.bf16.gmra.mxu0 %v2237
      %v2327 = vpop.f32.mrf.mxu0
      %v2328 = vadd.f32 0.0, %v2327
      %v2329 = vpop.f32.mrf.mxu0
      %v2330 = vadd.f32 0.0, %v2329
      %2331 = vmatmul.bf16.gmra.mxu0 %v2240
      %v2332 = vpop.f32.mrf.mxu0
      %v2333 = vadd.f32 0.0, %v2332
      %v2334 = vpop.f32.mrf.mxu0
      %v2335 = vadd.f32 0.0, %v2334
      %2336 = vmatmul.bf16.gmra.mxu0 %v2243
      %v2337 = vpop.f32.mrf.mxu0
      %v2338 = vadd.f32 0.0, %v2337
      %v2339 = vpop.f32.mrf.mxu0
      %v2340 = vadd.f32 0.0, %v2339
      %2341 = vmatmul.bf16.gmra.mxu0 %v2246
      %v2342 = vpop.f32.mrf.mxu0
      %v2343 = vadd.f32 0.0, %v2342
      %v2344 = vpop.f32.mrf.mxu0
      %v2345 = vadd.f32 0.0, %v2344
      %2346 = vmatmul.bf16.gmra.mxu0 %v2249
      %v2347 = vpop.f32.mrf.mxu0
      %v2348 = vadd.f32 0.0, %v2347
      %v2349 = vpop.f32.mrf.mxu0
      %v2350 = vadd.f32 0.0, %v2349
      %2351 = vmatmul.bf16.gmra.mxu0 %v2252
      %v2352 = vpop.f32.mrf.mxu0
      %v2353 = vadd.f32 0.0, %v2352
      %v2354 = vpop.f32.mrf.mxu0
      %v2355 = vadd.f32 0.0, %v2354
      %2356 = vdwg.mxu0
      %2357 = vst.msk [vmem:[#allocation3] sm:$0xff] %vm2199, %v2268
      %2358 = vst.msk [vmem:[#allocation3 + $0x8] sm:$0xff] %vm2199, %v2270
      %2359 = vst.msk [vmem:[#allocation3 + $0x10] sm:$0xff] %vm2199, %v2273
      %2360 = vst.msk [vmem:[#allocation3 + $0x18] sm:$0xff] %vm2199, %v2275
      %2361 = vst.msk [vmem:[#allocation3 + $0x20] sm:$0xff] %vm2199, %v2278
      %2362 = vst.msk [vmem:[#allocation3 + $0x28] sm:$0xff] %vm2199, %v2280
      %2363 = vst.msk [vmem:[#allocation3 + $0x30] sm:$0xff] %vm2199, %v2283
      %2364 = vst.msk [vmem:[#allocation3 + $0x38] sm:$0xff] %vm2199, %v2285
      %2365 = vst.msk [vmem:[#allocation3 + $0x40] sm:$0xff] %vm2199, %v2288
      %2366 = vst.msk [vmem:[#allocation3 + $0x48] sm:$0xff] %vm2199, %v2290
      %2367 = vst.msk [vmem:[#allocation3 + $0x50] sm:$0xff] %vm2199, %v2293
      %2368 = vst.msk [vmem:[#allocation3 + $0x58] sm:$0xff] %vm2199, %v2295
      %2369 = vst.msk [vmem:[#allocation3 + $0x60] sm:$0xff] %vm2199, %v2298
      %2370 = vst.msk [vmem:[#allocation3 + $0x68] sm:$0xff] %vm2199, %v2300
      %2371 = vst.msk [vmem:[#allocation3 + $0x70] sm:$0xff] %vm2199, %v2303
      %2372 = vst.msk [vmem:[#allocation3 + $0x78] sm:$0xff] %vm2199, %v2305
      %2373 = vst.msk [vmem:[#allocation3 + $0x80] sm:$0xff] %vm2199, %v2308
      %2374 = vst.msk [vmem:[#allocation3 + $0x88] sm:$0xff] %vm2199, %v2310
      %2375 = vst.msk [vmem:[#allocation3 + $0x90] sm:$0xff] %vm2199, %v2313
      %2376 = vst.msk [vmem:[#allocation3 + $0x98] sm:$0xff] %vm2199, %v2315
      %2377 = vst.msk [vmem:[#allocation3 + $0xa0] sm:$0xff] %vm2199, %v2318
      %2378 = vst.msk [vmem:[#allocation3 + $0xa8] sm:$0xff] %vm2199, %v2320
      %2379 = vst.msk [vmem:[#allocation3 + $0xb0] sm:$0xff] %vm2199, %v2323
      %2380 = vst.msk [vmem:[#allocation3 + $0xb8] sm:$0xff] %vm2199, %v2325
      %2381 = vst.msk [vmem:[#allocation3 + $0xc0] sm:$0xff] %vm2199, %v2328
      %2382 = vst.msk [vmem:[#allocation3 + $0xc8] sm:$0xff] %vm2199, %v2330
      %2383 = vst.msk [vmem:[#allocation3 + $0xd0] sm:$0xff] %vm2199, %v2333
      %2384 = vst.msk [vmem:[#allocation3 + $0xd8] sm:$0xff] %vm2199, %v2335
      %2385 = vst.msk [vmem:[#allocation3 + $0xe0] sm:$0xff] %vm2199, %v2338
      %2386 = vst.msk [vmem:[#allocation3 + $0xe8] sm:$0xff] %vm2199, %v2340
      %2387 = vst.msk [vmem:[#allocation3 + $0xf0] sm:$0xff] %vm2199, %v2343
      %2388 = vst.msk [vmem:[#allocation3 + $0xf8] sm:$0xff] %vm2199, %v2345
      %2389 = vst.msk [vmem:[#allocation3 + $0x100] sm:$0xff] %vm2199, %v2348
      %2390 = vst.msk [vmem:[#allocation3 + $0x108] sm:$0xff] %vm2199, %v2350
      %2391 = vst.msk [vmem:[#allocation3 + $0x110] sm:$0xff] %vm2199, %v2353
      %2392 = vst.msk [vmem:[#allocation3 + $0x118] sm:$0xff] %vm2199, %v2355
      %v2393 = vld [vmem:[#allocation2] sm:$0xf]
      %v2394 = vld [vmem:[#allocation2 + $0x4] sm:$0xf]
      %v2395 = vld [vmem:[#allocation2 + $0x8] sm:$0xf]
      %v2396 = vld [vmem:[#allocation2 + $0xc] sm:$0xf]
      %v2397 = vld [vmem:[#allocation2 + $0x10] sm:$0xf]
      %v2398 = vld [vmem:[#allocation2 + $0x14] sm:$0xf]
      %v2399 = vld [vmem:[#allocation2 + $0x18] sm:$0xf]
      %v2400 = vld [vmem:[#allocation2 + $0x1c] sm:$0xf]
      %v2401 = vld [vmem:[#allocation2 + $0x20] sm:$0xf]
      %v2402 = vld [vmem:[#allocation2 + $0x24] sm:$0xf]
      %v2403 = vld [vmem:[#allocation2 + $0x28] sm:$0xf]
      %v2404 = vld [vmem:[#allocation2 + $0x2c] sm:$0xf]
      %v2405 = vld [vmem:[#allocation2 + $0x30] sm:$0xf]
      %v2406 = vld [vmem:[#allocation2 + $0x34] sm:$0xf]
      %v2407 = vld [vmem:[#allocation2 + $0x38] sm:$0xf]
      %v2408 = vld [vmem:[#allocation2 + $0x3c] sm:$0xf]
      %v2409 = vld [vmem:[#allocation2 + $0x40] sm:$0xf]
      %v2410 = vld [vmem:[#allocation2 + $0x44] sm:$0xf]
      %v2411 = vld [vmem:[#allocation2 + $0x48] sm:$0xf]
      %v2412 = vld [vmem:[#allocation2 + $0x4c] sm:$0xf]
      %v2413 = vld [vmem:[#allocation2 + $0x50] sm:$0xf]
      %v2414 = vld [vmem:[#allocation2 + $0x54] sm:$0xf]
      %v2415 = vld [vmem:[#allocation2 + $0x58] sm:$0xf]
      %v2416 = vld [vmem:[#allocation2 + $0x5c] sm:$0xf]
      %v2417 = vld [vmem:[#allocation2 + $0x60] sm:$0xf]
      %v2418 = vld [vmem:[#allocation2 + $0x64] sm:$0xf]
      %v2419 = vld [vmem:[#allocation2 + $0x68] sm:$0xf]
      %v2420 = vld [vmem:[#allocation2 + $0x6c] sm:$0xf]
      %v2421 = vld [vmem:[#allocation2 + $0x70] sm:$0xf]
      %v2422 = vld [vmem:[#allocation2 + $0x74] sm:$0xf]
      %v2423 = vld [vmem:[#allocation2 + $0x78] sm:$0xf]
      %v2424 = vld [vmem:[#allocation2 + $0x7c] sm:$0xf]
      %v2425 = vld [vmem:[#allocation2 + $0x80] sm:$0xf]
      %v2426 = vld [vmem:[#allocation2 + $0x84] sm:$0xf]
      %v2427 = vld [vmem:[#allocation2 + $0x88] sm:$0xf]
      %v2428 = vld [vmem:[#allocation2 + $0x8c] sm:$0xf]
      %v2429 = vld [vmem:[#allocation2 + $0x90] sm:$0x1]
      %s2430 = scalar_lea.vmem %s1, 2
      %v2431 = vld [vmem:[%s2430] sm:$0x3]
      %v2469 = vunpack.c.l.b16 %v2393
      %v2470 = vunpack.c.l.b16 %v2394
      %v2471 = vunpack.c.l.b16 %v2395
      %v2472 = vunpack.c.l.b16 %v2396
      %v2473 = vunpack.c.l.b16 %v2397
      %v2474 = vunpack.c.l.b16 %v2398
      %v2475 = vunpack.c.l.b16 %v2399
      %v2476 = vunpack.c.l.b16 %v2400
      %v2477 = vunpack.c.l.b16 %v2401
      %v2478 = vunpack.c.l.b16 %v2402
      %v2479 = vunpack.c.l.b16 %v2403
      %v2480 = vunpack.c.l.b16 %v2404
      %v2481 = vunpack.c.l.b16 %v2405
      %v2482 = vunpack.c.l.b16 %v2406
      %v2483 = vunpack.c.l.b16 %v2407
      %v2484 = vunpack.c.l.b16 %v2408
      %v2485 = vunpack.c.l.b16 %v2409
      %v2486 = vunpack.c.l.b16 %v2410
      %v2487 = vunpack.c.l.b16 %v2411
      %v2488 = vunpack.c.l.b16 %v2412
      %v2489 = vunpack.c.l.b16 %v2413
      %v2490 = vunpack.c.l.b16 %v2414
      %v2491 = vunpack.c.l.b16 %v2415
      %v2492 = vunpack.c.l.b16 %v2416
      %v2493 = vunpack.c.l.b16 %v2417
      %v2494 = vunpack.c.l.b16 %v2418
      %v2495 = vunpack.c.l.b16 %v2419
      %v2496 = vunpack.c.l.b16 %v2420
      %v2497 = vunpack.c.l.b16 %v2421
      %v2498 = vunpack.c.l.b16 %v2422
      %v2499 = vunpack.c.l.b16 %v2423
      %v2500 = vunpack.c.l.b16 %v2424
      %v2501 = vunpack.c.l.b16 %v2425
      %v2502 = vunpack.c.l.b16 %v2426
      %v2503 = vunpack.c.l.b16 %v2427
      %v2504 = vunpack.c.l.b16 %v2428
      %v2505 = vunpack.c.l.b16 %v2429
      %v2506 = vpack.c.b16 %v2470, %v2469
      %v2507 = vpack.c.b16 %v2472, %v2471
      %v2508 = vpack.c.b16 %v2474, %v2473
      %v2509 = vpack.c.b16 %v2476, %v2475
      %v2510 = vpack.c.b16 %v2478, %v2477
      %v2511 = vpack.c.b16 %v2480, %v2479
      %v2512 = vpack.c.b16 %v2482, %v2481
      %v2513 = vpack.c.b16 %v2484, %v2483
      %v2514 = vpack.c.b16 %v2486, %v2485
      %v2515 = vpack.c.b16 %v2488, %v2487
      %v2516 = vpack.c.b16 %v2490, %v2489
      %v2517 = vpack.c.b16 %v2492, %v2491
      %v2518 = vpack.c.b16 %v2494, %v2493
      %v2519 = vpack.c.b16 %v2496, %v2495
      %v2520 = vpack.c.b16 %v2498, %v2497
      %v2521 = vpack.c.b16 %v2500, %v2499
      %v2522 = vpack.c.b16 %v2502, %v2501
      %v2523 = vpack.c.b16 %v2504, %v2503
      %v2524 = vpack.c.b16 %v2505, %v2505
      %vm2525 = vsmask.f32 7424
      %v2527 = vshrl.u32 %v2506, 16
      %v2529 = vshll.u32 %v2506, 16
      %v2531 = vrot.slane %v2529, 1
      %v2532 = vor.u32 %v2527, %v2531
      %v2534 = vshll.u32 %v2507, 16
      %v2536 = vrot.slane %v2534, 1
      %v2537 = vsel %vm2525, %v2532, %v2536
      %v2538 = vshrl.u32 %v2507, 16
      %v2540 = vor.u32 %v2538, %v2536
      %v2542 = vshll.u32 %v2508, 16
      %v2544 = vrot.slane %v2542, 1
      %v2545 = vsel %vm2525, %v2540, %v2544
      %v2546 = vshrl.u32 %v2508, 16
      %v2548 = vor.u32 %v2546, %v2544
      %v2550 = vshll.u32 %v2509, 16
      %v2552 = vrot.slane %v2550, 1
      %v2553 = vsel %vm2525, %v2548, %v2552
      %v2554 = vshrl.u32 %v2509, 16
      %v2556 = vor.u32 %v2554, %v2552
      %v2558 = vshll.u32 %v2510, 16
      %v2560 = vrot.slane %v2558, 1
      %v2561 = vsel %vm2525, %v2556, %v2560
      %v2562 = vshrl.u32 %v2510, 16
      %v2564 = vor.u32 %v2562, %v2560
      %v2566 = vshll.u32 %v2511, 16
      %v2568 = vrot.slane %v2566, 1
      %v2569 = vsel %vm2525, %v2564, %v2568
      %v2570 = vshrl.u32 %v2511, 16
      %v2572 = vor.u32 %v2570, %v2568
      %v2574 = vshll.u32 %v2512, 16
      %v2576 = vrot.slane %v2574, 1
      %v2577 = vsel %vm2525, %v2572, %v2576
      %v2578 = vshrl.u32 %v2512, 16
      %v2580 = vor.u32 %v2578, %v2576
      %v2582 = vshll.u32 %v2513, 16
      %v2584 = vrot.slane %v2582, 1
      %v2585 = vsel %vm2525, %v2580, %v2584
      %v2586 = vshrl.u32 %v2513, 16
      %v2588 = vor.u32 %v2586, %v2584
      %v2590 = vshll.u32 %v2514, 16
      %v2592 = vrot.slane %v2590, 1
      %v2593 = vsel %vm2525, %v2588, %v2592
      %v2594 = vshrl.u32 %v2514, 16
      %v2596 = vor.u32 %v2594, %v2592
      %v2598 = vshll.u32 %v2515, 16
      %v2600 = vrot.slane %v2598, 1
      %v2601 = vsel %vm2525, %v2596, %v2600
      %v2602 = vshrl.u32 %v2515, 16
      %v2604 = vor.u32 %v2602, %v2600
      %v2606 = vshll.u32 %v2516, 16
      %v2608 = vrot.slane %v2606, 1
      %v2609 = vsel %vm2525, %v2604, %v2608
      %v2610 = vshrl.u32 %v2516, 16
      %v2612 = vor.u32 %v2610, %v2608
      %v2614 = vshll.u32 %v2517, 16
      %v2616 = vrot.slane %v2614, 1
      %v2617 = vsel %vm2525, %v2612, %v2616
      %v2618 = vshrl.u32 %v2517, 16
      %v2620 = vor.u32 %v2618, %v2616
      %v2622 = vshll.u32 %v2518, 16
      %v2624 = vrot.slane %v2622, 1
      %v2625 = vsel %vm2525, %v2620, %v2624
      %v2626 = vshrl.u32 %v2518, 16
      %v2628 = vor.u32 %v2626, %v2624
      %v2630 = vshll.u32 %v2519, 16
      %v2632 = vrot.slane %v2630, 1
      %v2633 = vsel %vm2525, %v2628, %v2632
      %v2634 = vshrl.u32 %v2519, 16
      %v2636 = vor.u32 %v2634, %v2632
      %v2638 = vshll.u32 %v2520, 16
      %v2640 = vrot.slane %v2638, 1
      %v2641 = vsel %vm2525, %v2636, %v2640
      %v2642 = vshrl.u32 %v2520, 16
      %v2644 = vor.u32 %v2642, %v2640
      %v2646 = vshll.u32 %v2521, 16
      %v2648 = vrot.slane %v2646, 1
      %v2649 = vsel %vm2525, %v2644, %v2648
      %v2650 = vshrl.u32 %v2521, 16
      %v2652 = vor.u32 %v2650, %v2648
      %v2654 = vshll.u32 %v2522, 16
      %v2656 = vrot.slane %v2654, 1
      %v2657 = vsel %vm2525, %v2652, %v2656
      %v2658 = vshrl.u32 %v2522, 16
      %v2660 = vor.u32 %v2658, %v2656
      %v2662 = vshll.u32 %v2523, 16
      %v2664 = vrot.slane %v2662, 1
      %v2665 = vsel %vm2525, %v2660, %v2664
      %v2666 = vshrl.u32 %v2523, 16
      %v2668 = vor.u32 %v2666, %v2664
      %v2670 = vshll.u32 %v2524, 16
      %v2672 = vrot.slane %v2670, 1
      %v2673 = vsel %vm2525, %v2668, %v2672
      %v2675 = vsel %vm2199, %v2537, 0
      %v2678 = vsel %vm2199, %v2545, 0
      %v2681 = vsel %vm2199, %v2553, 0
      %v2684 = vsel %vm2199, %v2561, 0
      %v2687 = vsel %vm2199, %v2569, 0
      %v2690 = vsel %vm2199, %v2577, 0
      %v2693 = vsel %vm2199, %v2585, 0
      %v2696 = vsel %vm2199, %v2593, 0
      %v2699 = vsel %vm2199, %v2601, 0
      %v2702 = vsel %vm2199, %v2609, 0
      %v2705 = vsel %vm2199, %v2617, 0
      %v2708 = vsel %vm2199, %v2625, 0
      %v2711 = vsel %vm2199, %v2633, 0
      %v2714 = vsel %vm2199, %v2641, 0
      %v2717 = vsel %vm2199, %v2649, 0
      %v2720 = vsel %vm2199, %v2657, 0
      %v2723 = vsel %vm2199, %v2665, 0
      %v2726 = vsel %vm2199, %v2673, 0
      %v2729 = vsel %vm2254, %v2431, 0
      %2731 = vmatpush.bf16.msra.mxu0 0
      %2732 = vmatpush.bf16.msra.mxu0 0
      %2733 = vmatpush.bf16.msra.mxu0 0
      %2734 = vmatpush.bf16.msra.mxu0 0
      %2735 = vmatpush.bf16.msra.mxu0 0
      %2736 = vmatpush.bf16.msra.mxu0 0
      %2737 = vmatpush.bf16.msra.mxu0 0
      %2738 = vmatpush.bf16.msra.mxu0 %v2729
      %2739 = vmatmul.bf16.gmra.mxu0 %v2675
      %v2740 = vpop.f32.mrf.mxu0
      %v2741 = vadd.f32 0.0, %v2740
      %v2742 = vpop.f32.mrf.mxu0
      %v2743 = vadd.f32 0.0, %v2742
      %2744 = vmatmul.bf16.gmra.mxu0 %v2678
      %v2745 = vpop.f32.mrf.mxu0
      %v2746 = vadd.f32 0.0, %v2745
      %v2747 = vpop.f32.mrf.mxu0
      %v2748 = vadd.f32 0.0, %v2747
      %2749 = vmatmul.bf16.gmra.mxu0 %v2681
      %v2750 = vpop.f32.mrf.mxu0
      %v2751 = vadd.f32 0.0, %v2750
      %v2752 = vpop.f32.mrf.mxu0
      %v2753 = vadd.f32 0.0, %v2752
      %2754 = vmatmul.bf16.gmra.mxu0 %v2684
      %v2755 = vpop.f32.mrf.mxu0
      %v2756 = vadd.f32 0.0, %v2755
      %v2757 = vpop.f32.mrf.mxu0
      %v2758 = vadd.f32 0.0, %v2757
      %2759 = vmatmul.bf16.gmra.mxu0 %v2687
      %v2760 = vpop.f32.mrf.mxu0
      %v2761 = vadd.f32 0.0, %v2760
      %v2762 = vpop.f32.mrf.mxu0
      %v2763 = vadd.f32 0.0, %v2762
      %2764 = vmatmul.bf16.gmra.mxu0 %v2690
      %v2765 = vpop.f32.mrf.mxu0
      %v2766 = vadd.f32 0.0, %v2765
      %v2767 = vpop.f32.mrf.mxu0
      %v2768 = vadd.f32 0.0, %v2767
      %2769 = vmatmul.bf16.gmra.mxu0 %v2693
      %v2770 = vpop.f32.mrf.mxu0
      %v2771 = vadd.f32 0.0, %v2770
      %v2772 = vpop.f32.mrf.mxu0
      %v2773 = vadd.f32 0.0, %v2772
      %2774 = vmatmul.bf16.gmra.mxu0 %v2696
      %v2775 = vpop.f32.mrf.mxu0
      %v2776 = vadd.f32 0.0, %v2775
      %v2777 = vpop.f32.mrf.mxu0
      %v2778 = vadd.f32 0.0, %v2777
      %2779 = vmatmul.bf16.gmra.mxu0 %v2699
      %v2780 = vpop.f32.mrf.mxu0
      %v2781 = vadd.f32 0.0, %v2780
      %v2782 = vpop.f32.mrf.mxu0
      %v2783 = vadd.f32 0.0, %v2782
      %2784 = vmatmul.bf16.gmra.mxu0 %v2702
      %v2785 = vpop.f32.mrf.mxu0
      %v2786 = vadd.f32 0.0, %v2785
      %v2787 = vpop.f32.mrf.mxu0
      %v2788 = vadd.f32 0.0, %v2787
      %2789 = vmatmul.bf16.gmra.mxu0 %v2705
      %v2790 = vpop.f32.mrf.mxu0
      %v2791 = vadd.f32 0.0, %v2790
      %v2792 = vpop.f32.mrf.mxu0
      %v2793 = vadd.f32 0.0, %v2792
      %2794 = vmatmul.bf16.gmra.mxu0 %v2708
      %v2795 = vpop.f32.mrf.mxu0
      %v2796 = vadd.f32 0.0, %v2795
      %v2797 = vpop.f32.mrf.mxu0
      %v2798 = vadd.f32 0.0, %v2797
      %2799 = vmatmul.bf16.gmra.mxu0 %v2711
      %v2800 = vpop.f32.mrf.mxu0
      %v2801 = vadd.f32 0.0, %v2800
      %v2802 = vpop.f32.mrf.mxu0
      %v2803 = vadd.f32 0.0, %v2802
      %2804 = vmatmul.bf16.gmra.mxu0 %v2714
      %v2805 = vpop.f32.mrf.mxu0
      %v2806 = vadd.f32 0.0, %v2805
      %v2807 = vpop.f32.mrf.mxu0
      %v2808 = vadd.f32 0.0, %v2807
      %2809 = vmatmul.bf16.gmra.mxu0 %v2717
      %v2810 = vpop.f32.mrf.mxu0
      %v2811 = vadd.f32 0.0, %v2810
      %v2812 = vpop.f32.mrf.mxu0
      %v2813 = vadd.f32 0.0, %v2812
      %2814 = vmatmul.bf16.gmra.mxu0 %v2720
      %v2815 = vpop.f32.mrf.mxu0
      %v2816 = vadd.f32 0.0, %v2815
      %v2817 = vpop.f32.mrf.mxu0
      %v2818 = vadd.f32 0.0, %v2817
      %2819 = vmatmul.bf16.gmra.mxu0 %v2723
      %v2820 = vpop.f32.mrf.mxu0
      %v2821 = vadd.f32 0.0, %v2820
      %v2822 = vpop.f32.mrf.mxu0
      %v2823 = vadd.f32 0.0, %v2822
      %2824 = vmatmul.bf16.gmra.mxu0 %v2726
      %v2825 = vpop.f32.mrf.mxu0
      %v2826 = vadd.f32 0.0, %v2825
      %v2827 = vpop.f32.mrf.mxu0
      %v2828 = vadd.f32 0.0, %v2827
      %2829 = vdwg.mxu0
      %v2830 = vld [vmem:[#allocation3] sm:$0xff]
      %v2831 = vld [vmem:[#allocation3 + $0x8] sm:$0xff]
      %v2832 = vld [vmem:[#allocation3 + $0x10] sm:$0xff]
      %v2833 = vld [vmem:[#allocation3 + $0x18] sm:$0xff]
      %v2834 = vld [vmem:[#allocation3 + $0x20] sm:$0xff]
      %v2835 = vld [vmem:[#allocation3 + $0x28] sm:$0xff]
      %v2836 = vld [vmem:[#allocation3 + $0x30] sm:$0xff]
      %v2837 = vld [vmem:[#allocation3 + $0x38] sm:$0xff]
      %v2838 = vld [vmem:[#allocation3 + $0x40] sm:$0xff]
      %v2839 = vld [vmem:[#allocation3 + $0x48] sm:$0xff]
      %v2840 = vld [vmem:[#allocation3 + $0x50] sm:$0xff]
      %v2841 = vld [vmem:[#allocation3 + $0x58] sm:$0xff]
      %v2842 = vld [vmem:[#allocation3 + $0x60] sm:$0xff]
      %v2843 = vld [vmem:[#allocation3 + $0x68] sm:$0xff]
      %v2844 = vld [vmem:[#allocation3 + $0x70] sm:$0xff]
      %v2845 = vld [vmem:[#allocation3 + $0x78] sm:$0xff]
      %v2846 = vld [vmem:[#allocation3 + $0x80] sm:$0xff]
      %v2847 = vld [vmem:[#allocation3 + $0x88] sm:$0xff]
      %v2848 = vld [vmem:[#allocation3 + $0x90] sm:$0xff]
      %v2849 = vld [vmem:[#allocation3 + $0x98] sm:$0xff]
      %v2850 = vld [vmem:[#allocation3 + $0xa0] sm:$0xff]
      %v2851 = vld [vmem:[#allocation3 + $0xa8] sm:$0xff]
      %v2852 = vld [vmem:[#allocation3 + $0xb0] sm:$0xff]
      %v2853 = vld [vmem:[#allocation3 + $0xb8] sm:$0xff]
      %v2854 = vld [vmem:[#allocation3 + $0xc0] sm:$0xff]
      %v2855 = vld [vmem:[#allocation3 + $0xc8] sm:$0xff]
      %v2856 = vld [vmem:[#allocation3 + $0xd0] sm:$0xff]
      %v2857 = vld [vmem:[#allocation3 + $0xd8] sm:$0xff]
      %v2858 = vld [vmem:[#allocation3 + $0xe0] sm:$0xff]
      %v2859 = vld [vmem:[#allocation3 + $0xe8] sm:$0xff]
      %v2860 = vld [vmem:[#allocation3 + $0xf0] sm:$0xff]
      %v2861 = vld [vmem:[#allocation3 + $0xf8] sm:$0xff]
      %v2862 = vld [vmem:[#allocation3 + $0x100] sm:$0xff]
      %v2863 = vld [vmem:[#allocation3 + $0x108] sm:$0xff]
      %v2864 = vld [vmem:[#allocation3 + $0x110] sm:$0xff]
      %v2865 = vld [vmem:[#allocation3 + $0x118] sm:$0xff]
      %v2866 = vadd.f32 %v2830, %v2741
      %v2867 = vadd.f32 %v2831, %v2743
      %v2868 = vadd.f32 %v2832, %v2746
      %v2869 = vadd.f32 %v2833, %v2748
      %v2870 = vadd.f32 %v2834, %v2751
      %v2871 = vadd.f32 %v2835, %v2753
      %v2872 = vadd.f32 %v2836, %v2756
      %v2873 = vadd.f32 %v2837, %v2758
      %v2874 = vadd.f32 %v2838, %v2761
      %v2875 = vadd.f32 %v2839, %v2763
      %v2876 = vadd.f32 %v2840, %v2766
      %v2877 = vadd.f32 %v2841, %v2768
      %v2878 = vadd.f32 %v2842, %v2771
      %v2879 = vadd.f32 %v2843, %v2773
      %v2880 = vadd.f32 %v2844, %v2776
      %v2881 = vadd.f32 %v2845, %v2778
      %v2882 = vadd.f32 %v2846, %v2781
      %v2883 = vadd.f32 %v2847, %v2783
      %v2884 = vadd.f32 %v2848, %v2786
      %v2885 = vadd.f32 %v2849, %v2788
      %v2886 = vadd.f32 %v2850, %v2791
      %v2887 = vadd.f32 %v2851, %v2793
      %v2888 = vadd.f32 %v2852, %v2796
      %v2889 = vadd.f32 %v2853, %v2798
      %v2890 = vadd.f32 %v2854, %v2801
      %v2891 = vadd.f32 %v2855, %v2803
      %v2892 = vadd.f32 %v2856, %v2806
      %v2893 = vadd.f32 %v2857, %v2808
      %v2894 = vadd.f32 %v2858, %v2811
      %v2895 = vadd.f32 %v2859, %v2813
      %v2896 = vadd.f32 %v2860, %v2816
      %v2897 = vadd.f32 %v2861, %v2818
      %v2898 = vadd.f32 %v2862, %v2821
      %v2899 = vadd.f32 %v2863, %v2823
      %v2900 = vadd.f32 %v2864, %v2826
      %v2901 = vadd.f32 %v2865, %v2828
      %2902 = vst.msk [vmem:[#allocation3] sm:$0xff] %vm2199, %v2866
      %2903 = vst.msk [vmem:[#allocation3 + $0x8] sm:$0xff] %vm2199, %v2867
      %2904 = vst.msk [vmem:[#allocation3 + $0x10] sm:$0xff] %vm2199, %v2868
      %2905 = vst.msk [vmem:[#allocation3 + $0x18] sm:$0xff] %vm2199, %v2869
      %2906 = vst.msk [vmem:[#allocation3 + $0x20] sm:$0xff] %vm2199, %v2870
      %2907 = vst.msk [vmem:[#allocation3 + $0x28] sm:$0xff] %vm2199, %v2871
      %2908 = vst.msk [vmem:[#allocation3 + $0x30] sm:$0xff] %vm2199, %v2872
      %2909 = vst.msk [vmem:[#allocation3 + $0x38] sm:$0xff] %vm2199, %v2873
      %2910 = vst.msk [vmem:[#allocation3 + $0x40] sm:$0xff] %vm2199, %v2874
      %2911 = vst.msk [vmem:[#allocation3 + $0x48] sm:$0xff] %vm2199, %v2875
      %2912 = vst.msk [vmem:[#allocation3 + $0x50] sm:$0xff] %vm2199, %v2876
      %2913 = vst.msk [vmem:[#allocation3 + $0x58] sm:$0xff] %vm2199, %v2877
      %2914 = vst.msk [vmem:[#allocation3 + $0x60] sm:$0xff] %vm2199, %v2878
      %2915 = vst.msk [vmem:[#allocation3 + $0x68] sm:$0xff] %vm2199, %v2879
      %2916 = vst.msk [vmem:[#allocation3 + $0x70] sm:$0xff] %vm2199, %v2880
      %2917 = vst.msk [vmem:[#allocation3 + $0x78] sm:$0xff] %vm2199, %v2881
      %2918 = vst.msk [vmem:[#allocation3 + $0x80] sm:$0xff] %vm2199, %v2882
      %2919 = vst.msk [vmem:[#allocation3 + $0x88] sm:$0xff] %vm2199, %v2883
      %2920 = vst.msk [vmem:[#allocation3 + $0x90] sm:$0xff] %vm2199, %v2884
      %2921 = vst.msk [vmem:[#allocation3 + $0x98] sm:$0xff] %vm2199, %v2885
      %2922 = vst.msk [vmem:[#allocation3 + $0xa0] sm:$0xff] %vm2199, %v2886
      %2923 = vst.msk [vmem:[#allocation3 + $0xa8] sm:$0xff] %vm2199, %v2887
      %2924 = vst.msk [vmem:[#allocation3 + $0xb0] sm:$0xff] %vm2199, %v2888
      %2925 = vst.msk [vmem:[#allocation3 + $0xb8] sm:$0xff] %vm2199, %v2889
      %2926 = vst.msk [vmem:[#allocation3 + $0xc0] sm:$0xff] %vm2199, %v2890
      %2927 = vst.msk [vmem:[#allocation3 + $0xc8] sm:$0xff] %vm2199, %v2891
      %2928 = vst.msk [vmem:[#allocation3 + $0xd0] sm:$0xff] %vm2199, %v2892
      %2929 = vst.msk [vmem:[#allocation3 + $0xd8] sm:$0xff] %vm2199, %v2893
      %2930 = vst.msk [vmem:[#allocation3 + $0xe0] sm:$0xff] %vm2199, %v2894
      %2931 = vst.msk [vmem:[#allocation3 + $0xe8] sm:$0xff] %vm2199, %v2895
      %2932 = vst.msk [vmem:[#allocation3 + $0xf0] sm:$0xff] %vm2199, %v2896
      %2933 = vst.msk [vmem:[#allocation3 + $0xf8] sm:$0xff] %vm2199, %v2897
      %2934 = vst.msk [vmem:[#allocation3 + $0x100] sm:$0xff] %vm2199, %v2898
      %2935 = vst.msk [vmem:[#allocation3 + $0x108] sm:$0xff] %vm2199, %v2899
      %2936 = vst.msk [vmem:[#allocation3 + $0x110] sm:$0xff] %vm2199, %v2900
      %2937 = vst.msk [vmem:[#allocation3 + $0x118] sm:$0xff] %vm2199, %v2901
      %v2938 = vld [vmem:[#allocation2] sm:$0xe]
      %v2939 = vld [vmem:[#allocation2 + $0x4] sm:$0xf]
      %v2940 = vld [vmem:[#allocation2 + $0x8] sm:$0xf]
      %v2941 = vld [vmem:[#allocation2 + $0xc] sm:$0xf]
      %v2942 = vld [vmem:[#allocation2 + $0x10] sm:$0xf]
      %v2943 = vld [vmem:[#allocation2 + $0x14] sm:$0xf]
      %v2944 = vld [vmem:[#allocation2 + $0x18] sm:$0xf]
      %v2945 = vld [vmem:[#allocation2 + $0x1c] sm:$0xf]
      %v2946 = vld [vmem:[#allocation2 + $0x20] sm:$0xf]
      %v2947 = vld [vmem:[#allocation2 + $0x24] sm:$0xf]
      %v2948 = vld [vmem:[#allocation2 + $0x28] sm:$0xf]
      %v2949 = vld [vmem:[#allocation2 + $0x2c] sm:$0xf]
      %v2950 = vld [vmem:[#allocation2 + $0x30] sm:$0xf]
      %v2951 = vld [vmem:[#allocation2 + $0x34] sm:$0xf]
      %v2952 = vld [vmem:[#allocation2 + $0x38] sm:$0xf]
      %v2953 = vld [vmem:[#allocation2 + $0x3c] sm:$0xf]
      %v2954 = vld [vmem:[#allocation2 + $0x40] sm:$0xf]
      %v2955 = vld [vmem:[#allocation2 + $0x44] sm:$0xf]
      %v2956 = vld [vmem:[#allocation2 + $0x48] sm:$0xf]
      %v2957 = vld [vmem:[#allocation2 + $0x4c] sm:$0xf]
      %v2958 = vld [vmem:[#allocation2 + $0x50] sm:$0xf]
      %v2959 = vld [vmem:[#allocation2 + $0x54] sm:$0xf]
      %v2960 = vld [vmem:[#allocation2 + $0x58] sm:$0xf]
      %v2961 = vld [vmem:[#allocation2 + $0x5c] sm:$0xf]
      %v2962 = vld [vmem:[#allocation2 + $0x60] sm:$0xf]
      %v2963 = vld [vmem:[#allocation2 + $0x64] sm:$0xf]
      %v2964 = vld [vmem:[#allocation2 + $0x68] sm:$0xf]
      %v2965 = vld [vmem:[#allocation2 + $0x6c] sm:$0xf]
      %v2966 = vld [vmem:[#allocation2 + $0x70] sm:$0xf]
      %v2967 = vld [vmem:[#allocation2 + $0x74] sm:$0xf]
      %v2968 = vld [vmem:[#allocation2 + $0x78] sm:$0xf]
      %v2969 = vld [vmem:[#allocation2 + $0x7c] sm:$0xf]
      %v2970 = vld [vmem:[#allocation2 + $0x80] sm:$0xf]
      %v2971 = vld [vmem:[#allocation2 + $0x84] sm:$0xf]
      %v2972 = vld [vmem:[#allocation2 + $0x88] sm:$0xf]
      %v2973 = vld [vmem:[#allocation2 + $0x8c] sm:$0xf]
      %v2974 = vld [vmem:[#allocation2 + $0x90] sm:$0x1]
      %s2975 = scalar_lea.vmem %s1, 4
      %v2976 = vld [vmem:[%s2975] sm:$0x3]
      %v3014 = vunpack.c.l.b16 %v2938
      %v3015 = vunpack.c.l.b16 %v2939
      %v3016 = vunpack.c.l.b16 %v2940
      %v3017 = vunpack.c.l.b16 %v2941
      %v3018 = vunpack.c.l.b16 %v2942
      %v3019 = vunpack.c.l.b16 %v2943
      %v3020 = vunpack.c.l.b16 %v2944
      %v3021 = vunpack.c.l.b16 %v2945
      %v3022 = vunpack.c.l.b16 %v2946
      %v3023 = vunpack.c.l.b16 %v2947
      %v3024 = vunpack.c.l.b16 %v2948
      %v3025 = vunpack.c.l.b16 %v2949
      %v3026 = vunpack.c.l.b16 %v2950
      %v3027 = vunpack.c.l.b16 %v2951
      %v3028 = vunpack.c.l.b16 %v2952
      %v3029 = vunpack.c.l.b16 %v2953
      %v3030 = vunpack.c.l.b16 %v2954
      %v3031 = vunpack.c.l.b16 %v2955
      %v3032 = vunpack.c.l.b16 %v2956
      %v3033 = vunpack.c.l.b16 %v2957
      %v3034 = vunpack.c.l.b16 %v2958
      %v3035 = vunpack.c.l.b16 %v2959
      %v3036 = vunpack.c.l.b16 %v2960
      %v3037 = vunpack.c.l.b16 %v2961
      %v3038 = vunpack.c.l.b16 %v2962
      %v3039 = vunpack.c.l.b16 %v2963
      %v3040 = vunpack.c.l.b16 %v2964
      %v3041 = vunpack.c.l.b16 %v2965
      %v3042 = vunpack.c.l.b16 %v2966
      %v3043 = vunpack.c.l.b16 %v2967
      %v3044 = vunpack.c.l.b16 %v2968
      %v3045 = vunpack.c.l.b16 %v2969
      %v3046 = vunpack.c.l.b16 %v2970
      %v3047 = vunpack.c.l.b16 %v2971
      %v3048 = vunpack.c.l.b16 %v2972
      %v3049 = vunpack.c.l.b16 %v2973
      %v3050 = vunpack.c.l.b16 %v2974
      %v3051 = vpack.c.b16 %v3015, %v3014
      %v3052 = vpack.c.b16 %v3017, %v3016
      %v3053 = vpack.c.b16 %v3019, %v3018
      %v3054 = vpack.c.b16 %v3021, %v3020
      %v3055 = vpack.c.b16 %v3023, %v3022
      %v3056 = vpack.c.b16 %v3025, %v3024
      %v3057 = vpack.c.b16 %v3027, %v3026
      %v3058 = vpack.c.b16 %v3029, %v3028
      %v3059 = vpack.c.b16 %v3031, %v3030
      %v3060 = vpack.c.b16 %v3033, %v3032
      %v3061 = vpack.c.b16 %v3035, %v3034
      %v3062 = vpack.c.b16 %v3037, %v3036
      %v3063 = vpack.c.b16 %v3039, %v3038
      %v3064 = vpack.c.b16 %v3041, %v3040
      %v3065 = vpack.c.b16 %v3043, %v3042
      %v3066 = vpack.c.b16 %v3045, %v3044
      %v3067 = vpack.c.b16 %v3047, %v3046
      %v3068 = vpack.c.b16 %v3049, %v3048
      %v3069 = vpack.c.b16 %v3050, %v3050
      %vm3070 = vcmask 1046528
      %v3071 = vrot.slane %v3051, 1
      %v3072 = vrot.slane %v3052, 1
      %v3073 = vsel %vm3070, %v3071, %v3072
      %v3074 = vrot.slane %v3053, 1
      %v3075 = vsel %vm3070, %v3072, %v3074
      %v3076 = vrot.slane %v3054, 1
      %v3077 = vsel %vm3070, %v3074, %v3076
      %v3078 = vrot.slane %v3055, 1
      %v3079 = vsel %vm3070, %v3076, %v3078
      %v3080 = vrot.slane %v3056, 1
      %v3081 = vsel %vm3070, %v3078, %v3080
      %v3082 = vrot.slane %v3057, 1
      %v3083 = vsel %vm3070, %v3080, %v3082
      %v3084 = vrot.slane %v3058, 1
      %v3085 = vsel %vm3070, %v3082, %v3084
      %v3086 = vrot.slane %v3059, 1
      %v3087 = vsel %vm3070, %v3084, %v3086
      %v3088 = vrot.slane %v3060, 1
      %v3089 = vsel %vm3070, %v3086, %v3088
      %v3090 = vrot.slane %v3061, 1
      %v3091 = vsel %vm3070, %v3088, %v3090
      %v3092 = vrot.slane %v3062, 1
      %v3093 = vsel %vm3070, %v3090, %v3092
      %v3094 = vrot.slane %v3063, 1
      %v3095 = vsel %vm3070, %v3092, %v3094
      %v3096 = vrot.slane %v3064, 1
      %v3097 = vsel %vm3070, %v3094, %v3096
      %v3098 = vrot.slane %v3065, 1
      %v3099 = vsel %vm3070, %v3096, %v3098
      %v3100 = vrot.slane %v3066, 1
      %v3101 = vsel %vm3070, %v3098, %v3100
      %v3102 = vrot.slane %v3067, 1
      %v3103 = vsel %vm3070, %v3100, %v3102
      %v3104 = vrot.slane %v3068, 1
      %v3105 = vsel %vm3070, %v3102, %v3104
      %v3106 = vrot.slane %v3069, 1
      %v3107 = vsel %vm3070, %v3104, %v3106
      %v3109 = vsel %vm2199, %v3073, 0
      %v3112 = vsel %vm2199, %v3075, 0
      %v3115 = vsel %vm2199, %v3077, 0
      %v3118 = vsel %vm2199, %v3079, 0
      %v3121 = vsel %vm2199, %v3081, 0
      %v3124 = vsel %vm2199, %v3083, 0
      %v3127 = vsel %vm2199, %v3085, 0
      %v3130 = vsel %vm2199, %v3087, 0
      %v3133 = vsel %vm2199, %v3089, 0
      %v3136 = vsel %vm2199, %v3091, 0
      %v3139 = vsel %vm2199, %v3093, 0
      %v3142 = vsel %vm2199, %v3095, 0
      %v3145 = vsel %vm2199, %v3097, 0
      %v3148 = vsel %vm2199, %v3099, 0
      %v3151 = vsel %vm2199, %v3101, 0
      %v3154 = vsel %vm2199, %v3103, 0
      %v3157 = vsel %vm2199, %v3105, 0
      %v3160 = vsel %vm2199, %v3107, 0
      %v3163 = vsel %vm2254, %v2976, 0
      %3165 = vmatpush.bf16.msra.mxu0 0
      %3166 = vmatpush.bf16.msra.mxu0 0
      %3167 = vmatpush.bf16.msra.mxu0 0
      %3168 = vmatpush.bf16.msra.mxu0 0
      %3169 = vmatpush.bf16.msra.mxu0 0
      %3170 = vmatpush.bf16.msra.mxu0 0
      %3171 = vmatpush.bf16.msra.mxu0 0
      %3172 = vmatpush.bf16.msra.mxu0 %v3163
      %3173 = vmatmul.bf16.gmra.mxu0 %v3109
      %v3174 = vpop.f32.mrf.mxu0
      %v3175 = vadd.f32 0.0, %v3174
      %v3176 = vpop.f32.mrf.mxu0
      %v3177 = vadd.f32 0.0, %v3176
      %3178 = vmatmul.bf16.gmra.mxu0 %v3112
      %v3179 = vpop.f32.mrf.mxu0
      %v3180 = vadd.f32 0.0, %v3179
      %v3181 = vpop.f32.mrf.mxu0
      %v3182 = vadd.f32 0.0, %v3181
      %3183 = vmatmul.bf16.gmra.mxu0 %v3115
      %v3184 = vpop.f32.mrf.mxu0
      %v3185 = vadd.f32 0.0, %v3184
      %v3186 = vpop.f32.mrf.mxu0
      %v3187 = vadd.f32 0.0, %v3186
      %3188 = vmatmul.bf16.gmra.mxu0 %v3118
      %v3189 = vpop.f32.mrf.mxu0
      %v3190 = vadd.f32 0.0, %v3189
      %v3191 = vpop.f32.mrf.mxu0
      %v3192 = vadd.f32 0.0, %v3191
      %3193 = vmatmul.bf16.gmra.mxu0 %v3121
      %v3194 = vpop.f32.mrf.mxu0
      %v3195 = vadd.f32 0.0, %v3194
      %v3196 = vpop.f32.mrf.mxu0
      %v3197 = vadd.f32 0.0, %v3196
      %3198 = vmatmul.bf16.gmra.mxu0 %v3124
      %v3199 = vpop.f32.mrf.mxu0
      %v3200 = vadd.f32 0.0, %v3199
      %v3201 = vpop.f32.mrf.mxu0
      %v3202 = vadd.f32 0.0, %v3201
      %3203 = vmatmul.bf16.gmra.mxu0 %v3127
      %v3204 = vpop.f32.mrf.mxu0
      %v3205 = vadd.f32 0.0, %v3204
      %v3206 = vpop.f32.mrf.mxu0
      %v3207 = vadd.f32 0.0, %v3206
      %3208 = vmatmul.bf16.gmra.mxu0 %v3130
      %v3209 = vpop.f32.mrf.mxu0
      %v3210 = vadd.f32 0.0, %v3209
      %v3211 = vpop.f32.mrf.mxu0
      %v3212 = vadd.f32 0.0, %v3211
      %3213 = vmatmul.bf16.gmra.mxu0 %v3133
      %v3214 = vpop.f32.mrf.mxu0
      %v3215 = vadd.f32 0.0, %v3214
      %v3216 = vpop.f32.mrf.mxu0
      %v3217 = vadd.f32 0.0, %v3216
      %3218 = vmatmul.bf16.gmra.mxu0 %v3136
      %v3219 = vpop.f32.mrf.mxu0
      %v3220 = vadd.f32 0.0, %v3219
      %v3221 = vpop.f32.mrf.mxu0
      %v3222 = vadd.f32 0.0, %v3221
      %3223 = vmatmul.bf16.gmra.mxu0 %v3139
      %v3224 = vpop.f32.mrf.mxu0
      %v3225 = vadd.f32 0.0, %v3224
      %v3226 = vpop.f32.mrf.mxu0
      %v3227 = vadd.f32 0.0, %v3226
      %3228 = vmatmul.bf16.gmra.mxu0 %v3142
      %v3229 = vpop.f32.mrf.mxu0
      %v3230 = vadd.f32 0.0, %v3229
      %v3231 = vpop.f32.mrf.mxu0
      %v3232 = vadd.f32 0.0, %v3231
      %3233 = vmatmul.bf16.gmra.mxu0 %v3145
      %v3234 = vpop.f32.mrf.mxu0
      %v3235 = vadd.f32 0.0, %v3234
      %v3236 = vpop.f32.mrf.mxu0
      %v3237 = vadd.f32 0.0, %v3236
      %3238 = vmatmul.bf16.gmra.mxu0 %v3148
      %v3239 = vpop.f32.mrf.mxu0
      %v3240 = vadd.f32 0.0, %v3239
      %v3241 = vpop.f32.mrf.mxu0
      %v3242 = vadd.f32 0.0, %v3241
      %3243 = vmatmul.bf16.gmra.mxu0 %v3151
      %v3244 = vpop.f32.mrf.mxu0
      %v3245 = vadd.f32 0.0, %v3244
      %v3246 = vpop.f32.mrf.mxu0
      %v3247 = vadd.f32 0.0, %v3246
      %3248 = vmatmul.bf16.gmra.mxu0 %v3154
      %v3249 = vpop.f32.mrf.mxu0
      %v3250 = vadd.f32 0.0, %v3249
      %v3251 = vpop.f32.mrf.mxu0
      %v3252 = vadd.f32 0.0, %v3251
      %3253 = vmatmul.bf16.gmra.mxu0 %v3157
      %v3254 = vpop.f32.mrf.mxu0
      %v3255 = vadd.f32 0.0, %v3254
      %v3256 = vpop.f32.mrf.mxu0
      %v3257 = vadd.f32 0.0, %v3256
      %3258 = vmatmul.bf16.gmra.mxu0 %v3160
      %v3259 = vpop.f32.mrf.mxu0
      %v3260 = vadd.f32 0.0, %v3259
      %v3261 = vpop.f32.mrf.mxu0
      %v3262 = vadd.f32 0.0, %v3261
      %3263 = vdwg.mxu0
      %v3264 = vld [vmem:[#allocation3] sm:$0xff]
      %v3265 = vld [vmem:[#allocation3 + $0x8] sm:$0xff]
      %v3266 = vld [vmem:[#allocation3 + $0x10] sm:$0xff]
      %v3267 = vld [vmem:[#allocation3 + $0x18] sm:$0xff]
      %v3268 = vld [vmem:[#allocation3 + $0x20] sm:$0xff]
      %v3269 = vld [vmem:[#allocation3 + $0x28] sm:$0xff]
      %v3270 = vld [vmem:[#allocation3 + $0x30] sm:$0xff]
      %v3271 = vld [vmem:[#allocation3 + $0x38] sm:$0xff]
      %v3272 = vld [vmem:[#allocation3 + $0x40] sm:$0xff]
      %v3273 = vld [vmem:[#allocation3 + $0x48] sm:$0xff]
      %v3274 = vld [vmem:[#allocation3 + $0x50] sm:$0xff]
      %v3275 = vld [vmem:[#allocation3 + $0x58] sm:$0xff]
      %v3276 = vld [vmem:[#allocation3 + $0x60] sm:$0xff]
      %v3277 = vld [vmem:[#allocation3 + $0x68] sm:$0xff]
      %v3278 = vld [vmem:[#allocation3 + $0x70] sm:$0xff]
      %v3279 = vld [vmem:[#allocation3 + $0x78] sm:$0xff]
      %v3280 = vld [vmem:[#allocation3 + $0x80] sm:$0xff]
      %v3281 = vld [vmem:[#allocation3 + $0x88] sm:$0xff]
      %v3282 = vld [vmem:[#allocation3 + $0x90] sm:$0xff]
      %v3283 = vld [vmem:[#allocation3 + $0x98] sm:$0xff]
      %v3284 = vld [vmem:[#allocation3 + $0xa0] sm:$0xff]
      %v3285 = vld [vmem:[#allocation3 + $0xa8] sm:$0xff]
      %v3286 = vld [vmem:[#allocation3 + $0xb0] sm:$0xff]
      %v3287 = vld [vmem:[#allocation3 + $0xb8] sm:$0xff]
      %v3288 = vld [vmem:[#allocation3 + $0xc0] sm:$0xff]
      %v3289 = vld [vmem:[#allocation3 + $0xc8] sm:$0xff]
      %v3290 = vld [vmem:[#allocation3 + $0xd0] sm:$0xff]
      %v3291 = vld [vmem:[#allocation3 + $0xd8] sm:$0xff]
      %v3292 = vld [vmem:[#allocation3 + $0xe0] sm:$0xff]
      %v3293 = vld [vmem:[#allocation3 + $0xe8] sm:$0xff]
      %v3294 = vld [vmem:[#allocation3 + $0xf0] sm:$0xff]
      %v3295 = vld [vmem:[#allocation3 + $0xf8] sm:$0xff]
      %v3296 = vld [vmem:[#allocation3 + $0x100] sm:$0xff]
      %v3297 = vld [vmem:[#allocation3 + $0x108] sm:$0xff]
      %v3298 = vld [vmem:[#allocation3 + $0x110] sm:$0xff]
      %v3299 = vld [vmem:[#allocation3 + $0x118] sm:$0xff]
      %v3300 = vadd.f32 %v3264, %v3175
      %v3301 = vadd.f32 %v3265, %v3177
      %v3302 = vadd.f32 %v3266, %v3180
      %v3303 = vadd.f32 %v3267, %v3182
      %v3304 = vadd.f32 %v3268, %v3185
      %v3305 = vadd.f32 %v3269, %v3187
      %v3306 = vadd.f32 %v3270, %v3190
      %v3307 = vadd.f32 %v3271, %v3192
      %v3308 = vadd.f32 %v3272, %v3195
      %v3309 = vadd.f32 %v3273, %v3197
      %v3310 = vadd.f32 %v3274, %v3200
      %v3311 = vadd.f32 %v3275, %v3202
      %v3312 = vadd.f32 %v3276, %v3205
      %v3313 = vadd.f32 %v3277, %v3207
      %v3314 = vadd.f32 %v3278, %v3210
      %v3315 = vadd.f32 %v3279, %v3212
      %v3316 = vadd.f32 %v3280, %v3215
      %v3317 = vadd.f32 %v3281, %v3217
      %v3318 = vadd.f32 %v3282, %v3220
      %v3319 = vadd.f32 %v3283, %v3222
      %v3320 = vadd.f32 %v3284, %v3225
      %v3321 = vadd.f32 %v3285, %v3227
      %v3322 = vadd.f32 %v3286, %v3230
      %v3323 = vadd.f32 %v3287, %v3232
      %v3324 = vadd.f32 %v3288, %v3235
      %v3325 = vadd.f32 %v3289, %v3237
      %v3326 = vadd.f32 %v3290, %v3240
      %v3327 = vadd.f32 %v3291, %v3242
      %v3328 = vadd.f32 %v3292, %v3245
      %v3329 = vadd.f32 %v3293, %v3247
      %v3330 = vadd.f32 %v3294, %v3250
      %v3331 = vadd.f32 %v3295, %v3252
      %v3332 = vadd.f32 %v3296, %v3255
      %v3333 = vadd.f32 %v3297, %v3257
      %v3334 = vadd.f32 %v3298, %v3260
      %v3335 = vadd.f32 %v3299, %v3262
      %3336 = vst.msk [vmem:[#allocation3] sm:$0xff] %vm2199, %v3300
      %3337 = vst.msk [vmem:[#allocation3 + $0x8] sm:$0xff] %vm2199, %v3301
      %3338 = vst.msk [vmem:[#allocation3 + $0x10] sm:$0xff] %vm2199, %v3302
      %3339 = vst.msk [vmem:[#allocation3 + $0x18] sm:$0xff] %vm2199, %v3303
      %3340 = vst.msk [vmem:[#allocation3 + $0x20] sm:$0xff] %vm2199, %v3304
      %3341 = vst.msk [vmem:[#allocation3 + $0x28] sm:$0xff] %vm2199, %v3305
      %3342 = vst.msk [vmem:[#allocation3 + $0x30] sm:$0xff] %vm2199, %v3306
      %3343 = vst.msk [vmem:[#allocation3 + $0x38] sm:$0xff] %vm2199, %v3307
      %3344 = vst.msk [vmem:[#allocation3 + $0x40] sm:$0xff] %vm2199, %v3308
      %3345 = vst.msk [vmem:[#allocation3 + $0x48] sm:$0xff] %vm2199, %v3309
      %3346 = vst.msk [vmem:[#allocation3 + $0x50] sm:$0xff] %vm2199, %v3310
      %3347 = vst.msk [vmem:[#allocation3 + $0x58] sm:$0xff] %vm2199, %v3311
      %3348 = vst.msk [vmem:[#allocation3 + $0x60] sm:$0xff] %vm2199, %v3312
      %3349 = vst.msk [vmem:[#allocation3 + $0x68] sm:$0xff] %vm2199, %v3313
      %3350 = vst.msk [vmem:[#allocation3 + $0x70] sm:$0xff] %vm2199, %v3314
      %3351 = vst.msk [vmem:[#allocation3 + $0x78] sm:$0xff] %vm2199, %v3315
      %3352 = vst.msk [vmem:[#allocation3 + $0x80] sm:$0xff] %vm2199, %v3316
      %3353 = vst.msk [vmem:[#allocation3 + $0x88] sm:$0xff] %vm2199, %v3317
      %3354 = vst.msk [vmem:[#allocation3 + $0x90] sm:$0xff] %vm2199, %v3318
      %3355 = vst.msk [vmem:[#allocation3 + $0x98] sm:$0xff] %vm2199, %v3319
      %3356 = vst.msk [vmem:[#allocation3 + $0xa0] sm:$0xff] %vm2199, %v3320
      %3357 = vst.msk [vmem:[#allocation3 + $0xa8] sm:$0xff] %vm2199, %v3321
      %3358 = vst.msk [vmem:[#allocation3 + $0xb0] sm:$0xff] %vm2199, %v3322
      %3359 = vst.msk [vmem:[#allocation3 + $0xb8] sm:$0xff] %vm2199, %v3323
      %3360 = vst.msk [vmem:[#allocation3 + $0xc0] sm:$0xff] %vm2199, %v3324
      %3361 = vst.msk [vmem:[#allocation3 + $0xc8] sm:$0xff] %vm2199, %v3325
      %3362 = vst.msk [vmem:[#allocation3 + $0xd0] sm:$0xff] %vm2199, %v3326
      %3363 = vst.msk [vmem:[#allocation3 + $0xd8] sm:$0xff] %vm2199, %v3327
      %3364 = vst.msk [vmem:[#allocation3 + $0xe0] sm:$0xff] %vm2199, %v3328
      %3365 = vst.msk [vmem:[#allocation3 + $0xe8] sm:$0xff] %vm2199, %v3329
      %3366 = vst.msk [vmem:[#allocation3 + $0xf0] sm:$0xff] %vm2199, %v3330
      %3367 = vst.msk [vmem:[#allocation3 + $0xf8] sm:$0xff] %vm2199, %v3331
      %3368 = vst.msk [vmem:[#allocation3 + $0x100] sm:$0xff] %vm2199, %v3332
      %3369 = vst.msk [vmem:[#allocation3 + $0x108] sm:$0xff] %vm2199, %v3333
      %3370 = vst.msk [vmem:[#allocation3 + $0x110] sm:$0xff] %vm2199, %v3334
      %3371 = vst.msk [vmem:[#allocation3 + $0x118] sm:$0xff] %vm2199, %v3335
      %v3372 = vld [vmem:[#allocation2 + $0x8] sm:$0xe]
      %v3373 = vld [vmem:[#allocation2 + $0xc] sm:$0xf]
      %v3374 = vld [vmem:[#allocation2 + $0x10] sm:$0xf]
      %v3375 = vld [vmem:[#allocation2 + $0x14] sm:$0xf]
      %v3376 = vld [vmem:[#allocation2 + $0x18] sm:$0xf]
      %v3377 = vld [vmem:[#allocation2 + $0x1c] sm:$0xf]
      %v3378 = vld [vmem:[#allocation2 + $0x20] sm:$0xf]
      %v3379 = vld [vmem:[#allocation2 + $0x24] sm:$0xf]
      %v3380 = vld [vmem:[#allocation2 + $0x28] sm:$0xf]
      %v3381 = vld [vmem:[#allocation2 + $0x2c] sm:$0xf]
      %v3382 = vld [vmem:[#allocation2 + $0x30] sm:$0xf]
      %v3383 = vld [vmem:[#allocation2 + $0x34] sm:$0xf]
      %v3384 = vld [vmem:[#allocation2 + $0x38] sm:$0xf]
      %v3385 = vld [vmem:[#allocation2 + $0x3c] sm:$0xf]
      %v3386 = vld [vmem:[#allocation2 + $0x40] sm:$0xf]
      %v3387 = vld [vmem:[#allocation2 + $0x44] sm:$0xf]
      %v3388 = vld [vmem:[#allocation2 + $0x48] sm:$0xf]
      %v3389 = vld [vmem:[#allocation2 + $0x4c] sm:$0xf]
      %v3390 = vld [vmem:[#allocation2 + $0x50] sm:$0xf]
      %v3391 = vld [vmem:[#allocation2 + $0x54] sm:$0xf]
      %v3392 = vld [vmem:[#allocation2 + $0x58] sm:$0xf]
      %v3393 = vld [vmem:[#allocation2 + $0x5c] sm:$0xf]
      %v3394 = vld [vmem:[#allocation2 + $0x60] sm:$0xf]
      %v3395 = vld [vmem:[#allocation2 + $0x64] sm:$0xf]
      %v3396 = vld [vmem:[#allocation2 + $0x68] sm:$0xf]
      %v3397 = vld [vmem:[#allocation2 + $0x6c] sm:$0xf]
      %v3398 = vld [vmem:[#allocation2 + $0x70] sm:$0xf]
      %v3399 = vld [vmem:[#allocation2 + $0x74] sm:$0xf]
      %v3400 = vld [vmem:[#allocation2 + $0x78] sm:$0xf]
      %v3401 = vld [vmem:[#allocation2 + $0x7c] sm:$0xf]
      %v3402 = vld [vmem:[#allocation2 + $0x80] sm:$0xf]
      %v3403 = vld [vmem:[#allocation2 + $0x84] sm:$0xf]
      %v3404 = vld [vmem:[#allocation2 + $0x88] sm:$0xf]
      %v3405 = vld [vmem:[#allocation2 + $0x8c] sm:$0xf]
      %v3406 = vld [vmem:[#allocation2 + $0x90] sm:$0xf]
      %v3407 = vld [vmem:[#allocation2 + $0x94] sm:$0xf]
      %v3408 = vld [vmem:[#allocation2 + $0x98] sm:$0x1]
      %s3409 = scalar_lea.vmem %s1, 6
      %v3410 = vld [vmem:[%s3409] sm:$0x3]
      %v3448 = vunpack.c.l.b16 %v3372
      %v3449 = vunpack.c.l.b16 %v3373
      %v3450 = vunpack.c.l.b16 %v3374
      %v3451 = vunpack.c.l.b16 %v3375
      %v3452 = vunpack.c.l.b16 %v3376
      %v3453 = vunpack.c.l.b16 %v3377
      %v3454 = vunpack.c.l.b16 %v3378
      %v3455 = vunpack.c.l.b16 %v3379
      %v3456 = vunpack.c.l.b16 %v3380
      %v3457 = vunpack.c.l.b16 %v3381
      %v3458 = vunpack.c.l.b16 %v3382
      %v3459 = vunpack.c.l.b16 %v3383
      %v3460 = vunpack.c.l.b16 %v3384
      %v3461 = vunpack.c.l.b16 %v3385
      %v3462 = vunpack.c.l.b16 %v3386
      %v3463 = vunpack.c.l.b16 %v3387
      %v3464 = vunpack.c.l.b16 %v3388
      %v3465 = vunpack.c.l.b16 %v3389
      %v3466 = vunpack.c.l.b16 %v3390
      %v3467 = vunpack.c.l.b16 %v3391
      %v3468 = vunpack.c.l.b16 %v3392
      %v3469 = vunpack.c.l.b16 %v3393
      %v3470 = vunpack.c.l.b16 %v3394
      %v3471 = vunpack.c.l.b16 %v3395
      %v3472 = vunpack.c.l.b16 %v3396
      %v3473 = vunpack.c.l.b16 %v3397
      %v3474 = vunpack.c.l.b16 %v3398
      %v3475 = vunpack.c.l.b16 %v3399
      %v3476 = vunpack.c.l.b16 %v3400
      %v3477 = vunpack.c.l.b16 %v3401
      %v3478 = vunpack.c.l.b16 %v3402
      %v3479 = vunpack.c.l.b16 %v3403
      %v3480 = vunpack.c.l.b16 %v3404
      %v3481 = vunpack.c.l.b16 %v3405
      %v3482 = vunpack.c.l.b16 %v3406
      %v3483 = vunpack.c.l.b16 %v3407
      %v3484 = vunpack.c.l.b16 %v3408
      %v3485 = vpack.c.b16 %v3449, %v3448
      %v3486 = vpack.c.b16 %v3451, %v3450
      %v3487 = vpack.c.b16 %v3453, %v3452
      %v3488 = vpack.c.b16 %v3455, %v3454
      %v3489 = vpack.c.b16 %v3457, %v3456
      %v3490 = vpack.c.b16 %v3459, %v3458
      %v3491 = vpack.c.b16 %v3461, %v3460
      %v3492 = vpack.c.b16 %v3463, %v3462
      %v3493 = vpack.c.b16 %v3465, %v3464
      %v3494 = vpack.c.b16 %v3467, %v3466
      %v3495 = vpack.c.b16 %v3469, %v3468
      %v3496 = vpack.c.b16 %v3471, %v3470
      %v3497 = vpack.c.b16 %v3473, %v3472
      %v3498 = vpack.c.b16 %v3475, %v3474
      %v3499 = vpack.c.b16 %v3477, %v3476
      %v3500 = vpack.c.b16 %v3479, %v3478
      %v3501 = vpack.c.b16 %v3481, %v3480
      %v3502 = vpack.c.b16 %v3483, %v3482
      %v3503 = vpack.c.b16 %v3484, %v3484
      %v3504 = vrot.slane %v3485, 1
      %v3505 = vrot.slane %v3486, 1
      %v3506 = vsel %vm3070, %v3504, %v3505
      %v3507 = vrot.slane %v3487, 1
      %v3508 = vsel %vm3070, %v3505, %v3507
      %v3509 = vrot.slane %v3488, 1
      %v3510 = vsel %vm3070, %v3507, %v3509
      %v3511 = vrot.slane %v3489, 1
      %v3512 = vsel %vm3070, %v3509, %v3511
      %v3513 = vrot.slane %v3490, 1
      %v3514 = vsel %vm3070, %v3511, %v3513
      %v3515 = vrot.slane %v3491, 1
      %v3516 = vsel %vm3070, %v3513, %v3515
      %v3517 = vrot.slane %v3492, 1
      %v3518 = vsel %vm3070, %v3515, %v3517
      %v3519 = vrot.slane %v3493, 1
      %v3520 = vsel %vm3070, %v3517, %v3519
      %v3521 = vrot.slane %v3494, 1
      %v3522 = vsel %vm3070, %v3519, %v3521
      %v3523 = vrot.slane %v3495, 1
      %v3524 = vsel %vm3070, %v3521, %v3523
      %v3525 = vrot.slane %v3496, 1
      %v3526 = vsel %vm3070, %v3523, %v3525
      %v3527 = vrot.slane %v3497, 1
      %v3528 = vsel %vm3070, %v3525, %v3527
      %v3529 = vrot.slane %v3498, 1
      %v3530 = vsel %vm3070, %v3527, %v3529
      %v3531 = vrot.slane %v3499, 1
      %v3532 = vsel %vm3070, %v3529, %v3531
      %v3533 = vrot.slane %v3500, 1
      %v3534 = vsel %vm3070, %v3531, %v3533
      %v3535 = vrot.slane %v3501, 1
      %v3536 = vsel %vm3070, %v3533, %v3535
      %v3537 = vrot.slane %v3502, 1
      %v3538 = vsel %vm3070, %v3535, %v3537
      %v3539 = vrot.slane %v3503, 1
      %v3540 = vsel %vm3070, %v3537, %v3539
      %v3542 = vsel %vm2199, %v3506, 0
      %v3545 = vsel %vm2199, %v3508, 0
      %v3548 = vsel %vm2199, %v3510, 0
      %v3551 = vsel %vm2199, %v3512, 0
      %v3554 = vsel %vm2199, %v3514, 0
      %v3557 = vsel %vm2199, %v3516, 0
      %v3560 = vsel %vm2199, %v3518, 0
      %v3563 = vsel %vm2199, %v3520, 0
      %v3566 = vsel %vm2199, %v3522, 0
      %v3569 = vsel %vm2199, %v3524, 0
      %v3572 = vsel %vm2199, %v3526, 0
      %v3575 = vsel %vm2199, %v3528, 0
      %v3578 = vsel %vm2199, %v3530, 0
      %v3581 = vsel %vm2199, %v3532, 0
      %v3584 = vsel %vm2199, %v3534, 0
      %v3587 = vsel %vm2199, %v3536, 0
      %v3590 = vsel %vm2199, %v3538, 0
      %v3593 = vsel %vm2199, %v3540, 0
      %v3596 = vsel %vm2254, %v3410, 0
      %3598 = vmatpush.bf16.msra.mxu0 0
      %3599 = vmatpush.bf16.msra.mxu0 0
      %3600 = vmatpush.bf16.msra.mxu0 0
      %3601 = vmatpush.bf16.msra.mxu0 0
      %3602 = vmatpush.bf16.msra.mxu0 0
      %3603 = vmatpush.bf16.msra.mxu0 0
      %3604 = vmatpush.bf16.msra.mxu0 0
      %3605 = vmatpush.bf16.msra.mxu0 %v3596
      %3606 = vmatmul.bf16.gmra.mxu0 %v3542
      %v3607 = vpop.f32.mrf.mxu0
      %v3608 = vadd.f32 0.0, %v3607
      %v3609 = vpop.f32.mrf.mxu0
      %v3610 = vadd.f32 0.0, %v3609
      %3611 = vmatmul.bf16.gmra.mxu0 %v3545
      %v3612 = vpop.f32.mrf.mxu0
      %v3613 = vadd.f32 0.0, %v3612
      %v3614 = vpop.f32.mrf.mxu0
      %v3615 = vadd.f32 0.0, %v3614
      %3616 = vmatmul.bf16.gmra.mxu0 %v3548
      %v3617 = vpop.f32.mrf.mxu0
      %v3618 = vadd.f32 0.0, %v3617
      %v3619 = vpop.f32.mrf.mxu0
      %v3620 = vadd.f32 0.0, %v3619
      %3621 = vmatmul.bf16.gmra.mxu0 %v3551
      %v3622 = vpop.f32.mrf.mxu0
      %v3623 = vadd.f32 0.0, %v3622
      %v3624 = vpop.f32.mrf.mxu0
      %v3625 = vadd.f32 0.0, %v3624
      %3626 = vmatmul.bf16.gmra.mxu0 %v3554
      %v3627 = vpop.f32.mrf.mxu0
      %v3628 = vadd.f32 0.0, %v3627
      %v3629 = vpop.f32.mrf.mxu0
      %v3630 = vadd.f32 0.0, %v3629
      %3631 = vmatmul.bf16.gmra.mxu0 %v3557
      %v3632 = vpop.f32.mrf.mxu0
      %v3633 = vadd.f32 0.0, %v3632
      %v3634 = vpop.f32.mrf.mxu0
      %v3635 = vadd.f32 0.0, %v3634
      %3636 = vmatmul.bf16.gmra.mxu0 %v3560
      %v3637 = vpop.f32.mrf.mxu0
      %v3638 = vadd.f32 0.0, %v3637
      %v3639 = vpop.f32.mrf.mxu0
      %v3640 = vadd.f32 0.0, %v3639
      %3641 = vmatmul.bf16.gmra.mxu0 %v3563
      %v3642 = vpop.f32.mrf.mxu0
      %v3643 = vadd.f32 0.0, %v3642
      %v3644 = vpop.f32.mrf.mxu0
      %v3645 = vadd.f32 0.0, %v3644
      %3646 = vmatmul.bf16.gmra.mxu0 %v3566
      %v3647 = vpop.f32.mrf.mxu0
      %v3648 = vadd.f32 0.0, %v3647
      %v3649 = vpop.f32.mrf.mxu0
      %v3650 = vadd.f32 0.0, %v3649
      %3651 = vmatmul.bf16.gmra.mxu0 %v3569
      %v3652 = vpop.f32.mrf.mxu0
      %v3653 = vadd.f32 0.0, %v3652
      %v3654 = vpop.f32.mrf.mxu0
      %v3655 = vadd.f32 0.0, %v3654
      %3656 = vmatmul.bf16.gmra.mxu0 %v3572
      %v3657 = vpop.f32.mrf.mxu0
      %v3658 = vadd.f32 0.0, %v3657
      %v3659 = vpop.f32.mrf.mxu0
      %v3660 = vadd.f32 0.0, %v3659
      %3661 = vmatmul.bf16.gmra.mxu0 %v3575
      %v3662 = vpop.f32.mrf.mxu0
      %v3663 = vadd.f32 0.0, %v3662
      %v3664 = vpop.f32.mrf.mxu0
      %v3665 = vadd.f32 0.0, %v3664
      %3666 = vmatmul.bf16.gmra.mxu0 %v3578
      %v3667 = vpop.f32.mrf.mxu0
      %v3668 = vadd.f32 0.0, %v3667
      %v3669 = vpop.f32.mrf.mxu0
      %v3670 = vadd.f32 0.0, %v3669
      %3671 = vmatmul.bf16.gmra.mxu0 %v3581
      %v3672 = vpop.f32.mrf.mxu0
      %v3673 = vadd.f32 0.0, %v3672
      %v3674 = vpop.f32.mrf.mxu0
      %v3675 = vadd.f32 0.0, %v3674
      %3676 = vmatmul.bf16.gmra.mxu0 %v3584
      %v3677 = vpop.f32.mrf.mxu0
      %v3678 = vadd.f32 0.0, %v3677
      %v3679 = vpop.f32.mrf.mxu0
      %v3680 = vadd.f32 0.0, %v3679
      %3681 = vmatmul.bf16.gmra.mxu0 %v3587
      %v3682 = vpop.f32.mrf.mxu0
      %v3683 = vadd.f32 0.0, %v3682
      %v3684 = vpop.f32.mrf.mxu0
      %v3685 = vadd.f32 0.0, %v3684
      %3686 = vmatmul.bf16.gmra.mxu0 %v3590
      %v3687 = vpop.f32.mrf.mxu0
      %v3688 = vadd.f32 0.0, %v3687
      %v3689 = vpop.f32.mrf.mxu0
      %v3690 = vadd.f32 0.0, %v3689
      %3691 = vmatmul.bf16.gmra.mxu0 %v3593
      %v3692 = vpop.f32.mrf.mxu0
      %v3693 = vadd.f32 0.0, %v3692
      %v3694 = vpop.f32.mrf.mxu0
      %v3695 = vadd.f32 0.0, %v3694
      %3696 = vdwg.mxu0
      %v3697 = vld [vmem:[#allocation3] sm:$0xff]
      %v3698 = vld [vmem:[#allocation3 + $0x8] sm:$0xff]
      %v3699 = vld [vmem:[#allocation3 + $0x10] sm:$0xff]
      %v3700 = vld [vmem:[#allocation3 + $0x18] sm:$0xff]
      %v3701 = vld [vmem:[#allocation3 + $0x20] sm:$0xff]
      %v3702 = vld [vmem:[#allocation3 + $0x28] sm:$0xff]
      %v3703 = vld [vmem:[#allocation3 + $0x30] sm:$0xff]
      %v3704 = vld [vmem:[#allocation3 + $0x38] sm:$0xff]
      %v3705 = vld [vmem:[#allocation3 + $0x40] sm:$0xff]
      %v3706 = vld [vmem:[#allocation3 + $0x48] sm:$0xff]
      %v3707 = vld [vmem:[#allocation3 + $0x50] sm:$0xff]
      %v3708 = vld [vmem:[#allocation3 + $0x58] sm:$0xff]
      %v3709 = vld [vmem:[#allocation3 + $0x60] sm:$0xff]
      %v3710 = vld [vmem:[#allocation3 + $0x68] sm:$0xff]
      %v3711 = vld [vmem:[#allocation3 + $0x70] sm:$0xff]
      %v3712 = vld [vmem:[#allocation3 + $0x78] sm:$0xff]
      %v3713 = vld [vmem:[#allocation3 + $0x80] sm:$0xff]
      %v3714 = vld [vmem:[#allocation3 + $0x88] sm:$0xff]
      %v3715 = vld [vmem:[#allocation3 + $0x90] sm:$0xff]
      %v3716 = vld [vmem:[#allocation3 + $0x98] sm:$0xff]
      %v3717 = vld [vmem:[#allocation3 + $0xa0] sm:$0xff]
      %v3718 = vld [vmem:[#allocation3 + $0xa8] sm:$0xff]
      %v3719 = vld [vmem:[#allocation3 + $0xb0] sm:$0xff]
      %v3720 = vld [vmem:[#allocation3 + $0xb8] sm:$0xff]
      %v3721 = vld [vmem:[#allocation3 + $0xc0] sm:$0xff]
      %v3722 = vld [vmem:[#allocation3 + $0xc8] sm:$0xff]
      %v3723 = vld [vmem:[#allocation3 + $0xd0] sm:$0xff]
      %v3724 = vld [vmem:[#allocation3 + $0xd8] sm:$0xff]
      %v3725 = vld [vmem:[#allocation3 + $0xe0] sm:$0xff]
      %v3726 = vld [vmem:[#allocation3 + $0xe8] sm:$0xff]
      %v3727 = vld [vmem:[#allocation3 + $0xf0] sm:$0xff]
      %v3728 = vld [vmem:[#allocation3 + $0xf8] sm:$0xff]
      %v3729 = vld [vmem:[#allocation3 + $0x100] sm:$0xff]
      %v3730 = vld [vmem:[#allocation3 + $0x108] sm:$0xff]
      %v3731 = vld [vmem:[#allocation3 + $0x110] sm:$0xff]
      %v3732 = vld [vmem:[#allocation3 + $0x118] sm:$0xff]
      %v3733 = vadd.f32 %v3697, %v3608
      %v3734 = vadd.f32 %v3698, %v3610
      %v3735 = vadd.f32 %v3699, %v3613
      %v3736 = vadd.f32 %v3700, %v3615
      %v3737 = vadd.f32 %v3701, %v3618
      %v3738 = vadd.f32 %v3702, %v3620
      %v3739 = vadd.f32 %v3703, %v3623
      %v3740 = vadd.f32 %v3704, %v3625
      %v3741 = vadd.f32 %v3705, %v3628
      %v3742 = vadd.f32 %v3706, %v3630
      %v3743 = vadd.f32 %v3707, %v3633
      %v3744 = vadd.f32 %v3708, %v3635
      %v3745 = vadd.f32 %v3709, %v3638
      %v3746 = vadd.f32 %v3710, %v3640
      %v3747 = vadd.f32 %v3711, %v3643
      %v3748 = vadd.f32 %v3712, %v3645
      %v3749 = vadd.f32 %v3713, %v3648
      %v3750 = vadd.f32 %v3714, %v3650
      %v3751 = vadd.f32 %v3715, %v3653
      %v3752 = vadd.f32 %v3716, %v3655
      %v3753 = vadd.f32 %v3717, %v3658
      %v3754 = vadd.f32 %v3718, %v3660
      %v3755 = vadd.f32 %v3719, %v3663
      %v3756 = vadd.f32 %v3720, %v3665
      %v3757 = vadd.f32 %v3721, %v3668
      %v3758 = vadd.f32 %v3722, %v3670
      %v3759 = vadd.f32 %v3723, %v3673
      %v3760 = vadd.f32 %v3724, %v3675
      %v3761 = vadd.f32 %v3725, %v3678
      %v3762 = vadd.f32 %v3726, %v3680
      %v3763 = vadd.f32 %v3727, %v3683
      %v3764 = vadd.f32 %v3728, %v3685
      %v3765 = vadd.f32 %v3729, %v3688
      %v3766 = vadd.f32 %v3730, %v3690
      %v3767 = vadd.f32 %v3731, %v3693
      %v3768 = vadd.f32 %v3732, %v3695
      %3769 = vst.msk [vmem:[#allocation3] sm:$0xff] %vm2199, %v3733
      %3770 = vst.msk [vmem:[#allocation3 + $0x8] sm:$0xff] %vm2199, %v3734
      %3771 = vst.msk [vmem:[#allocation3 + $0x10] sm:$0xff] %vm2199, %v3735
      %3772 = vst.msk [vmem:[#allocation3 + $0x18] sm:$0xff] %vm2199, %v3736
      %3773 = vst.msk [vmem:[#allocation3 + $0x20] sm:$0xff] %vm2199, %v3737
      %3774 = vst.msk [vmem:[#allocation3 + $0x28] sm:$0xff] %vm2199, %v3738
      %3775 = vst.msk [vmem:[#allocation3 + $0x30] sm:$0xff] %vm2199, %v3739
      %3776 = vst.msk [vmem:[#allocation3 + $0x38] sm:$0xff] %vm2199, %v3740
      %3777 = vst.msk [vmem:[#allocation3 + $0x40] sm:$0xff] %vm2199, %v3741
      %3778 = vst.msk [vmem:[#allocation3 + $0x48] sm:$0xff] %vm2199, %v3742
      %3779 = vst.msk [vmem:[#allocation3 + $0x50] sm:$0xff] %vm2199, %v3743
      %3780 = vst.msk [vmem:[#allocation3 + $0x58] sm:$0xff] %vm2199, %v3744
      %3781 = vst.msk [vmem:[#allocation3 + $0x60] sm:$0xff] %vm2199, %v3745
      %3782 = vst.msk [vmem:[#allocation3 + $0x68] sm:$0xff] %vm2199, %v3746
      %3783 = vst.msk [vmem:[#allocation3 + $0x70] sm:$0xff] %vm2199, %v3747
      %3784 = vst.msk [vmem:[#allocation3 + $0x78] sm:$0xff] %vm2199, %v3748
      %3785 = vst.msk [vmem:[#allocation3 + $0x80] sm:$0xff] %vm2199, %v3749
      %3786 = vst.msk [vmem:[#allocation3 + $0x88] sm:$0xff] %vm2199, %v3750
      %3787 = vst.msk [vmem:[#allocation3 + $0x90] sm:$0xff] %vm2199, %v3751
      %3788 = vst.msk [vmem:[#allocation3 + $0x98] sm:$0xff] %vm2199, %v3752
      %3789 = vst.msk [vmem:[#allocation3 + $0xa0] sm:$0xff] %vm2199, %v3753
      %3790 = vst.msk [vmem:[#allocation3 + $0xa8] sm:$0xff] %vm2199, %v3754
      %3791 = vst.msk [vmem:[#allocation3 + $0xb0] sm:$0xff] %vm2199, %v3755
      %3792 = vst.msk [vmem:[#allocation3 + $0xb8] sm:$0xff] %vm2199, %v3756
      %3793 = vst.msk [vmem:[#allocation3 + $0xc0] sm:$0xff] %vm2199, %v3757
      %3794 = vst.msk [vmem:[#allocation3 + $0xc8] sm:$0xff] %vm2199, %v3758
      %3795 = vst.msk [vmem:[#allocation3 + $0xd0] sm:$0xff] %vm2199, %v3759
      %3796 = vst.msk [vmem:[#allocation3 + $0xd8] sm:$0xff] %vm2199, %v3760
      %3797 = vst.msk [vmem:[#allocation3 + $0xe0] sm:$0xff] %vm2199, %v3761
      %3798 = vst.msk [vmem:[#allocation3 + $0xe8] sm:$0xff] %vm2199, %v3762
      %3799 = vst.msk [vmem:[#allocation3 + $0xf0] sm:$0xff] %vm2199, %v3763
      %3800 = vst.msk [vmem:[#allocation3 + $0xf8] sm:$0xff] %vm2199, %v3764
      %3801 = vst.msk [vmem:[#allocation3 + $0x100] sm:$0xff] %vm2199, %v3765
      %3802 = vst.msk [vmem:[#allocation3 + $0x108] sm:$0xff] %vm2199, %v3766
      %3803 = vst.msk [vmem:[#allocation3 + $0x110] sm:$0xff] %vm2199, %v3767
      %3804 = vst.msk [vmem:[#allocation3 + $0x118] sm:$0xff] %vm2199, %v3768
      %v3805 = vld [vmem:[#allocation2 + $0x8] sm:$0xe]
      %v3806 = vld [vmem:[#allocation2 + $0xc] sm:$0xf]
      %v3807 = vld [vmem:[#allocation2 + $0x10] sm:$0xf]
      %v3808 = vld [vmem:[#allocation2 + $0x14] sm:$0xf]
      %v3809 = vld [vmem:[#allocation2 + $0x18] sm:$0xf]
      %v3810 = vld [vmem:[#allocation2 + $0x1c] sm:$0xf]
      %v3811 = vld [vmem:[#allocation2 + $0x20] sm:$0xf]
      %v3812 = vld [vmem:[#allocation2 + $0x24] sm:$0xf]
      %v3813 = vld [vmem:[#allocation2 + $0x28] sm:$0xf]
      %v3814 = vld [vmem:[#allocation2 + $0x2c] sm:$0xf]
      %v3815 = vld [vmem:[#allocation2 + $0x30] sm:$0xf]
      %v3816 = vld [vmem:[#allocation2 + $0x34] sm:$0xf]
      %v3817 = vld [vmem:[#allocation2 + $0x38] sm:$0xf]
      %v3818 = vld [vmem:[#allocation2 + $0x3c] sm:$0xf]
      %v3819 = vld [vmem:[#allocation2 + $0x40] sm:$0xf]
      %v3820 = vld [vmem:[#allocation2 + $0x44] sm:$0xf]
      %v3821 = vld [vmem:[#allocation2 + $0x48] sm:$0xf]
      %v3822 = vld [vmem:[#allocation2 + $0x4c] sm:$0xf]
      %v3823 = vld [vmem:[#allocation2 + $0x50] sm:$0xf]
      %v3824 = vld [vmem:[#allocation2 + $0x54] sm:$0xf]
      %v3825 = vld [vmem:[#allocation2 + $0x58] sm:$0xf]
      %v3826 = vld [vmem:[#allocation2 + $0x5c] sm:$0xf]
      %v3827 = vld [vmem:[#allocation2 + $0x60] sm:$0xf]
      %v3828 = vld [vmem:[#allocation2 + $0x64] sm:$0xf]
      %v3829 = vld [vmem:[#allocation2 + $0x68] sm:$0xf]
      %v3830 = vld [vmem:[#allocation2 + $0x6c] sm:$0xf]
      %v3831 = vld [vmem:[#allocation2 + $0x70] sm:$0xf]
      %v3832 = vld [vmem:[#allocation2 + $0x74] sm:$0xf]
      %v3833 = vld [vmem:[#allocation2 + $0x78] sm:$0xf]
      %v3834 = vld [vmem:[#allocation2 + $0x7c] sm:$0xf]
      %v3835 = vld [vmem:[#allocation2 + $0x80] sm:$0xf]
      %v3836 = vld [vmem:[#allocation2 + $0x84] sm:$0xf]
      %v3837 = vld [vmem:[#allocation2 + $0x88] sm:$0xf]
      %v3838 = vld [vmem:[#allocation2 + $0x8c] sm:$0xf]
      %v3839 = vld [vmem:[#allocation2 + $0x90] sm:$0xf]
      %v3840 = vld [vmem:[#allocation2 + $0x94] sm:$0xf]
      %v3841 = vld [vmem:[#allocation2 + $0x98] sm:$0x3]
      %s3842 = scalar_lea.vmem %s1, 8
      %v3843 = vld [vmem:[%s3842] sm:$0x3]
      %v3881 = vunpack.c.l.b16 %v3805
      %v3882 = vunpack.c.l.b16 %v3806
      %v3883 = vunpack.c.l.b16 %v3807
      %v3884 = vunpack.c.l.b16 %v3808
      %v3885 = vunpack.c.l.b16 %v3809
      %v3886 = vunpack.c.l.b16 %v3810
      %v3887 = vunpack.c.l.b16 %v3811
      %v3888 = vunpack.c.l.b16 %v3812
      %v3889 = vunpack.c.l.b16 %v3813
      %v3890 = vunpack.c.l.b16 %v3814
      %v3891 = vunpack.c.l.b16 %v3815
      %v3892 = vunpack.c.l.b16 %v3816
      %v3893 = vunpack.c.l.b16 %v3817
      %v3894 = vunpack.c.l.b16 %v3818
      %v3895 = vunpack.c.l.b16 %v3819
      %v3896 = vunpack.c.l.b16 %v3820
      %v3897 = vunpack.c.l.b16 %v3821
      %v3898 = vunpack.c.l.b16 %v3822
      %v3899 = vunpack.c.l.b16 %v3823
      %v3900 = vunpack.c.l.b16 %v3824
      %v3901 = vunpack.c.l.b16 %v3825
      %v3902 = vunpack.c.l.b16 %v3826
      %v3903 = vunpack.c.l.b16 %v3827
      %v3904 = vunpack.c.l.b16 %v3828
      %v3905 = vunpack.c.l.b16 %v3829
      %v3906 = vunpack.c.l.b16 %v3830
      %v3907 = vunpack.c.l.b16 %v3831
      %v3908 = vunpack.c.l.b16 %v3832
      %v3909 = vunpack.c.l.b16 %v3833
      %v3910 = vunpack.c.l.b16 %v3834
      %v3911 = vunpack.c.l.b16 %v3835
      %v3912 = vunpack.c.l.b16 %v3836
      %v3913 = vunpack.c.l.b16 %v3837
      %v3914 = vunpack.c.l.b16 %v3838
      %v3915 = vunpack.c.l.b16 %v3839
      %v3916 = vunpack.c.l.b16 %v3840
      %v3917 = vunpack.c.l.b16 %v3841
      %v3918 = vpack.c.b16 %v3882, %v3881
      %v3919 = vpack.c.b16 %v3884, %v3883
      %v3920 = vpack.c.b16 %v3886, %v3885
      %v3921 = vpack.c.b16 %v3888, %v3887
      %v3922 = vpack.c.b16 %v3890, %v3889
      %v3923 = vpack.c.b16 %v3892, %v3891
      %v3924 = vpack.c.b16 %v3894, %v3893
      %v3925 = vpack.c.b16 %v3896, %v3895
      %v3926 = vpack.c.b16 %v3898, %v3897
      %v3927 = vpack.c.b16 %v3900, %v3899
      %v3928 = vpack.c.b16 %v3902, %v3901
      %v3929 = vpack.c.b16 %v3904, %v3903
      %v3930 = vpack.c.b16 %v3906, %v3905
      %v3931 = vpack.c.b16 %v3908, %v3907
      %v3932 = vpack.c.b16 %v3910, %v3909
      %v3933 = vpack.c.b16 %v3912, %v3911
      %v3934 = vpack.c.b16 %v3914, %v3913
      %v3935 = vpack.c.b16 %v3916, %v3915
      %v3936 = vpack.c.b16 %v3917, %v3917
      %vm3937 = vsmask.f32 6400
      %v3939 = vshrl.u32 %v3918, 16
      %v3941 = vrot.slane %v3939, 1
      %v3942 = vshll.u32 %v3918, 16
      %v3944 = vrot.slane %v3942, 2
      %v3945 = vor.u32 %v3941, %v3944
      %v3947 = vshrl.u32 %v3919, 16
      %v3949 = vrot.slane %v3947, 1
      %v3950 = vshll.u32 %v3919, 16
      %v3952 = vrot.slane %v3950, 2
      %v3953 = vor.u32 %v3949, %v3952
      %v3954 = vsel %vm3937, %v3945, %v3953
      %v3956 = vshrl.u32 %v3920, 16
      %v3958 = vrot.slane %v3956, 1
      %v3959 = vshll.u32 %v3920, 16
      %v3961 = vrot.slane %v3959, 2
      %v3962 = vor.u32 %v3958, %v3961
      %v3963 = vsel %vm3937, %v3953, %v3962
      %v3965 = vshrl.u32 %v3921, 16
      %v3967 = vrot.slane %v3965, 1
      %v3968 = vshll.u32 %v3921, 16
      %v3970 = vrot.slane %v3968, 2
      %v3971 = vor.u32 %v3967, %v3970
      %v3972 = vsel %vm3937, %v3962, %v3971
      %v3974 = vshrl.u32 %v3922, 16
      %v3976 = vrot.slane %v3974, 1
      %v3977 = vshll.u32 %v3922, 16
      %v3979 = vrot.slane %v3977, 2
      %v3980 = vor.u32 %v3976, %v3979
      %v3981 = vsel %vm3937, %v3971, %v3980
      %v3983 = vshrl.u32 %v3923, 16
      %v3985 = vrot.slane %v3983, 1
      %v3986 = vshll.u32 %v3923, 16
      %v3988 = vrot.slane %v3986, 2
      %v3989 = vor.u32 %v3985, %v3988
      %v3990 = vsel %vm3937, %v3980, %v3989
      %v3992 = vshrl.u32 %v3924, 16
      %v3994 = vrot.slane %v3992, 1
      %v3995 = vshll.u32 %v3924, 16
      %v3997 = vrot.slane %v3995, 2
      %v3998 = vor.u32 %v3994, %v3997
      %v3999 = vsel %vm3937, %v3989, %v3998
      %v4001 = vshrl.u32 %v3925, 16
      %v4003 = vrot.slane %v4001, 1
      %v4004 = vshll.u32 %v3925, 16
      %v4006 = vrot.slane %v4004, 2
      %v4007 = vor.u32 %v4003, %v4006
      %v4008 = vsel %vm3937, %v3998, %v4007
      %v4010 = vshrl.u32 %v3926, 16
      %v4012 = vrot.slane %v4010, 1
      %v4013 = vshll.u32 %v3926, 16
      %v4015 = vrot.slane %v4013, 2
      %v4016 = vor.u32 %v4012, %v4015
      %v4017 = vsel %vm3937, %v4007, %v4016
      %v4019 = vshrl.u32 %v3927, 16
      %v4021 = vrot.slane %v4019, 1
      %v4022 = vshll.u32 %v3927, 16
      %v4024 = vrot.slane %v4022, 2
      %v4025 = vor.u32 %v4021, %v4024
      %v4026 = vsel %vm3937, %v4016, %v4025
      %v4028 = vshrl.u32 %v3928, 16
      %v4030 = vrot.slane %v4028, 1
      %v4031 = vshll.u32 %v3928, 16
      %v4033 = vrot.slane %v4031, 2
      %v4034 = vor.u32 %v4030, %v4033
      %v4035 = vsel %vm3937, %v4025, %v4034
      %v4037 = vshrl.u32 %v3929, 16
      %v4039 = vrot.slane %v4037, 1
      %v4040 = vshll.u32 %v3929, 16
      %v4042 = vrot.slane %v4040, 2
      %v4043 = vor.u32 %v4039, %v4042
      %v4044 = vsel %vm3937, %v4034, %v4043
      %v4046 = vshrl.u32 %v3930, 16
      %v4048 = vrot.slane %v4046, 1
      %v4049 = vshll.u32 %v3930, 16
      %v4051 = vrot.slane %v4049, 2
      %v4052 = vor.u32 %v4048, %v4051
      %v4053 = vsel %vm3937, %v4043, %v4052
      %v4055 = vshrl.u32 %v3931, 16
      %v4057 = vrot.slane %v4055, 1
      %v4058 = vshll.u32 %v3931, 16
      %v4060 = vrot.slane %v4058, 2
      %v4061 = vor.u32 %v4057, %v4060
      %v4062 = vsel %vm3937, %v4052, %v4061
      %v4064 = vshrl.u32 %v3932, 16
      %v4066 = vrot.slane %v4064, 1
      %v4067 = vshll.u32 %v3932, 16
      %v4069 = vrot.slane %v4067, 2
      %v4070 = vor.u32 %v4066, %v4069
      %v4071 = vsel %vm3937, %v4061, %v4070
      %v4073 = vshrl.u32 %v3933, 16
      %v4075 = vrot.slane %v4073, 1
      %v4076 = vshll.u32 %v3933, 16
      %v4078 = vrot.slane %v4076, 2
      %v4079 = vor.u32 %v4075, %v4078
      %v4080 = vsel %vm3937, %v4070, %v4079
      %v4082 = vshrl.u32 %v3934, 16
      %v4084 = vrot.slane %v4082, 1
      %v4085 = vshll.u32 %v3934, 16
      %v4087 = vrot.slane %v4085, 2
      %v4088 = vor.u32 %v4084, %v4087
      %v4089 = vsel %vm3937, %v4079, %v4088
      %v4091 = vshrl.u32 %v3935, 16
      %v4093 = vrot.slane %v4091, 1
      %v4094 = vshll.u32 %v3935, 16
      %v4096 = vrot.slane %v4094, 2
      %v4097 = vor.u32 %v4093, %v4096
      %v4098 = vsel %vm3937, %v4088, %v4097
      %v4100 = vshrl.u32 %v3936, 16
      %v4102 = vrot.slane %v4100, 1
      %v4103 = vshll.u32 %v3936, 16
      %v4105 = vrot.slane %v4103, 2
      %v4106 = vor.u32 %v4102, %v4105
      %v4107 = vsel %vm3937, %v4097, %v4106
      %v4109 = vsel %vm2199, %v3954, 0
      %v4112 = vsel %vm2199, %v3963, 0
      %v4115 = vsel %vm2199, %v3972, 0
      %v4118 = vsel %vm2199, %v3981, 0
      %v4121 = vsel %vm2199, %v3990, 0
      %v4124 = vsel %vm2199, %v3999, 0
      %v4127 = vsel %vm2199, %v4008, 0
      %v4130 = vsel %vm2199, %v4017, 0
      %v4133 = vsel %vm2199, %v4026, 0
      %v4136 = vsel %vm2199, %v4035, 0
      %v4139 = vsel %vm2199, %v4044, 0
      %v4142 = vsel %vm2199, %v4053, 0
      %v4145 = vsel %vm2199, %v4062, 0
      %v4148 = vsel %vm2199, %v4071, 0
      %v4151 = vsel %vm2199, %v4080, 0
      %v4154 = vsel %vm2199, %v4089, 0
      %v4157 = vsel %vm2199, %v4098, 0
      %v4160 = vsel %vm2199, %v4107, 0
      %v4163 = vsel %vm2254, %v3843, 0
      %4165 = vmatpush.bf16.msra.mxu0 0
      %4166 = vmatpush.bf16.msra.mxu0 0
      %4167 = vmatpush.bf16.msra.mxu0 0
      %4168 = vmatpush.bf16.msra.mxu0 0
      %4169 = vmatpush.bf16.msra.mxu0 0
      %4170 = vmatpush.bf16.msra.mxu0 0
      %4171 = vmatpush.bf16.msra.mxu0 0
      %4172 = vmatpush.bf16.msra.mxu0 %v4163
      %4173 = vmatmul.bf16.gmra.mxu0 %v4109
      %v4174 = vpop.f32.mrf.mxu0
      %v4175 = vadd.f32 0.0, %v4174
      %v4176 = vpop.f32.mrf.mxu0
      %v4177 = vadd.f32 0.0, %v4176
      %4178 = vmatmul.bf16.gmra.mxu0 %v4112
      %v4179 = vpop.f32.mrf.mxu0
      %v4180 = vadd.f32 0.0, %v4179
      %v4181 = vpop.f32.mrf.mxu0
      %v4182 = vadd.f32 0.0, %v4181
      %4183 = vmatmul.bf16.gmra.mxu0 %v4115
      %v4184 = vpop.f32.mrf.mxu0
      %v4185 = vadd.f32 0.0, %v4184
      %v4186 = vpop.f32.mrf.mxu0
      %v4187 = vadd.f32 0.0, %v4186
      %4188 = vmatmul.bf16.gmra.mxu0 %v4118
      %v4189 = vpop.f32.mrf.mxu0
      %v4190 = vadd.f32 0.0, %v4189
      %v4191 = vpop.f32.mrf.mxu0
      %v4192 = vadd.f32 0.0, %v4191
      %4193 = vmatmul.bf16.gmra.mxu0 %v4121
      %v4194 = vpop.f32.mrf.mxu0
      %v4195 = vadd.f32 0.0, %v4194
      %v4196 = vpop.f32.mrf.mxu0
      %v4197 = vadd.f32 0.0, %v4196
      %4198 = vmatmul.bf16.gmra.mxu0 %v4124
      %v4199 = vpop.f32.mrf.mxu0
      %v4200 = vadd.f32 0.0, %v4199
      %v4201 = vpop.f32.mrf.mxu0
      %v4202 = vadd.f32 0.0, %v4201
      %4203 = vmatmul.bf16.gmra.mxu0 %v4127
      %v4204 = vpop.f32.mrf.mxu0
      %v4205 = vadd.f32 0.0, %v4204
      %v4206 = vpop.f32.mrf.mxu0
      %v4207 = vadd.f32 0.0, %v4206
      %4208 = vmatmul.bf16.gmra.mxu0 %v4130
      %v4209 = vpop.f32.mrf.mxu0
      %v4210 = vadd.f32 0.0, %v4209
      %v4211 = vpop.f32.mrf.mxu0
      %v4212 = vadd.f32 0.0, %v4211
      %4213 = vmatmul.bf16.gmra.mxu0 %v4133
      %v4214 = vpop.f32.mrf.mxu0
      %v4215 = vadd.f32 0.0, %v4214
      %v4216 = vpop.f32.mrf.mxu0
      %v4217 = vadd.f32 0.0, %v4216
      %4218 = vmatmul.bf16.gmra.mxu0 %v4136
      %v4219 = vpop.f32.mrf.mxu0
      %v4220 = vadd.f32 0.0, %v4219
      %v4221 = vpop.f32.mrf.mxu0
      %v4222 = vadd.f32 0.0, %v4221
      %4223 = vmatmul.bf16.gmra.mxu0 %v4139
      %v4224 = vpop.f32.mrf.mxu0
      %v4225 = vadd.f32 0.0, %v4224
      %v4226 = vpop.f32.mrf.mxu0
      %v4227 = vadd.f32 0.0, %v4226
      %4228 = vmatmul.bf16.gmra.mxu0 %v4142
      %v4229 = vpop.f32.mrf.mxu0
      %v4230 = vadd.f32 0.0, %v4229
      %v4231 = vpop.f32.mrf.mxu0
      %v4232 = vadd.f32 0.0, %v4231
      %4233 = vmatmul.bf16.gmra.mxu0 %v4145
      %v4234 = vpop.f32.mrf.mxu0
      %v4235 = vadd.f32 0.0, %v4234
      %v4236 = vpop.f32.mrf.mxu0
      %v4237 = vadd.f32 0.0, %v4236
      %4238 = vmatmul.bf16.gmra.mxu0 %v4148
      %v4239 = vpop.f32.mrf.mxu0
      %v4240 = vadd.f32 0.0, %v4239
      %v4241 = vpop.f32.mrf.mxu0
      %v4242 = vadd.f32 0.0, %v4241
      %4243 = vmatmul.bf16.gmra.mxu0 %v4151
      %v4244 = vpop.f32.mrf.mxu0
      %v4245 = vadd.f32 0.0, %v4244
      %v4246 = vpop.f32.mrf.mxu0
      %v4247 = vadd.f32 0.0, %v4246
      %4248 = vmatmul.bf16.gmra.mxu0 %v4154
      %v4249 = vpop.f32.mrf.mxu0
      %v4250 = vadd.f32 0.0, %v4249
      %v4251 = vpop.f32.mrf.mxu0
      %v4252 = vadd.f32 0.0, %v4251
      %4253 = vmatmul.bf16.gmra.mxu0 %v4157
      %v4254 = vpop.f32.mrf.mxu0
      %v4255 = vadd.f32 0.0, %v4254
      %v4256 = vpop.f32.mrf.mxu0
      %v4257 = vadd.f32 0.0, %v4256
      %4258 = vmatmul.bf16.gmra.mxu0 %v4160
      %v4259 = vpop.f32.mrf.mxu0
      %v4260 = vadd.f32 0.0, %v4259
      %v4261 = vpop.f32.mrf.mxu0
      %v4262 = vadd.f32 0.0, %v4261
      %4263 = vdwg.mxu0
      %v4264 = vld [vmem:[#allocation3] sm:$0xff]
      %v4265 = vld [vmem:[#allocation3 + $0x8] sm:$0xff]
      %v4266 = vld [vmem:[#allocation3 + $0x10] sm:$0xff]
      %v4267 = vld [vmem:[#allocation3 + $0x18] sm:$0xff]
      %v4268 = vld [vmem:[#allocation3 + $0x20] sm:$0xff]
      %v4269 = vld [vmem:[#allocation3 + $0x28] sm:$0xff]
      %v4270 = vld [vmem:[#allocation3 + $0x30] sm:$0xff]
      %v4271 = vld [vmem:[#allocation3 + $0x38] sm:$0xff]
      %v4272 = vld [vmem:[#allocation3 + $0x40] sm:$0xff]
      %v4273 = vld [vmem:[#allocation3 + $0x48] sm:$0xff]
      %v4274 = vld [vmem:[#allocation3 + $0x50] sm:$0xff]
      %v4275 = vld [vmem:[#allocation3 + $0x58] sm:$0xff]
      %v4276 = vld [vmem:[#allocation3 + $0x60] sm:$0xff]
      %v4277 = vld [vmem:[#allocation3 + $0x68] sm:$0xff]
      %v4278 = vld [vmem:[#allocation3 + $0x70] sm:$0xff]
      %v4279 = vld [vmem:[#allocation3 + $0x78] sm:$0xff]
      %v4280 = vld [vmem:[#allocation3 + $0x80] sm:$0xff]
      %v4281 = vld [vmem:[#allocation3 + $0x88] sm:$0xff]
      %v4282 = vld [vmem:[#allocation3 + $0x90] sm:$0xff]
      %v4283 = vld [vmem:[#allocation3 + $0x98] sm:$0xff]
      %v4284 = vld [vmem:[#allocation3 + $0xa0] sm:$0xff]
      %v4285 = vld [vmem:[#allocation3 + $0xa8] sm:$0xff]
      %v4286 = vld [vmem:[#allocation3 + $0xb0] sm:$0xff]
      %v4287 = vld [vmem:[#allocation3 + $0xb8] sm:$0xff]
      %v4288 = vld [vmem:[#allocation3 + $0xc0] sm:$0xff]
      %v4289 = vld [vmem:[#allocation3 + $0xc8] sm:$0xff]
      %v4290 = vld [vmem:[#allocation3 + $0xd0] sm:$0xff]
      %v4291 = vld [vmem:[#allocation3 + $0xd8] sm:$0xff]
      %v4292 = vld [vmem:[#allocation3 + $0xe0] sm:$0xff]
      %v4293 = vld [vmem:[#allocation3 + $0xe8] sm:$0xff]
      %v4294 = vld [vmem:[#allocation3 + $0xf0] sm:$0xff]
      %v4295 = vld [vmem:[#allocation3 + $0xf8] sm:$0xff]
      %v4296 = vld [vmem:[#allocation3 + $0x100] sm:$0xff]
      %v4297 = vld [vmem:[#allocation3 + $0x108] sm:$0xff]
      %v4298 = vld [vmem:[#allocation3 + $0x110] sm:$0xff]
      %v4299 = vld [vmem:[#allocation3 + $0x118] sm:$0xff]
      %v4300 = vadd.f32 %v4264, %v4175
      %v4301 = vadd.f32 %v4265, %v4177
      %v4302 = vadd.f32 %v4266, %v4180
      %v4303 = vadd.f32 %v4267, %v4182
      %v4304 = vadd.f32 %v4268, %v4185
      %v4305 = vadd.f32 %v4269, %v4187
      %v4306 = vadd.f32 %v4270, %v4190
      %v4307 = vadd.f32 %v4271, %v4192
      %v4308 = vadd.f32 %v4272, %v4195
      %v4309 = vadd.f32 %v4273, %v4197
      %v4310 = vadd.f32 %v4274, %v4200
      %v4311 = vadd.f32 %v4275, %v4202
      %v4312 = vadd.f32 %v4276, %v4205
      %v4313 = vadd.f32 %v4277, %v4207
      %v4314 = vadd.f32 %v4278, %v4210
      %v4315 = vadd.f32 %v4279, %v4212
      %v4316 = vadd.f32 %v4280, %v4215
      %v4317 = vadd.f32 %v4281, %v4217
      %v4318 = vadd.f32 %v4282, %v4220
      %v4319 = vadd.f32 %v4283, %v4222
      %v4320 = vadd.f32 %v4284, %v4225
      %v4321 = vadd.f32 %v4285, %v4227
      %v4322 = vadd.f32 %v4286, %v4230
      %v4323 = vadd.f32 %v4287, %v4232
      %v4324 = vadd.f32 %v4288, %v4235
      %v4325 = vadd.f32 %v4289, %v4237
      %v4326 = vadd.f32 %v4290, %v4240
      %v4327 = vadd.f32 %v4291, %v4242
      %v4328 = vadd.f32 %v4292, %v4245
      %v4329 = vadd.f32 %v4293, %v4247
      %v4330 = vadd.f32 %v4294, %v4250
      %v4331 = vadd.f32 %v4295, %v4252
      %v4332 = vadd.f32 %v4296, %v4255
      %v4333 = vadd.f32 %v4297, %v4257
      %v4334 = vadd.f32 %v4298, %v4260
      %v4335 = vadd.f32 %v4299, %v4262
      %4336 = vst.msk [vmem:[#allocation3] sm:$0xff] %vm2199, %v4300
      %4337 = vst.msk [vmem:[#allocation3 + $0x8] sm:$0xff] %vm2199, %v4301
      %4338 = vst.msk [vmem:[#allocation3 + $0x10] sm:$0xff] %vm2199, %v4302
      %4339 = vst.msk [vmem:[#allocation3 + $0x18] sm:$0xff] %vm2199, %v4303
      %4340 = vst.msk [vmem:[#allocation3 + $0x20] sm:$0xff] %vm2199, %v4304
      %4341 = vst.msk [vmem:[#allocation3 + $0x28] sm:$0xff] %vm2199, %v4305
      %4342 = vst.msk [vmem:[#allocation3 + $0x30] sm:$0xff] %vm2199, %v4306
      %4343 = vst.msk [vmem:[#allocation3 + $0x38] sm:$0xff] %vm2199, %v4307
      %4344 = vst.msk [vmem:[#allocation3 + $0x40] sm:$0xff] %vm2199, %v4308
      %4345 = vst.msk [vmem:[#allocation3 + $0x48] sm:$0xff] %vm2199, %v4309
      %4346 = vst.msk [vmem:[#allocation3 + $0x50] sm:$0xff] %vm2199, %v4310
      %4347 = vst.msk [vmem:[#allocation3 + $0x58] sm:$0xff] %vm2199, %v4311
      %4348 = vst.msk [vmem:[#allocation3 + $0x60] sm:$0xff] %vm2199, %v4312
      %4349 = vst.msk [vmem:[#allocation3 + $0x68] sm:$0xff] %vm2199, %v4313
      %4350 = vst.msk [vmem:[#allocation3 + $0x70] sm:$0xff] %vm2199, %v4314
      %4351 = vst.msk [vmem:[#allocation3 + $0x78] sm:$0xff] %vm2199, %v4315
      %4352 = vst.msk [vmem:[#allocation3 + $0x80] sm:$0xff] %vm2199, %v4316
      %4353 = vst.msk [vmem:[#allocation3 + $0x88] sm:$0xff] %vm2199, %v4317
      %4354 = vst.msk [vmem:[#allocation3 + $0x90] sm:$0xff] %vm2199, %v4318
      %4355 = vst.msk [vmem:[#allocation3 + $0x98] sm:$0xff] %vm2199, %v4319
      %4356 = vst.msk [vmem:[#allocation3 + $0xa0] sm:$0xff] %vm2199, %v4320
      %4357 = vst.msk [vmem:[#allocation3 + $0xa8] sm:$0xff] %vm2199, %v4321
      %4358 = vst.msk [vmem:[#allocation3 + $0xb0] sm:$0xff] %vm2199, %v4322
      %4359 = vst.msk [vmem:[#allocation3 + $0xb8] sm:$0xff] %vm2199, %v4323
      %4360 = vst.msk [vmem:[#allocation3 + $0xc0] sm:$0xff] %vm2199, %v4324
      %4361 = vst.msk [vmem:[#allocation3 + $0xc8] sm:$0xff] %vm2199, %v4325
      %4362 = vst.msk [vmem:[#allocation3 + $0xd0] sm:$0xff] %vm2199, %v4326
      %4363 = vst.msk [vmem:[#allocation3 + $0xd8] sm:$0xff] %vm2199, %v4327
      %4364 = vst.msk [vmem:[#allocation3 + $0xe0] sm:$0xff] %vm2199, %v4328
      %4365 = vst.msk [vmem:[#allocation3 + $0xe8] sm:$0xff] %vm2199, %v4329
      %4366 = vst.msk [vmem:[#allocation3 + $0xf0] sm:$0xff] %vm2199, %v4330
      %4367 = vst.msk [vmem:[#allocation3 + $0xf8] sm:$0xff] %vm2199, %v4331
      %4368 = vst.msk [vmem:[#allocation3 + $0x100] sm:$0xff] %vm2199, %v4332
      %4369 = vst.msk [vmem:[#allocation3 + $0x108] sm:$0xff] %vm2199, %v4333
      %4370 = vst.msk [vmem:[#allocation3 + $0x110] sm:$0xff] %vm2199, %v4334
      %4371 = vst.msk [vmem:[#allocation3 + $0x118] sm:$0xff] %vm2199, %v4335
      %v4372 = vld [vmem:[#allocation2 + $0x8] sm:$0xc]
      %v4373 = vld [vmem:[#allocation2 + $0xc] sm:$0xf]
      %v4374 = vld [vmem:[#allocation2 + $0x10] sm:$0xf]
      %v4375 = vld [vmem:[#allocation2 + $0x14] sm:$0xf]
      %v4376 = vld [vmem:[#allocation2 + $0x18] sm:$0xf]
      %v4377 = vld [vmem:[#allocation2 + $0x1c] sm:$0xf]
      %v4378 = vld [vmem:[#allocation2 + $0x20] sm:$0xf]
      %v4379 = vld [vmem:[#allocation2 + $0x24] sm:$0xf]
      %v4380 = vld [vmem:[#allocation2 + $0x28] sm:$0xf]
      %v4381 = vld [vmem:[#allocation2 + $0x2c] sm:$0xf]
      %v4382 = vld [vmem:[#allocation2 + $0x30] sm:$0xf]
      %v4383 = vld [vmem:[#allocation2 + $0x34] sm:$0xf]
      %v4384 = vld [vmem:[#allocation2 + $0x38] sm:$0xf]
      %v4385 = vld [vmem:[#allocation2 + $0x3c] sm:$0xf]
      %v4386 = vld [vmem:[#allocation2 + $0x40] sm:$0xf]
      %v4387 = vld [vmem:[#allocation2 + $0x44] sm:$0xf]
      %v4388 = vld [vmem:[#allocation2 + $0x48] sm:$0xf]
      %v4389 = vld [vmem:[#allocation2 + $0x4c] sm:$0xf]
      %v4390 = vld [vmem:[#allocation2 + $0x50] sm:$0xf]
      %v4391 = vld [vmem:[#allocation2 + $0x54] sm:$0xf]
      %v4392 = vld [vmem:[#allocation2 + $0x58] sm:$0xf]
      %v4393 = vld [vmem:[#allocation2 + $0x5c] sm:$0xf]
      %v4394 = vld [vmem:[#allocation2 + $0x60] sm:$0xf]
      %v4395 = vld [vmem:[#allocation2 + $0x64] sm:$0xf]
      %v4396 = vld [vmem:[#allocation2 + $0x68] sm:$0xf]
      %v4397 = vld [vmem:[#allocation2 + $0x6c] sm:$0xf]
      %v4398 = vld [vmem:[#allocation2 + $0x70] sm:$0xf]
      %v4399 = vld [vmem:[#allocation2 + $0x74] sm:$0xf]
      %v4400 = vld [vmem:[#allocation2 + $0x78] sm:$0xf]
      %v4401 = vld [vmem:[#allocation2 + $0x7c] sm:$0xf]
      %v4402 = vld [vmem:[#allocation2 + $0x80] sm:$0xf]
      %v4403 = vld [vmem:[#allocation2 + $0x84] sm:$0xf]
      %v4404 = vld [vmem:[#allocation2 + $0x88] sm:$0xf]
      %v4405 = vld [vmem:[#allocation2 + $0x8c] sm:$0xf]
      %v4406 = vld [vmem:[#allocation2 + $0x90] sm:$0xf]
      %v4407 = vld [vmem:[#allocation2 + $0x94] sm:$0xf]
      %v4408 = vld [vmem:[#allocation2 + $0x98] sm:$0x3]
      %s4409 = scalar_lea.vmem %s1, 10
      %v4410 = vld [vmem:[%s4409] sm:$0x3]
      %v4448 = vunpack.c.l.b16 %v4372
      %v4449 = vunpack.c.l.b16 %v4373
      %v4450 = vunpack.c.l.b16 %v4374
      %v4451 = vunpack.c.l.b16 %v4375
      %v4452 = vunpack.c.l.b16 %v4376
      %v4453 = vunpack.c.l.b16 %v4377
      %v4454 = vunpack.c.l.b16 %v4378
      %v4455 = vunpack.c.l.b16 %v4379
      %v4456 = vunpack.c.l.b16 %v4380
      %v4457 = vunpack.c.l.b16 %v4381
      %v4458 = vunpack.c.l.b16 %v4382
      %v4459 = vunpack.c.l.b16 %v4383
      %v4460 = vunpack.c.l.b16 %v4384
      %v4461 = vunpack.c.l.b16 %v4385
      %v4462 = vunpack.c.l.b16 %v4386
      %v4463 = vunpack.c.l.b16 %v4387
      %v4464 = vunpack.c.l.b16 %v4388
      %v4465 = vunpack.c.l.b16 %v4389
      %v4466 = vunpack.c.l.b16 %v4390
      %v4467 = vunpack.c.l.b16 %v4391
      %v4468 = vunpack.c.l.b16 %v4392
      %v4469 = vunpack.c.l.b16 %v4393
      %v4470 = vunpack.c.l.b16 %v4394
      %v4471 = vunpack.c.l.b16 %v4395
      %v4472 = vunpack.c.l.b16 %v4396
      %v4473 = vunpack.c.l.b16 %v4397
      %v4474 = vunpack.c.l.b16 %v4398
      %v4475 = vunpack.c.l.b16 %v4399
      %v4476 = vunpack.c.l.b16 %v4400
      %v4477 = vunpack.c.l.b16 %v4401
      %v4478 = vunpack.c.l.b16 %v4402
      %v4479 = vunpack.c.l.b16 %v4403
      %v4480 = vunpack.c.l.b16 %v4404
      %v4481 = vunpack.c.l.b16 %v4405
      %v4482 = vunpack.c.l.b16 %v4406
      %v4483 = vunpack.c.l.b16 %v4407
      %v4484 = vunpack.c.l.b16 %v4408
      %v4485 = vpack.c.b16 %v4449, %v4448
      %v4486 = vpack.c.b16 %v4451, %v4450
      %v4487 = vpack.c.b16 %v4453, %v4452
      %v4488 = vpack.c.b16 %v4455, %v4454
      %v4489 = vpack.c.b16 %v4457, %v4456
      %v4490 = vpack.c.b16 %v4459, %v4458
      %v4491 = vpack.c.b16 %v4461, %v4460
      %v4492 = vpack.c.b16 %v4463, %v4462
      %v4493 = vpack.c.b16 %v4465, %v4464
      %v4494 = vpack.c.b16 %v4467, %v4466
      %v4495 = vpack.c.b16 %v4469, %v4468
      %v4496 = vpack.c.b16 %v4471, %v4470
      %v4497 = vpack.c.b16 %v4473, %v4472
      %v4498 = vpack.c.b16 %v4475, %v4474
      %v4499 = vpack.c.b16 %v4477, %v4476
      %v4500 = vpack.c.b16 %v4479, %v4478
      %v4501 = vpack.c.b16 %v4481, %v4480
      %v4502 = vpack.c.b16 %v4483, %v4482
      %v4503 = vpack.c.b16 %v4484, %v4484
      %vm4504 = vcmask 1045504
      %v4505 = vrot.slane %v4485, 2
      %v4506 = vrot.slane %v4486, 2
      %v4507 = vsel %vm4504, %v4505, %v4506
      %v4508 = vrot.slane %v4487, 2
      %v4509 = vsel %vm4504, %v4506, %v4508
      %v4510 = vrot.slane %v4488, 2
      %v4511 = vsel %vm4504, %v4508, %v4510
      %v4512 = vrot.slane %v4489, 2
      %v4513 = vsel %vm4504, %v4510, %v4512
      %v4514 = vrot.slane %v4490, 2
      %v4515 = vsel %vm4504, %v4512, %v4514
      %v4516 = vrot.slane %v4491, 2
      %v4517 = vsel %vm4504, %v4514, %v4516
      %v4518 = vrot.slane %v4492, 2
      %v4519 = vsel %vm4504, %v4516, %v4518
      %v4520 = vrot.slane %v4493, 2
      %v4521 = vsel %vm4504, %v4518, %v4520
      %v4522 = vrot.slane %v4494, 2
      %v4523 = vsel %vm4504, %v4520, %v4522
      %v4524 = vrot.slane %v4495, 2
      %v4525 = vsel %vm4504, %v4522, %v4524
      %v4526 = vrot.slane %v4496, 2
      %v4527 = vsel %vm4504, %v4524, %v4526
      %v4528 = vrot.slane %v4497, 2
      %v4529 = vsel %vm4504, %v4526, %v4528
      %v4530 = vrot.slane %v4498, 2
      %v4531 = vsel %vm4504, %v4528, %v4530
      %v4532 = vrot.slane %v4499, 2
      %v4533 = vsel %vm4504, %v4530, %v4532
      %v4534 = vrot.slane %v4500, 2
      %v4535 = vsel %vm4504, %v4532, %v4534
      %v4536 = vrot.slane %v4501, 2
      %v4537 = vsel %vm4504, %v4534, %v4536
      %v4538 = vrot.slane %v4502, 2
      %v4539 = vsel %vm4504, %v4536, %v4538
      %v4540 = vrot.slane %v4503, 2
      %v4541 = vsel %vm4504, %v4538, %v4540
      %v4543 = vsel %vm2199, %v4507, 0
      %v4546 = vsel %vm2199, %v4509, 0
      %v4549 = vsel %vm2199, %v4511, 0
      %v4552 = vsel %vm2199, %v4513, 0
      %v4555 = vsel %vm2199, %v4515, 0
      %v4558 = vsel %vm2199, %v4517, 0
      %v4561 = vsel %vm2199, %v4519, 0
      %v4564 = vsel %vm2199, %v4521, 0
      %v4567 = vsel %vm2199, %v4523, 0
      %v4570 = vsel %vm2199, %v4525, 0
      %v4573 = vsel %vm2199, %v4527, 0
      %v4576 = vsel %vm2199, %v4529, 0
      %v4579 = vsel %vm2199, %v4531, 0
      %v4582 = vsel %vm2199, %v4533, 0
      %v4585 = vsel %vm2199, %v4535, 0
      %v4588 = vsel %vm2199, %v4537, 0
      %v4591 = vsel %vm2199, %v4539, 0
      %v4594 = vsel %vm2199, %v4541, 0
      %v4597 = vsel %vm2254, %v4410, 0
      %4599 = vmatpush.bf16.msra.mxu0 0
      %4600 = vmatpush.bf16.msra.mxu0 0
      %4601 = vmatpush.bf16.msra.mxu0 0
      %4602 = vmatpush.bf16.msra.mxu0 0
      %4603 = vmatpush.bf16.msra.mxu0 0
      %4604 = vmatpush.bf16.msra.mxu0 0
      %4605 = vmatpush.bf16.msra.mxu0 0
      %4606 = vmatpush.bf16.msra.mxu0 %v4597
      %4607 = vmatmul.bf16.gmra.mxu0 %v4543
      %v4608 = vpop.f32.mrf.mxu0
      %v4609 = vadd.f32 0.0, %v4608
      %v4610 = vpop.f32.mrf.mxu0
      %v4611 = vadd.f32 0.0, %v4610
      %4612 = vmatmul.bf16.gmra.mxu0 %v4546
      %v4613 = vpop.f32.mrf.mxu0
      %v4614 = vadd.f32 0.0, %v4613
      %v4615 = vpop.f32.mrf.mxu0
      %v4616 = vadd.f32 0.0, %v4615
      %4617 = vmatmul.bf16.gmra.mxu0 %v4549
      %v4618 = vpop.f32.mrf.mxu0
      %v4619 = vadd.f32 0.0, %v4618
      %v4620 = vpop.f32.mrf.mxu0
      %v4621 = vadd.f32 0.0, %v4620
      %4622 = vmatmul.bf16.gmra.mxu0 %v4552
      %v4623 = vpop.f32.mrf.mxu0
      %v4624 = vadd.f32 0.0, %v4623
      %v4625 = vpop.f32.mrf.mxu0
      %v4626 = vadd.f32 0.0, %v4625
      %4627 = vmatmul.bf16.gmra.mxu0 %v4555
      %v4628 = vpop.f32.mrf.mxu0
      %v4629 = vadd.f32 0.0, %v4628
      %v4630 = vpop.f32.mrf.mxu0
      %v4631 = vadd.f32 0.0, %v4630
      %4632 = vmatmul.bf16.gmra.mxu0 %v4558
      %v4633 = vpop.f32.mrf.mxu0
      %v4634 = vadd.f32 0.0, %v4633
      %v4635 = vpop.f32.mrf.mxu0
      %v4636 = vadd.f32 0.0, %v4635
      %4637 = vmatmul.bf16.gmra.mxu0 %v4561
      %v4638 = vpop.f32.mrf.mxu0
      %v4639 = vadd.f32 0.0, %v4638
      %v4640 = vpop.f32.mrf.mxu0
      %v4641 = vadd.f32 0.0, %v4640
      %4642 = vmatmul.bf16.gmra.mxu0 %v4564
      %v4643 = vpop.f32.mrf.mxu0
      %v4644 = vadd.f32 0.0, %v4643
      %v4645 = vpop.f32.mrf.mxu0
      %v4646 = vadd.f32 0.0, %v4645
      %4647 = vmatmul.bf16.gmra.mxu0 %v4567
      %v4648 = vpop.f32.mrf.mxu0
      %v4649 = vadd.f32 0.0, %v4648
      %v4650 = vpop.f32.mrf.mxu0
      %v4651 = vadd.f32 0.0, %v4650
      %4652 = vmatmul.bf16.gmra.mxu0 %v4570
      %v4653 = vpop.f32.mrf.mxu0
      %v4654 = vadd.f32 0.0, %v4653
      %v4655 = vpop.f32.mrf.mxu0
      %v4656 = vadd.f32 0.0, %v4655
      %4657 = vmatmul.bf16.gmra.mxu0 %v4573
      %v4658 = vpop.f32.mrf.mxu0
      %v4659 = vadd.f32 0.0, %v4658
      %v4660 = vpop.f32.mrf.mxu0
      %v4661 = vadd.f32 0.0, %v4660
      %4662 = vmatmul.bf16.gmra.mxu0 %v4576
      %v4663 = vpop.f32.mrf.mxu0
      %v4664 = vadd.f32 0.0, %v4663
      %v4665 = vpop.f32.mrf.mxu0
      %v4666 = vadd.f32 0.0, %v4665
      %4667 = vmatmul.bf16.gmra.mxu0 %v4579
      %v4668 = vpop.f32.mrf.mxu0
      %v4669 = vadd.f32 0.0, %v4668
      %v4670 = vpop.f32.mrf.mxu0
      %v4671 = vadd.f32 0.0, %v4670
      %4672 = vmatmul.bf16.gmra.mxu0 %v4582
      %v4673 = vpop.f32.mrf.mxu0
      %v4674 = vadd.f32 0.0, %v4673
      %v4675 = vpop.f32.mrf.mxu0
      %v4676 = vadd.f32 0.0, %v4675
      %4677 = vmatmul.bf16.gmra.mxu0 %v4585
      %v4678 = vpop.f32.mrf.mxu0
      %v4679 = vadd.f32 0.0, %v4678
      %v4680 = vpop.f32.mrf.mxu0
      %v4681 = vadd.f32 0.0, %v4680
      %4682 = vmatmul.bf16.gmra.mxu0 %v4588
      %v4683 = vpop.f32.mrf.mxu0
      %v4684 = vadd.f32 0.0, %v4683
      %v4685 = vpop.f32.mrf.mxu0
      %v4686 = vadd.f32 0.0, %v4685
      %4687 = vmatmul.bf16.gmra.mxu0 %v4591
      %v4688 = vpop.f32.mrf.mxu0
      %v4689 = vadd.f32 0.0, %v4688
      %v4690 = vpop.f32.mrf.mxu0
      %v4691 = vadd.f32 0.0, %v4690
      %4692 = vmatmul.bf16.gmra.mxu0 %v4594
      %v4693 = vpop.f32.mrf.mxu0
      %v4694 = vadd.f32 0.0, %v4693
      %v4695 = vpop.f32.mrf.mxu0
      %v4696 = vadd.f32 0.0, %v4695
      %4697 = vdwg.mxu0
      %v4698 = vld [vmem:[#allocation3] sm:$0xff]
      %v4699 = vld [vmem:[#allocation3 + $0x8] sm:$0xff]
      %v4700 = vld [vmem:[#allocation3 + $0x10] sm:$0xff]
      %v4701 = vld [vmem:[#allocation3 + $0x18] sm:$0xff]
      %v4702 = vld [vmem:[#allocation3 + $0x20] sm:$0xff]
      %v4703 = vld [vmem:[#allocation3 + $0x28] sm:$0xff]
      %v4704 = vld [vmem:[#allocation3 + $0x30] sm:$0xff]
      %v4705 = vld [vmem:[#allocation3 + $0x38] sm:$0xff]
      %v4706 = vld [vmem:[#allocation3 + $0x40] sm:$0xff]
      %v4707 = vld [vmem:[#allocation3 + $0x48] sm:$0xff]
      %v4708 = vld [vmem:[#allocation3 + $0x50] sm:$0xff]
      %v4709 = vld [vmem:[#allocation3 + $0x58] sm:$0xff]
      %v4710 = vld [vmem:[#allocation3 + $0x60] sm:$0xff]
      %v4711 = vld [vmem:[#allocation3 + $0x68] sm:$0xff]
      %v4712 = vld [vmem:[#allocation3 + $0x70] sm:$0xff]
      %v4713 = vld [vmem:[#allocation3 + $0x78] sm:$0xff]
      %v4714 = vld [vmem:[#allocation3 + $0x80] sm:$0xff]
      %v4715 = vld [vmem:[#allocation3 + $0x88] sm:$0xff]
      %v4716 = vld [vmem:[#allocation3 + $0x90] sm:$0xff]
      %v4717 = vld [vmem:[#allocation3 + $0x98] sm:$0xff]
      %v4718 = vld [vmem:[#allocation3 + $0xa0] sm:$0xff]
      %v4719 = vld [vmem:[#allocation3 + $0xa8] sm:$0xff]
      %v4720 = vld [vmem:[#allocation3 + $0xb0] sm:$0xff]
      %v4721 = vld [vmem:[#allocation3 + $0xb8] sm:$0xff]
      %v4722 = vld [vmem:[#allocation3 + $0xc0] sm:$0xff]
      %v4723 = vld [vmem:[#allocation3 + $0xc8] sm:$0xff]
      %v4724 = vld [vmem:[#allocation3 + $0xd0] sm:$0xff]
      %v4725 = vld [vmem:[#allocation3 + $0xd8] sm:$0xff]
      %v4726 = vld [vmem:[#allocation3 + $0xe0] sm:$0xff]
      %v4727 = vld [vmem:[#allocation3 + $0xe8] sm:$0xff]
      %v4728 = vld [vmem:[#allocation3 + $0xf0] sm:$0xff]
      %v4729 = vld [vmem:[#allocation3 + $0xf8] sm:$0xff]
      %v4730 = vld [vmem:[#allocation3 + $0x100] sm:$0xff]
      %v4731 = vld [vmem:[#allocation3 + $0x108] sm:$0xff]
      %v4732 = vld [vmem:[#allocation3 + $0x110] sm:$0xff]
      %v4733 = vld [vmem:[#allocation3 + $0x118] sm:$0xff]
      %v4734 = vadd.f32 %v4698, %v4609
      %v4735 = vadd.f32 %v4699, %v4611
      %v4736 = vadd.f32 %v4700, %v4614
      %v4737 = vadd.f32 %v4701, %v4616
      %v4738 = vadd.f32 %v4702, %v4619
      %v4739 = vadd.f32 %v4703, %v4621
      %v4740 = vadd.f32 %v4704, %v4624
      %v4741 = vadd.f32 %v4705, %v4626
      %v4742 = vadd.f32 %v4706, %v4629
      %v4743 = vadd.f32 %v4707, %v4631
      %v4744 = vadd.f32 %v4708, %v4634
      %v4745 = vadd.f32 %v4709, %v4636
      %v4746 = vadd.f32 %v4710, %v4639
      %v4747 = vadd.f32 %v4711, %v4641
      %v4748 = vadd.f32 %v4712, %v4644
      %v4749 = vadd.f32 %v4713, %v4646
      %v4750 = vadd.f32 %v4714, %v4649
      %v4751 = vadd.f32 %v4715, %v4651
      %v4752 = vadd.f32 %v4716, %v4654
      %v4753 = vadd.f32 %v4717, %v4656
      %v4754 = vadd.f32 %v4718, %v4659
      %v4755 = vadd.f32 %v4719, %v4661
      %v4756 = vadd.f32 %v4720, %v4664
      %v4757 = vadd.f32 %v4721, %v4666
      %v4758 = vadd.f32 %v4722, %v4669
      %v4759 = vadd.f32 %v4723, %v4671
      %v4760 = vadd.f32 %v4724, %v4674
      %v4761 = vadd.f32 %v4725, %v4676
      %v4762 = vadd.f32 %v4726, %v4679
      %v4763 = vadd.f32 %v4727, %v4681
      %v4764 = vadd.f32 %v4728, %v4684
      %v4765 = vadd.f32 %v4729, %v4686
      %v4766 = vadd.f32 %v4730, %v4689
      %v4767 = vadd.f32 %v4731, %v4691
      %v4768 = vadd.f32 %v4732, %v4694
      %v4769 = vadd.f32 %v4733, %v4696
      %4770 = vst.msk [vmem:[#allocation3] sm:$0xff] %vm2199, %v4734
      %4771 = vst.msk [vmem:[#allocation3 + $0x8] sm:$0xff] %vm2199, %v4735
      %4772 = vst.msk [vmem:[#allocation3 + $0x10] sm:$0xff] %vm2199, %v4736
      %4773 = vst.msk [vmem:[#allocation3 + $0x18] sm:$0xff] %vm2199, %v4737
      %4774 = vst.msk [vmem:[#allocation3 + $0x20] sm:$0xff] %vm2199, %v4738
      %4775 = vst.msk [vmem:[#allocation3 + $0x28] sm:$0xff] %vm2199, %v4739
      %4776 = vst.msk [vmem:[#allocation3 + $0x30] sm:$0xff] %vm2199, %v4740
      %4777 = vst.msk [vmem:[#allocation3 + $0x38] sm:$0xff] %vm2199, %v4741
      %4778 = vst.msk [vmem:[#allocation3 + $0x40] sm:$0xff] %vm2199, %v4742
      %4779 = vst.msk [vmem:[#allocation3 + $0x48] sm:$0xff] %vm2199, %v4743
      %4780 = vst.msk [vmem:[#allocation3 + $0x50] sm:$0xff] %vm2199, %v4744
      %4781 = vst.msk [vmem:[#allocation3 + $0x58] sm:$0xff] %vm2199, %v4745
      %4782 = vst.msk [vmem:[#allocation3 + $0x60] sm:$0xff] %vm2199, %v4746
      %4783 = vst.msk [vmem:[#allocation3 + $0x68] sm:$0xff] %vm2199, %v4747
      %4784 = vst.msk [vmem:[#allocation3 + $0x70] sm:$0xff] %vm2199, %v4748
      %4785 = vst.msk [vmem:[#allocation3 + $0x78] sm:$0xff] %vm2199, %v4749
      %4786 = vst.msk [vmem:[#allocation3 + $0x80] sm:$0xff] %vm2199, %v4750
      %4787 = vst.msk [vmem:[#allocation3 + $0x88] sm:$0xff] %vm2199, %v4751
      %4788 = vst.msk [vmem:[#allocation3 + $0x90] sm:$0xff] %vm2199, %v4752
      %4789 = vst.msk [vmem:[#allocation3 + $0x98] sm:$0xff] %vm2199, %v4753
      %4790 = vst.msk [vmem:[#allocation3 + $0xa0] sm:$0xff] %vm2199, %v4754
      %4791 = vst.msk [vmem:[#allocation3 + $0xa8] sm:$0xff] %vm2199, %v4755
      %4792 = vst.msk [vmem:[#allocation3 + $0xb0] sm:$0xff] %vm2199, %v4756
      %4793 = vst.msk [vmem:[#allocation3 + $0xb8] sm:$0xff] %vm2199, %v4757
      %4794 = vst.msk [vmem:[#allocation3 + $0xc0] sm:$0xff] %vm2199, %v4758
      %4795 = vst.msk [vmem:[#allocation3 + $0xc8] sm:$0xff] %vm2199, %v4759
      %4796 = vst.msk [vmem:[#allocation3 + $0xd0] sm:$0xff] %vm2199, %v4760
      %4797 = vst.msk [vmem:[#allocation3 + $0xd8] sm:$0xff] %vm2199, %v4761
      %4798 = vst.msk [vmem:[#allocation3 + $0xe0] sm:$0xff] %vm2199, %v4762
      %4799 = vst.msk [vmem:[#allocation3 + $0xe8] sm:$0xff] %vm2199, %v4763
      %4800 = vst.msk [vmem:[#allocation3 + $0xf0] sm:$0xff] %vm2199, %v4764
      %4801 = vst.msk [vmem:[#allocation3 + $0xf8] sm:$0xff] %vm2199, %v4765
      %4802 = vst.msk [vmem:[#allocation3 + $0x100] sm:$0xff] %vm2199, %v4766
      %4803 = vst.msk [vmem:[#allocation3 + $0x108] sm:$0xff] %vm2199, %v4767
      %4804 = vst.msk [vmem:[#allocation3 + $0x110] sm:$0xff] %vm2199, %v4768
      %4805 = vst.msk [vmem:[#allocation3 + $0x118] sm:$0xff] %vm2199, %v4769
      %v4806 = vld [vmem:[#allocation2 + $0x10] sm:$0xc]
      %v4807 = vld [vmem:[#allocation2 + $0x14] sm:$0xf]
      %v4808 = vld [vmem:[#allocation2 + $0x18] sm:$0xf]
      %v4809 = vld [vmem:[#allocation2 + $0x1c] sm:$0xf]
      %v4810 = vld [vmem:[#allocation2 + $0x20] sm:$0xf]
      %v4811 = vld [vmem:[#allocation2 + $0x24] sm:$0xf]
      %v4812 = vld [vmem:[#allocation2 + $0x28] sm:$0xf]
      %v4813 = vld [vmem:[#allocation2 + $0x2c] sm:$0xf]
      %v4814 = vld [vmem:[#allocation2 + $0x30] sm:$0xf]
      %v4815 = vld [vmem:[#allocation2 + $0x34] sm:$0xf]
      %v4816 = vld [vmem:[#allocation2 + $0x38] sm:$0xf]
      %v4817 = vld [vmem:[#allocation2 + $0x3c] sm:$0xf]
      %v4818 = vld [vmem:[#allocation2 + $0x40] sm:$0xf]
      %v4819 = vld [vmem:[#allocation2 + $0x44] sm:$0xf]
      %v4820 = vld [vmem:[#allocation2 + $0x48] sm:$0xf]
      %v4821 = vld [vmem:[#allocation2 + $0x4c] sm:$0xf]
      %v4822 = vld [vmem:[#allocation2 + $0x50] sm:$0xf]
      %v4823 = vld [vmem:[#allocation2 + $0x54] sm:$0xf]
      %v4824 = vld [vmem:[#allocation2 + $0x58] sm:$0xf]
      %v4825 = vld [vmem:[#allocation2 + $0x5c] sm:$0xf]
      %v4826 = vld [vmem:[#allocation2 + $0x60] sm:$0xf]
      %v4827 = vld [vmem:[#allocation2 + $0x64] sm:$0xf]
      %v4828 = vld [vmem:[#allocation2 + $0x68] sm:$0xf]
      %v4829 = vld [vmem:[#allocation2 + $0x6c] sm:$0xf]
      %v4830 = vld [vmem:[#allocation2 + $0x70] sm:$0xf]
      %v4831 = vld [vmem:[#allocation2 + $0x74] sm:$0xf]
      %v4832 = vld [vmem:[#allocation2 + $0x78] sm:$0xf]
      %v4833 = vld [vmem:[#allocation2 + $0x7c] sm:$0xf]
      %v4834 = vld [vmem:[#allocation2 + $0x80] sm:$0xf]
      %v4835 = vld [vmem:[#allocation2 + $0x84] sm:$0xf]
      %v4836 = vld [vmem:[#allocation2 + $0x88] sm:$0xf]
      %v4837 = vld [vmem:[#allocation2 + $0x8c] sm:$0xf]
      %v4838 = vld [vmem:[#allocation2 + $0x90] sm:$0xf]
      %v4839 = vld [vmem:[#allocation2 + $0x94] sm:$0xf]
      %v4840 = vld [vmem:[#allocation2 + $0x98] sm:$0xf]
      %v4841 = vld [vmem:[#allocation2 + $0x9c] sm:$0xf]
      %v4842 = vld [vmem:[#allocation2 + $0xa0] sm:$0x3]
      %s4843 = scalar_lea.vmem %s1, 12
      %v4844 = vld [vmem:[%s4843] sm:$0x3]
      %v4882 = vunpack.c.l.b16 %v4806
      %v4883 = vunpack.c.l.b16 %v4807
      %v4884 = vunpack.c.l.b16 %v4808
      %v4885 = vunpack.c.l.b16 %v4809
      %v4886 = vunpack.c.l.b16 %v4810
      %v4887 = vunpack.c.l.b16 %v4811
      %v4888 = vunpack.c.l.b16 %v4812
      %v4889 = vunpack.c.l.b16 %v4813
      %v4890 = vunpack.c.l.b16 %v4814
      %v4891 = vunpack.c.l.b16 %v4815
      %v4892 = vunpack.c.l.b16 %v4816
      %v4893 = vunpack.c.l.b16 %v4817
      %v4894 = vunpack.c.l.b16 %v4818
      %v4895 = vunpack.c.l.b16 %v4819
      %v4896 = vunpack.c.l.b16 %v4820
      %v4897 = vunpack.c.l.b16 %v4821
      %v4898 = vunpack.c.l.b16 %v4822
      %v4899 = vunpack.c.l.b16 %v4823
      %v4900 = vunpack.c.l.b16 %v4824
      %v4901 = vunpack.c.l.b16 %v4825
      %v4902 = vunpack.c.l.b16 %v4826
      %v4903 = vunpack.c.l.b16 %v4827
      %v4904 = vunpack.c.l.b16 %v4828
      %v4905 = vunpack.c.l.b16 %v4829
      %v4906 = vunpack.c.l.b16 %v4830
      %v4907 = vunpack.c.l.b16 %v4831
      %v4908 = vunpack.c.l.b16 %v4832
      %v4909 = vunpack.c.l.b16 %v4833
      %v4910 = vunpack.c.l.b16 %v4834
      %v4911 = vunpack.c.l.b16 %v4835
      %v4912 = vunpack.c.l.b16 %v4836
      %v4913 = vunpack.c.l.b16 %v4837
      %v4914 = vunpack.c.l.b16 %v4838
      %v4915 = vunpack.c.l.b16 %v4839
      %v4916 = vunpack.c.l.b16 %v4840
      %v4917 = vunpack.c.l.b16 %v4841
      %v4918 = vunpack.c.l.b16 %v4842
      %v4919 = vpack.c.b16 %v4883, %v4882
      %v4920 = vpack.c.b16 %v4885, %v4884
      %v4921 = vpack.c.b16 %v4887, %v4886
      %v4922 = vpack.c.b16 %v4889, %v4888
      %v4923 = vpack.c.b16 %v4891, %v4890
      %v4924 = vpack.c.b16 %v4893, %v4892
      %v4925 = vpack.c.b16 %v4895, %v4894
      %v4926 = vpack.c.b16 %v4897, %v4896
      %v4927 = vpack.c.b16 %v4899, %v4898
      %v4928 = vpack.c.b16 %v4901, %v4900
      %v4929 = vpack.c.b16 %v4903, %v4902
      %v4930 = vpack.c.b16 %v4905, %v4904
      %v4931 = vpack.c.b16 %v4907, %v4906
      %v4932 = vpack.c.b16 %v4909, %v4908
      %v4933 = vpack.c.b16 %v4911, %v4910
      %v4934 = vpack.c.b16 %v4913, %v4912
      %v4935 = vpack.c.b16 %v4915, %v4914
      %v4936 = vpack.c.b16 %v4917, %v4916
      %v4937 = vpack.c.b16 %v4918, %v4918
      %v4938 = vrot.slane %v4919, 2
      %v4939 = vrot.slane %v4920, 2
      %v4940 = vsel %vm4504, %v4938, %v4939
      %v4941 = vrot.slane %v4921, 2
      %v4942 = vsel %vm4504, %v4939, %v4941
      %v4943 = vrot.slane %v4922, 2
      %v4944 = vsel %vm4504, %v4941, %v4943
      %v4945 = vrot.slane %v4923, 2
      %v4946 = vsel %vm4504, %v4943, %v4945
      %v4947 = vrot.slane %v4924, 2
      %v4948 = vsel %vm4504, %v4945, %v4947
      %v4949 = vrot.slane %v4925, 2
      %v4950 = vsel %vm4504, %v4947, %v4949
      %v4951 = vrot.slane %v4926, 2
      %v4952 = vsel %vm4504, %v4949, %v4951
      %v4953 = vrot.slane %v4927, 2
      %v4954 = vsel %vm4504, %v4951, %v4953
      %v4955 = vrot.slane %v4928, 2
      %v4956 = vsel %vm4504, %v4953, %v4955
      %v4957 = vrot.slane %v4929, 2
      %v4958 = vsel %vm4504, %v4955, %v4957
      %v4959 = vrot.slane %v4930, 2
      %v4960 = vsel %vm4504, %v4957, %v4959
      %v4961 = vrot.slane %v4931, 2
      %v4962 = vsel %vm4504, %v4959, %v4961
      %v4963 = vrot.slane %v4932, 2
      %v4964 = vsel %vm4504, %v4961, %v4963
      %v4965 = vrot.slane %v4933, 2
      %v4966 = vsel %vm4504, %v4963, %v4965
      %v4967 = vrot.slane %v4934, 2
      %v4968 = vsel %vm4504, %v4965, %v4967
      %v4969 = vrot.slane %v4935, 2
      %v4970 = vsel %vm4504, %v4967, %v4969
      %v4971 = vrot.slane %v4936, 2
      %v4972 = vsel %vm4504, %v4969, %v4971
      %v4973 = vrot.slane %v4937, 2
      %v4974 = vsel %vm4504, %v4971, %v4973
      %v4976 = vsel %vm2199, %v4940, 0
      %v4979 = vsel %vm2199, %v4942, 0
      %v4982 = vsel %vm2199, %v4944, 0
      %v4985 = vsel %vm2199, %v4946, 0
      %v4988 = vsel %vm2199, %v4948, 0
      %v4991 = vsel %vm2199, %v4950, 0
      %v4994 = vsel %vm2199, %v4952, 0
      %v4997 = vsel %vm2199, %v4954, 0
      %v5000 = vsel %vm2199, %v4956, 0
      %v5003 = vsel %vm2199, %v4958, 0
      %v5006 = vsel %vm2199, %v4960, 0
      %v5009 = vsel %vm2199, %v4962, 0
      %v5012 = vsel %vm2199, %v4964, 0
      %v5015 = vsel %vm2199, %v4966, 0
      %v5018 = vsel %vm2199, %v4968, 0
      %v5021 = vsel %vm2199, %v4970, 0
      %v5024 = vsel %vm2199, %v4972, 0
      %v5027 = vsel %vm2199, %v4974, 0
      %v5030 = vsel %vm2254, %v4844, 0
      %5032 = vmatpush.bf16.msra.mxu0 0
      %5033 = vmatpush.bf16.msra.mxu0 0
      %5034 = vmatpush.bf16.msra.mxu0 0
      %5035 = vmatpush.bf16.msra.mxu0 0
      %5036 = vmatpush.bf16.msra.mxu0 0
      %5037 = vmatpush.bf16.msra.mxu0 0
      %5038 = vmatpush.bf16.msra.mxu0 0
      %5039 = vmatpush.bf16.msra.mxu0 %v5030
      %5040 = vmatmul.bf16.gmra.mxu0 %v4976
      %v5041 = vpop.f32.mrf.mxu0
      %v5042 = vadd.f32 0.0, %v5041
      %v5043 = vpop.f32.mrf.mxu0
      %v5044 = vadd.f32 0.0, %v5043
      %5045 = vmatmul.bf16.gmra.mxu0 %v4979
      %v5046 = vpop.f32.mrf.mxu0
      %v5047 = vadd.f32 0.0, %v5046
      %v5048 = vpop.f32.mrf.mxu0
      %v5049 = vadd.f32 0.0, %v5048
      %5050 = vmatmul.bf16.gmra.mxu0 %v4982
      %v5051 = vpop.f32.mrf.mxu0
      %v5052 = vadd.f32 0.0, %v5051
      %v5053 = vpop.f32.mrf.mxu0
      %v5054 = vadd.f32 0.0, %v5053
      %5055 = vmatmul.bf16.gmra.mxu0 %v4985
      %v5056 = vpop.f32.mrf.mxu0
      %v5057 = vadd.f32 0.0, %v5056
      %v5058 = vpop.f32.mrf.mxu0
      %v5059 = vadd.f32 0.0, %v5058
      %5060 = vmatmul.bf16.gmra.mxu0 %v4988
      %v5061 = vpop.f32.mrf.mxu0
      %v5062 = vadd.f32 0.0, %v5061
      %v5063 = vpop.f32.mrf.mxu0
      %v5064 = vadd.f32 0.0, %v5063
      %5065 = vmatmul.bf16.gmra.mxu0 %v4991
      %v5066 = vpop.f32.mrf.mxu0
      %v5067 = vadd.f32 0.0, %v5066
      %v5068 = vpop.f32.mrf.mxu0
      %v5069 = vadd.f32 0.0, %v5068
      %5070 = vmatmul.bf16.gmra.mxu0 %v4994
      %v5071 = vpop.f32.mrf.mxu0
      %v5072 = vadd.f32 0.0, %v5071
      %v5073 = vpop.f32.mrf.mxu0
      %v5074 = vadd.f32 0.0, %v5073
      %5075 = vmatmul.bf16.gmra.mxu0 %v4997
      %v5076 = vpop.f32.mrf.mxu0
      %v5077 = vadd.f32 0.0, %v5076
      %v5078 = vpop.f32.mrf.mxu0
      %v5079 = vadd.f32 0.0, %v5078
      %5080 = vmatmul.bf16.gmra.mxu0 %v5000
      %v5081 = vpop.f32.mrf.mxu0
      %v5082 = vadd.f32 0.0, %v5081
      %v5083 = vpop.f32.mrf.mxu0
      %v5084 = vadd.f32 0.0, %v5083
      %5085 = vmatmul.bf16.gmra.mxu0 %v5003
      %v5086 = vpop.f32.mrf.mxu0
      %v5087 = vadd.f32 0.0, %v5086
      %v5088 = vpop.f32.mrf.mxu0
      %v5089 = vadd.f32 0.0, %v5088
      %5090 = vmatmul.bf16.gmra.mxu0 %v5006
      %v5091 = vpop.f32.mrf.mxu0
      %v5092 = vadd.f32 0.0, %v5091
      %v5093 = vpop.f32.mrf.mxu0
      %v5094 = vadd.f32 0.0, %v5093
      %5095 = vmatmul.bf16.gmra.mxu0 %v5009
      %v5096 = vpop.f32.mrf.mxu0
      %v5097 = vadd.f32 0.0, %v5096
      %v5098 = vpop.f32.mrf.mxu0
      %v5099 = vadd.f32 0.0, %v5098
      %5100 = vmatmul.bf16.gmra.mxu0 %v5012
      %v5101 = vpop.f32.mrf.mxu0
      %v5102 = vadd.f32 0.0, %v5101
      %v5103 = vpop.f32.mrf.mxu0
      %v5104 = vadd.f32 0.0, %v5103
      %5105 = vmatmul.bf16.gmra.mxu0 %v5015
      %v5106 = vpop.f32.mrf.mxu0
      %v5107 = vadd.f32 0.0, %v5106
      %v5108 = vpop.f32.mrf.mxu0
      %v5109 = vadd.f32 0.0, %v5108
      %5110 = vmatmul.bf16.gmra.mxu0 %v5018
      %v5111 = vpop.f32.mrf.mxu0
      %v5112 = vadd.f32 0.0, %v5111
      %v5113 = vpop.f32.mrf.mxu0
      %v5114 = vadd.f32 0.0, %v5113
      %5115 = vmatmul.bf16.gmra.mxu0 %v5021
      %v5116 = vpop.f32.mrf.mxu0
      %v5117 = vadd.f32 0.0, %v5116
      %v5118 = vpop.f32.mrf.mxu0
      %v5119 = vadd.f32 0.0, %v5118
      %5120 = vmatmul.bf16.gmra.mxu0 %v5024
      %v5121 = vpop.f32.mrf.mxu0
      %v5122 = vadd.f32 0.0, %v5121
      %v5123 = vpop.f32.mrf.mxu0
      %v5124 = vadd.f32 0.0, %v5123
      %5125 = vmatmul.bf16.gmra.mxu0 %v5027
      %v5126 = vpop.f32.mrf.mxu0
      %v5127 = vadd.f32 0.0, %v5126
      %v5128 = vpop.f32.mrf.mxu0
      %v5129 = vadd.f32 0.0, %v5128
      %5130 = vdwg.mxu0
      %v5131 = vld [vmem:[#allocation3] sm:$0xff]
      %v5132 = vld [vmem:[#allocation3 + $0x8] sm:$0xff]
      %v5133 = vld [vmem:[#allocation3 + $0x10] sm:$0xff]
      %v5134 = vld [vmem:[#allocation3 + $0x18] sm:$0xff]
      %v5135 = vld [vmem:[#allocation3 + $0x20] sm:$0xff]
      %v5136 = vld [vmem:[#allocation3 + $0x28] sm:$0xff]
      %v5137 = vld [vmem:[#allocation3 + $0x30] sm:$0xff]
      %v5138 = vld [vmem:[#allocation3 + $0x38] sm:$0xff]
      %v5139 = vld [vmem:[#allocation3 + $0x40] sm:$0xff]
      %v5140 = vld [vmem:[#allocation3 + $0x48] sm:$0xff]
      %v5141 = vld [vmem:[#allocation3 + $0x50] sm:$0xff]
      %v5142 = vld [vmem:[#allocation3 + $0x58] sm:$0xff]
      %v5143 = vld [vmem:[#allocation3 + $0x60] sm:$0xff]
      %v5144 = vld [vmem:[#allocation3 + $0x68] sm:$0xff]
      %v5145 = vld [vmem:[#allocation3 + $0x70] sm:$0xff]
      %v5146 = vld [vmem:[#allocation3 + $0x78] sm:$0xff]
      %v5147 = vld [vmem:[#allocation3 + $0x80] sm:$0xff]
      %v5148 = vld [vmem:[#allocation3 + $0x88] sm:$0xff]
      %v5149 = vld [vmem:[#allocation3 + $0x90] sm:$0xff]
      %v5150 = vld [vmem:[#allocation3 + $0x98] sm:$0xff]
      %v5151 = vld [vmem:[#allocation3 + $0xa0] sm:$0xff]
      %v5152 = vld [vmem:[#allocation3 + $0xa8] sm:$0xff]
      %v5153 = vld [vmem:[#allocation3 + $0xb0] sm:$0xff]
      %v5154 = vld [vmem:[#allocation3 + $0xb8] sm:$0xff]
      %v5155 = vld [vmem:[#allocation3 + $0xc0] sm:$0xff]
      %v5156 = vld [vmem:[#allocation3 + $0xc8] sm:$0xff]
      %v5157 = vld [vmem:[#allocation3 + $0xd0] sm:$0xff]
      %v5158 = vld [vmem:[#allocation3 + $0xd8] sm:$0xff]
      %v5159 = vld [vmem:[#allocation3 + $0xe0] sm:$0xff]
      %v5160 = vld [vmem:[#allocation3 + $0xe8] sm:$0xff]
      %v5161 = vld [vmem:[#allocation3 + $0xf0] sm:$0xff]
      %v5162 = vld [vmem:[#allocation3 + $0xf8] sm:$0xff]
      %v5163 = vld [vmem:[#allocation3 + $0x100] sm:$0xff]
      %v5164 = vld [vmem:[#allocation3 + $0x108] sm:$0xff]
      %v5165 = vld [vmem:[#allocation3 + $0x110] sm:$0xff]
      %v5166 = vld [vmem:[#allocation3 + $0x118] sm:$0xff]
      %v5167 = vadd.f32 %v5131, %v5042
      %v5168 = vadd.f32 %v5132, %v5044
      %v5169 = vadd.f32 %v5133, %v5047
      %v5170 = vadd.f32 %v5134, %v5049
      %v5171 = vadd.f32 %v5135, %v5052
      %v5172 = vadd.f32 %v5136, %v5054
      %v5173 = vadd.f32 %v5137, %v5057
      %v5174 = vadd.f32 %v5138, %v5059
      %v5175 = vadd.f32 %v5139, %v5062
      %v5176 = vadd.f32 %v5140, %v5064
      %v5177 = vadd.f32 %v5141, %v5067
      %v5178 = vadd.f32 %v5142, %v5069
      %v5179 = vadd.f32 %v5143, %v5072
      %v5180 = vadd.f32 %v5144, %v5074
      %v5181 = vadd.f32 %v5145, %v5077
      %v5182 = vadd.f32 %v5146, %v5079
      %v5183 = vadd.f32 %v5147, %v5082
      %v5184 = vadd.f32 %v5148, %v5084
      %v5185 = vadd.f32 %v5149, %v5087
      %v5186 = vadd.f32 %v5150, %v5089
      %v5187 = vadd.f32 %v5151, %v5092
      %v5188 = vadd.f32 %v5152, %v5094
      %v5189 = vadd.f32 %v5153, %v5097
      %v5190 = vadd.f32 %v5154, %v5099
      %v5191 = vadd.f32 %v5155, %v5102
      %v5192 = vadd.f32 %v5156, %v5104
      %v5193 = vadd.f32 %v5157, %v5107
      %v5194 = vadd.f32 %v5158, %v5109
      %v5195 = vadd.f32 %v5159, %v5112
      %v5196 = vadd.f32 %v5160, %v5114
      %v5197 = vadd.f32 %v5161, %v5117
      %v5198 = vadd.f32 %v5162, %v5119
      %v5199 = vadd.f32 %v5163, %v5122
      %v5200 = vadd.f32 %v5164, %v5124
      %v5201 = vadd.f32 %v5165, %v5127
      %v5202 = vadd.f32 %v5166, %v5129
      %5203 = vst.msk [vmem:[#allocation3] sm:$0xff] %vm2199, %v5167
      %5204 = vst.msk [vmem:[#allocation3 + $0x8] sm:$0xff] %vm2199, %v5168
      %5205 = vst.msk [vmem:[#allocation3 + $0x10] sm:$0xff] %vm2199, %v5169
      %5206 = vst.msk [vmem:[#allocation3 + $0x18] sm:$0xff] %vm2199, %v5170
      %5207 = vst.msk [vmem:[#allocation3 + $0x20] sm:$0xff] %vm2199, %v5171
      %5208 = vst.msk [vmem:[#allocation3 + $0x28] sm:$0xff] %vm2199, %v5172
      %5209 = vst.msk [vmem:[#allocation3 + $0x30] sm:$0xff] %vm2199, %v5173
      %5210 = vst.msk [vmem:[#allocation3 + $0x38] sm:$0xff] %vm2199, %v5174
      %5211 = vst.msk [vmem:[#allocation3 + $0x40] sm:$0xff] %vm2199, %v5175
      %5212 = vst.msk [vmem:[#allocation3 + $0x48] sm:$0xff] %vm2199, %v5176
      %5213 = vst.msk [vmem:[#allocation3 + $0x50] sm:$0xff] %vm2199, %v5177
      %5214 = vst.msk [vmem:[#allocation3 + $0x58] sm:$0xff] %vm2199, %v5178
      %5215 = vst.msk [vmem:[#allocation3 + $0x60] sm:$0xff] %vm2199, %v5179
      %5216 = vst.msk [vmem:[#allocation3 + $0x68] sm:$0xff] %vm2199, %v5180
      %5217 = vst.msk [vmem:[#allocation3 + $0x70] sm:$0xff] %vm2199, %v5181
      %5218 = vst.msk [vmem:[#allocation3 + $0x78] sm:$0xff] %vm2199, %v5182
      %5219 = vst.msk [vmem:[#allocation3 + $0x80] sm:$0xff] %vm2199, %v5183
      %5220 = vst.msk [vmem:[#allocation3 + $0x88] sm:$0xff] %vm2199, %v5184
      %5221 = vst.msk [vmem:[#allocation3 + $0x90] sm:$0xff] %vm2199, %v5185
      %5222 = vst.msk [vmem:[#allocation3 + $0x98] sm:$0xff] %vm2199, %v5186
      %5223 = vst.msk [vmem:[#allocation3 + $0xa0] sm:$0xff] %vm2199, %v5187
      %5224 = vst.msk [vmem:[#allocation3 + $0xa8] sm:$0xff] %vm2199, %v5188
      %5225 = vst.msk [vmem:[#allocation3 + $0xb0] sm:$0xff] %vm2199, %v5189
      %5226 = vst.msk [vmem:[#allocation3 + $0xb8] sm:$0xff] %vm2199, %v5190
      %5227 = vst.msk [vmem:[#allocation3 + $0xc0] sm:$0xff] %vm2199, %v5191
      %5228 = vst.msk [vmem:[#allocation3 + $0xc8] sm:$0xff] %vm2199, %v5192
      %5229 = vst.msk [vmem:[#allocation3 + $0xd0] sm:$0xff] %vm2199, %v5193
      %5230 = vst.msk [vmem:[#allocation3 + $0xd8] sm:$0xff] %vm2199, %v5194
      %5231 = vst.msk [vmem:[#allocation3 + $0xe0] sm:$0xff] %vm2199, %v5195
      %5232 = vst.msk [vmem:[#allocation3 + $0xe8] sm:$0xff] %vm2199, %v5196
      %5233 = vst.msk [vmem:[#allocation3 + $0xf0] sm:$0xff] %vm2199, %v5197
      %5234 = vst.msk [vmem:[#allocation3 + $0xf8] sm:$0xff] %vm2199, %v5198
      %5235 = vst.msk [vmem:[#allocation3 + $0x100] sm:$0xff] %vm2199, %v5199
      %5236 = vst.msk [vmem:[#allocation3 + $0x108] sm:$0xff] %vm2199, %v5200
      %5237 = vst.msk [vmem:[#allocation3 + $0x110] sm:$0xff] %vm2199, %v5201
      %5238 = vst.msk [vmem:[#allocation3 + $0x118] sm:$0xff] %vm2199, %v5202
      %v5239 = vld [vmem:[#allocation2 + $0x10] sm:$0xc]
      %v5240 = vld [vmem:[#allocation2 + $0x14] sm:$0xf]
      %v5241 = vld [vmem:[#allocation2 + $0x18] sm:$0xf]
      %v5242 = vld [vmem:[#allocation2 + $0x1c] sm:$0xf]
      %v5243 = vld [vmem:[#allocation2 + $0x20] sm:$0xf]
      %v5244 = vld [vmem:[#allocation2 + $0x24] sm:$0xf]
      %v5245 = vld [vmem:[#allocation2 + $0x28] sm:$0xf]
      %v5246 = vld [vmem:[#allocation2 + $0x2c] sm:$0xf]
      %v5247 = vld [vmem:[#allocation2 + $0x30] sm:$0xf]
      %v5248 = vld [vmem:[#allocation2 + $0x34] sm:$0xf]
      %v5249 = vld [vmem:[#allocation2 + $0x38] sm:$0xf]
      %v5250 = vld [vmem:[#allocation2 + $0x3c] sm:$0xf]
      %v5251 = vld [vmem:[#allocation2 + $0x40] sm:$0xf]
      %v5252 = vld [vmem:[#allocation2 + $0x44] sm:$0xf]
      %v5253 = vld [vmem:[#allocation2 + $0x48] sm:$0xf]
      %v5254 = vld [vmem:[#allocation2 + $0x4c] sm:$0xf]
      %v5255 = vld [vmem:[#allocation2 + $0x50] sm:$0xf]
      %v5256 = vld [vmem:[#allocation2 + $0x54] sm:$0xf]
      %v5257 = vld [vmem:[#allocation2 + $0x58] sm:$0xf]
      %v5258 = vld [vmem:[#allocation2 + $0x5c] sm:$0xf]
      %v5259 = vld [vmem:[#allocation2 + $0x60] sm:$0xf]
      %v5260 = vld [vmem:[#allocation2 + $0x64] sm:$0xf]
      %v5261 = vld [vmem:[#allocation2 + $0x68] sm:$0xf]
      %v5262 = vld [vmem:[#allocation2 + $0x6c] sm:$0xf]
      %v5263 = vld [vmem:[#allocation2 + $0x70] sm:$0xf]
      %v5264 = vld [vmem:[#allocation2 + $0x74] sm:$0xf]
      %v5265 = vld [vmem:[#allocation2 + $0x78] sm:$0xf]
      %v5266 = vld [vmem:[#allocation2 + $0x7c] sm:$0xf]
      %v5267 = vld [vmem:[#allocation2 + $0x80] sm:$0xf]
      %v5268 = vld [vmem:[#allocation2 + $0x84] sm:$0xf]
      %v5269 = vld [vmem:[#allocation2 + $0x88] sm:$0xf]
      %v5270 = vld [vmem:[#allocation2 + $0x8c] sm:$0xf]
      %v5271 = vld [vmem:[#allocation2 + $0x90] sm:$0xf]
      %v5272 = vld [vmem:[#allocation2 + $0x94] sm:$0xf]
      %v5273 = vld [vmem:[#allocation2 + $0x98] sm:$0xf]
      %v5274 = vld [vmem:[#allocation2 + $0x9c] sm:$0xf]
      %v5275 = vld [vmem:[#allocation2 + $0xa0] sm:$0x7]
      %s5276 = scalar_lea.vmem %s1, 14
      %v5277 = vld [vmem:[%s5276] sm:$0x3]
      %v5315 = vunpack.c.l.b16 %v5239
      %v5316 = vunpack.c.l.b16 %v5240
      %v5317 = vunpack.c.l.b16 %v5241
      %v5318 = vunpack.c.l.b16 %v5242
      %v5319 = vunpack.c.l.b16 %v5243
      %v5320 = vunpack.c.l.b16 %v5244
      %v5321 = vunpack.c.l.b16 %v5245
      %v5322 = vunpack.c.l.b16 %v5246
      %v5323 = vunpack.c.l.b16 %v5247
      %v5324 = vunpack.c.l.b16 %v5248
      %v5325 = vunpack.c.l.b16 %v5249
      %v5326 = vunpack.c.l.b16 %v5250
      %v5327 = vunpack.c.l.b16 %v5251
      %v5328 = vunpack.c.l.b16 %v5252
      %v5329 = vunpack.c.l.b16 %v5253
      %v5330 = vunpack.c.l.b16 %v5254
      %v5331 = vunpack.c.l.b16 %v5255
      %v5332 = vunpack.c.l.b16 %v5256
      %v5333 = vunpack.c.l.b16 %v5257
      %v5334 = vunpack.c.l.b16 %v5258
      %v5335 = vunpack.c.l.b16 %v5259
      %v5336 = vunpack.c.l.b16 %v5260
      %v5337 = vunpack.c.l.b16 %v5261
      %v5338 = vunpack.c.l.b16 %v5262
      %v5339 = vunpack.c.l.b16 %v5263
      %v5340 = vunpack.c.l.b16 %v5264
      %v5341 = vunpack.c.l.b16 %v5265
      %v5342 = vunpack.c.l.b16 %v5266
      %v5343 = vunpack.c.l.b16 %v5267
      %v5344 = vunpack.c.l.b16 %v5268
      %v5345 = vunpack.c.l.b16 %v5269
      %v5346 = vunpack.c.l.b16 %v5270
      %v5347 = vunpack.c.l.b16 %v5271
      %v5348 = vunpack.c.l.b16 %v5272
      %v5349 = vunpack.c.l.b16 %v5273
      %v5350 = vunpack.c.l.b16 %v5274
      %v5351 = vunpack.c.l.b16 %v5275
      %v5352 = vpack.c.b16 %v5316, %v5315
      %v5353 = vpack.c.b16 %v5318, %v5317
      %v5354 = vpack.c.b16 %v5320, %v5319
      %v5355 = vpack.c.b16 %v5322, %v5321
      %v5356 = vpack.c.b16 %v5324, %v5323
      %v5357 = vpack.c.b16 %v5326, %v5325
      %v5358 = vpack.c.b16 %v5328, %v5327
      %v5359 = vpack.c.b16 %v5330, %v5329
      %v5360 = vpack.c.b16 %v5332, %v5331
      %v5361 = vpack.c.b16 %v5334, %v5333
      %v5362 = vpack.c.b16 %v5336, %v5335
      %v5363 = vpack.c.b16 %v5338, %v5337
      %v5364 = vpack.c.b16 %v5340, %v5339
      %v5365 = vpack.c.b16 %v5342, %v5341
      %v5366 = vpack.c.b16 %v5344, %v5343
      %v5367 = vpack.c.b16 %v5346, %v5345
      %v5368 = vpack.c.b16 %v5348, %v5347
      %v5369 = vpack.c.b16 %v5350, %v5349
      %v5370 = vpack.c.b16 %v5351, %v5351
      %vm5371 = vsmask.f32 5376
      %v5373 = vshrl.u32 %v5352, 16
      %v5375 = vrot.slane %v5373, 2
      %v5376 = vshll.u32 %v5352, 16
      %v5378 = vrot.slane %v5376, 3
      %v5379 = vor.u32 %v5375, %v5378
      %v5381 = vshrl.u32 %v5353, 16
      %v5383 = vrot.slane %v5381, 2
      %v5384 = vshll.u32 %v5353, 16
      %v5386 = vrot.slane %v5384, 3
      %v5387 = vor.u32 %v5383, %v5386
      %v5388 = vsel %vm5371, %v5379, %v5387
      %v5390 = vshrl.u32 %v5354, 16
      %v5392 = vrot.slane %v5390, 2
      %v5393 = vshll.u32 %v5354, 16
      %v5395 = vrot.slane %v5393, 3
      %v5396 = vor.u32 %v5392, %v5395
      %v5397 = vsel %vm5371, %v5387, %v5396
      %v5399 = vshrl.u32 %v5355, 16
      %v5401 = vrot.slane %v5399, 2
      %v5402 = vshll.u32 %v5355, 16
      %v5404 = vrot.slane %v5402, 3
      %v5405 = vor.u32 %v5401, %v5404
      %v5406 = vsel %vm5371, %v5396, %v5405
      %v5408 = vshrl.u32 %v5356, 16
      %v5410 = vrot.slane %v5408, 2
      %v5411 = vshll.u32 %v5356, 16
      %v5413 = vrot.slane %v5411, 3
      %v5414 = vor.u32 %v5410, %v5413
      %v5415 = vsel %vm5371, %v5405, %v5414
      %v5417 = vshrl.u32 %v5357, 16
      %v5419 = vrot.slane %v5417, 2
      %v5420 = vshll.u32 %v5357, 16
      %v5422 = vrot.slane %v5420, 3
      %v5423 = vor.u32 %v5419, %v5422
      %v5424 = vsel %vm5371, %v5414, %v5423
      %v5426 = vshrl.u32 %v5358, 16
      %v5428 = vrot.slane %v5426, 2
      %v5429 = vshll.u32 %v5358, 16
      %v5431 = vrot.slane %v5429, 3
      %v5432 = vor.u32 %v5428, %v5431
      %v5433 = vsel %vm5371, %v5423, %v5432
      %v5435 = vshrl.u32 %v5359, 16
      %v5437 = vrot.slane %v5435, 2
      %v5438 = vshll.u32 %v5359, 16
      %v5440 = vrot.slane %v5438, 3
      %v5441 = vor.u32 %v5437, %v5440
      %v5442 = vsel %vm5371, %v5432, %v5441
      %v5444 = vshrl.u32 %v5360, 16
      %v5446 = vrot.slane %v5444, 2
      %v5447 = vshll.u32 %v5360, 16
      %v5449 = vrot.slane %v5447, 3
      %v5450 = vor.u32 %v5446, %v5449
      %v5451 = vsel %vm5371, %v5441, %v5450
      %v5453 = vshrl.u32 %v5361, 16
      %v5455 = vrot.slane %v5453, 2
      %v5456 = vshll.u32 %v5361, 16
      %v5458 = vrot.slane %v5456, 3
      %v5459 = vor.u32 %v5455, %v5458
      %v5460 = vsel %vm5371, %v5450, %v5459
      %v5462 = vshrl.u32 %v5362, 16
      %v5464 = vrot.slane %v5462, 2
      %v5465 = vshll.u32 %v5362, 16
      %v5467 = vrot.slane %v5465, 3
      %v5468 = vor.u32 %v5464, %v5467
      %v5469 = vsel %vm5371, %v5459, %v5468
      %v5471 = vshrl.u32 %v5363, 16
      %v5473 = vrot.slane %v5471, 2
      %v5474 = vshll.u32 %v5363, 16
      %v5476 = vrot.slane %v5474, 3
      %v5477 = vor.u32 %v5473, %v5476
      %v5478 = vsel %vm5371, %v5468, %v5477
      %v5480 = vshrl.u32 %v5364, 16
      %v5482 = vrot.slane %v5480, 2
      %v5483 = vshll.u32 %v5364, 16
      %v5485 = vrot.slane %v5483, 3
      %v5486 = vor.u32 %v5482, %v5485
      %v5487 = vsel %vm5371, %v5477, %v5486
      %v5489 = vshrl.u32 %v5365, 16
      %v5491 = vrot.slane %v5489, 2
      %v5492 = vshll.u32 %v5365, 16
      %v5494 = vrot.slane %v5492, 3
      %v5495 = vor.u32 %v5491, %v5494
      %v5496 = vsel %vm5371, %v5486, %v5495
      %v5498 = vshrl.u32 %v5366, 16
      %v5500 = vrot.slane %v5498, 2
      %v5501 = vshll.u32 %v5366, 16
      %v5503 = vrot.slane %v5501, 3
      %v5504 = vor.u32 %v5500, %v5503
      %v5505 = vsel %vm5371, %v5495, %v5504
      %v5507 = vshrl.u32 %v5367, 16
      %v5509 = vrot.slane %v5507, 2
      %v5510 = vshll.u32 %v5367, 16
      %v5512 = vrot.slane %v5510, 3
      %v5513 = vor.u32 %v5509, %v5512
      %v5514 = vsel %vm5371, %v5504, %v5513
      %v5516 = vshrl.u32 %v5368, 16
      %v5518 = vrot.slane %v5516, 2
      %v5519 = vshll.u32 %v5368, 16
      %v5521 = vrot.slane %v5519, 3
      %v5522 = vor.u32 %v5518, %v5521
      %v5523 = vsel %vm5371, %v5513, %v5522
      %v5525 = vshrl.u32 %v5369, 16
      %v5527 = vrot.slane %v5525, 2
      %v5528 = vshll.u32 %v5369, 16
      %v5530 = vrot.slane %v5528, 3
      %v5531 = vor.u32 %v5527, %v5530
      %v5532 = vsel %vm5371, %v5522, %v5531
      %v5534 = vshrl.u32 %v5370, 16
      %v5536 = vrot.slane %v5534, 2
      %v5537 = vshll.u32 %v5370, 16
      %v5539 = vrot.slane %v5537, 3
      %v5540 = vor.u32 %v5536, %v5539
      %v5541 = vsel %vm5371, %v5531, %v5540
      %v5543 = vsel %vm2199, %v5388, 0
      %v5546 = vsel %vm2199, %v5397, 0
      %v5549 = vsel %vm2199, %v5406, 0
      %v5552 = vsel %vm2199, %v5415, 0
      %v5555 = vsel %vm2199, %v5424, 0
      %v5558 = vsel %vm2199, %v5433, 0
      %v5561 = vsel %vm2199, %v5442, 0
      %v5564 = vsel %vm2199, %v5451, 0
      %v5567 = vsel %vm2199, %v5460, 0
      %v5570 = vsel %vm2199, %v5469, 0
      %v5573 = vsel %vm2199, %v5478, 0
      %v5576 = vsel %vm2199, %v5487, 0
      %v5579 = vsel %vm2199, %v5496, 0
      %v5582 = vsel %vm2199, %v5505, 0
      %v5585 = vsel %vm2199, %v5514, 0
      %v5588 = vsel %vm2199, %v5523, 0
      %v5591 = vsel %vm2199, %v5532, 0
      %v5594 = vsel %vm2199, %v5541, 0
      %v5597 = vsel %vm2254, %v5277, 0
      %5599 = vmatpush.bf16.msra.mxu0 0
      %5600 = vmatpush.bf16.msra.mxu0 0
      %5601 = vmatpush.bf16.msra.mxu0 0
      %5602 = vmatpush.bf16.msra.mxu0 0
      %5603 = vmatpush.bf16.msra.mxu0 0
      %5604 = vmatpush.bf16.msra.mxu0 0
      %5605 = vmatpush.bf16.msra.mxu0 0
      %5606 = vmatpush.bf16.msra.mxu0 %v5597
      %5607 = vmatmul.bf16.gmra.mxu0 %v5543
      %v5608 = vpop.f32.mrf.mxu0
      %v5609 = vadd.f32 0.0, %v5608
      %v5610 = vpop.f32.mrf.mxu0
      %v5611 = vadd.f32 0.0, %v5610
      %5612 = vmatmul.bf16.gmra.mxu0 %v5546
      %v5613 = vpop.f32.mrf.mxu0
      %v5614 = vadd.f32 0.0, %v5613
      %v5615 = vpop.f32.mrf.mxu0
      %v5616 = vadd.f32 0.0, %v5615
      %5617 = vmatmul.bf16.gmra.mxu0 %v5549
      %v5618 = vpop.f32.mrf.mxu0
      %v5619 = vadd.f32 0.0, %v5618
      %v5620 = vpop.f32.mrf.mxu0
      %v5621 = vadd.f32 0.0, %v5620
      %5622 = vmatmul.bf16.gmra.mxu0 %v5552
      %v5623 = vpop.f32.mrf.mxu0
      %v5624 = vadd.f32 0.0, %v5623
      %v5625 = vpop.f32.mrf.mxu0
      %v5626 = vadd.f32 0.0, %v5625
      %5627 = vmatmul.bf16.gmra.mxu0 %v5555
      %v5628 = vpop.f32.mrf.mxu0
      %v5629 = vadd.f32 0.0, %v5628
      %v5630 = vpop.f32.mrf.mxu0
      %v5631 = vadd.f32 0.0, %v5630
      %5632 = vmatmul.bf16.gmra.mxu0 %v5558
      %v5633 = vpop.f32.mrf.mxu0
      %v5634 = vadd.f32 0.0, %v5633
      %v5635 = vpop.f32.mrf.mxu0
      %v5636 = vadd.f32 0.0, %v5635
      %5637 = vmatmul.bf16.gmra.mxu0 %v5561
      %v5638 = vpop.f32.mrf.mxu0
      %v5639 = vadd.f32 0.0, %v5638
      %v5640 = vpop.f32.mrf.mxu0
      %v5641 = vadd.f32 0.0, %v5640
      %5642 = vmatmul.bf16.gmra.mxu0 %v5564
      %v5643 = vpop.f32.mrf.mxu0
      %v5644 = vadd.f32 0.0, %v5643
      %v5645 = vpop.f32.mrf.mxu0
      %v5646 = vadd.f32 0.0, %v5645
      %5647 = vmatmul.bf16.gmra.mxu0 %v5567
      %v5648 = vpop.f32.mrf.mxu0
      %v5649 = vadd.f32 0.0, %v5648
      %v5650 = vpop.f32.mrf.mxu0
      %v5651 = vadd.f32 0.0, %v5650
      %5652 = vmatmul.bf16.gmra.mxu0 %v5570
      %v5653 = vpop.f32.mrf.mxu0
      %v5654 = vadd.f32 0.0, %v5653
      %v5655 = vpop.f32.mrf.mxu0
      %v5656 = vadd.f32 0.0, %v5655
      %5657 = vmatmul.bf16.gmra.mxu0 %v5573
      %v5658 = vpop.f32.mrf.mxu0
      %v5659 = vadd.f32 0.0, %v5658
      %v5660 = vpop.f32.mrf.mxu0
      %v5661 = vadd.f32 0.0, %v5660
      %5662 = vmatmul.bf16.gmra.mxu0 %v5576
      %v5663 = vpop.f32.mrf.mxu0
      %v5664 = vadd.f32 0.0, %v5663
      %v5665 = vpop.f32.mrf.mxu0
      %v5666 = vadd.f32 0.0, %v5665
      %5667 = vmatmul.bf16.gmra.mxu0 %v5579
      %v5668 = vpop.f32.mrf.mxu0
      %v5669 = vadd.f32 0.0, %v5668
      %v5670 = vpop.f32.mrf.mxu0
      %v5671 = vadd.f32 0.0, %v5670
      %5672 = vmatmul.bf16.gmra.mxu0 %v5582
      %v5673 = vpop.f32.mrf.mxu0
      %v5674 = vadd.f32 0.0, %v5673
      %v5675 = vpop.f32.mrf.mxu0
      %v5676 = vadd.f32 0.0, %v5675
      %5677 = vmatmul.bf16.gmra.mxu0 %v5585
      %v5678 = vpop.f32.mrf.mxu0
      %v5679 = vadd.f32 0.0, %v5678
      %v5680 = vpop.f32.mrf.mxu0
      %v5681 = vadd.f32 0.0, %v5680
      %5682 = vmatmul.bf16.gmra.mxu0 %v5588
      %v5683 = vpop.f32.mrf.mxu0
      %v5684 = vadd.f32 0.0, %v5683
      %v5685 = vpop.f32.mrf.mxu0
      %v5686 = vadd.f32 0.0, %v5685
      %5687 = vmatmul.bf16.gmra.mxu0 %v5591
      %v5688 = vpop.f32.mrf.mxu0
      %v5689 = vadd.f32 0.0, %v5688
      %v5690 = vpop.f32.mrf.mxu0
      %v5691 = vadd.f32 0.0, %v5690
      %5692 = vmatmul.bf16.gmra.mxu0 %v5594
      %v5693 = vpop.f32.mrf.mxu0
      %v5694 = vadd.f32 0.0, %v5693
      %v5695 = vpop.f32.mrf.mxu0
      %v5696 = vadd.f32 0.0, %v5695
      %5697 = vdwg.mxu0
      %v5698 = vld [vmem:[#allocation3] sm:$0xff]
      %v5699 = vld [vmem:[#allocation3 + $0x8] sm:$0xff]
      %v5700 = vld [vmem:[#allocation3 + $0x10] sm:$0xff]
      %v5701 = vld [vmem:[#allocation3 + $0x18] sm:$0xff]
      %v5702 = vld [vmem:[#allocation3 + $0x20] sm:$0xff]
      %v5703 = vld [vmem:[#allocation3 + $0x28] sm:$0xff]
      %v5704 = vld [vmem:[#allocation3 + $0x30] sm:$0xff]
      %v5705 = vld [vmem:[#allocation3 + $0x38] sm:$0xff]
      %v5706 = vld [vmem:[#allocation3 + $0x40] sm:$0xff]
      %v5707 = vld [vmem:[#allocation3 + $0x48] sm:$0xff]
      %v5708 = vld [vmem:[#allocation3 + $0x50] sm:$0xff]
      %v5709 = vld [vmem:[#allocation3 + $0x58] sm:$0xff]
      %v5710 = vld [vmem:[#allocation3 + $0x60] sm:$0xff]
      %v5711 = vld [vmem:[#allocation3 + $0x68] sm:$0xff]
      %v5712 = vld [vmem:[#allocation3 + $0x70] sm:$0xff]
      %v5713 = vld [vmem:[#allocation3 + $0x78] sm:$0xff]
      %v5714 = vld [vmem:[#allocation3 + $0x80] sm:$0xff]
      %v5715 = vld [vmem:[#allocation3 + $0x88] sm:$0xff]
      %v5716 = vld [vmem:[#allocation3 + $0x90] sm:$0xff]
      %v5717 = vld [vmem:[#allocation3 + $0x98] sm:$0xff]
      %v5718 = vld [vmem:[#allocation3 + $0xa0] sm:$0xff]
      %v5719 = vld [vmem:[#allocation3 + $0xa8] sm:$0xff]
      %v5720 = vld [vmem:[#allocation3 + $0xb0] sm:$0xff]
      %v5721 = vld [vmem:[#allocation3 + $0xb8] sm:$0xff]
      %v5722 = vld [vmem:[#allocation3 + $0xc0] sm:$0xff]
      %v5723 = vld [vmem:[#allocation3 + $0xc8] sm:$0xff]
      %v5724 = vld [vmem:[#allocation3 + $0xd0] sm:$0xff]
      %v5725 = vld [vmem:[#allocation3 + $0xd8] sm:$0xff]
      %v5726 = vld [vmem:[#allocation3 + $0xe0] sm:$0xff]
      %v5727 = vld [vmem:[#allocation3 + $0xe8] sm:$0xff]
      %v5728 = vld [vmem:[#allocation3 + $0xf0] sm:$0xff]
      %v5729 = vld [vmem:[#allocation3 + $0xf8] sm:$0xff]
      %v5730 = vld [vmem:[#allocation3 + $0x100] sm:$0xff]
      %v5731 = vld [vmem:[#allocation3 + $0x108] sm:$0xff]
      %v5732 = vld [vmem:[#allocation3 + $0x110] sm:$0xff]
      %v5733 = vld [vmem:[#allocation3 + $0x118] sm:$0xff]
      %v5734 = vadd.f32 %v5698, %v5609
      %v5735 = vadd.f32 %v5699, %v5611
      %v5736 = vadd.f32 %v5700, %v5614
      %v5737 = vadd.f32 %v5701, %v5616
      %v5738 = vadd.f32 %v5702, %v5619
      %v5739 = vadd.f32 %v5703, %v5621
      %v5740 = vadd.f32 %v5704, %v5624
      %v5741 = vadd.f32 %v5705, %v5626
      %v5742 = vadd.f32 %v5706, %v5629
      %v5743 = vadd.f32 %v5707, %v5631
      %v5744 = vadd.f32 %v5708, %v5634
      %v5745 = vadd.f32 %v5709, %v5636
      %v5746 = vadd.f32 %v5710, %v5639
      %v5747 = vadd.f32 %v5711, %v5641
      %v5748 = vadd.f32 %v5712, %v5644
      %v5749 = vadd.f32 %v5713, %v5646
      %v5750 = vadd.f32 %v5714, %v5649
      %v5751 = vadd.f32 %v5715, %v5651
      %v5752 = vadd.f32 %v5716, %v5654
      %v5753 = vadd.f32 %v5717, %v5656
      %v5754 = vadd.f32 %v5718, %v5659
      %v5755 = vadd.f32 %v5719, %v5661
      %v5756 = vadd.f32 %v5720, %v5664
      %v5757 = vadd.f32 %v5721, %v5666
      %v5758 = vadd.f32 %v5722, %v5669
      %v5759 = vadd.f32 %v5723, %v5671
      %v5760 = vadd.f32 %v5724, %v5674
      %v5761 = vadd.f32 %v5725, %v5676
      %v5762 = vadd.f32 %v5726, %v5679
      %v5763 = vadd.f32 %v5727, %v5681
      %v5764 = vadd.f32 %v5728, %v5684
      %v5765 = vadd.f32 %v5729, %v5686
      %v5766 = vadd.f32 %v5730, %v5689
      %v5767 = vadd.f32 %v5731, %v5691
      %v5768 = vadd.f32 %v5732, %v5694
      %v5769 = vadd.f32 %v5733, %v5696
      %5770 = vst.msk [vmem:[#allocation3] sm:$0xff] %vm2199, %v5734
      %5771 = vst.msk [vmem:[#allocation3 + $0x8] sm:$0xff] %vm2199, %v5735
      %5772 = vst.msk [vmem:[#allocation3 + $0x10] sm:$0xff] %vm2199, %v5736
      %5773 = vst.msk [vmem:[#allocation3 + $0x18] sm:$0xff] %vm2199, %v5737
      %5774 = vst.msk [vmem:[#allocation3 + $0x20] sm:$0xff] %vm2199, %v5738
      %5775 = vst.msk [vmem:[#allocation3 + $0x28] sm:$0xff] %vm2199, %v5739
      %5776 = vst.msk [vmem:[#allocation3 + $0x30] sm:$0xff] %vm2199, %v5740
      %5777 = vst.msk [vmem:[#allocation3 + $0x38] sm:$0xff] %vm2199, %v5741
      %5778 = vst.msk [vmem:[#allocation3 + $0x40] sm:$0xff] %vm2199, %v5742
      %5779 = vst.msk [vmem:[#allocation3 + $0x48] sm:$0xff] %vm2199, %v5743
      %5780 = vst.msk [vmem:[#allocation3 + $0x50] sm:$0xff] %vm2199, %v5744
      %5781 = vst.msk [vmem:[#allocation3 + $0x58] sm:$0xff] %vm2199, %v5745
      %5782 = vst.msk [vmem:[#allocation3 + $0x60] sm:$0xff] %vm2199, %v5746
      %5783 = vst.msk [vmem:[#allocation3 + $0x68] sm:$0xff] %vm2199, %v5747
      %5784 = vst.msk [vmem:[#allocation3 + $0x70] sm:$0xff] %vm2199, %v5748
      %5785 = vst.msk [vmem:[#allocation3 + $0x78] sm:$0xff] %vm2199, %v5749
      %5786 = vst.msk [vmem:[#allocation3 + $0x80] sm:$0xff] %vm2199, %v5750
      %5787 = vst.msk [vmem:[#allocation3 + $0x88] sm:$0xff] %vm2199, %v5751
      %5788 = vst.msk [vmem:[#allocation3 + $0x90] sm:$0xff] %vm2199, %v5752
      %5789 = vst.msk [vmem:[#allocation3 + $0x98] sm:$0xff] %vm2199, %v5753
      %5790 = vst.msk [vmem:[#allocation3 + $0xa0] sm:$0xff] %vm2199, %v5754
      %5791 = vst.msk [vmem:[#allocation3 + $0xa8] sm:$0xff] %vm2199, %v5755
      %5792 = vst.msk [vmem:[#allocation3 + $0xb0] sm:$0xff] %vm2199, %v5756
      %5793 = vst.msk [vmem:[#allocation3 + $0xb8] sm:$0xff] %vm2199, %v5757
      %5794 = vst.msk [vmem:[#allocation3 + $0xc0] sm:$0xff] %vm2199, %v5758
      %5795 = vst.msk [vmem:[#allocation3 + $0xc8] sm:$0xff] %vm2199, %v5759
      %5796 = vst.msk [vmem:[#allocation3 + $0xd0] sm:$0xff] %vm2199, %v5760
      %5797 = vst.msk [vmem:[#allocation3 + $0xd8] sm:$0xff] %vm2199, %v5761
      %5798 = vst.msk [vmem:[#allocation3 + $0xe0] sm:$0xff] %vm2199, %v5762
      %5799 = vst.msk [vmem:[#allocation3 + $0xe8] sm:$0xff] %vm2199, %v5763
      %5800 = vst.msk [vmem:[#allocation3 + $0xf0] sm:$0xff] %vm2199, %v5764
      %5801 = vst.msk [vmem:[#allocation3 + $0xf8] sm:$0xff] %vm2199, %v5765
      %5802 = vst.msk [vmem:[#allocation3 + $0x100] sm:$0xff] %vm2199, %v5766
      %5803 = vst.msk [vmem:[#allocation3 + $0x108] sm:$0xff] %vm2199, %v5767
      %5804 = vst.msk [vmem:[#allocation3 + $0x110] sm:$0xff] %vm2199, %v5768
      %5805 = vst.msk [vmem:[#allocation3 + $0x118] sm:$0xff] %vm2199, %v5769
      %v5806 = vld [vmem:[#allocation2 + $0x10] sm:$0x8]
      %v5807 = vld [vmem:[#allocation2 + $0x14] sm:$0xf]
      %v5808 = vld [vmem:[#allocation2 + $0x18] sm:$0xf]
      %v5809 = vld [vmem:[#allocation2 + $0x1c] sm:$0xf]
      %v5810 = vld [vmem:[#allocation2 + $0x20] sm:$0xf]
      %v5811 = vld [vmem:[#allocation2 + $0x24] sm:$0xf]
      %v5812 = vld [vmem:[#allocation2 + $0x28] sm:$0xf]
      %v5813 = vld [vmem:[#allocation2 + $0x2c] sm:$0xf]
      %v5814 = vld [vmem:[#allocation2 + $0x30] sm:$0xf]
      %v5815 = vld [vmem:[#allocation2 + $0x34] sm:$0xf]
      %v5816 = vld [vmem:[#allocation2 + $0x38] sm:$0xf]
      %v5817 = vld [vmem:[#allocation2 + $0x3c] sm:$0xf]
      %v5818 = vld [vmem:[#allocation2 + $0x40] sm:$0xf]
      %v5819 = vld [vmem:[#allocation2 + $0x44] sm:$0xf]
      %v5820 = vld [vmem:[#allocation2 + $0x48] sm:$0xf]
      %v5821 = vld [vmem:[#allocation2 + $0x4c] sm:$0xf]
      %v5822 = vld [vmem:[#allocation2 + $0x50] sm:$0xf]
      %v5823 = vld [vmem:[#allocation2 + $0x54] sm:$0xf]
      %v5824 = vld [vmem:[#allocation2 + $0x58] sm:$0xf]
      %v5825 = vld [vmem:[#allocation2 + $0x5c] sm:$0xf]
      %v5826 = vld [vmem:[#allocation2 + $0x60] sm:$0xf]
      %v5827 = vld [vmem:[#allocation2 + $0x64] sm:$0xf]
      %v5828 = vld [vmem:[#allocation2 + $0x68] sm:$0xf]
      %v5829 = vld [vmem:[#allocation2 + $0x6c] sm:$0xf]
      %v5830 = vld [vmem:[#allocation2 + $0x70] sm:$0xf]
      %v5831 = vld [vmem:[#allocation2 + $0x74] sm:$0xf]
      %v5832 = vld [vmem:[#allocation2 + $0x78] sm:$0xf]
      %v5833 = vld [vmem:[#allocation2 + $0x7c] sm:$0xf]
      %v5834 = vld [vmem:[#allocation2 + $0x80] sm:$0xf]
      %v5835 = vld [vmem:[#allocation2 + $0x84] sm:$0xf]
      %v5836 = vld [vmem:[#allocation2 + $0x88] sm:$0xf]
      %v5837 = vld [vmem:[#allocation2 + $0x8c] sm:$0xf]
      %v5838 = vld [vmem:[#allocation2 + $0x90] sm:$0xf]
      %v5839 = vld [vmem:[#allocation2 + $0x94] sm:$0xf]
      %v5840 = vld [vmem:[#allocation2 + $0x98] sm:$0xf]
      %v5841 = vld [vmem:[#allocation2 + $0x9c] sm:$0xf]
      %v5842 = vld [vmem:[#allocation2 + $0xa0] sm:$0x7]
      %s5843 = scalar_lea.vmem %s1, 16
      %v5844 = vld [vmem:[%s5843] sm:$0x3]
      %v5882 = vunpack.c.l.b16 %v5806
      %v5883 = vunpack.c.l.b16 %v5807
      %v5884 = vunpack.c.l.b16 %v5808
      %v5885 = vunpack.c.l.b16 %v5809
      %v5886 = vunpack.c.l.b16 %v5810
      %v5887 = vunpack.c.l.b16 %v5811
      %v5888 = vunpack.c.l.b16 %v5812
      %v5889 = vunpack.c.l.b16 %v5813
      %v5890 = vunpack.c.l.b16 %v5814
      %v5891 = vunpack.c.l.b16 %v5815
      %v5892 = vunpack.c.l.b16 %v5816
      %v5893 = vunpack.c.l.b16 %v5817
      %v5894 = vunpack.c.l.b16 %v5818
      %v5895 = vunpack.c.l.b16 %v5819
      %v5896 = vunpack.c.l.b16 %v5820
      %v5897 = vunpack.c.l.b16 %v5821
      %v5898 = vunpack.c.l.b16 %v5822
      %v5899 = vunpack.c.l.b16 %v5823
      %v5900 = vunpack.c.l.b16 %v5824
      %v5901 = vunpack.c.l.b16 %v5825
      %v5902 = vunpack.c.l.b16 %v5826
      %v5903 = vunpack.c.l.b16 %v5827
      %v5904 = vunpack.c.l.b16 %v5828
      %v5905 = vunpack.c.l.b16 %v5829
      %v5906 = vunpack.c.l.b16 %v5830
      %v5907 = vunpack.c.l.b16 %v5831
      %v5908 = vunpack.c.l.b16 %v5832
      %v5909 = vunpack.c.l.b16 %v5833
      %v5910 = vunpack.c.l.b16 %v5834
      %v5911 = vunpack.c.l.b16 %v5835
      %v5912 = vunpack.c.l.b16 %v5836
      %v5913 = vunpack.c.l.b16 %v5837
      %v5914 = vunpack.c.l.b16 %v5838
      %v5915 = vunpack.c.l.b16 %v5839
      %v5916 = vunpack.c.l.b16 %v5840
      %v5917 = vunpack.c.l.b16 %v5841
      %v5918 = vunpack.c.l.b16 %v5842
      %v5919 = vpack.c.b16 %v5883, %v5882
      %v5920 = vpack.c.b16 %v5885, %v5884
      %v5921 = vpack.c.b16 %v5887, %v5886
      %v5922 = vpack.c.b16 %v5889, %v5888
      %v5923 = vpack.c.b16 %v5891, %v5890
      %v5924 = vpack.c.b16 %v5893, %v5892
      %v5925 = vpack.c.b16 %v5895, %v5894
      %v5926 = vpack.c.b16 %v5897, %v5896
      %v5927 = vpack.c.b16 %v5899, %v5898
      %v5928 = vpack.c.b16 %v5901, %v5900
      %v5929 = vpack.c.b16 %v5903, %v5902
      %v5930 = vpack.c.b16 %v5905, %v5904
      %v5931 = vpack.c.b16 %v5907, %v5906
      %v5932 = vpack.c.b16 %v5909, %v5908
      %v5933 = vpack.c.b16 %v5911, %v5910
      %v5934 = vpack.c.b16 %v5913, %v5912
      %v5935 = vpack.c.b16 %v5915, %v5914
      %v5936 = vpack.c.b16 %v5917, %v5916
      %v5937 = vpack.c.b16 %v5918, %v5918
      %vm5938 = vcmask 1044480
      %v5939 = vrot.slane %v5919, 3
      %v5940 = vrot.slane %v5920, 3
      %v5941 = vsel %vm5938, %v5939, %v5940
      %v5942 = vrot.slane %v5921, 3
      %v5943 = vsel %vm5938, %v5940, %v5942
      %v5944 = vrot.slane %v5922, 3
      %v5945 = vsel %vm5938, %v5942, %v5944
      %v5946 = vrot.slane %v5923, 3
      %v5947 = vsel %vm5938, %v5944, %v5946
      %v5948 = vrot.slane %v5924, 3
      %v5949 = vsel %vm5938, %v5946, %v5948
      %v5950 = vrot.slane %v5925, 3
      %v5951 = vsel %vm5938, %v5948, %v5950
      %v5952 = vrot.slane %v5926, 3
      %v5953 = vsel %vm5938, %v5950, %v5952
      %v5954 = vrot.slane %v5927, 3
      %v5955 = vsel %vm5938, %v5952, %v5954
      %v5956 = vrot.slane %v5928, 3
      %v5957 = vsel %vm5938, %v5954, %v5956
      %v5958 = vrot.slane %v5929, 3
      %v5959 = vsel %vm5938, %v5956, %v5958
      %v5960 = vrot.slane %v5930, 3
      %v5961 = vsel %vm5938, %v5958, %v5960
      %v5962 = vrot.slane %v5931, 3
      %v5963 = vsel %vm5938, %v5960, %v5962
      %v5964 = vrot.slane %v5932, 3
      %v5965 = vsel %vm5938, %v5962, %v5964
      %v5966 = vrot.slane %v5933, 3
      %v5967 = vsel %vm5938, %v5964, %v5966
      %v5968 = vrot.slane %v5934, 3
      %v5969 = vsel %vm5938, %v5966, %v5968
      %v5970 = vrot.slane %v5935, 3
      %v5971 = vsel %vm5938, %v5968, %v5970
      %v5972 = vrot.slane %v5936, 3
      %v5973 = vsel %vm5938, %v5970, %v5972
      %v5974 = vrot.slane %v5937, 3
      %v5975 = vsel %vm5938, %v5972, %v5974
      %v5977 = vsel %vm2199, %v5941, 0
      %v5980 = vsel %vm2199, %v5943, 0
      %v5983 = vsel %vm2199, %v5945, 0
      %v5986 = vsel %vm2199, %v5947, 0
      %v5989 = vsel %vm2199, %v5949, 0
      %v5992 = vsel %vm2199, %v5951, 0
      %v5995 = vsel %vm2199, %v5953, 0
      %v5998 = vsel %vm2199, %v5955, 0
      %v6001 = vsel %vm2199, %v5957, 0
      %v6004 = vsel %vm2199, %v5959, 0
      %v6007 = vsel %vm2199, %v5961, 0
      %v6010 = vsel %vm2199, %v5963, 0
      %v6013 = vsel %vm2199, %v5965, 0
      %v6016 = vsel %vm2199, %v5967, 0
      %v6019 = vsel %vm2199, %v5969, 0
      %v6022 = vsel %vm2199, %v5971, 0
      %v6025 = vsel %vm2199, %v5973, 0
      %v6028 = vsel %vm2199, %v5975, 0
      %v6031 = vsel %vm2254, %v5844, 0
      %6033 = vmatpush.bf16.msra.mxu0 0
      %6034 = vmatpush.bf16.msra.mxu0 0
      %6035 = vmatpush.bf16.msra.mxu0 0
      %6036 = vmatpush.bf16.msra.mxu0 0
      %6037 = vmatpush.bf16.msra.mxu0 0
      %6038 = vmatpush.bf16.msra.mxu0 0
      %6039 = vmatpush.bf16.msra.mxu0 0
      %6040 = vmatpush.bf16.msra.mxu0 %v6031
      %6041 = vmatmul.bf16.gmra.mxu0 %v5977
      %v6042 = vpop.f32.mrf.mxu0
      %v6043 = vadd.f32 0.0, %v6042
      %v6044 = vpop.f32.mrf.mxu0
      %v6045 = vadd.f32 0.0, %v6044
      %6046 = vmatmul.bf16.gmra.mxu0 %v5980
      %v6047 = vpop.f32.mrf.mxu0
      %v6048 = vadd.f32 0.0, %v6047
      %v6049 = vpop.f32.mrf.mxu0
      %v6050 = vadd.f32 0.0, %v6049
      %6051 = vmatmul.bf16.gmra.mxu0 %v5983
      %v6052 = vpop.f32.mrf.mxu0
      %v6053 = vadd.f32 0.0, %v6052
      %v6054 = vpop.f32.mrf.mxu0
      %v6055 = vadd.f32 0.0, %v6054
      %6056 = vmatmul.bf16.gmra.mxu0 %v5986
      %v6057 = vpop.f32.mrf.mxu0
      %v6058 = vadd.f32 0.0, %v6057
      %v6059 = vpop.f32.mrf.mxu0
      %v6060 = vadd.f32 0.0, %v6059
      %6061 = vmatmul.bf16.gmra.mxu0 %v5989
      %v6062 = vpop.f32.mrf.mxu0
      %v6063 = vadd.f32 0.0, %v6062
      %v6064 = vpop.f32.mrf.mxu0
      %v6065 = vadd.f32 0.0, %v6064
      %6066 = vmatmul.bf16.gmra.mxu0 %v5992
      %v6067 = vpop.f32.mrf.mxu0
      %v6068 = vadd.f32 0.0, %v6067
      %v6069 = vpop.f32.mrf.mxu0
      %v6070 = vadd.f32 0.0, %v6069
      %6071 = vmatmul.bf16.gmra.mxu0 %v5995
      %v6072 = vpop.f32.mrf.mxu0
      %v6073 = vadd.f32 0.0, %v6072
      %v6074 = vpop.f32.mrf.mxu0
      %v6075 = vadd.f32 0.0, %v6074
      %6076 = vmatmul.bf16.gmra.mxu0 %v5998
      %v6077 = vpop.f32.mrf.mxu0
      %v6078 = vadd.f32 0.0, %v6077
      %v6079 = vpop.f32.mrf.mxu0
      %v6080 = vadd.f32 0.0, %v6079
      %6081 = vmatmul.bf16.gmra.mxu0 %v6001
      %v6082 = vpop.f32.mrf.mxu0
      %v6083 = vadd.f32 0.0, %v6082
      %v6084 = vpop.f32.mrf.mxu0
      %v6085 = vadd.f32 0.0, %v6084
      %6086 = vmatmul.bf16.gmra.mxu0 %v6004
      %v6087 = vpop.f32.mrf.mxu0
      %v6088 = vadd.f32 0.0, %v6087
      %v6089 = vpop.f32.mrf.mxu0
      %v6090 = vadd.f32 0.0, %v6089
      %6091 = vmatmul.bf16.gmra.mxu0 %v6007
      %v6092 = vpop.f32.mrf.mxu0
      %v6093 = vadd.f32 0.0, %v6092
      %v6094 = vpop.f32.mrf.mxu0
      %v6095 = vadd.f32 0.0, %v6094
      %6096 = vmatmul.bf16.gmra.mxu0 %v6010
      %v6097 = vpop.f32.mrf.mxu0
      %v6098 = vadd.f32 0.0, %v6097
      %v6099 = vpop.f32.mrf.mxu0
      %v6100 = vadd.f32 0.0, %v6099
      %6101 = vmatmul.bf16.gmra.mxu0 %v6013
      %v6102 = vpop.f32.mrf.mxu0
      %v6103 = vadd.f32 0.0, %v6102
      %v6104 = vpop.f32.mrf.mxu0
      %v6105 = vadd.f32 0.0, %v6104
      %6106 = vmatmul.bf16.gmra.mxu0 %v6016
      %v6107 = vpop.f32.mrf.mxu0
      %v6108 = vadd.f32 0.0, %v6107
      %v6109 = vpop.f32.mrf.mxu0
      %v6110 = vadd.f32 0.0, %v6109
      %6111 = vmatmul.bf16.gmra.mxu0 %v6019
      %v6112 = vpop.f32.mrf.mxu0
      %v6113 = vadd.f32 0.0, %v6112
      %v6114 = vpop.f32.mrf.mxu0
      %v6115 = vadd.f32 0.0, %v6114
      %6116 = vmatmul.bf16.gmra.mxu0 %v6022
      %v6117 = vpop.f32.mrf.mxu0
      %v6118 = vadd.f32 0.0, %v6117
      %v6119 = vpop.f32.mrf.mxu0
      %v6120 = vadd.f32 0.0, %v6119
      %6121 = vmatmul.bf16.gmra.mxu0 %v6025
      %v6122 = vpop.f32.mrf.mxu0
      %v6123 = vadd.f32 0.0, %v6122
      %v6124 = vpop.f32.mrf.mxu0
      %v6125 = vadd.f32 0.0, %v6124
      %6126 = vmatmul.bf16.gmra.mxu0 %v6028
      %v6127 = vpop.f32.mrf.mxu0
      %v6128 = vadd.f32 0.0, %v6127
      %v6129 = vpop.f32.mrf.mxu0
      %v6130 = vadd.f32 0.0, %v6129
      %6131 = vdwg.mxu0
      %v6132 = vld [vmem:[#allocation3] sm:$0xff]
      %v6133 = vld [vmem:[#allocation3 + $0x8] sm:$0xff]
      %v6134 = vld [vmem:[#allocation3 + $0x10] sm:$0xff]
      %v6135 = vld [vmem:[#allocation3 + $0x18] sm:$0xff]
      %v6136 = vld [vmem:[#allocation3 + $0x20] sm:$0xff]
      %v6137 = vld [vmem:[#allocation3 + $0x28] sm:$0xff]
      %v6138 = vld [vmem:[#allocation3 + $0x30] sm:$0xff]
      %v6139 = vld [vmem:[#allocation3 + $0x38] sm:$0xff]
      %v6140 = vld [vmem:[#allocation3 + $0x40] sm:$0xff]
      %v6141 = vld [vmem:[#allocation3 + $0x48] sm:$0xff]
      %v6142 = vld [vmem:[#allocation3 + $0x50] sm:$0xff]
      %v6143 = vld [vmem:[#allocation3 + $0x58] sm:$0xff]
      %v6144 = vld [vmem:[#allocation3 + $0x60] sm:$0xff]
      %v6145 = vld [vmem:[#allocation3 + $0x68] sm:$0xff]
      %v6146 = vld [vmem:[#allocation3 + $0x70] sm:$0xff]
      %v6147 = vld [vmem:[#allocation3 + $0x78] sm:$0xff]
      %v6148 = vld [vmem:[#allocation3 + $0x80] sm:$0xff]
      %v6149 = vld [vmem:[#allocation3 + $0x88] sm:$0xff]
      %v6150 = vld [vmem:[#allocation3 + $0x90] sm:$0xff]
      %v6151 = vld [vmem:[#allocation3 + $0x98] sm:$0xff]
      %v6152 = vld [vmem:[#allocation3 + $0xa0] sm:$0xff]
      %v6153 = vld [vmem:[#allocation3 + $0xa8] sm:$0xff]
      %v6154 = vld [vmem:[#allocation3 + $0xb0] sm:$0xff]
      %v6155 = vld [vmem:[#allocation3 + $0xb8] sm:$0xff]
      %v6156 = vld [vmem:[#allocation3 + $0xc0] sm:$0xff]
      %v6157 = vld [vmem:[#allocation3 + $0xc8] sm:$0xff]
      %v6158 = vld [vmem:[#allocation3 + $0xd0] sm:$0xff]
      %v6159 = vld [vmem:[#allocation3 + $0xd8] sm:$0xff]
      %v6160 = vld [vmem:[#allocation3 + $0xe0] sm:$0xff]
      %v6161 = vld [vmem:[#allocation3 + $0xe8] sm:$0xff]
      %v6162 = vld [vmem:[#allocation3 + $0xf0] sm:$0xff]
      %v6163 = vld [vmem:[#allocation3 + $0xf8] sm:$0xff]
      %v6164 = vld [vmem:[#allocation3 + $0x100] sm:$0xff]
      %v6165 = vld [vmem:[#allocation3 + $0x108] sm:$0xff]
      %v6166 = vld [vmem:[#allocation3 + $0x110] sm:$0xff]
      %v6167 = vld [vmem:[#allocation3 + $0x118] sm:$0xff]
      %v6168 = vadd.f32 %v6132, %v6043
      %v6169 = vadd.f32 %v6133, %v6045
      %v6170 = vadd.f32 %v6134, %v6048
      %v6171 = vadd.f32 %v6135, %v6050
      %v6172 = vadd.f32 %v6136, %v6053
      %v6173 = vadd.f32 %v6137, %v6055
      %v6174 = vadd.f32 %v6138, %v6058
      %v6175 = vadd.f32 %v6139, %v6060
      %v6176 = vadd.f32 %v6140, %v6063
      %v6177 = vadd.f32 %v6141, %v6065
      %v6178 = vadd.f32 %v6142, %v6068
      %v6179 = vadd.f32 %v6143, %v6070
      %v6180 = vadd.f32 %v6144, %v6073
      %v6181 = vadd.f32 %v6145, %v6075
      %v6182 = vadd.f32 %v6146, %v6078
      %v6183 = vadd.f32 %v6147, %v6080
      %v6184 = vadd.f32 %v6148, %v6083
      %v6185 = vadd.f32 %v6149, %v6085
      %v6186 = vadd.f32 %v6150, %v6088
      %v6187 = vadd.f32 %v6151, %v6090
      %v6188 = vadd.f32 %v6152, %v6093
      %v6189 = vadd.f32 %v6153, %v6095
      %v6190 = vadd.f32 %v6154, %v6098
      %v6191 = vadd.f32 %v6155, %v6100
      %v6192 = vadd.f32 %v6156, %v6103
      %v6193 = vadd.f32 %v6157, %v6105
      %v6194 = vadd.f32 %v6158, %v6108
      %v6195 = vadd.f32 %v6159, %v6110
      %v6196 = vadd.f32 %v6160, %v6113
      %v6197 = vadd.f32 %v6161, %v6115
      %v6198 = vadd.f32 %v6162, %v6118
      %v6199 = vadd.f32 %v6163, %v6120
      %v6200 = vadd.f32 %v6164, %v6123
      %v6201 = vadd.f32 %v6165, %v6125
      %v6202 = vadd.f32 %v6166, %v6128
      %v6203 = vadd.f32 %v6167, %v6130
      %6204 = vst.msk [vmem:[#allocation3] sm:$0xff] %vm2199, %v6168
      %6205 = vst.msk [vmem:[#allocation3 + $0x8] sm:$0xff] %vm2199, %v6169
      %6206 = vst.msk [vmem:[#allocation3 + $0x10] sm:$0xff] %vm2199, %v6170
      %6207 = vst.msk [vmem:[#allocation3 + $0x18] sm:$0xff] %vm2199, %v6171
      %6208 = vst.msk [vmem:[#allocation3 + $0x20] sm:$0xff] %vm2199, %v6172
      %6209 = vst.msk [vmem:[#allocation3 + $0x28] sm:$0xff] %vm2199, %v6173
      %6210 = vst.msk [vmem:[#allocation3 + $0x30] sm:$0xff] %vm2199, %v6174
      %6211 = vst.msk [vmem:[#allocation3 + $0x38] sm:$0xff] %vm2199, %v6175
      %6212 = vst.msk [vmem:[#allocation3 + $0x40] sm:$0xff] %vm2199, %v6176
      %6213 = vst.msk [vmem:[#allocation3 + $0x48] sm:$0xff] %vm2199, %v6177
      %6214 = vst.msk [vmem:[#allocation3 + $0x50] sm:$0xff] %vm2199, %v6178
      %6215 = vst.msk [vmem:[#allocation3 + $0x58] sm:$0xff] %vm2199, %v6179
      %6216 = vst.msk [vmem:[#allocation3 + $0x60] sm:$0xff] %vm2199, %v6180
      %6217 = vst.msk [vmem:[#allocation3 + $0x68] sm:$0xff] %vm2199, %v6181
      %6218 = vst.msk [vmem:[#allocation3 + $0x70] sm:$0xff] %vm2199, %v6182
      %6219 = vst.msk [vmem:[#allocation3 + $0x78] sm:$0xff] %vm2199, %v6183
      %6220 = vst.msk [vmem:[#allocation3 + $0x80] sm:$0xff] %vm2199, %v6184
      %6221 = vst.msk [vmem:[#allocation3 + $0x88] sm:$0xff] %vm2199, %v6185
      %6222 = vst.msk [vmem:[#allocation3 + $0x90] sm:$0xff] %vm2199, %v6186
      %6223 = vst.msk [vmem:[#allocation3 + $0x98] sm:$0xff] %vm2199, %v6187
      %6224 = vst.msk [vmem:[#allocation3 + $0xa0] sm:$0xff] %vm2199, %v6188
      %6225 = vst.msk [vmem:[#allocation3 + $0xa8] sm:$0xff] %vm2199, %v6189
      %6226 = vst.msk [vmem:[#allocation3 + $0xb0] sm:$0xff] %vm2199, %v6190
      %6227 = vst.msk [vmem:[#allocation3 + $0xb8] sm:$0xff] %vm2199, %v6191
      %6228 = vst.msk [vmem:[#allocation3 + $0xc0] sm:$0xff] %vm2199, %v6192
      %6229 = vst.msk [vmem:[#allocation3 + $0xc8] sm:$0xff] %vm2199, %v6193
      %6230 = vst.msk [vmem:[#allocation3 + $0xd0] sm:$0xff] %vm2199, %v6194
      %6231 = vst.msk [vmem:[#allocation3 + $0xd8] sm:$0xff] %vm2199, %v6195
      %6232 = vst.msk [vmem:[#allocation3 + $0xe0] sm:$0xff] %vm2199, %v6196
      %6233 = vst.msk [vmem:[#allocation3 + $0xe8] sm:$0xff] %vm2199, %v6197
      %6234 = vst.msk [vmem:[#allocation3 + $0xf0] sm:$0xff] %vm2199, %v6198
      %6235 = vst.msk [vmem:[#allocation3 + $0xf8] sm:$0xff] %vm2199, %v6199
      %6236 = vst.msk [vmem:[#allocation3 + $0x100] sm:$0xff] %vm2199, %v6200
      %6237 = vst.msk [vmem:[#allocation3 + $0x108] sm:$0xff] %vm2199, %v6201
      %6238 = vst.msk [vmem:[#allocation3 + $0x110] sm:$0xff] %vm2199, %v6202
      %6239 = vst.msk [vmem:[#allocation3 + $0x118] sm:$0xff] %vm2199, %v6203
      %v6240 = vld [vmem:[#allocation3] sm:$0xff]
      %v6241 = vld [vmem:[#allocation3 + $0x8] sm:$0xff]
      %v6242 = vld [vmem:[#allocation3 + $0x10] sm:$0xff]
      %v6243 = vld [vmem:[#allocation3 + $0x18] sm:$0xff]
      %v6244 = vld [vmem:[#allocation3 + $0x20] sm:$0xff]
      %v6245 = vld [vmem:[#allocation3 + $0x28] sm:$0xff]
      %v6246 = vld [vmem:[#allocation3 + $0x30] sm:$0xff]
      %v6247 = vld [vmem:[#allocation3 + $0x38] sm:$0xff]
      %v6248 = vld [vmem:[#allocation3 + $0x40] sm:$0xff]
      %v6249 = vld [vmem:[#allocation3 + $0x48] sm:$0xff]
      %v6250 = vld [vmem:[#allocation3 + $0x50] sm:$0xff]
      %v6251 = vld [vmem:[#allocation3 + $0x58] sm:$0xff]
      %v6252 = vld [vmem:[#allocation3 + $0x60] sm:$0xff]
      %v6253 = vld [vmem:[#allocation3 + $0x68] sm:$0xff]
      %v6254 = vld [vmem:[#allocation3 + $0x70] sm:$0xff]
      %v6255 = vld [vmem:[#allocation3 + $0x78] sm:$0xff]
      %v6256 = vld [vmem:[#allocation3 + $0x80] sm:$0xff]
      %v6257 = vld [vmem:[#allocation3 + $0x88] sm:$0xff]
      %v6258 = vld [vmem:[#allocation3 + $0x90] sm:$0xff]
      %v6259 = vld [vmem:[#allocation3 + $0x98] sm:$0xff]
      %v6260 = vld [vmem:[#allocation3 + $0xa0] sm:$0xff]
      %v6261 = vld [vmem:[#allocation3 + $0xa8] sm:$0xff]
      %v6262 = vld [vmem:[#allocation3 + $0xb0] sm:$0xff]
      %v6263 = vld [vmem:[#allocation3 + $0xb8] sm:$0xff]
      %v6264 = vld [vmem:[#allocation3 + $0xc0] sm:$0xff]
      %v6265 = vld [vmem:[#allocation3 + $0xc8] sm:$0xff]
      %v6266 = vld [vmem:[#allocation3 + $0xd0] sm:$0xff]
      %v6267 = vld [vmem:[#allocation3 + $0xd8] sm:$0xff]
      %v6268 = vld [vmem:[#allocation3 + $0xe0] sm:$0xff]
      %v6269 = vld [vmem:[#allocation3 + $0xe8] sm:$0xff]
      %v6270 = vld [vmem:[#allocation3 + $0xf0] sm:$0xff]
      %v6271 = vld [vmem:[#allocation3 + $0xf8] sm:$0xff]
      %v6272 = vld [vmem:[#allocation3 + $0x100] sm:$0xff]
      %v6273 = vld [vmem:[#allocation3 + $0x108] sm:$0xff]
      %v6274 = vld [vmem:[#allocation3 + $0x110] sm:$0xff]
      %v6275 = vld [vmem:[#allocation3 + $0x118] sm:$0xff]
      %v6276 = vsel %vm1541, 1, 0
      %v6277 = vsel %vm1542, 1, 0
      %v6278 = vsel %vm1543, 1, 0
      %v6279 = vsel %vm1544, 1, 0
      %v6280 = vsel %vm1545, 1, 0
      %v6281 = vsel %vm1546, 1, 0
      %v6282 = vsel %vm1547, 1, 0
      %v6283 = vsel %vm1548, 1, 0
      %v6284 = vsel %vm1549, 1, 0
      %v6285 = vsel %vm1550, 1, 0
      %v6286 = vsel %vm1551, 1, 0
      %v6287 = vsel %vm1552, 1, 0
      %v6288 = vsel %vm1553, 1, 0
      %v6289 = vsel %vm1554, 1, 0
      %v6290 = vsel %vm1555, 1, 0
      %v6291 = vsel %vm1556, 1, 0
      %v6292 = vsel %vm1557, 1, 0
      %v6293 = vsel %vm1558, 1, 0
      %v6294 = vsel %vm1559, 1, 0
      %v6295 = vsel %vm1560, 1, 0
      %v6296 = vsel %vm1561, 1, 0
      %v6297 = vsel %vm1562, 1, 0
      %v6298 = vsel %vm1563, 1, 0
      %v6299 = vsel %vm1564, 1, 0
      %v6300 = vsel %vm1565, 1, 0
      %v6301 = vsel %vm1566, 1, 0
      %v6302 = vsel %vm1567, 1, 0
      %v6303 = vsel %vm1568, 1, 0
      %v6304 = vsel %vm1569, 1, 0
      %v6305 = vsel %vm1570, 1, 0
      %v6306 = vsel %vm1571, 1, 0
      %v6307 = vsel %vm1572, 1, 0
      %v6308 = vsel %vm1573, 1, 0
      %v6309 = vsel %vm1574, 1, 0
      %v6310 = vsel %vm1575, 1, 0
      %v6311 = vsel %vm1576, 1, 0
      %vm6312 = vcmp.eq.s32.totalorder %v6276, 1
      %vm6313 = vcmp.eq.s32.totalorder %v6277, 1
      %vm6314 = vcmp.eq.s32.totalorder %v6278, 1
      %vm6315 = vcmp.eq.s32.totalorder %v6279, 1
      %vm6316 = vcmp.eq.s32.totalorder %v6280, 1
      %vm6317 = vcmp.eq.s32.totalorder %v6281, 1
      %vm6318 = vcmp.eq.s32.totalorder %v6282, 1
      %vm6319 = vcmp.eq.s32.totalorder %v6283, 1
      %vm6320 = vcmp.eq.s32.totalorder %v6284, 1
      %vm6321 = vcmp.eq.s32.totalorder %v6285, 1
      %vm6322 = vcmp.eq.s32.totalorder %v6286, 1
      %vm6323 = vcmp.eq.s32.totalorder %v6287, 1
      %vm6324 = vcmp.eq.s32.totalorder %v6288, 1
      %vm6325 = vcmp.eq.s32.totalorder %v6289, 1
      %vm6326 = vcmp.eq.s32.totalorder %v6290, 1
      %vm6327 = vcmp.eq.s32.totalorder %v6291, 1
      %vm6328 = vcmp.eq.s32.totalorder %v6292, 1
      %vm6329 = vcmp.eq.s32.totalorder %v6293, 1
      %vm6330 = vcmp.eq.s32.totalorder %v6294, 1
      %vm6331 = vcmp.eq.s32.totalorder %v6295, 1
      %vm6332 = vcmp.eq.s32.totalorder %v6296, 1
      %vm6333 = vcmp.eq.s32.totalorder %v6297, 1
      %vm6334 = vcmp.eq.s32.totalorder %v6298, 1
      %vm6335 = vcmp.eq.s32.totalorder %v6299, 1
      %vm6336 = vcmp.eq.s32.totalorder %v6300, 1
      %vm6337 = vcmp.eq.s32.totalorder %v6301, 1
      %vm6338 = vcmp.eq.s32.totalorder %v6302, 1
      %vm6339 = vcmp.eq.s32.totalorder %v6303, 1
      %vm6340 = vcmp.eq.s32.totalorder %v6304, 1
      %vm6341 = vcmp.eq.s32.totalorder %v6305, 1
      %vm6342 = vcmp.eq.s32.totalorder %v6306, 1
      %vm6343 = vcmp.eq.s32.totalorder %v6307, 1
      %vm6344 = vcmp.eq.s32.totalorder %v6308, 1
      %vm6345 = vcmp.eq.s32.totalorder %v6309, 1
      %vm6346 = vcmp.eq.s32.totalorder %v6310, 1
      %vm6347 = vcmp.eq.s32.totalorder %v6311, 1
      %v6348 = vsel %vm6312, %v6240, 0.0
      %v6349 = vsel %vm6313, %v6241, 0.0
      %v6350 = vsel %vm6314, %v6242, 0.0
      %v6351 = vsel %vm6315, %v6243, 0.0
      %v6352 = vsel %vm6316, %v6244, 0.0
      %v6353 = vsel %vm6317, %v6245, 0.0
      %v6354 = vsel %vm6318, %v6246, 0.0
      %v6355 = vsel %vm6319, %v6247, 0.0
      %v6356 = vsel %vm6320, %v6248, 0.0
      %v6357 = vsel %vm6321, %v6249, 0.0
      %v6358 = vsel %vm6322, %v6250, 0.0
      %v6359 = vsel %vm6323, %v6251, 0.0
      %v6360 = vsel %vm6324, %v6252, 0.0
      %v6361 = vsel %vm6325, %v6253, 0.0
      %v6362 = vsel %vm6326, %v6254, 0.0
      %v6363 = vsel %vm6327, %v6255, 0.0
      %v6364 = vsel %vm6328, %v6256, 0.0
      %v6365 = vsel %vm6329, %v6257, 0.0
      %v6366 = vsel %vm6330, %v6258, 0.0
      %v6367 = vsel %vm6331, %v6259, 0.0
      %v6368 = vsel %vm6332, %v6260, 0.0
      %v6369 = vsel %vm6333, %v6261, 0.0
      %v6370 = vsel %vm6334, %v6262, 0.0
      %v6371 = vsel %vm6335, %v6263, 0.0
      %v6372 = vsel %vm6336, %v6264, 0.0
      %v6373 = vsel %vm6337, %v6265, 0.0
      %v6374 = vsel %vm6338, %v6266, 0.0
      %v6375 = vsel %vm6339, %v6267, 0.0
      %v6376 = vsel %vm6340, %v6268, 0.0
      %v6377 = vsel %vm6341, %v6269, 0.0
      %v6378 = vsel %vm6342, %v6270, 0.0
      %v6379 = vsel %vm6343, %v6271, 0.0
      %v6380 = vsel %vm6344, %v6272, 0.0
      %v6381 = vsel %vm6345, %v6273, 0.0
      %v6382 = vsel %vm6346, %v6274, 0.0
      %v6383 = vsel %vm6347, %v6275, 0.0
      %v6384 = vsel %vm2199, %v6348, 0.0
      %v6385 = vsel %vm2199, %v6349, 0.0
      %v6386 = vadd.f32 %v6384, %v6385
      %v6387 = vsel %vm2199, %v6350, 0.0
      %v6388 = vadd.f32 %v6386, %v6387
      %v6389 = vsel %vm2199, %v6351, 0.0
      %v6390 = vadd.f32 %v6388, %v6389
      %v6391 = vsel %vm2199, %v6352, 0.0
      %v6392 = vadd.f32 %v6390, %v6391
      %v6393 = vsel %vm2199, %v6353, 0.0
      %v6394 = vadd.f32 %v6392, %v6393
      %v6395 = vsel %vm2199, %v6354, 0.0
      %v6396 = vadd.f32 %v6394, %v6395
      %v6397 = vsel %vm2199, %v6355, 0.0
      %v6398 = vadd.f32 %v6396, %v6397
      %v6399 = vsel %vm2199, %v6356, 0.0
      %v6400 = vadd.f32 %v6398, %v6399
      %v6401 = vsel %vm2199, %v6357, 0.0
      %v6402 = vadd.f32 %v6400, %v6401
      %v6403 = vsel %vm2199, %v6358, 0.0
      %v6404 = vadd.f32 %v6402, %v6403
      %v6405 = vsel %vm2199, %v6359, 0.0
      %v6406 = vadd.f32 %v6404, %v6405
      %v6407 = vsel %vm2199, %v6360, 0.0
      %v6408 = vadd.f32 %v6406, %v6407
      %v6409 = vsel %vm2199, %v6361, 0.0
      %v6410 = vadd.f32 %v6408, %v6409
      %v6411 = vsel %vm2199, %v6362, 0.0
      %v6412 = vadd.f32 %v6410, %v6411
      %v6413 = vsel %vm2199, %v6363, 0.0
      %v6414 = vadd.f32 %v6412, %v6413
      %v6415 = vsel %vm2199, %v6364, 0.0
      %v6416 = vadd.f32 %v6414, %v6415
      %v6417 = vsel %vm2199, %v6365, 0.0
      %v6418 = vadd.f32 %v6416, %v6417
      %v6419 = vsel %vm2199, %v6366, 0.0
      %v6420 = vadd.f32 %v6418, %v6419
      %v6421 = vsel %vm2199, %v6367, 0.0
      %v6422 = vadd.f32 %v6420, %v6421
      %v6423 = vsel %vm2199, %v6368, 0.0
      %v6424 = vadd.f32 %v6422, %v6423
      %v6425 = vsel %vm2199, %v6369, 0.0
      %v6426 = vadd.f32 %v6424, %v6425
      %v6427 = vsel %vm2199, %v6370, 0.0
      %v6428 = vadd.f32 %v6426, %v6427
      %v6429 = vsel %vm2199, %v6371, 0.0
      %v6430 = vadd.f32 %v6428, %v6429
      %v6431 = vsel %vm2199, %v6372, 0.0
      %v6432 = vadd.f32 %v6430, %v6431
      %v6433 = vsel %vm2199, %v6373, 0.0
      %v6434 = vadd.f32 %v6432, %v6433
      %v6435 = vsel %vm2199, %v6374, 0.0
      %v6436 = vadd.f32 %v6434, %v6435
      %v6437 = vsel %vm2199, %v6375, 0.0
      %v6438 = vadd.f32 %v6436, %v6437
      %v6439 = vsel %vm2199, %v6376, 0.0
      %v6440 = vadd.f32 %v6438, %v6439
      %v6441 = vsel %vm2199, %v6377, 0.0
      %v6442 = vadd.f32 %v6440, %v6441
      %v6443 = vsel %vm2199, %v6378, 0.0
      %v6444 = vadd.f32 %v6442, %v6443
      %v6445 = vsel %vm2199, %v6379, 0.0
      %v6446 = vadd.f32 %v6444, %v6445
      %v6447 = vsel %vm2199, %v6380, 0.0
      %v6448 = vadd.f32 %v6446, %v6447
      %v6449 = vsel %vm2199, %v6381, 0.0
      %v6450 = vadd.f32 %v6448, %v6449
      %v6451 = vsel %vm2199, %v6382, 0.0
      %v6452 = vadd.f32 %v6450, %v6451
      %v6453 = vsel %vm2199, %v6383, 0.0
      %v6454 = vadd.f32 %v6452, %v6453
      %v6455 = vrot.slane %v6454, 4
      %v6456 = vadd.f32 %v6454, %v6455
      %v6457 = vrot.slane %v6456, 2
      %v6458 = vadd.f32 %v6456, %v6457
      %v6459 = vrot.slane %v6458, 1
      %v6460 = vadd.f32 %v6458, %v6459
      %v6461 = vrcp.pop 256.0
      %v6462 = vmul.f32 256.0, %v6461
      %v6463 = vsub.f32 1.0, %v6462
      %v6464 = vmul.f32 %v6461, %v6463
      %v6465 = vadd.f32 %v6461, %v6464
      %vm6466 = vweird.f32 %v6461
      %v6467 = vsel %vm6466, %v6461, %v6465
      %v6468 = vmul.f32 %v6460, %v6467
      %v6469 = vmul.f32 %v6348, %v6348
      %v6470 = vmul.f32 %v6349, %v6349
      %v6471 = vmul.f32 %v6350, %v6350
      %v6472 = vmul.f32 %v6351, %v6351
      %v6473 = vmul.f32 %v6352, %v6352
      %v6474 = vmul.f32 %v6353, %v6353
      %v6475 = vmul.f32 %v6354, %v6354
      %v6476 = vmul.f32 %v6355, %v6355
      %v6477 = vmul.f32 %v6356, %v6356
      %v6478 = vmul.f32 %v6357, %v6357
      %v6479 = vmul.f32 %v6358, %v6358
      %v6480 = vmul.f32 %v6359, %v6359
      %v6481 = vmul.f32 %v6360, %v6360
      %v6482 = vmul.f32 %v6361, %v6361
      %v6483 = vmul.f32 %v6362, %v6362
      %v6484 = vmul.f32 %v6363, %v6363
      %v6485 = vmul.f32 %v6364, %v6364
      %v6486 = vmul.f32 %v6365, %v6365
      %v6487 = vmul.f32 %v6366, %v6366
      %v6488 = vmul.f32 %v6367, %v6367
      %v6489 = vmul.f32 %v6368, %v6368
      %v6490 = vmul.f32 %v6369, %v6369
      %v6491 = vmul.f32 %v6370, %v6370
      %v6492 = vmul.f32 %v6371, %v6371
      %v6493 = vmul.f32 %v6372, %v6372
      %v6494 = vmul.f32 %v6373, %v6373
      %v6495 = vmul.f32 %v6374, %v6374
      %v6496 = vmul.f32 %v6375, %v6375
      %v6497 = vmul.f32 %v6376, %v6376
      %v6498 = vmul.f32 %v6377, %v6377
      %v6499 = vmul.f32 %v6378, %v6378
      %v6500 = vmul.f32 %v6379, %v6379
      %v6501 = vmul.f32 %v6380, %v6380
      %v6502 = vmul.f32 %v6381, %v6381
      %v6503 = vmul.f32 %v6382, %v6382
      %v6504 = vmul.f32 %v6383, %v6383
      %v6505 = vsel %vm2199, %v6469, 0.0
      %v6506 = vsel %vm2199, %v6470, 0.0
      %v6507 = vadd.f32 %v6505, %v6506
      %v6508 = vsel %vm2199, %v6471, 0.0
      %v6509 = vadd.f32 %v6507, %v6508
      %v6510 = vsel %vm2199, %v6472, 0.0
      %v6511 = vadd.f32 %v6509, %v6510
      %v6512 = vsel %vm2199, %v6473, 0.0
      %v6513 = vadd.f32 %v6511, %v6512
      %v6514 = vsel %vm2199, %v6474, 0.0
      %v6515 = vadd.f32 %v6513, %v6514
      %v6516 = vsel %vm2199, %v6475, 0.0
      %v6517 = vadd.f32 %v6515, %v6516
      %v6518 = vsel %vm2199, %v6476, 0.0
      %v6519 = vadd.f32 %v6517, %v6518
      %v6520 = vsel %vm2199, %v6477, 0.0
      %v6521 = vadd.f32 %v6519, %v6520
      %v6522 = vsel %vm2199, %v6478, 0.0
      %v6523 = vadd.f32 %v6521, %v6522
      %v6524 = vsel %vm2199, %v6479, 0.0
      %v6525 = vadd.f32 %v6523, %v6524
      %v6526 = vsel %vm2199, %v6480, 0.0
      %v6527 = vadd.f32 %v6525, %v6526
      %v6528 = vsel %vm2199, %v6481, 0.0
      %v6529 = vadd.f32 %v6527, %v6528
      %v6530 = vsel %vm2199, %v6482, 0.0
      %v6531 = vadd.f32 %v6529, %v6530
      %v6532 = vsel %vm2199, %v6483, 0.0
      %v6533 = vadd.f32 %v6531, %v6532
      %v6534 = vsel %vm2199, %v6484, 0.0
      %v6535 = vadd.f32 %v6533, %v6534
      %v6536 = vsel %vm2199, %v6485, 0.0
      %v6537 = vadd.f32 %v6535, %v6536
      %v6538 = vsel %vm2199, %v6486, 0.0
      %v6539 = vadd.f32 %v6537, %v6538
      %v6540 = vsel %vm2199, %v6487, 0.0
      %v6541 = vadd.f32 %v6539, %v6540
      %v6542 = vsel %vm2199, %v6488, 0.0
      %v6543 = vadd.f32 %v6541, %v6542
      %v6544 = vsel %vm2199, %v6489, 0.0
      %v6545 = vadd.f32 %v6543, %v6544
      %v6546 = vsel %vm2199, %v6490, 0.0
      %v6547 = vadd.f32 %v6545, %v6546
      %v6548 = vsel %vm2199, %v6491, 0.0
      %v6549 = vadd.f32 %v6547, %v6548
      %v6550 = vsel %vm2199, %v6492, 0.0
      %v6551 = vadd.f32 %v6549, %v6550
      %v6552 = vsel %vm2199, %v6493, 0.0
      %v6553 = vadd.f32 %v6551, %v6552
      %v6554 = vsel %vm2199, %v6494, 0.0
      %v6555 = vadd.f32 %v6553, %v6554
      %v6556 = vsel %vm2199, %v6495, 0.0
      %v6557 = vadd.f32 %v6555, %v6556
      %v6558 = vsel %vm2199, %v6496, 0.0
      %v6559 = vadd.f32 %v6557, %v6558
      %v6560 = vsel %vm2199, %v6497, 0.0
      %v6561 = vadd.f32 %v6559, %v6560
      %v6562 = vsel %vm2199, %v6498, 0.0
      %v6563 = vadd.f32 %v6561, %v6562
      %v6564 = vsel %vm2199, %v6499, 0.0
      %v6565 = vadd.f32 %v6563, %v6564
      %v6566 = vsel %vm2199, %v6500, 0.0
      %v6567 = vadd.f32 %v6565, %v6566
      %v6568 = vsel %vm2199, %v6501, 0.0
      %v6569 = vadd.f32 %v6567, %v6568
      %v6570 = vsel %vm2199, %v6502, 0.0
      %v6571 = vadd.f32 %v6569, %v6570
      %v6572 = vsel %vm2199, %v6503, 0.0
      %v6573 = vadd.f32 %v6571, %v6572
      %v6574 = vsel %vm2199, %v6504, 0.0
      %v6575 = vadd.f32 %v6573, %v6574
      %v6576 = vrot.slane %v6575, 4
      %v6577 = vadd.f32 %v6575, %v6576
      %v6578 = vrot.slane %v6577, 2
      %v6579 = vadd.f32 %v6577, %v6578
      %v6580 = vrot.slane %v6579, 1
      %v6581 = vadd.f32 %v6579, %v6580
      %v6582 = vmul.f32 %v6581, %v6467
      %v6583 = vmul.f32 %v6468, %v6468
      %v6584 = vsub.f32 %v6582, %v6583
      %v6585 = vmax.f32 %v6584, 0.0
      %v6586 = vld [vmem:[%s2] sm:$0x1]
      %v6587 = vadd.f32 %v6585, 1e-05
      %v6588 = vrsqrt.pop %v6587
      %v6589 = vmul.f32 %v6588, %v6587
      %v6590 = vmul.f32 %v6589, %v6588
      %v6591 = vmul.f32 0.5, %v6590
      %v6592 = vsub.f32 1.5, %v6591
      %v6593 = vmul.f32 %v6588, %v6592
      %vm6594 = vweird.f32 %v6587
      %vm6595 = vweird.f32 %v6588
      %vm6596 = vmor %vm6594, %vm6595
      %v6597 = vsel %vm6596, %v6588, %v6593
      %v6598 = vmul.f32 %v6586, %v6597
      %v6599 = vld [vmem:[%s3] sm:$0x1]
      %v6600 = vmul.f32 %v6468, %v6598
      %v6601 = vsub.f32 %v6599, %v6600
      %v6603 = vperm.slane %v6598, 0
      %v6605 = vmul.f32 %v6348, %v6603
      %v6606 = vmul.f32 %v6349, %v6603
      %v6607 = vmul.f32 %v6350, %v6603
      %v6608 = vmul.f32 %v6351, %v6603
      %v6609 = vmul.f32 %v6352, %v6603
      %v6610 = vmul.f32 %v6353, %v6603
      %v6611 = vmul.f32 %v6354, %v6603
      %v6612 = vmul.f32 %v6355, %v6603
      %v6613 = vmul.f32 %v6356, %v6603
      %v6614 = vmul.f32 %v6357, %v6603
      %v6615 = vmul.f32 %v6358, %v6603
      %v6616 = vmul.f32 %v6359, %v6603
      %v6617 = vmul.f32 %v6360, %v6603
      %v6618 = vmul.f32 %v6361, %v6603
      %v6619 = vmul.f32 %v6362, %v6603
      %v6620 = vmul.f32 %v6363, %v6603
      %v6621 = vmul.f32 %v6364, %v6603
      %v6622 = vmul.f32 %v6365, %v6603
      %v6623 = vmul.f32 %v6366, %v6603
      %v6624 = vmul.f32 %v6367, %v6603
      %v6625 = vmul.f32 %v6368, %v6603
      %v6626 = vmul.f32 %v6369, %v6603
      %v6627 = vmul.f32 %v6370, %v6603
      %v6628 = vmul.f32 %v6371, %v6603
      %v6629 = vmul.f32 %v6372, %v6603
      %v6630 = vmul.f32 %v6373, %v6603
      %v6631 = vmul.f32 %v6374, %v6603
      %v6632 = vmul.f32 %v6375, %v6603
      %v6633 = vmul.f32 %v6376, %v6603
      %v6634 = vmul.f32 %v6377, %v6603
      %v6635 = vmul.f32 %v6378, %v6603
      %v6636 = vmul.f32 %v6379, %v6603
      %v6637 = vmul.f32 %v6380, %v6603
      %v6638 = vmul.f32 %v6381, %v6603
      %v6639 = vmul.f32 %v6382, %v6603
      %v6640 = vmul.f32 %v6383, %v6603
      %v6642 = vperm.slane %v6601, 0
      %v6644 = vadd.f32 %v6605, %v6642
      %v6645 = vadd.f32 %v6606, %v6642
      %v6646 = vadd.f32 %v6607, %v6642
      %v6647 = vadd.f32 %v6608, %v6642
      %v6648 = vadd.f32 %v6609, %v6642
      %v6649 = vadd.f32 %v6610, %v6642
      %v6650 = vadd.f32 %v6611, %v6642
      %v6651 = vadd.f32 %v6612, %v6642
      %v6652 = vadd.f32 %v6613, %v6642
      %v6653 = vadd.f32 %v6614, %v6642
      %v6654 = vadd.f32 %v6615, %v6642
      %v6655 = vadd.f32 %v6616, %v6642
      %v6656 = vadd.f32 %v6617, %v6642
      %v6657 = vadd.f32 %v6618, %v6642
      %v6658 = vadd.f32 %v6619, %v6642
      %v6659 = vadd.f32 %v6620, %v6642
      %v6660 = vadd.f32 %v6621, %v6642
      %v6661 = vadd.f32 %v6622, %v6642
      %v6662 = vadd.f32 %v6623, %v6642
      %v6663 = vadd.f32 %v6624, %v6642
      %v6664 = vadd.f32 %v6625, %v6642
      %v6665 = vadd.f32 %v6626, %v6642
      %v6666 = vadd.f32 %v6627, %v6642
      %v6667 = vadd.f32 %v6628, %v6642
      %v6668 = vadd.f32 %v6629, %v6642
      %v6669 = vadd.f32 %v6630, %v6642
      %v6670 = vadd.f32 %v6631, %v6642
      %v6671 = vadd.f32 %v6632, %v6642
      %v6672 = vadd.f32 %v6633, %v6642
      %v6673 = vadd.f32 %v6634, %v6642
      %v6674 = vadd.f32 %v6635, %v6642
      %v6675 = vadd.f32 %v6636, %v6642
      %v6676 = vadd.f32 %v6637, %v6642
      %v6677 = vadd.f32 %v6638, %v6642
      %v6678 = vadd.f32 %v6639, %v6642
      %v6679 = vadd.f32 %v6640, %v6642
      %v6680 = vmax.f32 %v6644, 0.0
      %v6681 = vmax.f32 %v6645, 0.0
      %v6682 = vmax.f32 %v6646, 0.0
      %v6683 = vmax.f32 %v6647, 0.0
      %v6684 = vmax.f32 %v6648, 0.0
      %v6685 = vmax.f32 %v6649, 0.0
      %v6686 = vmax.f32 %v6650, 0.0
      %v6687 = vmax.f32 %v6651, 0.0
      %v6688 = vmax.f32 %v6652, 0.0
      %v6689 = vmax.f32 %v6653, 0.0
      %v6690 = vmax.f32 %v6654, 0.0
      %v6691 = vmax.f32 %v6655, 0.0
      %v6692 = vmax.f32 %v6656, 0.0
      %v6693 = vmax.f32 %v6657, 0.0
      %v6694 = vmax.f32 %v6658, 0.0
      %v6695 = vmax.f32 %v6659, 0.0
      %v6696 = vmax.f32 %v6660, 0.0
      %v6697 = vmax.f32 %v6661, 0.0
      %v6698 = vmax.f32 %v6662, 0.0
      %v6699 = vmax.f32 %v6663, 0.0
      %v6700 = vmax.f32 %v6664, 0.0
      %v6701 = vmax.f32 %v6665, 0.0
      %v6702 = vmax.f32 %v6666, 0.0
      %v6703 = vmax.f32 %v6667, 0.0
      %v6704 = vmax.f32 %v6668, 0.0
      %v6705 = vmax.f32 %v6669, 0.0
      %v6706 = vmax.f32 %v6670, 0.0
      %v6707 = vmax.f32 %v6671, 0.0
      %v6708 = vmax.f32 %v6672, 0.0
      %v6709 = vmax.f32 %v6673, 0.0
      %v6710 = vmax.f32 %v6674, 0.0
      %v6711 = vmax.f32 %v6675, 0.0
      %v6712 = vmax.f32 %v6676, 0.0
      %v6713 = vmax.f32 %v6677, 0.0
      %v6714 = vmax.f32 %v6678, 0.0
      %v6715 = vmax.f32 %v6679, 0.0
      %v6716 = vsel %vm6312, %v6680, 0.0
      %v6717 = vsel %vm6313, %v6681, 0.0
      %v6718 = vsel %vm6314, %v6682, 0.0
      %v6719 = vsel %vm6315, %v6683, 0.0
      %v6720 = vsel %vm6316, %v6684, 0.0
      %v6721 = vsel %vm6317, %v6685, 0.0
      %v6722 = vsel %vm6318, %v6686, 0.0
      %v6723 = vsel %vm6319, %v6687, 0.0
      %v6724 = vsel %vm6320, %v6688, 0.0
      %v6725 = vsel %vm6321, %v6689, 0.0
      %v6726 = vsel %vm6322, %v6690, 0.0
      %v6727 = vsel %vm6323, %v6691, 0.0
      %v6728 = vsel %vm6324, %v6692, 0.0
      %v6729 = vsel %vm6325, %v6693, 0.0
      %v6730 = vsel %vm6326, %v6694, 0.0
      %v6731 = vsel %vm6327, %v6695, 0.0
      %v6732 = vsel %vm6328, %v6696, 0.0
      %v6733 = vsel %vm6329, %v6697, 0.0
      %v6734 = vsel %vm6330, %v6698, 0.0
      %v6735 = vsel %vm6331, %v6699, 0.0
      %v6736 = vsel %vm6332, %v6700, 0.0
      %v6737 = vsel %vm6333, %v6701, 0.0
      %v6738 = vsel %vm6334, %v6702, 0.0
      %v6739 = vsel %vm6335, %v6703, 0.0
      %v6740 = vsel %vm6336, %v6704, 0.0
      %v6741 = vsel %vm6337, %v6705, 0.0
      %v6742 = vsel %vm6338, %v6706, 0.0
      %v6743 = vsel %vm6339, %v6707, 0.0
      %v6744 = vsel %vm6340, %v6708, 0.0
      %v6745 = vsel %vm6341, %v6709, 0.0
      %v6746 = vsel %vm6342, %v6710, 0.0
      %v6747 = vsel %vm6343, %v6711, 0.0
      %v6748 = vsel %vm6344, %v6712, 0.0
      %v6749 = vsel %vm6345, %v6713, 0.0
      %v6750 = vsel %vm6346, %v6714, 0.0
      %v6751 = vsel %vm6347, %v6715, 0.0
      %v6752 = vpack.c.bf16 %v6716, %v6716
      %v6753 = vpack.c.bf16 %v6717, %v6717
      %v6754 = vpack.c.bf16 %v6718, %v6718
      %v6755 = vpack.c.bf16 %v6719, %v6719
      %v6756 = vpack.c.bf16 %v6720, %v6720
      %v6757 = vpack.c.bf16 %v6721, %v6721
      %v6758 = vpack.c.bf16 %v6722, %v6722
      %v6759 = vpack.c.bf16 %v6723, %v6723
      %v6760 = vpack.c.bf16 %v6724, %v6724
      %v6761 = vpack.c.bf16 %v6725, %v6725
      %v6762 = vpack.c.bf16 %v6726, %v6726
      %v6763 = vpack.c.bf16 %v6727, %v6727
      %v6764 = vpack.c.bf16 %v6728, %v6728
      %v6765 = vpack.c.bf16 %v6729, %v6729
      %v6766 = vpack.c.bf16 %v6730, %v6730
      %v6767 = vpack.c.bf16 %v6731, %v6731
      %v6768 = vpack.c.bf16 %v6732, %v6732
      %v6769 = vpack.c.bf16 %v6733, %v6733
      %v6770 = vpack.c.bf16 %v6734, %v6734
      %v6771 = vpack.c.bf16 %v6735, %v6735
      %v6772 = vpack.c.bf16 %v6736, %v6736
      %v6773 = vpack.c.bf16 %v6737, %v6737
      %v6774 = vpack.c.bf16 %v6738, %v6738
      %v6775 = vpack.c.bf16 %v6739, %v6739
      %v6776 = vpack.c.bf16 %v6740, %v6740
      %v6777 = vpack.c.bf16 %v6741, %v6741
      %v6778 = vpack.c.bf16 %v6742, %v6742
      %v6779 = vpack.c.bf16 %v6743, %v6743
      %v6780 = vpack.c.bf16 %v6744, %v6744
      %v6781 = vpack.c.bf16 %v6745, %v6745
      %v6782 = vpack.c.bf16 %v6746, %v6746
      %v6783 = vpack.c.bf16 %v6747, %v6747
      %v6784 = vpack.c.bf16 %v6748, %v6748
      %v6785 = vpack.c.bf16 %v6749, %v6749
      %v6786 = vpack.c.bf16 %v6750, %v6750
      %v6787 = vpack.c.bf16 %v6751, %v6751
      %v6789 = vshrl.u32 %v6752, 16
      %v6791 = vrot.slane %v6789, 6
      %v6792 = vshll.u32 %v6752, 16
      %v6794 = vrot.slane %v6792, 7
      %v6795 = vor.u32 %v6791, %v6794
      %v6796 = vrot.slane %v6795, 4
      %v6798 = vshrl.u32 %v6753, 16
      %v6800 = vrot.slane %v6798, 6
      %v6801 = vshll.u32 %v6753, 16
      %v6803 = vrot.slane %v6801, 7
      %v6804 = vor.u32 %v6800, %v6803
      %v6805 = vsel %vm1634, %v6796, %v6804
      %v6806 = vrot.slane %v6804, 4
      %v6808 = vshrl.u32 %v6754, 16
      %v6810 = vrot.slane %v6808, 6
      %v6811 = vshll.u32 %v6754, 16
      %v6813 = vrot.slane %v6811, 7
      %v6814 = vor.u32 %v6810, %v6813
      %v6815 = vsel %vm1634, %v6806, %v6814
      %v6816 = vrot.slane %v6814, 4
      %v6818 = vshrl.u32 %v6755, 16
      %v6820 = vrot.slane %v6818, 6
      %v6821 = vshll.u32 %v6755, 16
      %v6823 = vrot.slane %v6821, 7
      %v6824 = vor.u32 %v6820, %v6823
      %v6825 = vsel %vm1634, %v6816, %v6824
      %v6826 = vrot.slane %v6824, 4
      %v6828 = vshrl.u32 %v6756, 16
      %v6830 = vrot.slane %v6828, 6
      %v6831 = vshll.u32 %v6756, 16
      %v6833 = vrot.slane %v6831, 7
      %v6834 = vor.u32 %v6830, %v6833
      %v6835 = vsel %vm1634, %v6826, %v6834
      %v6836 = vrot.slane %v6834, 4
      %v6838 = vshrl.u32 %v6757, 16
      %v6840 = vrot.slane %v6838, 6
      %v6841 = vshll.u32 %v6757, 16
      %v6843 = vrot.slane %v6841, 7
      %v6844 = vor.u32 %v6840, %v6843
      %v6845 = vsel %vm1634, %v6836, %v6844
      %v6846 = vrot.slane %v6844, 4
      %v6848 = vshrl.u32 %v6758, 16
      %v6850 = vrot.slane %v6848, 6
      %v6851 = vshll.u32 %v6758, 16
      %v6853 = vrot.slane %v6851, 7
      %v6854 = vor.u32 %v6850, %v6853
      %v6855 = vsel %vm1634, %v6846, %v6854
      %v6856 = vrot.slane %v6854, 4
      %v6858 = vshrl.u32 %v6759, 16
      %v6860 = vrot.slane %v6858, 6
      %v6861 = vshll.u32 %v6759, 16
      %v6863 = vrot.slane %v6861, 7
      %v6864 = vor.u32 %v6860, %v6863
      %v6865 = vsel %vm1634, %v6856, %v6864
      %v6866 = vrot.slane %v6864, 4
      %v6868 = vshrl.u32 %v6760, 16
      %v6870 = vrot.slane %v6868, 6
      %v6871 = vshll.u32 %v6760, 16
      %v6873 = vrot.slane %v6871, 7
      %v6874 = vor.u32 %v6870, %v6873
      %v6875 = vsel %vm1634, %v6866, %v6874
      %v6876 = vrot.slane %v6874, 4
      %v6878 = vshrl.u32 %v6761, 16
      %v6880 = vrot.slane %v6878, 6
      %v6881 = vshll.u32 %v6761, 16
      %v6883 = vrot.slane %v6881, 7
      %v6884 = vor.u32 %v6880, %v6883
      %v6885 = vsel %vm1634, %v6876, %v6884
      %v6886 = vrot.slane %v6884, 4
      %v6888 = vshrl.u32 %v6762, 16
      %v6890 = vrot.slane %v6888, 6
      %v6891 = vshll.u32 %v6762, 16
      %v6893 = vrot.slane %v6891, 7
      %v6894 = vor.u32 %v6890, %v6893
      %v6895 = vsel %vm1634, %v6886, %v6894
      %v6896 = vrot.slane %v6894, 4
      %v6898 = vshrl.u32 %v6763, 16
      %v6900 = vrot.slane %v6898, 6
      %v6901 = vshll.u32 %v6763, 16
      %v6903 = vrot.slane %v6901, 7
      %v6904 = vor.u32 %v6900, %v6903
      %v6905 = vsel %vm1634, %v6896, %v6904
      %v6906 = vrot.slane %v6904, 4
      %v6908 = vshrl.u32 %v6764, 16
      %v6910 = vrot.slane %v6908, 6
      %v6911 = vshll.u32 %v6764, 16
      %v6913 = vrot.slane %v6911, 7
      %v6914 = vor.u32 %v6910, %v6913
      %v6915 = vsel %vm1634, %v6906, %v6914
      %v6916 = vrot.slane %v6914, 4
      %v6918 = vshrl.u32 %v6765, 16
      %v6920 = vrot.slane %v6918, 6
      %v6921 = vshll.u32 %v6765, 16
      %v6923 = vrot.slane %v6921, 7
      %v6924 = vor.u32 %v6920, %v6923
      %v6925 = vsel %vm1634, %v6916, %v6924
      %v6926 = vrot.slane %v6924, 4
      %v6928 = vshrl.u32 %v6766, 16
      %v6930 = vrot.slane %v6928, 6
      %v6931 = vshll.u32 %v6766, 16
      %v6933 = vrot.slane %v6931, 7
      %v6934 = vor.u32 %v6930, %v6933
      %v6935 = vsel %vm1634, %v6926, %v6934
      %v6936 = vrot.slane %v6934, 4
      %v6938 = vshrl.u32 %v6767, 16
      %v6940 = vrot.slane %v6938, 6
      %v6941 = vshll.u32 %v6767, 16
      %v6943 = vrot.slane %v6941, 7
      %v6944 = vor.u32 %v6940, %v6943
      %v6945 = vsel %vm1634, %v6936, %v6944
      %v6946 = vrot.slane %v6944, 4
      %v6948 = vshrl.u32 %v6768, 16
      %v6950 = vrot.slane %v6948, 6
      %v6951 = vshll.u32 %v6768, 16
      %v6953 = vrot.slane %v6951, 7
      %v6954 = vor.u32 %v6950, %v6953
      %v6955 = vsel %vm1634, %v6946, %v6954
      %v6956 = vrot.slane %v6954, 4
      %v6958 = vshrl.u32 %v6769, 16
      %v6960 = vrot.slane %v6958, 6
      %v6961 = vshll.u32 %v6769, 16
      %v6963 = vrot.slane %v6961, 7
      %v6964 = vor.u32 %v6960, %v6963
      %v6965 = vsel %vm1634, %v6956, %v6964
      %v6966 = vrot.slane %v6964, 4
      %v6968 = vshrl.u32 %v6770, 16
      %v6970 = vrot.slane %v6968, 6
      %v6971 = vshll.u32 %v6770, 16
      %v6973 = vrot.slane %v6971, 7
      %v6974 = vor.u32 %v6970, %v6973
      %v6975 = vsel %vm1634, %v6966, %v6974
      %v6976 = vrot.slane %v6974, 4
      %v6978 = vshrl.u32 %v6771, 16
      %v6980 = vrot.slane %v6978, 6
      %v6981 = vshll.u32 %v6771, 16
      %v6983 = vrot.slane %v6981, 7
      %v6984 = vor.u32 %v6980, %v6983
      %v6985 = vsel %vm1634, %v6976, %v6984
      %v6986 = vrot.slane %v6984, 4
      %v6988 = vshrl.u32 %v6772, 16
      %v6990 = vrot.slane %v6988, 6
      %v6991 = vshll.u32 %v6772, 16
      %v6993 = vrot.slane %v6991, 7
      %v6994 = vor.u32 %v6990, %v6993
      %v6995 = vsel %vm1634, %v6986, %v6994
      %v6996 = vrot.slane %v6994, 4
      %v6998 = vshrl.u32 %v6773, 16
      %v7000 = vrot.slane %v6998, 6
      %v7001 = vshll.u32 %v6773, 16
      %v7003 = vrot.slane %v7001, 7
      %v7004 = vor.u32 %v7000, %v7003
      %v7005 = vsel %vm1634, %v6996, %v7004
      %v7006 = vrot.slane %v7004, 4
      %v7008 = vshrl.u32 %v6774, 16
      %v7010 = vrot.slane %v7008, 6
      %v7011 = vshll.u32 %v6774, 16
      %v7013 = vrot.slane %v7011, 7
      %v7014 = vor.u32 %v7010, %v7013
      %v7015 = vsel %vm1634, %v7006, %v7014
      %v7016 = vrot.slane %v7014, 4
      %v7018 = vshrl.u32 %v6775, 16
      %v7020 = vrot.slane %v7018, 6
      %v7021 = vshll.u32 %v6775, 16
      %v7023 = vrot.slane %v7021, 7
      %v7024 = vor.u32 %v7020, %v7023
      %v7025 = vsel %vm1634, %v7016, %v7024
      %v7026 = vrot.slane %v7024, 4
      %v7028 = vshrl.u32 %v6776, 16
      %v7030 = vrot.slane %v7028, 6
      %v7031 = vshll.u32 %v6776, 16
      %v7033 = vrot.slane %v7031, 7
      %v7034 = vor.u32 %v7030, %v7033
      %v7035 = vsel %vm1634, %v7026, %v7034
      %v7036 = vrot.slane %v7034, 4
      %v7038 = vshrl.u32 %v6777, 16
      %v7040 = vrot.slane %v7038, 6
      %v7041 = vshll.u32 %v6777, 16
      %v7043 = vrot.slane %v7041, 7
      %v7044 = vor.u32 %v7040, %v7043
      %v7045 = vsel %vm1634, %v7036, %v7044
      %v7046 = vrot.slane %v7044, 4
      %v7048 = vshrl.u32 %v6778, 16
      %v7050 = vrot.slane %v7048, 6
      %v7051 = vshll.u32 %v6778, 16
      %v7053 = vrot.slane %v7051, 7
      %v7054 = vor.u32 %v7050, %v7053
      %v7055 = vsel %vm1634, %v7046, %v7054
      %v7056 = vrot.slane %v7054, 4
      %v7058 = vshrl.u32 %v6779, 16
      %v7060 = vrot.slane %v7058, 6
      %v7061 = vshll.u32 %v6779, 16
      %v7063 = vrot.slane %v7061, 7
      %v7064 = vor.u32 %v7060, %v7063
      %v7065 = vsel %vm1634, %v7056, %v7064
      %v7066 = vrot.slane %v7064, 4
      %v7068 = vshrl.u32 %v6780, 16
      %v7070 = vrot.slane %v7068, 6
      %v7071 = vshll.u32 %v6780, 16
      %v7073 = vrot.slane %v7071, 7
      %v7074 = vor.u32 %v7070, %v7073
      %v7075 = vsel %vm1634, %v7066, %v7074
      %v7076 = vrot.slane %v7074, 4
      %v7078 = vshrl.u32 %v6781, 16
      %v7080 = vrot.slane %v7078, 6
      %v7081 = vshll.u32 %v6781, 16
      %v7083 = vrot.slane %v7081, 7
      %v7084 = vor.u32 %v7080, %v7083
      %v7085 = vsel %vm1634, %v7076, %v7084
      %v7086 = vrot.slane %v7084, 4
      %v7088 = vshrl.u32 %v6782, 16
      %v7090 = vrot.slane %v7088, 6
      %v7091 = vshll.u32 %v6782, 16
      %v7093 = vrot.slane %v7091, 7
      %v7094 = vor.u32 %v7090, %v7093
      %v7095 = vsel %vm1634, %v7086, %v7094
      %v7096 = vrot.slane %v7094, 4
      %v7098 = vshrl.u32 %v6783, 16
      %v7100 = vrot.slane %v7098, 6
      %v7101 = vshll.u32 %v6783, 16
      %v7103 = vrot.slane %v7101, 7
      %v7104 = vor.u32 %v7100, %v7103
      %v7105 = vsel %vm1634, %v7096, %v7104
      %v7106 = vrot.slane %v7104, 4
      %v7108 = vshrl.u32 %v6784, 16
      %v7110 = vrot.slane %v7108, 6
      %v7111 = vshll.u32 %v6784, 16
      %v7113 = vrot.slane %v7111, 7
      %v7114 = vor.u32 %v7110, %v7113
      %v7115 = vsel %vm1634, %v7106, %v7114
      %v7116 = vrot.slane %v7114, 4
      %v7118 = vshrl.u32 %v6785, 16
      %v7120 = vrot.slane %v7118, 6
      %v7121 = vshll.u32 %v6785, 16
      %v7123 = vrot.slane %v7121, 7
      %v7124 = vor.u32 %v7120, %v7123
      %v7125 = vsel %vm1634, %v7116, %v7124
      %v7126 = vrot.slane %v7124, 4
      %v7128 = vshrl.u32 %v6786, 16
      %v7130 = vrot.slane %v7128, 6
      %v7131 = vshll.u32 %v6786, 16
      %v7133 = vrot.slane %v7131, 7
      %v7134 = vor.u32 %v7130, %v7133
      %v7135 = vsel %vm1634, %v7126, %v7134
      %v7136 = vrot.slane %v7134, 4
      %v7138 = vshrl.u32 %v6787, 16
      %v7140 = vrot.slane %v7138, 6
      %v7141 = vshll.u32 %v6787, 16
      %v7143 = vrot.slane %v7141, 7
      %v7144 = vor.u32 %v7140, %v7143
      %v7145 = vsel %vm1634, %v7136, %v7144
      %v7146 = vrot.slane %v7144, 4
      %v7184 = vld [vmem:[#allocation2 + $0x8] sm:$0xe]
      %v7185 = vsel %vm1588, %v6795, %v7184
      %7186 = vst [vmem:[#allocation2 + $0x8] sm:$0xe] %v7185
      %7187 = vst.msk [vmem:[#allocation2 + $0xc] sm:$0xf] %vm1577, %v6805
      %7188 = vst.msk [vmem:[#allocation2 + $0x10] sm:$0xf] %vm1577, %v6815
      %7189 = vst.msk [vmem:[#allocation2 + $0x14] sm:$0xf] %vm1577, %v6825
      %7190 = vst.msk [vmem:[#allocation2 + $0x18] sm:$0xf] %vm1577, %v6835
      %7191 = vst.msk [vmem:[#allocation2 + $0x1c] sm:$0xf] %vm1577, %v6845
      %7192 = vst.msk [vmem:[#allocation2 + $0x20] sm:$0xf] %vm1577, %v6855
      %7193 = vst.msk [vmem:[#allocation2 + $0x24] sm:$0xf] %vm1577, %v6865
      %7194 = vst.msk [vmem:[#allocation2 + $0x28] sm:$0xf] %vm1577, %v6875
      %7195 = vst.msk [vmem:[#allocation2 + $0x2c] sm:$0xf] %vm1577, %v6885
      %7196 = vst.msk [vmem:[#allocation2 + $0x30] sm:$0xf] %vm1577, %v6895
      %7197 = vst.msk [vmem:[#allocation2 + $0x34] sm:$0xf] %vm1577, %v6905
      %7198 = vst.msk [vmem:[#allocation2 + $0x38] sm:$0xf] %vm1577, %v6915
      %7199 = vst.msk [vmem:[#allocation2 + $0x3c] sm:$0xf] %vm1577, %v6925
      %7200 = vst.msk [vmem:[#allocation2 + $0x40] sm:$0xf] %vm1577, %v6935
      %7201 = vst.msk [vmem:[#allocation2 + $0x44] sm:$0xf] %vm1577, %v6945
      %7202 = vst.msk [vmem:[#allocation2 + $0x48] sm:$0xf] %vm1577, %v6955
      %7203 = vst.msk [vmem:[#allocation2 + $0x4c] sm:$0xf] %vm1577, %v6965
      %7204 = vst.msk [vmem:[#allocation2 + $0x50] sm:$0xf] %vm1577, %v6975
      %7205 = vst.msk [vmem:[#allocation2 + $0x54] sm:$0xf] %vm1577, %v6985
      %7206 = vst.msk [vmem:[#allocation2 + $0x58] sm:$0xf] %vm1577, %v6995
      %7207 = vst.msk [vmem:[#allocation2 + $0x5c] sm:$0xf] %vm1577, %v7005
      %7208 = vst.msk [vmem:[#allocation2 + $0x60] sm:$0xf] %vm1577, %v7015
      %7209 = vst.msk [vmem:[#allocation2 + $0x64] sm:$0xf] %vm1577, %v7025
      %7210 = vst.msk [vmem:[#allocation2 + $0x68] sm:$0xf] %vm1577, %v7035
      %7211 = vst.msk [vmem:[#allocation2 + $0x6c] sm:$0xf] %vm1577, %v7045
      %7212 = vst.msk [vmem:[#allocation2 + $0x70] sm:$0xf] %vm1577, %v7055
      %7213 = vst.msk [vmem:[#allocation2 + $0x74] sm:$0xf] %vm1577, %v7065
      %7214 = vst.msk [vmem:[#allocation2 + $0x78] sm:$0xf] %vm1577, %v7075
      %7215 = vst.msk [vmem:[#allocation2 + $0x7c] sm:$0xf] %vm1577, %v7085
      %7216 = vst.msk [vmem:[#allocation2 + $0x80] sm:$0xf] %vm1577, %v7095
      %7217 = vst.msk [vmem:[#allocation2 + $0x84] sm:$0xf] %vm1577, %v7105
      %7218 = vst.msk [vmem:[#allocation2 + $0x88] sm:$0xf] %vm1577, %v7115
      %7219 = vst.msk [vmem:[#allocation2 + $0x8c] sm:$0xf] %vm1577, %v7125
      %7220 = vst.msk [vmem:[#allocation2 + $0x90] sm:$0xf] %vm1577, %v7135
      %7221 = vst.msk [vmem:[#allocation2 + $0x94] sm:$0xf] %vm1577, %v7145
      %v7222 = vld [vmem:[#allocation2 + $0x98] sm:$0x3]
      %v7223 = vsel %vm1582, %v7146, %v7222
      %7224 = vst [vmem:[#allocation2 + $0x98] sm:$0x3] %v7223
      %v7225 = vld [vmem:[#allocation2] sm:$0xf]
      %v7226 = vld [vmem:[#allocation2 + $0x4] sm:$0xf]
      %v7227 = vld [vmem:[#allocation2 + $0x8] sm:$0xf]
      %v7228 = vld [vmem:[#allocation2 + $0xc] sm:$0xf]
      %v7229 = vld [vmem:[#allocation2 + $0x10] sm:$0xf]
      %v7230 = vld [vmem:[#allocation2 + $0x14] sm:$0xf]
      %v7231 = vld [vmem:[#allocation2 + $0x18] sm:$0xf]
      %v7232 = vld [vmem:[#allocation2 + $0x1c] sm:$0xf]
      %v7233 = vld [vmem:[#allocation2 + $0x20] sm:$0xf]
      %v7234 = vld [vmem:[#allocation2 + $0x24] sm:$0xf]
      %v7235 = vld [vmem:[#allocation2 + $0x28] sm:$0xf]
      %v7236 = vld [vmem:[#allocation2 + $0x2c] sm:$0xf]
      %v7237 = vld [vmem:[#allocation2 + $0x30] sm:$0xf]
      %v7238 = vld [vmem:[#allocation2 + $0x34] sm:$0xf]
      %v7239 = vld [vmem:[#allocation2 + $0x38] sm:$0xf]
      %v7240 = vld [vmem:[#allocation2 + $0x3c] sm:$0xf]
      %v7241 = vld [vmem:[#allocation2 + $0x40] sm:$0xf]
      %v7242 = vld [vmem:[#allocation2 + $0x44] sm:$0xf]
      %v7243 = vld [vmem:[#allocation2 + $0x48] sm:$0xf]
      %v7244 = vld [vmem:[#allocation2 + $0x4c] sm:$0xf]
      %v7245 = vld [vmem:[#allocation2 + $0x50] sm:$0xf]
      %v7246 = vld [vmem:[#allocation2 + $0x54] sm:$0xf]
      %v7247 = vld [vmem:[#allocation2 + $0x58] sm:$0xf]
      %v7248 = vld [vmem:[#allocation2 + $0x5c] sm:$0xf]
      %v7249 = vld [vmem:[#allocation2 + $0x60] sm:$0xf]
      %v7250 = vld [vmem:[#allocation2 + $0x64] sm:$0xf]
      %v7251 = vld [vmem:[#allocation2 + $0x68] sm:$0xf]
      %v7252 = vld [vmem:[#allocation2 + $0x6c] sm:$0xf]
      %v7253 = vld [vmem:[#allocation2 + $0x70] sm:$0xf]
      %v7254 = vld [vmem:[#allocation2 + $0x74] sm:$0xf]
      %v7255 = vld [vmem:[#allocation2 + $0x78] sm:$0xf]
      %v7256 = vld [vmem:[#allocation2 + $0x7c] sm:$0xf]
      %v7257 = vld [vmem:[#allocation2 + $0x80] sm:$0xf]
      %v7258 = vld [vmem:[#allocation2 + $0x84] sm:$0xf]
      %v7259 = vld [vmem:[#allocation2 + $0x88] sm:$0xf]
      %v7260 = vld [vmem:[#allocation2 + $0x8c] sm:$0xf]
      %v7261 = vld [vmem:[%s4] sm:$0x3]
      %v7298 = vunpack.c.l.b16 %v7225
      %v7299 = vunpack.c.l.b16 %v7226
      %v7300 = vunpack.c.l.b16 %v7227
      %v7301 = vunpack.c.l.b16 %v7228
      %v7302 = vunpack.c.l.b16 %v7229
      %v7303 = vunpack.c.l.b16 %v7230
      %v7304 = vunpack.c.l.b16 %v7231
      %v7305 = vunpack.c.l.b16 %v7232
      %v7306 = vunpack.c.l.b16 %v7233
      %v7307 = vunpack.c.l.b16 %v7234
      %v7308 = vunpack.c.l.b16 %v7235
      %v7309 = vunpack.c.l.b16 %v7236
      %v7310 = vunpack.c.l.b16 %v7237
      %v7311 = vunpack.c.l.b16 %v7238
      %v7312 = vunpack.c.l.b16 %v7239
      %v7313 = vunpack.c.l.b16 %v7240
      %v7314 = vunpack.c.l.b16 %v7241
      %v7315 = vunpack.c.l.b16 %v7242
      %v7316 = vunpack.c.l.b16 %v7243
      %v7317 = vunpack.c.l.b16 %v7244
      %v7318 = vunpack.c.l.b16 %v7245
      %v7319 = vunpack.c.l.b16 %v7246
      %v7320 = vunpack.c.l.b16 %v7247
      %v7321 = vunpack.c.l.b16 %v7248
      %v7322 = vunpack.c.l.b16 %v7249
      %v7323 = vunpack.c.l.b16 %v7250
      %v7324 = vunpack.c.l.b16 %v7251
      %v7325 = vunpack.c.l.b16 %v7252
      %v7326 = vunpack.c.l.b16 %v7253
      %v7327 = vunpack.c.l.b16 %v7254
      %v7328 = vunpack.c.l.b16 %v7255
      %v7329 = vunpack.c.l.b16 %v7256
      %v7330 = vunpack.c.l.b16 %v7257
      %v7331 = vunpack.c.l.b16 %v7258
      %v7332 = vunpack.c.l.b16 %v7259
      %v7333 = vunpack.c.l.b16 %v7260
      %v7334 = vpack.c.b16 %v7299, %v7298
      %v7335 = vpack.c.b16 %v7301, %v7300
      %v7336 = vpack.c.b16 %v7303, %v7302
      %v7337 = vpack.c.b16 %v7305, %v7304
      %v7338 = vpack.c.b16 %v7307, %v7306
      %v7339 = vpack.c.b16 %v7309, %v7308
      %v7340 = vpack.c.b16 %v7311, %v7310
      %v7341 = vpack.c.b16 %v7313, %v7312
      %v7342 = vpack.c.b16 %v7315, %v7314
      %v7343 = vpack.c.b16 %v7317, %v7316
      %v7344 = vpack.c.b16 %v7319, %v7318
      %v7345 = vpack.c.b16 %v7321, %v7320
      %v7346 = vpack.c.b16 %v7323, %v7322
      %v7347 = vpack.c.b16 %v7325, %v7324
      %v7348 = vpack.c.b16 %v7327, %v7326
      %v7349 = vpack.c.b16 %v7329, %v7328
      %v7350 = vpack.c.b16 %v7331, %v7330
      %v7351 = vpack.c.b16 %v7333, %v7332
      %v7353 = vsel %vm2199, %v7334, 0
      %v7356 = vsel %vm2199, %v7335, 0
      %v7359 = vsel %vm2199, %v7336, 0
      %v7362 = vsel %vm2199, %v7337, 0
      %v7365 = vsel %vm2199, %v7338, 0
      %v7368 = vsel %vm2199, %v7339, 0
      %v7371 = vsel %vm2199, %v7340, 0
      %v7374 = vsel %vm2199, %v7341, 0
      %v7377 = vsel %vm2199, %v7342, 0
      %v7380 = vsel %vm2199, %v7343, 0
      %v7383 = vsel %vm2199, %v7344, 0
      %v7386 = vsel %vm2199, %v7345, 0
      %v7389 = vsel %vm2199, %v7346, 0
      %v7392 = vsel %vm2199, %v7347, 0
      %v7395 = vsel %vm2199, %v7348, 0
      %v7398 = vsel %vm2199, %v7349, 0
      %v7401 = vsel %vm2199, %v7350, 0
      %v7404 = vsel %vm2199, %v7351, 0
      %v7407 = vsel %vm2254, %v7261, 0
      %7409 = vmatpush.bf16.msra.mxu0 0
      %7410 = vmatpush.bf16.msra.mxu0 0
      %7411 = vmatpush.bf16.msra.mxu0 0
      %7412 = vmatpush.bf16.msra.mxu0 0
      %7413 = vmatpush.bf16.msra.mxu0 0
      %7414 = vmatpush.bf16.msra.mxu0 0
      %7415 = vmatpush.bf16.msra.mxu0 0
      %7416 = vmatpush.bf16.msra.mxu0 %v7407
      %7417 = vmatmul.bf16.gmra.mxu0 %v7353
      %v7418 = vpop.f32.mrf.mxu0
      %v7419 = vadd.f32 0.0, %v7418
      %v7420 = vpop.f32.mrf.mxu0
      %v7421 = vadd.f32 0.0, %v7420
      %7422 = vmatmul.bf16.gmra.mxu0 %v7356
      %v7423 = vpop.f32.mrf.mxu0
      %v7424 = vadd.f32 0.0, %v7423
      %v7425 = vpop.f32.mrf.mxu0
      %v7426 = vadd.f32 0.0, %v7425
      %7427 = vmatmul.bf16.gmra.mxu0 %v7359
      %v7428 = vpop.f32.mrf.mxu0
      %v7429 = vadd.f32 0.0, %v7428
      %v7430 = vpop.f32.mrf.mxu0
      %v7431 = vadd.f32 0.0, %v7430
      %7432 = vmatmul.bf16.gmra.mxu0 %v7362
      %v7433 = vpop.f32.mrf.mxu0
      %v7434 = vadd.f32 0.0, %v7433
      %v7435 = vpop.f32.mrf.mxu0
      %v7436 = vadd.f32 0.0, %v7435
      %7437 = vmatmul.bf16.gmra.mxu0 %v7365
      %v7438 = vpop.f32.mrf.mxu0
      %v7439 = vadd.f32 0.0, %v7438
      %v7440 = vpop.f32.mrf.mxu0
      %v7441 = vadd.f32 0.0, %v7440
      %7442 = vmatmul.bf16.gmra.mxu0 %v7368
      %v7443 = vpop.f32.mrf.mxu0
      %v7444 = vadd.f32 0.0, %v7443
      %v7445 = vpop.f32.mrf.mxu0
      %v7446 = vadd.f32 0.0, %v7445
      %7447 = vmatmul.bf16.gmra.mxu0 %v7371
      %v7448 = vpop.f32.mrf.mxu0
      %v7449 = vadd.f32 0.0, %v7448
      %v7450 = vpop.f32.mrf.mxu0
      %v7451 = vadd.f32 0.0, %v7450
      %7452 = vmatmul.bf16.gmra.mxu0 %v7374
      %v7453 = vpop.f32.mrf.mxu0
      %v7454 = vadd.f32 0.0, %v7453
      %v7455 = vpop.f32.mrf.mxu0
      %v7456 = vadd.f32 0.0, %v7455
      %7457 = vmatmul.bf16.gmra.mxu0 %v7377
      %v7458 = vpop.f32.mrf.mxu0
      %v7459 = vadd.f32 0.0, %v7458
      %v7460 = vpop.f32.mrf.mxu0
      %v7461 = vadd.f32 0.0, %v7460
      %7462 = vmatmul.bf16.gmra.mxu0 %v7380
      %v7463 = vpop.f32.mrf.mxu0
      %v7464 = vadd.f32 0.0, %v7463
      %v7465 = vpop.f32.mrf.mxu0
      %v7466 = vadd.f32 0.0, %v7465
      %7467 = vmatmul.bf16.gmra.mxu0 %v7383
      %v7468 = vpop.f32.mrf.mxu0
      %v7469 = vadd.f32 0.0, %v7468
      %v7470 = vpop.f32.mrf.mxu0
      %v7471 = vadd.f32 0.0, %v7470
      %7472 = vmatmul.bf16.gmra.mxu0 %v7386
      %v7473 = vpop.f32.mrf.mxu0
      %v7474 = vadd.f32 0.0, %v7473
      %v7475 = vpop.f32.mrf.mxu0
      %v7476 = vadd.f32 0.0, %v7475
      %7477 = vmatmul.bf16.gmra.mxu0 %v7389
      %v7478 = vpop.f32.mrf.mxu0
      %v7479 = vadd.f32 0.0, %v7478
      %v7480 = vpop.f32.mrf.mxu0
      %v7481 = vadd.f32 0.0, %v7480
      %7482 = vmatmul.bf16.gmra.mxu0 %v7392
      %v7483 = vpop.f32.mrf.mxu0
      %v7484 = vadd.f32 0.0, %v7483
      %v7485 = vpop.f32.mrf.mxu0
      %v7486 = vadd.f32 0.0, %v7485
      %7487 = vmatmul.bf16.gmra.mxu0 %v7395
      %v7488 = vpop.f32.mrf.mxu0
      %v7489 = vadd.f32 0.0, %v7488
      %v7490 = vpop.f32.mrf.mxu0
      %v7491 = vadd.f32 0.0, %v7490
      %7492 = vmatmul.bf16.gmra.mxu0 %v7398
      %v7493 = vpop.f32.mrf.mxu0
      %v7494 = vadd.f32 0.0, %v7493
      %v7495 = vpop.f32.mrf.mxu0
      %v7496 = vadd.f32 0.0, %v7495
      %7497 = vmatmul.bf16.gmra.mxu0 %v7401
      %v7498 = vpop.f32.mrf.mxu0
      %v7499 = vadd.f32 0.0, %v7498
      %v7500 = vpop.f32.mrf.mxu0
      %v7501 = vadd.f32 0.0, %v7500
      %7502 = vmatmul.bf16.gmra.mxu0 %v7404
      %v7503 = vpop.f32.mrf.mxu0
      %v7504 = vadd.f32 0.0, %v7503
      %v7505 = vpop.f32.mrf.mxu0
      %v7506 = vadd.f32 0.0, %v7505
      %7507 = vdwg.mxu0
      %7508 = vst.msk [vmem:[#allocation3] sm:$0xff] %vm2199, %v7419
      %7509 = vst.msk [vmem:[#allocation3 + $0x8] sm:$0xff] %vm2199, %v7421
      %7510 = vst.msk [vmem:[#allocation3 + $0x10] sm:$0xff] %vm2199, %v7424
      %7511 = vst.msk [vmem:[#allocation3 + $0x18] sm:$0xff] %vm2199, %v7426
      %7512 = vst.msk [vmem:[#allocation3 + $0x20] sm:$0xff] %vm2199, %v7429
      %7513 = vst.msk [vmem:[#allocation3 + $0x28] sm:$0xff] %vm2199, %v7431
      %7514 = vst.msk [vmem:[#allocation3 + $0x30] sm:$0xff] %vm2199, %v7434
      %7515 = vst.msk [vmem:[#allocation3 + $0x38] sm:$0xff] %vm2199, %v7436
      %7516 = vst.msk [vmem:[#allocation3 + $0x40] sm:$0xff] %vm2199, %v7439
      %7517 = vst.msk [vmem:[#allocation3 + $0x48] sm:$0xff] %vm2199, %v7441
      %7518 = vst.msk [vmem:[#allocation3 + $0x50] sm:$0xff] %vm2199, %v7444
      %7519 = vst.msk [vmem:[#allocation3 + $0x58] sm:$0xff] %vm2199, %v7446
      %7520 = vst.msk [vmem:[#allocation3 + $0x60] sm:$0xff] %vm2199, %v7449
      %7521 = vst.msk [vmem:[#allocation3 + $0x68] sm:$0xff] %vm2199, %v7451
      %7522 = vst.msk [vmem:[#allocation3 + $0x70] sm:$0xff] %vm2199, %v7454
      %7523 = vst.msk [vmem:[#allocation3 + $0x78] sm:$0xff] %vm2199, %v7456
      %7524 = vst.msk [vmem:[#allocation3 + $0x80] sm:$0xff] %vm2199, %v7459
      %7525 = vst.msk [vmem:[#allocation3 + $0x88] sm:$0xff] %vm2199, %v7461
      %7526 = vst.msk [vmem:[#allocation3 + $0x90] sm:$0xff] %vm2199, %v7464
      %7527 = vst.msk [vmem:[#allocation3 + $0x98] sm:$0xff] %vm2199, %v7466
      %7528 = vst.msk [vmem:[#allocation3 + $0xa0] sm:$0xff] %vm2199, %v7469
      %7529 = vst.msk [vmem:[#allocation3 + $0xa8] sm:$0xff] %vm2199, %v7471
      %7530 = vst.msk [vmem:[#allocation3 + $0xb0] sm:$0xff] %vm2199, %v7474
      %7531 = vst.msk [vmem:[#allocation3 + $0xb8] sm:$0xff] %vm2199, %v7476
      %7532 = vst.msk [vmem:[#allocation3 + $0xc0] sm:$0xff] %vm2199, %v7479
      %7533 = vst.msk [vmem:[#allocation3 + $0xc8] sm:$0xff] %vm2199, %v7481
      %7534 = vst.msk [vmem:[#allocation3 + $0xd0] sm:$0xff] %vm2199, %v7484
      %7535 = vst.msk [vmem:[#allocation3 + $0xd8] sm:$0xff] %vm2199, %v7486
      %7536 = vst.msk [vmem:[#allocation3 + $0xe0] sm:$0xff] %vm2199, %v7489
      %7537 = vst.msk [vmem:[#allocation3 + $0xe8] sm:$0xff] %vm2199, %v7491
      %7538 = vst.msk [vmem:[#allocation3 + $0xf0] sm:$0xff] %vm2199, %v7494
      %7539 = vst.msk [vmem:[#allocation3 + $0xf8] sm:$0xff] %vm2199, %v7496
      %7540 = vst.msk [vmem:[#allocation3 + $0x100] sm:$0xff] %vm2199, %v7499
      %7541 = vst.msk [vmem:[#allocation3 + $0x108] sm:$0xff] %vm2199, %v7501
      %7542 = vst.msk [vmem:[#allocation3 + $0x110] sm:$0xff] %vm2199, %v7504
      %7543 = vst.msk [vmem:[#allocation3 + $0x118] sm:$0xff] %vm2199, %v7506
      %v7544 = vld [vmem:[#allocation2] sm:$0xf]
      %v7545 = vld [vmem:[#allocation2 + $0x4] sm:$0xf]
      %v7546 = vld [vmem:[#allocation2 + $0x8] sm:$0xf]
      %v7547 = vld [vmem:[#allocation2 + $0xc] sm:$0xf]
      %v7548 = vld [vmem:[#allocation2 + $0x10] sm:$0xf]
      %v7549 = vld [vmem:[#allocation2 + $0x14] sm:$0xf]
      %v7550 = vld [vmem:[#allocation2 + $0x18] sm:$0xf]
      %v7551 = vld [vmem:[#allocation2 + $0x1c] sm:$0xf]
      %v7552 = vld [vmem:[#allocation2 + $0x20] sm:$0xf]
      %v7553 = vld [vmem:[#allocation2 + $0x24] sm:$0xf]
      %v7554 = vld [vmem:[#allocation2 + $0x28] sm:$0xf]
      %v7555 = vld [vmem:[#allocation2 + $0x2c] sm:$0xf]
      %v7556 = vld [vmem:[#allocation2 + $0x30] sm:$0xf]
      %v7557 = vld [vmem:[#allocation2 + $0x34] sm:$0xf]
      %v7558 = vld [vmem:[#allocation2 + $0x38] sm:$0xf]
      %v7559 = vld [vmem:[#allocation2 + $0x3c] sm:$0xf]
      %v7560 = vld [vmem:[#allocation2 + $0x40] sm:$0xf]
      %v7561 = vld [vmem:[#allocation2 + $0x44] sm:$0xf]
      %v7562 = vld [vmem:[#allocation2 + $0x48] sm:$0xf]
      %v7563 = vld [vmem:[#allocation2 + $0x4c] sm:$0xf]
      %v7564 = vld [vmem:[#allocation2 + $0x50] sm:$0xf]
      %v7565 = vld [vmem:[#allocation2 + $0x54] sm:$0xf]
      %v7566 = vld [vmem:[#allocation2 + $0x58] sm:$0xf]
      %v7567 = vld [vmem:[#allocation2 + $0x5c] sm:$0xf]
      %v7568 = vld [vmem:[#allocation2 + $0x60] sm:$0xf]
      %v7569 = vld [vmem:[#allocation2 + $0x64] sm:$0xf]
      %v7570 = vld [vmem:[#allocation2 + $0x68] sm:$0xf]
      %v7571 = vld [vmem:[#allocation2 + $0x6c] sm:$0xf]
      %v7572 = vld [vmem:[#allocation2 + $0x70] sm:$0xf]
      %v7573 = vld [vmem:[#allocation2 + $0x74] sm:$0xf]
      %v7574 = vld [vmem:[#allocation2 + $0x78] sm:$0xf]
      %v7575 = vld [vmem:[#allocation2 + $0x7c] sm:$0xf]
      %v7576 = vld [vmem:[#allocation2 + $0x80] sm:$0xf]
      %v7577 = vld [vmem:[#allocation2 + $0x84] sm:$0xf]
      %v7578 = vld [vmem:[#allocation2 + $0x88] sm:$0xf]
      %v7579 = vld [vmem:[#allocation2 + $0x8c] sm:$0xf]
      %v7580 = vld [vmem:[#allocation2 + $0x90] sm:$0x1]
      %s7581 = scalar_lea.vmem %s4, 2
      %v7582 = vld [vmem:[%s7581] sm:$0x3]
      %v7620 = vunpack.c.l.b16 %v7544
      %v7621 = vunpack.c.l.b16 %v7545
      %v7622 = vunpack.c.l.b16 %v7546
      %v7623 = vunpack.c.l.b16 %v7547
      %v7624 = vunpack.c.l.b16 %v7548
      %v7625 = vunpack.c.l.b16 %v7549
      %v7626 = vunpack.c.l.b16 %v7550
      %v7627 = vunpack.c.l.b16 %v7551
      %v7628 = vunpack.c.l.b16 %v7552
      %v7629 = vunpack.c.l.b16 %v7553
      %v7630 = vunpack.c.l.b16 %v7554
      %v7631 = vunpack.c.l.b16 %v7555
      %v7632 = vunpack.c.l.b16 %v7556
      %v7633 = vunpack.c.l.b16 %v7557
      %v7634 = vunpack.c.l.b16 %v7558
      %v7635 = vunpack.c.l.b16 %v7559
      %v7636 = vunpack.c.l.b16 %v7560
      %v7637 = vunpack.c.l.b16 %v7561
      %v7638 = vunpack.c.l.b16 %v7562
      %v7639 = vunpack.c.l.b16 %v7563
      %v7640 = vunpack.c.l.b16 %v7564
      %v7641 = vunpack.c.l.b16 %v7565
      %v7642 = vunpack.c.l.b16 %v7566
      %v7643 = vunpack.c.l.b16 %v7567
      %v7644 = vunpack.c.l.b16 %v7568
      %v7645 = vunpack.c.l.b16 %v7569
      %v7646 = vunpack.c.l.b16 %v7570
      %v7647 = vunpack.c.l.b16 %v7571
      %v7648 = vunpack.c.l.b16 %v7572
      %v7649 = vunpack.c.l.b16 %v7573
      %v7650 = vunpack.c.l.b16 %v7574
      %v7651 = vunpack.c.l.b16 %v7575
      %v7652 = vunpack.c.l.b16 %v7576
      %v7653 = vunpack.c.l.b16 %v7577
      %v7654 = vunpack.c.l.b16 %v7578
      %v7655 = vunpack.c.l.b16 %v7579
      %v7656 = vunpack.c.l.b16 %v7580
      %v7657 = vpack.c.b16 %v7621, %v7620
      %v7658 = vpack.c.b16 %v7623, %v7622
      %v7659 = vpack.c.b16 %v7625, %v7624
      %v7660 = vpack.c.b16 %v7627, %v7626
      %v7661 = vpack.c.b16 %v7629, %v7628
      %v7662 = vpack.c.b16 %v7631, %v7630
      %v7663 = vpack.c.b16 %v7633, %v7632
      %v7664 = vpack.c.b16 %v7635, %v7634
      %v7665 = vpack.c.b16 %v7637, %v7636
      %v7666 = vpack.c.b16 %v7639, %v7638
      %v7667 = vpack.c.b16 %v7641, %v7640
      %v7668 = vpack.c.b16 %v7643, %v7642
      %v7669 = vpack.c.b16 %v7645, %v7644
      %v7670 = vpack.c.b16 %v7647, %v7646
      %v7671 = vpack.c.b16 %v7649, %v7648
      %v7672 = vpack.c.b16 %v7651, %v7650
      %v7673 = vpack.c.b16 %v7653, %v7652
      %v7674 = vpack.c.b16 %v7655, %v7654
      %v7675 = vpack.c.b16 %v7656, %v7656
      %v7677 = vshrl.u32 %v7657, 16
      %v7679 = vshll.u32 %v7657, 16
      %v7681 = vrot.slane %v7679, 1
      %v7682 = vor.u32 %v7677, %v7681
      %v7684 = vshll.u32 %v7658, 16
      %v7686 = vrot.slane %v7684, 1
      %v7687 = vsel %vm2525, %v7682, %v7686
      %v7688 = vshrl.u32 %v7658, 16
      %v7690 = vor.u32 %v7688, %v7686
      %v7692 = vshll.u32 %v7659, 16
      %v7694 = vrot.slane %v7692, 1
      %v7695 = vsel %vm2525, %v7690, %v7694
      %v7696 = vshrl.u32 %v7659, 16
      %v7698 = vor.u32 %v7696, %v7694
      %v7700 = vshll.u32 %v7660, 16
      %v7702 = vrot.slane %v7700, 1
      %v7703 = vsel %vm2525, %v7698, %v7702
      %v7704 = vshrl.u32 %v7660, 16
      %v7706 = vor.u32 %v7704, %v7702
      %v7708 = vshll.u32 %v7661, 16
      %v7710 = vrot.slane %v7708, 1
      %v7711 = vsel %vm2525, %v7706, %v7710
      %v7712 = vshrl.u32 %v7661, 16
      %v7714 = vor.u32 %v7712, %v7710
      %v7716 = vshll.u32 %v7662, 16
      %v7718 = vrot.slane %v7716, 1
      %v7719 = vsel %vm2525, %v7714, %v7718
      %v7720 = vshrl.u32 %v7662, 16
      %v7722 = vor.u32 %v7720, %v7718
      %v7724 = vshll.u32 %v7663, 16
      %v7726 = vrot.slane %v7724, 1
      %v7727 = vsel %vm2525, %v7722, %v7726
      %v7728 = vshrl.u32 %v7663, 16
      %v7730 = vor.u32 %v7728, %v7726
      %v7732 = vshll.u32 %v7664, 16
      %v7734 = vrot.slane %v7732, 1
      %v7735 = vsel %vm2525, %v7730, %v7734
      %v7736 = vshrl.u32 %v7664, 16
      %v7738 = vor.u32 %v7736, %v7734
      %v7740 = vshll.u32 %v7665, 16
      %v7742 = vrot.slane %v7740, 1
      %v7743 = vsel %vm2525, %v7738, %v7742
      %v7744 = vshrl.u32 %v7665, 16
      %v7746 = vor.u32 %v7744, %v7742
      %v7748 = vshll.u32 %v7666, 16
      %v7750 = vrot.slane %v7748, 1
      %v7751 = vsel %vm2525, %v7746, %v7750
      %v7752 = vshrl.u32 %v7666, 16
      %v7754 = vor.u32 %v7752, %v7750
      %v7756 = vshll.u32 %v7667, 16
      %v7758 = vrot.slane %v7756, 1
      %v7759 = vsel %vm2525, %v7754, %v7758
      %v7760 = vshrl.u32 %v7667, 16
      %v7762 = vor.u32 %v7760, %v7758
      %v7764 = vshll.u32 %v7668, 16
      %v7766 = vrot.slane %v7764, 1
      %v7767 = vsel %vm2525, %v7762, %v7766
      %v7768 = vshrl.u32 %v7668, 16
      %v7770 = vor.u32 %v7768, %v7766
      %v7772 = vshll.u32 %v7669, 16
      %v7774 = vrot.slane %v7772, 1
      %v7775 = vsel %vm2525, %v7770, %v7774
      %v7776 = vshrl.u32 %v7669, 16
      %v7778 = vor.u32 %v7776, %v7774
      %v7780 = vshll.u32 %v7670, 16
      %v7782 = vrot.slane %v7780, 1
      %v7783 = vsel %vm2525, %v7778, %v7782
      %v7784 = vshrl.u32 %v7670, 16
      %v7786 = vor.u32 %v7784, %v7782
      %v7788 = vshll.u32 %v7671, 16
      %v7790 = vrot.slane %v7788, 1
      %v7791 = vsel %vm2525, %v7786, %v7790
      %v7792 = vshrl.u32 %v7671, 16
      %v7794 = vor.u32 %v7792, %v7790
      %v7796 = vshll.u32 %v7672, 16
      %v7798 = vrot.slane %v7796, 1
      %v7799 = vsel %vm2525, %v7794, %v7798
      %v7800 = vshrl.u32 %v7672, 16
      %v7802 = vor.u32 %v7800, %v7798
      %v7804 = vshll.u32 %v7673, 16
      %v7806 = vrot.slane %v7804, 1
      %v7807 = vsel %vm2525, %v7802, %v7806
      %v7808 = vshrl.u32 %v7673, 16
      %v7810 = vor.u32 %v7808, %v7806
      %v7812 = vshll.u32 %v7674, 16
      %v7814 = vrot.slane %v7812, 1
      %v7815 = vsel %vm2525, %v7810, %v7814
      %v7816 = vshrl.u32 %v7674, 16
      %v7818 = vor.u32 %v7816, %v7814
      %v7820 = vshll.u32 %v7675, 16
      %v7822 = vrot.slane %v7820, 1
      %v7823 = vsel %vm2525, %v7818, %v7822
      %v7825 = vsel %vm2199, %v7687, 0
      %v7828 = vsel %vm2199, %v7695, 0
      %v7831 = vsel %vm2199, %v7703, 0
      %v7834 = vsel %vm2199, %v7711, 0
      %v7837 = vsel %vm2199, %v7719, 0
      %v7840 = vsel %vm2199, %v7727, 0
      %v7843 = vsel %vm2199, %v7735, 0
      %v7846 = vsel %vm2199, %v7743, 0
      %v7849 = vsel %vm2199, %v7751, 0
      %v7852 = vsel %vm2199, %v7759, 0
      %v7855 = vsel %vm2199, %v7767, 0
      %v7858 = vsel %vm2199, %v7775, 0
      %v7861 = vsel %vm2199, %v7783, 0
      %v7864 = vsel %vm2199, %v7791, 0
      %v7867 = vsel %vm2199, %v7799, 0
      %v7870 = vsel %vm2199, %v7807, 0
      %v7873 = vsel %vm2199, %v7815, 0
      %v7876 = vsel %vm2199, %v7823, 0
      %v7879 = vsel %vm2254, %v7582, 0
      %7881 = vmatpush.bf16.msra.mxu0 0
      %7882 = vmatpush.bf16.msra.mxu0 0
      %7883 = vmatpush.bf16.msra.mxu0 0
      %7884 = vmatpush.bf16.msra.mxu0 0
      %7885 = vmatpush.bf16.msra.mxu0 0
      %7886 = vmatpush.bf16.msra.mxu0 0
      %7887 = vmatpush.bf16.msra.mxu0 0
      %7888 = vmatpush.bf16.msra.mxu0 %v7879
      %7889 = vmatmul.bf16.gmra.mxu0 %v7825
      %v7890 = vpop.f32.mrf.mxu0
      %v7891 = vadd.f32 0.0, %v7890
      %v7892 = vpop.f32.mrf.mxu0
      %v7893 = vadd.f32 0.0, %v7892
      %7894 = vmatmul.bf16.gmra.mxu0 %v7828
      %v7895 = vpop.f32.mrf.mxu0
      %v7896 = vadd.f32 0.0, %v7895
      %v7897 = vpop.f32.mrf.mxu0
      %v7898 = vadd.f32 0.0, %v7897
      %7899 = vmatmul.bf16.gmra.mxu0 %v7831
      %v7900 = vpop.f32.mrf.mxu0
      %v7901 = vadd.f32 0.0, %v7900
      %v7902 = vpop.f32.mrf.mxu0
      %v7903 = vadd.f32 0.0, %v7902
      %7904 = vmatmul.bf16.gmra.mxu0 %v7834
      %v7905 = vpop.f32.mrf.mxu0
      %v7906 = vadd.f32 0.0, %v7905
      %v7907 = vpop.f32.mrf.mxu0
      %v7908 = vadd.f32 0.0, %v7907
      %7909 = vmatmul.bf16.gmra.mxu0 %v7837
      %v7910 = vpop.f32.mrf.mxu0
      %v7911 = vadd.f32 0.0, %v7910
      %v7912 = vpop.f32.mrf.mxu0
      %v7913 = vadd.f32 0.0, %v7912
      %7914 = vmatmul.bf16.gmra.mxu0 %v7840
      %v7915 = vpop.f32.mrf.mxu0
      %v7916 = vadd.f32 0.0, %v7915
      %v7917 = vpop.f32.mrf.mxu0
      %v7918 = vadd.f32 0.0, %v7917
      %7919 = vmatmul.bf16.gmra.mxu0 %v7843
      %v7920 = vpop.f32.mrf.mxu0
      %v7921 = vadd.f32 0.0, %v7920
      %v7922 = vpop.f32.mrf.mxu0
      %v7923 = vadd.f32 0.0, %v7922
      %7924 = vmatmul.bf16.gmra.mxu0 %v7846
      %v7925 = vpop.f32.mrf.mxu0
      %v7926 = vadd.f32 0.0, %v7925
      %v7927 = vpop.f32.mrf.mxu0
      %v7928 = vadd.f32 0.0, %v7927
      %7929 = vmatmul.bf16.gmra.mxu0 %v7849
      %v7930 = vpop.f32.mrf.mxu0
      %v7931 = vadd.f32 0.0, %v7930
      %v7932 = vpop.f32.mrf.mxu0
      %v7933 = vadd.f32 0.0, %v7932
      %7934 = vmatmul.bf16.gmra.mxu0 %v7852
      %v7935 = vpop.f32.mrf.mxu0
      %v7936 = vadd.f32 0.0, %v7935
      %v7937 = vpop.f32.mrf.mxu0
      %v7938 = vadd.f32 0.0, %v7937
      %7939 = vmatmul.bf16.gmra.mxu0 %v7855
      %v7940 = vpop.f32.mrf.mxu0
      %v7941 = vadd.f32 0.0, %v7940
      %v7942 = vpop.f32.mrf.mxu0
      %v7943 = vadd.f32 0.0, %v7942
      %7944 = vmatmul.bf16.gmra.mxu0 %v7858
      %v7945 = vpop.f32.mrf.mxu0
      %v7946 = vadd.f32 0.0, %v7945
      %v7947 = vpop.f32.mrf.mxu0
      %v7948 = vadd.f32 0.0, %v7947
      %7949 = vmatmul.bf16.gmra.mxu0 %v7861
      %v7950 = vpop.f32.mrf.mxu0
      %v7951 = vadd.f32 0.0, %v7950
      %v7952 = vpop.f32.mrf.mxu0
      %v7953 = vadd.f32 0.0, %v7952
      %7954 = vmatmul.bf16.gmra.mxu0 %v7864
      %v7955 = vpop.f32.mrf.mxu0
      %v7956 = vadd.f32 0.0, %v7955
      %v7957 = vpop.f32.mrf.mxu0
      %v7958 = vadd.f32 0.0, %v7957
      %7959 = vmatmul.bf16.gmra.mxu0 %v7867
      %v7960 = vpop.f32.mrf.mxu0
      %v7961 = vadd.f32 0.0, %v7960
      %v7962 = vpop.f32.mrf.mxu0
      %v7963 = vadd.f32 0.0, %v7962
      %7964 = vmatmul.bf16.gmra.mxu0 %v7870
      %v7965 = vpop.f32.mrf.mxu0
      %v7966 = vadd.f32 0.0, %v7965
      %v7967 = vpop.f32.mrf.mxu0
      %v7968 = vadd.f32 0.0, %v7967
      %7969 = vmatmul.bf16.gmra.mxu0 %v7873
      %v7970 = vpop.f32.mrf.mxu0
      %v7971 = vadd.f32 0.0, %v7970
      %v7972 = vpop.f32.mrf.mxu0
      %v7973 = vadd.f32 0.0, %v7972
      %7974 = vmatmul.bf16.gmra.mxu0 %v7876
      %v7975 = vpop.f32.mrf.mxu0
      %v7976 = vadd.f32 0.0, %v7975
      %v7977 = vpop.f32.mrf.mxu0
      %v7978 = vadd.f32 0.0, %v7977
      %7979 = vdwg.mxu0
      %v7980 = vld [vmem:[#allocation3] sm:$0xff]
      %v7981 = vld [vmem:[#allocation3 + $0x8] sm:$0xff]
      %v7982 = vld [vmem:[#allocation3 + $0x10] sm:$0xff]
      %v7983 = vld [vmem:[#allocation3 + $0x18] sm:$0xff]
      %v7984 = vld [vmem:[#allocation3 + $0x20] sm:$0xff]
      %v7985 = vld [vmem:[#allocation3 + $0x28] sm:$0xff]
      %v7986 = vld [vmem:[#allocation3 + $0x30] sm:$0xff]
      %v7987 = vld [vmem:[#allocation3 + $0x38] sm:$0xff]
      %v7988 = vld [vmem:[#allocation3 + $0x40] sm:$0xff]
      %v7989 = vld [vmem:[#allocation3 + $0x48] sm:$0xff]
      %v7990 = vld [vmem:[#allocation3 + $0x50] sm:$0xff]
      %v7991 = vld [vmem:[#allocation3 + $0x58] sm:$0xff]
      %v7992 = vld [vmem:[#allocation3 + $0x60] sm:$0xff]
      %v7993 = vld [vmem:[#allocation3 + $0x68] sm:$0xff]
      %v7994 = vld [vmem:[#allocation3 + $0x70] sm:$0xff]
      %v7995 = vld [vmem:[#allocation3 + $0x78] sm:$0xff]
      %v7996 = vld [vmem:[#allocation3 + $0x80] sm:$0xff]
      %v7997 = vld [vmem:[#allocation3 + $0x88] sm:$0xff]
      %v7998 = vld [vmem:[#allocation3 + $0x90] sm:$0xff]
      %v7999 = vld [vmem:[#allocation3 + $0x98] sm:$0xff]
      %v8000 = vld [vmem:[#allocation3 + $0xa0] sm:$0xff]
      %v8001 = vld [vmem:[#allocation3 + $0xa8] sm:$0xff]
      %v8002 = vld [vmem:[#allocation3 + $0xb0] sm:$0xff]
      %v8003 = vld [vmem:[#allocation3 + $0xb8] sm:$0xff]
      %v8004 = vld [vmem:[#allocation3 + $0xc0] sm:$0xff]
      %v8005 = vld [vmem:[#allocation3 + $0xc8] sm:$0xff]
      %v8006 = vld [vmem:[#allocation3 + $0xd0] sm:$0xff]
      %v8007 = vld [vmem:[#allocation3 + $0xd8] sm:$0xff]
      %v8008 = vld [vmem:[#allocation3 + $0xe0] sm:$0xff]
      %v8009 = vld [vmem:[#allocation3 + $0xe8] sm:$0xff]
      %v8010 = vld [vmem:[#allocation3 + $0xf0] sm:$0xff]
      %v8011 = vld [vmem:[#allocation3 + $0xf8] sm:$0xff]
      %v8012 = vld [vmem:[#allocation3 + $0x100] sm:$0xff]
      %v8013 = vld [vmem:[#allocation3 + $0x108] sm:$0xff]
      %v8014 = vld [vmem:[#allocation3 + $0x110] sm:$0xff]
      %v8015 = vld [vmem:[#allocation3 + $0x118] sm:$0xff]
      %v8016 = vadd.f32 %v7980, %v7891
      %v8017 = vadd.f32 %v7981, %v7893
      %v8018 = vadd.f32 %v7982, %v7896
      %v8019 = vadd.f32 %v7983, %v7898
      %v8020 = vadd.f32 %v7984, %v7901
      %v8021 = vadd.f32 %v7985, %v7903
      %v8022 = vadd.f32 %v7986, %v7906
      %v8023 = vadd.f32 %v7987, %v7908
      %v8024 = vadd.f32 %v7988, %v7911
      %v8025 = vadd.f32 %v7989, %v7913
      %v8026 = vadd.f32 %v7990, %v7916
      %v8027 = vadd.f32 %v7991, %v7918
      %v8028 = vadd.f32 %v7992, %v7921
      %v8029 = vadd.f32 %v7993, %v7923
      %v8030 = vadd.f32 %v7994, %v7926
      %v8031 = vadd.f32 %v7995, %v7928
      %v8032 = vadd.f32 %v7996, %v7931
      %v8033 = vadd.f32 %v7997, %v7933
      %v8034 = vadd.f32 %v7998, %v7936
      %v8035 = vadd.f32 %v7999, %v7938
      %v8036 = vadd.f32 %v8000, %v7941
      %v8037 = vadd.f32 %v8001, %v7943
      %v8038 = vadd.f32 %v8002, %v7946
      %v8039 = vadd.f32 %v8003, %v7948
      %v8040 = vadd.f32 %v8004, %v7951
      %v8041 = vadd.f32 %v8005, %v7953
      %v8042 = vadd.f32 %v8006, %v7956
      %v8043 = vadd.f32 %v8007, %v7958
      %v8044 = vadd.f32 %v8008, %v7961
      %v8045 = vadd.f32 %v8009, %v7963
      %v8046 = vadd.f32 %v8010, %v7966
      %v8047 = vadd.f32 %v8011, %v7968
      %v8048 = vadd.f32 %v8012, %v7971
      %v8049 = vadd.f32 %v8013, %v7973
      %v8050 = vadd.f32 %v8014, %v7976
      %v8051 = vadd.f32 %v8015, %v7978
      %8052 = vst.msk [vmem:[#allocation3] sm:$0xff] %vm2199, %v8016
      %8053 = vst.msk [vmem:[#allocation3 + $0x8] sm:$0xff] %vm2199, %v8017
      %8054 = vst.msk [vmem:[#allocation3 + $0x10] sm:$0xff] %vm2199, %v8018
      %8055 = vst.msk [vmem:[#allocation3 + $0x18] sm:$0xff] %vm2199, %v8019
      %8056 = vst.msk [vmem:[#allocation3 + $0x20] sm:$0xff] %vm2199, %v8020
      %8057 = vst.msk [vmem:[#allocation3 + $0x28] sm:$0xff] %vm2199, %v8021
      %8058 = vst.msk [vmem:[#allocation3 + $0x30] sm:$0xff] %vm2199, %v8022
      %8059 = vst.msk [vmem:[#allocation3 + $0x38] sm:$0xff] %vm2199, %v8023
      %8060 = vst.msk [vmem:[#allocation3 + $0x40] sm:$0xff] %vm2199, %v8024
      %8061 = vst.msk [vmem:[#allocation3 + $0x48] sm:$0xff] %vm2199, %v8025
      %8062 = vst.msk [vmem:[#allocation3 + $0x50] sm:$0xff] %vm2199, %v8026
      %8063 = vst.msk [vmem:[#allocation3 + $0x58] sm:$0xff] %vm2199, %v8027
      %8064 = vst.msk [vmem:[#allocation3 + $0x60] sm:$0xff] %vm2199, %v8028
      %8065 = vst.msk [vmem:[#allocation3 + $0x68] sm:$0xff] %vm2199, %v8029
      %8066 = vst.msk [vmem:[#allocation3 + $0x70] sm:$0xff] %vm2199, %v8030
      %8067 = vst.msk [vmem:[#allocation3 + $0x78] sm:$0xff] %vm2199, %v8031
      %8068 = vst.msk [vmem:[#allocation3 + $0x80] sm:$0xff] %vm2199, %v8032
      %8069 = vst.msk [vmem:[#allocation3 + $0x88] sm:$0xff] %vm2199, %v8033
      %8070 = vst.msk [vmem:[#allocation3 + $0x90] sm:$0xff] %vm2199, %v8034
      %8071 = vst.msk [vmem:[#allocation3 + $0x98] sm:$0xff] %vm2199, %v8035
      %8072 = vst.msk [vmem:[#allocation3 + $0xa0] sm:$0xff] %vm2199, %v8036
      %8073 = vst.msk [vmem:[#allocation3 + $0xa8] sm:$0xff] %vm2199, %v8037
      %8074 = vst.msk [vmem:[#allocation3 + $0xb0] sm:$0xff] %vm2199, %v8038
      %8075 = vst.msk [vmem:[#allocation3 + $0xb8] sm:$0xff] %vm2199, %v8039
      %8076 = vst.msk [vmem:[#allocation3 + $0xc0] sm:$0xff] %vm2199, %v8040
      %8077 = vst.msk [vmem:[#allocation3 + $0xc8] sm:$0xff] %vm2199, %v8041
      %8078 = vst.msk [vmem:[#allocation3 + $0xd0] sm:$0xff] %vm2199, %v8042
      %8079 = vst.msk [vmem:[#allocation3 + $0xd8] sm:$0xff] %vm2199, %v8043
      %8080 = vst.msk [vmem:[#allocation3 + $0xe0] sm:$0xff] %vm2199, %v8044
      %8081 = vst.msk [vmem:[#allocation3 + $0xe8] sm:$0xff] %vm2199, %v8045
      %8082 = vst.msk [vmem:[#allocation3 + $0xf0] sm:$0xff] %vm2199, %v8046
      %8083 = vst.msk [vmem:[#allocation3 + $0xf8] sm:$0xff] %vm2199, %v8047
      %8084 = vst.msk [vmem:[#allocation3 + $0x100] sm:$0xff] %vm2199, %v8048
      %8085 = vst.msk [vmem:[#allocation3 + $0x108] sm:$0xff] %vm2199, %v8049
      %8086 = vst.msk [vmem:[#allocation3 + $0x110] sm:$0xff] %vm2199, %v8050
      %8087 = vst.msk [vmem:[#allocation3 + $0x118] sm:$0xff] %vm2199, %v8051
      %v8088 = vld [vmem:[#allocation2] sm:$0xe]
      %v8089 = vld [vmem:[#allocation2 + $0x4] sm:$0xf]
      %v8090 = vld [vmem:[#allocation2 + $0x8] sm:$0xf]
      %v8091 = vld [vmem:[#allocation2 + $0xc] sm:$0xf]
      %v8092 = vld [vmem:[#allocation2 + $0x10] sm:$0xf]
      %v8093 = vld [vmem:[#allocation2 + $0x14] sm:$0xf]
      %v8094 = vld [vmem:[#allocation2 + $0x18] sm:$0xf]
      %v8095 = vld [vmem:[#allocation2 + $0x1c] sm:$0xf]
      %v8096 = vld [vmem:[#allocation2 + $0x20] sm:$0xf]
      %v8097 = vld [vmem:[#allocation2 + $0x24] sm:$0xf]
      %v8098 = vld [vmem:[#allocation2 + $0x28] sm:$0xf]
      %v8099 = vld [vmem:[#allocation2 + $0x2c] sm:$0xf]
      %v8100 = vld [vmem:[#allocation2 + $0x30] sm:$0xf]
      %v8101 = vld [vmem:[#allocation2 + $0x34] sm:$0xf]
      %v8102 = vld [vmem:[#allocation2 + $0x38] sm:$0xf]
      %v8103 = vld [vmem:[#allocation2 + $0x3c] sm:$0xf]
      %v8104 = vld [vmem:[#allocation2 + $0x40] sm:$0xf]
      %v8105 = vld [vmem:[#allocation2 + $0x44] sm:$0xf]
      %v8106 = vld [vmem:[#allocation2 + $0x48] sm:$0xf]
      %v8107 = vld [vmem:[#allocation2 + $0x4c] sm:$0xf]
      %v8108 = vld [vmem:[#allocation2 + $0x50] sm:$0xf]
      %v8109 = vld [vmem:[#allocation2 + $0x54] sm:$0xf]
      %v8110 = vld [vmem:[#allocation2 + $0x58] sm:$0xf]
      %v8111 = vld [vmem:[#allocation2 + $0x5c] sm:$0xf]
      %v8112 = vld [vmem:[#allocation2 + $0x60] sm:$0xf]
      %v8113 = vld [vmem:[#allocation2 + $0x64] sm:$0xf]
      %v8114 = vld [vmem:[#allocation2 + $0x68] sm:$0xf]
      %v8115 = vld [vmem:[#allocation2 + $0x6c] sm:$0xf]
      %v8116 = vld [vmem:[#allocation2 + $0x70] sm:$0xf]
      %v8117 = vld [vmem:[#allocation2 + $0x74] sm:$0xf]
      %v8118 = vld [vmem:[#allocation2 + $0x78] sm:$0xf]
      %v8119 = vld [vmem:[#allocation2 + $0x7c] sm:$0xf]
      %v8120 = vld [vmem:[#allocation2 + $0x80] sm:$0xf]
      %v8121 = vld [vmem:[#allocation2 + $0x84] sm:$0xf]
      %v8122 = vld [vmem:[#allocation2 + $0x88] sm:$0xf]
      %v8123 = vld [vmem:[#allocation2 + $0x8c] sm:$0xf]
      %v8124 = vld [vmem:[#allocation2 + $0x90] sm:$0x1]
      %s8125 = scalar_lea.vmem %s4, 4
      %v8126 = vld [vmem:[%s8125] sm:$0x3]
      %v8164 = vunpack.c.l.b16 %v8088
      %v8165 = vunpack.c.l.b16 %v8089
      %v8166 = vunpack.c.l.b16 %v8090
      %v8167 = vunpack.c.l.b16 %v8091
      %v8168 = vunpack.c.l.b16 %v8092
      %v8169 = vunpack.c.l.b16 %v8093
      %v8170 = vunpack.c.l.b16 %v8094
      %v8171 = vunpack.c.l.b16 %v8095
      %v8172 = vunpack.c.l.b16 %v8096
      %v8173 = vunpack.c.l.b16 %v8097
      %v8174 = vunpack.c.l.b16 %v8098
      %v8175 = vunpack.c.l.b16 %v8099
      %v8176 = vunpack.c.l.b16 %v8100
      %v8177 = vunpack.c.l.b16 %v8101
      %v8178 = vunpack.c.l.b16 %v8102
      %v8179 = vunpack.c.l.b16 %v8103
      %v8180 = vunpack.c.l.b16 %v8104
      %v8181 = vunpack.c.l.b16 %v8105
      %v8182 = vunpack.c.l.b16 %v8106
      %v8183 = vunpack.c.l.b16 %v8107
      %v8184 = vunpack.c.l.b16 %v8108
      %v8185 = vunpack.c.l.b16 %v8109
      %v8186 = vunpack.c.l.b16 %v8110
      %v8187 = vunpack.c.l.b16 %v8111
      %v8188 = vunpack.c.l.b16 %v8112
      %v8189 = vunpack.c.l.b16 %v8113
      %v8190 = vunpack.c.l.b16 %v8114
      %v8191 = vunpack.c.l.b16 %v8115
      %v8192 = vunpack.c.l.b16 %v8116
      %v8193 = vunpack.c.l.b16 %v8117
      %v8194 = vunpack.c.l.b16 %v8118
      %v8195 = vunpack.c.l.b16 %v8119
      %v8196 = vunpack.c.l.b16 %v8120
      %v8197 = vunpack.c.l.b16 %v8121
      %v8198 = vunpack.c.l.b16 %v8122
      %v8199 = vunpack.c.l.b16 %v8123
      %v8200 = vunpack.c.l.b16 %v8124
      %v8201 = vpack.c.b16 %v8165, %v8164
      %v8202 = vpack.c.b16 %v8167, %v8166
      %v8203 = vpack.c.b16 %v8169, %v8168
      %v8204 = vpack.c.b16 %v8171, %v8170
      %v8205 = vpack.c.b16 %v8173, %v8172
      %v8206 = vpack.c.b16 %v8175, %v8174
      %v8207 = vpack.c.b16 %v8177, %v8176
      %v8208 = vpack.c.b16 %v8179, %v8178
      %v8209 = vpack.c.b16 %v8181, %v8180
      %v8210 = vpack.c.b16 %v8183, %v8182
      %v8211 = vpack.c.b16 %v8185, %v8184
      %v8212 = vpack.c.b16 %v8187, %v8186
      %v8213 = vpack.c.b16 %v8189, %v8188
      %v8214 = vpack.c.b16 %v8191, %v8190
      %v8215 = vpack.c.b16 %v8193, %v8192
      %v8216 = vpack.c.b16 %v8195, %v8194
      %v8217 = vpack.c.b16 %v8197, %v8196
      %v8218 = vpack.c.b16 %v8199, %v8198
      %v8219 = vpack.c.b16 %v8200, %v8200
      %v8220 = vrot.slane %v8201, 1
      %v8221 = vrot.slane %v8202, 1
      %v8222 = vsel %vm3070, %v8220, %v8221
      %v8223 = vrot.slane %v8203, 1
      %v8224 = vsel %vm3070, %v8221, %v8223
      %v8225 = vrot.slane %v8204, 1
      %v8226 = vsel %vm3070, %v8223, %v8225
      %v8227 = vrot.slane %v8205, 1
      %v8228 = vsel %vm3070, %v8225, %v8227
      %v8229 = vrot.slane %v8206, 1
      %v8230 = vsel %vm3070, %v8227, %v8229
      %v8231 = vrot.slane %v8207, 1
      %v8232 = vsel %vm3070, %v8229, %v8231
      %v8233 = vrot.slane %v8208, 1
      %v8234 = vsel %vm3070, %v8231, %v8233
      %v8235 = vrot.slane %v8209, 1
      %v8236 = vsel %vm3070, %v8233, %v8235
      %v8237 = vrot.slane %v8210, 1
      %v8238 = vsel %vm3070, %v8235, %v8237
      %v8239 = vrot.slane %v8211, 1
      %v8240 = vsel %vm3070, %v8237, %v8239
      %v8241 = vrot.slane %v8212, 1
      %v8242 = vsel %vm3070, %v8239, %v8241
      %v8243 = vrot.slane %v8213, 1
      %v8244 = vsel %vm3070, %v8241, %v8243
      %v8245 = vrot.slane %v8214, 1
      %v8246 = vsel %vm3070, %v8243, %v8245
      %v8247 = vrot.slane %v8215, 1
      %v8248 = vsel %vm3070, %v8245, %v8247
      %v8249 = vrot.slane %v8216, 1
      %v8250 = vsel %vm3070, %v8247, %v8249
      %v8251 = vrot.slane %v8217, 1
      %v8252 = vsel %vm3070, %v8249, %v8251
      %v8253 = vrot.slane %v8218, 1
      %v8254 = vsel %vm3070, %v8251, %v8253
      %v8255 = vrot.slane %v8219, 1
      %v8256 = vsel %vm3070, %v8253, %v8255
      %v8258 = vsel %vm2199, %v8222, 0
      %v8261 = vsel %vm2199, %v8224, 0
      %v8264 = vsel %vm2199, %v8226, 0
      %v8267 = vsel %vm2199, %v8228, 0
      %v8270 = vsel %vm2199, %v8230, 0
      %v8273 = vsel %vm2199, %v8232, 0
      %v8276 = vsel %vm2199, %v8234, 0
      %v8279 = vsel %vm2199, %v8236, 0
      %v8282 = vsel %vm2199, %v8238, 0
      %v8285 = vsel %vm2199, %v8240, 0
      %v8288 = vsel %vm2199, %v8242, 0
      %v8291 = vsel %vm2199, %v8244, 0
      %v8294 = vsel %vm2199, %v8246, 0
      %v8297 = vsel %vm2199, %v8248, 0
      %v8300 = vsel %vm2199, %v8250, 0
      %v8303 = vsel %vm2199, %v8252, 0
      %v8306 = vsel %vm2199, %v8254, 0
      %v8309 = vsel %vm2199, %v8256, 0
      %v8312 = vsel %vm2254, %v8126, 0
      %8314 = vmatpush.bf16.msra.mxu0 0
      %8315 = vmatpush.bf16.msra.mxu0 0
      %8316 = vmatpush.bf16.msra.mxu0 0
      %8317 = vmatpush.bf16.msra.mxu0 0
      %8318 = vmatpush.bf16.msra.mxu0 0
      %8319 = vmatpush.bf16.msra.mxu0 0
      %8320 = vmatpush.bf16.msra.mxu0 0
      %8321 = vmatpush.bf16.msra.mxu0 %v8312
      %8322 = vmatmul.bf16.gmra.mxu0 %v8258
      %v8323 = vpop.f32.mrf.mxu0
      %v8324 = vadd.f32 0.0, %v8323
      %v8325 = vpop.f32.mrf.mxu0
      %v8326 = vadd.f32 0.0, %v8325
      %8327 = vmatmul.bf16.gmra.mxu0 %v8261
      %v8328 = vpop.f32.mrf.mxu0
      %v8329 = vadd.f32 0.0, %v8328
      %v8330 = vpop.f32.mrf.mxu0
      %v8331 = vadd.f32 0.0, %v8330
      %8332 = vmatmul.bf16.gmra.mxu0 %v8264
      %v8333 = vpop.f32.mrf.mxu0
      %v8334 = vadd.f32 0.0, %v8333
      %v8335 = vpop.f32.mrf.mxu0
      %v8336 = vadd.f32 0.0, %v8335
      %8337 = vmatmul.bf16.gmra.mxu0 %v8267
      %v8338 = vpop.f32.mrf.mxu0
      %v8339 = vadd.f32 0.0, %v8338
      %v8340 = vpop.f32.mrf.mxu0
      %v8341 = vadd.f32 0.0, %v8340
      %8342 = vmatmul.bf16.gmra.mxu0 %v8270
      %v8343 = vpop.f32.mrf.mxu0
      %v8344 = vadd.f32 0.0, %v8343
      %v8345 = vpop.f32.mrf.mxu0
      %v8346 = vadd.f32 0.0, %v8345
      %8347 = vmatmul.bf16.gmra.mxu0 %v8273
      %v8348 = vpop.f32.mrf.mxu0
      %v8349 = vadd.f32 0.0, %v8348
      %v8350 = vpop.f32.mrf.mxu0
      %v8351 = vadd.f32 0.0, %v8350
      %8352 = vmatmul.bf16.gmra.mxu0 %v8276
      %v8353 = vpop.f32.mrf.mxu0
      %v8354 = vadd.f32 0.0, %v8353
      %v8355 = vpop.f32.mrf.mxu0
      %v8356 = vadd.f32 0.0, %v8355
      %8357 = vmatmul.bf16.gmra.mxu0 %v8279
      %v8358 = vpop.f32.mrf.mxu0
      %v8359 = vadd.f32 0.0, %v8358
      %v8360 = vpop.f32.mrf.mxu0
      %v8361 = vadd.f32 0.0, %v8360
      %8362 = vmatmul.bf16.gmra.mxu0 %v8282
      %v8363 = vpop.f32.mrf.mxu0
      %v8364 = vadd.f32 0.0, %v8363
      %v8365 = vpop.f32.mrf.mxu0
      %v8366 = vadd.f32 0.0, %v8365
      %8367 = vmatmul.bf16.gmra.mxu0 %v8285
      %v8368 = vpop.f32.mrf.mxu0
      %v8369 = vadd.f32 0.0, %v8368
      %v8370 = vpop.f32.mrf.mxu0
      %v8371 = vadd.f32 0.0, %v8370
      %8372 = vmatmul.bf16.gmra.mxu0 %v8288
      %v8373 = vpop.f32.mrf.mxu0
      %v8374 = vadd.f32 0.0, %v8373
      %v8375 = vpop.f32.mrf.mxu0
      %v8376 = vadd.f32 0.0, %v8375
      %8377 = vmatmul.bf16.gmra.mxu0 %v8291
      %v8378 = vpop.f32.mrf.mxu0
      %v8379 = vadd.f32 0.0, %v8378
      %v8380 = vpop.f32.mrf.mxu0
      %v8381 = vadd.f32 0.0, %v8380
      %8382 = vmatmul.bf16.gmra.mxu0 %v8294
      %v8383 = vpop.f32.mrf.mxu0
      %v8384 = vadd.f32 0.0, %v8383
      %v8385 = vpop.f32.mrf.mxu0
      %v8386 = vadd.f32 0.0, %v8385
      %8387 = vmatmul.bf16.gmra.mxu0 %v8297
      %v8388 = vpop.f32.mrf.mxu0
      %v8389 = vadd.f32 0.0, %v8388
      %v8390 = vpop.f32.mrf.mxu0
      %v8391 = vadd.f32 0.0, %v8390
      %8392 = vmatmul.bf16.gmra.mxu0 %v8300
      %v8393 = vpop.f32.mrf.mxu0
      %v8394 = vadd.f32 0.0, %v8393
      %v8395 = vpop.f32.mrf.mxu0
      %v8396 = vadd.f32 0.0, %v8395
      %8397 = vmatmul.bf16.gmra.mxu0 %v8303
      %v8398 = vpop.f32.mrf.mxu0
      %v8399 = vadd.f32 0.0, %v8398
      %v8400 = vpop.f32.mrf.mxu0
      %v8401 = vadd.f32 0.0, %v8400
      %8402 = vmatmul.bf16.gmra.mxu0 %v8306
      %v8403 = vpop.f32.mrf.mxu0
      %v8404 = vadd.f32 0.0, %v8403
      %v8405 = vpop.f32.mrf.mxu0
      %v8406 = vadd.f32 0.0, %v8405
      %8407 = vmatmul.bf16.gmra.mxu0 %v8309
      %v8408 = vpop.f32.mrf.mxu0
      %v8409 = vadd.f32 0.0, %v8408
      %v8410 = vpop.f32.mrf.mxu0
      %v8411 = vadd.f32 0.0, %v8410
      %8412 = vdwg.mxu0
      %v8413 = vld [vmem:[#allocation3] sm:$0xff]
      %v8414 = vld [vmem:[#allocation3 + $0x8] sm:$0xff]
      %v8415 = vld [vmem:[#allocation3 + $0x10] sm:$0xff]
      %v8416 = vld [vmem:[#allocation3 + $0x18] sm:$0xff]
      %v8417 = vld [vmem:[#allocation3 + $0x20] sm:$0xff]
      %v8418 = vld [vmem:[#allocation3 + $0x28] sm:$0xff]
      %v8419 = vld [vmem:[#allocation3 + $0x30] sm:$0xff]
      %v8420 = vld [vmem:[#allocation3 + $0x38] sm:$0xff]
      %v8421 = vld [vmem:[#allocation3 + $0x40] sm:$0xff]
      %v8422 = vld [vmem:[#allocation3 + $0x48] sm:$0xff]
      %v8423 = vld [vmem:[#allocation3 + $0x50] sm:$0xff]
      %v8424 = vld [vmem:[#allocation3 + $0x58] sm:$0xff]
      %v8425 = vld [vmem:[#allocation3 + $0x60] sm:$0xff]
      %v8426 = vld [vmem:[#allocation3 + $0x68] sm:$0xff]
      %v8427 = vld [vmem:[#allocation3 + $0x70] sm:$0xff]
      %v8428 = vld [vmem:[#allocation3 + $0x78] sm:$0xff]
      %v8429 = vld [vmem:[#allocation3 + $0x80] sm:$0xff]
      %v8430 = vld [vmem:[#allocation3 + $0x88] sm:$0xff]
      %v8431 = vld [vmem:[#allocation3 + $0x90] sm:$0xff]
      %v8432 = vld [vmem:[#allocation3 + $0x98] sm:$0xff]
      %v8433 = vld [vmem:[#allocation3 + $0xa0] sm:$0xff]
      %v8434 = vld [vmem:[#allocation3 + $0xa8] sm:$0xff]
      %v8435 = vld [vmem:[#allocation3 + $0xb0] sm:$0xff]
      %v8436 = vld [vmem:[#allocation3 + $0xb8] sm:$0xff]
      %v8437 = vld [vmem:[#allocation3 + $0xc0] sm:$0xff]
      %v8438 = vld [vmem:[#allocation3 + $0xc8] sm:$0xff]
      %v8439 = vld [vmem:[#allocation3 + $0xd0] sm:$0xff]
      %v8440 = vld [vmem:[#allocation3 + $0xd8] sm:$0xff]
      %v8441 = vld [vmem:[#allocation3 + $0xe0] sm:$0xff]
      %v8442 = vld [vmem:[#allocation3 + $0xe8] sm:$0xff]
      %v8443 = vld [vmem:[#allocation3 + $0xf0] sm:$0xff]
      %v8444 = vld [vmem:[#allocation3 + $0xf8] sm:$0xff]
      %v8445 = vld [vmem:[#allocation3 + $0x100] sm:$0xff]
      %v8446 = vld [vmem:[#allocation3 + $0x108] sm:$0xff]
      %v8447 = vld [vmem:[#allocation3 + $0x110] sm:$0xff]
      %v8448 = vld [vmem:[#allocation3 + $0x118] sm:$0xff]
      %v8449 = vadd.f32 %v8413, %v8324
      %v8450 = vadd.f32 %v8414, %v8326
      %v8451 = vadd.f32 %v8415, %v8329
      %v8452 = vadd.f32 %v8416, %v8331
      %v8453 = vadd.f32 %v8417, %v8334
      %v8454 = vadd.f32 %v8418, %v8336
      %v8455 = vadd.f32 %v8419, %v8339
      %v8456 = vadd.f32 %v8420, %v8341
      %v8457 = vadd.f32 %v8421, %v8344
      %v8458 = vadd.f32 %v8422, %v8346
      %v8459 = vadd.f32 %v8423, %v8349
      %v8460 = vadd.f32 %v8424, %v8351
      %v8461 = vadd.f32 %v8425, %v8354
      %v8462 = vadd.f32 %v8426, %v8356
      %v8463 = vadd.f32 %v8427, %v8359
      %v8464 = vadd.f32 %v8428, %v8361
      %v8465 = vadd.f32 %v8429, %v8364
      %v8466 = vadd.f32 %v8430, %v8366
      %v8467 = vadd.f32 %v8431, %v8369
      %v8468 = vadd.f32 %v8432, %v8371
      %v8469 = vadd.f32 %v8433, %v8374
      %v8470 = vadd.f32 %v8434, %v8376
      %v8471 = vadd.f32 %v8435, %v8379
      %v8472 = vadd.f32 %v8436, %v8381
      %v8473 = vadd.f32 %v8437, %v8384
      %v8474 = vadd.f32 %v8438, %v8386
      %v8475 = vadd.f32 %v8439, %v8389
      %v8476 = vadd.f32 %v8440, %v8391
      %v8477 = vadd.f32 %v8441, %v8394
      %v8478 = vadd.f32 %v8442, %v8396
      %v8479 = vadd.f32 %v8443, %v8399
      %v8480 = vadd.f32 %v8444, %v8401
      %v8481 = vadd.f32 %v8445, %v8404
      %v8482 = vadd.f32 %v8446, %v8406
      %v8483 = vadd.f32 %v8447, %v8409
      %v8484 = vadd.f32 %v8448, %v8411
      %8485 = vst.msk [vmem:[#allocation3] sm:$0xff] %vm2199, %v8449
      %8486 = vst.msk [vmem:[#allocation3 + $0x8] sm:$0xff] %vm2199, %v8450
      %8487 = vst.msk [vmem:[#allocation3 + $0x10] sm:$0xff] %vm2199, %v8451
      %8488 = vst.msk [vmem:[#allocation3 + $0x18] sm:$0xff] %vm2199, %v8452
      %8489 = vst.msk [vmem:[#allocation3 + $0x20] sm:$0xff] %vm2199, %v8453
      %8490 = vst.msk [vmem:[#allocation3 + $0x28] sm:$0xff] %vm2199, %v8454
      %8491 = vst.msk [vmem:[#allocation3 + $0x30] sm:$0xff] %vm2199, %v8455
      %8492 = vst.msk [vmem:[#allocation3 + $0x38] sm:$0xff] %vm2199, %v8456
      %8493 = vst.msk [vmem:[#allocation3 + $0x40] sm:$0xff] %vm2199, %v8457
      %8494 = vst.msk [vmem:[#allocation3 + $0x48] sm:$0xff] %vm2199, %v8458
      %8495 = vst.msk [vmem:[#allocation3 + $0x50] sm:$0xff] %vm2199, %v8459
      %8496 = vst.msk [vmem:[#allocation3 + $0x58] sm:$0xff] %vm2199, %v8460
      %8497 = vst.msk [vmem:[#allocation3 + $0x60] sm:$0xff] %vm2199, %v8461
      %8498 = vst.msk [vmem:[#allocation3 + $0x68] sm:$0xff] %vm2199, %v8462
      %8499 = vst.msk [vmem:[#allocation3 + $0x70] sm:$0xff] %vm2199, %v8463
      %8500 = vst.msk [vmem:[#allocation3 + $0x78] sm:$0xff] %vm2199, %v8464
      %8501 = vst.msk [vmem:[#allocation3 + $0x80] sm:$0xff] %vm2199, %v8465
      %8502 = vst.msk [vmem:[#allocation3 + $0x88] sm:$0xff] %vm2199, %v8466
      %8503 = vst.msk [vmem:[#allocation3 + $0x90] sm:$0xff] %vm2199, %v8467
      %8504 = vst.msk [vmem:[#allocation3 + $0x98] sm:$0xff] %vm2199, %v8468
      %8505 = vst.msk [vmem:[#allocation3 + $0xa0] sm:$0xff] %vm2199, %v8469
      %8506 = vst.msk [vmem:[#allocation3 + $0xa8] sm:$0xff] %vm2199, %v8470
      %8507 = vst.msk [vmem:[#allocation3 + $0xb0] sm:$0xff] %vm2199, %v8471
      %8508 = vst.msk [vmem:[#allocation3 + $0xb8] sm:$0xff] %vm2199, %v8472
      %8509 = vst.msk [vmem:[#allocation3 + $0xc0] sm:$0xff] %vm2199, %v8473
      %8510 = vst.msk [vmem:[#allocation3 + $0xc8] sm:$0xff] %vm2199, %v8474
      %8511 = vst.msk [vmem:[#allocation3 + $0xd0] sm:$0xff] %vm2199, %v8475
      %8512 = vst.msk [vmem:[#allocation3 + $0xd8] sm:$0xff] %vm2199, %v8476
      %8513 = vst.msk [vmem:[#allocation3 + $0xe0] sm:$0xff] %vm2199, %v8477
      %8514 = vst.msk [vmem:[#allocation3 + $0xe8] sm:$0xff] %vm2199, %v8478
      %8515 = vst.msk [vmem:[#allocation3 + $0xf0] sm:$0xff] %vm2199, %v8479
      %8516 = vst.msk [vmem:[#allocation3 + $0xf8] sm:$0xff] %vm2199, %v8480
      %8517 = vst.msk [vmem:[#allocation3 + $0x100] sm:$0xff] %vm2199, %v8481
      %8518 = vst.msk [vmem:[#allocation3 + $0x108] sm:$0xff] %vm2199, %v8482
      %8519 = vst.msk [vmem:[#allocation3 + $0x110] sm:$0xff] %vm2199, %v8483
      %8520 = vst.msk [vmem:[#allocation3 + $0x118] sm:$0xff] %vm2199, %v8484
      %v8521 = vld [vmem:[#allocation2 + $0x8] sm:$0xe]
      %v8522 = vld [vmem:[#allocation2 + $0xc] sm:$0xf]
      %v8523 = vld [vmem:[#allocation2 + $0x10] sm:$0xf]
      %v8524 = vld [vmem:[#allocation2 + $0x14] sm:$0xf]
      %v8525 = vld [vmem:[#allocation2 + $0x18] sm:$0xf]
      %v8526 = vld [vmem:[#allocation2 + $0x1c] sm:$0xf]
      %v8527 = vld [vmem:[#allocation2 + $0x20] sm:$0xf]
      %v8528 = vld [vmem:[#allocation2 + $0x24] sm:$0xf]
      %v8529 = vld [vmem:[#allocation2 + $0x28] sm:$0xf]
      %v8530 = vld [vmem:[#allocation2 + $0x2c] sm:$0xf]
      %v8531 = vld [vmem:[#allocation2 + $0x30] sm:$0xf]
      %v8532 = vld [vmem:[#allocation2 + $0x34] sm:$0xf]
      %v8533 = vld [vmem:[#allocation2 + $0x38] sm:$0xf]
      %v8534 = vld [vmem:[#allocation2 + $0x3c] sm:$0xf]
      %v8535 = vld [vmem:[#allocation2 + $0x40] sm:$0xf]
      %v8536 = vld [vmem:[#allocation2 + $0x44] sm:$0xf]
      %v8537 = vld [vmem:[#allocation2 + $0x48] sm:$0xf]
      %v8538 = vld [vmem:[#allocation2 + $0x4c] sm:$0xf]
      %v8539 = vld [vmem:[#allocation2 + $0x50] sm:$0xf]
      %v8540 = vld [vmem:[#allocation2 + $0x54] sm:$0xf]
      %v8541 = vld [vmem:[#allocation2 + $0x58] sm:$0xf]
      %v8542 = vld [vmem:[#allocation2 + $0x5c] sm:$0xf]
      %v8543 = vld [vmem:[#allocation2 + $0x60] sm:$0xf]
      %v8544 = vld [vmem:[#allocation2 + $0x64] sm:$0xf]
      %v8545 = vld [vmem:[#allocation2 + $0x68] sm:$0xf]
      %v8546 = vld [vmem:[#allocation2 + $0x6c] sm:$0xf]
      %v8547 = vld [vmem:[#allocation2 + $0x70] sm:$0xf]
      %v8548 = vld [vmem:[#allocation2 + $0x74] sm:$0xf]
      %v8549 = vld [vmem:[#allocation2 + $0x78] sm:$0xf]
      %v8550 = vld [vmem:[#allocation2 + $0x7c] sm:$0xf]
      %v8551 = vld [vmem:[#allocation2 + $0x80] sm:$0xf]
      %v8552 = vld [vmem:[#allocation2 + $0x84] sm:$0xf]
      %v8553 = vld [vmem:[#allocation2 + $0x88] sm:$0xf]
      %v8554 = vld [vmem:[#allocation2 + $0x8c] sm:$0xf]
      %v8555 = vld [vmem:[#allocation2 + $0x90] sm:$0xf]
      %v8556 = vld [vmem:[#allocation2 + $0x94] sm:$0xf]
      %v8557 = vld [vmem:[#allocation2 + $0x98] sm:$0x1]
      %s8558 = scalar_lea.vmem %s4, 6
      %v8559 = vld [vmem:[%s8558] sm:$0x3]
      %v8597 = vunpack.c.l.b16 %v8521
      %v8598 = vunpack.c.l.b16 %v8522
      %v8599 = vunpack.c.l.b16 %v8523
      %v8600 = vunpack.c.l.b16 %v8524
      %v8601 = vunpack.c.l.b16 %v8525
      %v8602 = vunpack.c.l.b16 %v8526
      %v8603 = vunpack.c.l.b16 %v8527
      %v8604 = vunpack.c.l.b16 %v8528
      %v8605 = vunpack.c.l.b16 %v8529
      %v8606 = vunpack.c.l.b16 %v8530
      %v8607 = vunpack.c.l.b16 %v8531
      %v8608 = vunpack.c.l.b16 %v8532
      %v8609 = vunpack.c.l.b16 %v8533
      %v8610 = vunpack.c.l.b16 %v8534
      %v8611 = vunpack.c.l.b16 %v8535
      %v8612 = vunpack.c.l.b16 %v8536
      %v8613 = vunpack.c.l.b16 %v8537
      %v8614 = vunpack.c.l.b16 %v8538
      %v8615 = vunpack.c.l.b16 %v8539
      %v8616 = vunpack.c.l.b16 %v8540
      %v8617 = vunpack.c.l.b16 %v8541
      %v8618 = vunpack.c.l.b16 %v8542
      %v8619 = vunpack.c.l.b16 %v8543
      %v8620 = vunpack.c.l.b16 %v8544
      %v8621 = vunpack.c.l.b16 %v8545
      %v8622 = vunpack.c.l.b16 %v8546
      %v8623 = vunpack.c.l.b16 %v8547
      %v8624 = vunpack.c.l.b16 %v8548
      %v8625 = vunpack.c.l.b16 %v8549
      %v8626 = vunpack.c.l.b16 %v8550
      %v8627 = vunpack.c.l.b16 %v8551
      %v8628 = vunpack.c.l.b16 %v8552
      %v8629 = vunpack.c.l.b16 %v8553
      %v8630 = vunpack.c.l.b16 %v8554
      %v8631 = vunpack.c.l.b16 %v8555
      %v8632 = vunpack.c.l.b16 %v8556
      %v8633 = vunpack.c.l.b16 %v8557
      %v8634 = vpack.c.b16 %v8598, %v8597
      %v8635 = vpack.c.b16 %v8600, %v8599
      %v8636 = vpack.c.b16 %v8602, %v8601
      %v8637 = vpack.c.b16 %v8604, %v8603
      %v8638 = vpack.c.b16 %v8606, %v8605
      %v8639 = vpack.c.b16 %v8608, %v8607
      %v8640 = vpack.c.b16 %v8610, %v8609
      %v8641 = vpack.c.b16 %v8612, %v8611
      %v8642 = vpack.c.b16 %v8614, %v8613
      %v8643 = vpack.c.b16 %v8616, %v8615
      %v8644 = vpack.c.b16 %v8618, %v8617
      %v8645 = vpack.c.b16 %v8620, %v8619
      %v8646 = vpack.c.b16 %v8622, %v8621
      %v8647 = vpack.c.b16 %v8624, %v8623
      %v8648 = vpack.c.b16 %v8626, %v8625
      %v8649 = vpack.c.b16 %v8628, %v8627
      %v8650 = vpack.c.b16 %v8630, %v8629
      %v8651 = vpack.c.b16 %v8632, %v8631
      %v8652 = vpack.c.b16 %v8633, %v8633
      %v8653 = vrot.slane %v8634, 1
      %v8654 = vrot.slane %v8635, 1
      %v8655 = vsel %vm3070, %v8653, %v8654
      %v8656 = vrot.slane %v8636, 1
      %v8657 = vsel %vm3070, %v8654, %v8656
      %v8658 = vrot.slane %v8637, 1
      %v8659 = vsel %vm3070, %v8656, %v8658
      %v8660 = vrot.slane %v8638, 1
      %v8661 = vsel %vm3070, %v8658, %v8660
      %v8662 = vrot.slane %v8639, 1
      %v8663 = vsel %vm3070, %v8660, %v8662
      %v8664 = vrot.slane %v8640, 1
      %v8665 = vsel %vm3070, %v8662, %v8664
      %v8666 = vrot.slane %v8641, 1
      %v8667 = vsel %vm3070, %v8664, %v8666
      %v8668 = vrot.slane %v8642, 1
      %v8669 = vsel %vm3070, %v8666, %v8668
      %v8670 = vrot.slane %v8643, 1
      %v8671 = vsel %vm3070, %v8668, %v8670
      %v8672 = vrot.slane %v8644, 1
      %v8673 = vsel %vm3070, %v8670, %v8672
      %v8674 = vrot.slane %v8645, 1
      %v8675 = vsel %vm3070, %v8672, %v8674
      %v8676 = vrot.slane %v8646, 1
      %v8677 = vsel %vm3070, %v8674, %v8676
      %v8678 = vrot.slane %v8647, 1
      %v8679 = vsel %vm3070, %v8676, %v8678
      %v8680 = vrot.slane %v8648, 1
      %v8681 = vsel %vm3070, %v8678, %v8680
      %v8682 = vrot.slane %v8649, 1
      %v8683 = vsel %vm3070, %v8680, %v8682
      %v8684 = vrot.slane %v8650, 1
      %v8685 = vsel %vm3070, %v8682, %v8684
      %v8686 = vrot.slane %v8651, 1
      %v8687 = vsel %vm3070, %v8684, %v8686
      %v8688 = vrot.slane %v8652, 1
      %v8689 = vsel %vm3070, %v8686, %v8688
      %v8691 = vsel %vm2199, %v8655, 0
      %v8694 = vsel %vm2199, %v8657, 0
      %v8697 = vsel %vm2199, %v8659, 0
      %v8700 = vsel %vm2199, %v8661, 0
      %v8703 = vsel %vm2199, %v8663, 0
      %v8706 = vsel %vm2199, %v8665, 0
      %v8709 = vsel %vm2199, %v8667, 0
      %v8712 = vsel %vm2199, %v8669, 0
      %v8715 = vsel %vm2199, %v8671, 0
      %v8718 = vsel %vm2199, %v8673, 0
      %v8721 = vsel %vm2199, %v8675, 0
      %v8724 = vsel %vm2199, %v8677, 0
      %v8727 = vsel %vm2199, %v8679, 0
      %v8730 = vsel %vm2199, %v8681, 0
      %v8733 = vsel %vm2199, %v8683, 0
      %v8736 = vsel %vm2199, %v8685, 0
      %v8739 = vsel %vm2199, %v8687, 0
      %v8742 = vsel %vm2199, %v8689, 0
      %v8745 = vsel %vm2254, %v8559, 0
      %8747 = vmatpush.bf16.msra.mxu0 0
      %8748 = vmatpush.bf16.msra.mxu0 0
      %8749 = vmatpush.bf16.msra.mxu0 0
      %8750 = vmatpush.bf16.msra.mxu0 0
      %8751 = vmatpush.bf16.msra.mxu0 0
      %8752 = vmatpush.bf16.msra.mxu0 0
      %8753 = vmatpush.bf16.msra.mxu0 0
      %8754 = vmatpush.bf16.msra.mxu0 %v8745
      %8755 = vmatmul.bf16.gmra.mxu0 %v8691
      %v8756 = vpop.f32.mrf.mxu0
      %v8757 = vadd.f32 0.0, %v8756
      %v8758 = vpop.f32.mrf.mxu0
      %v8759 = vadd.f32 0.0, %v8758
      %8760 = vmatmul.bf16.gmra.mxu0 %v8694
      %v8761 = vpop.f32.mrf.mxu0
      %v8762 = vadd.f32 0.0, %v8761
      %v8763 = vpop.f32.mrf.mxu0
      %v8764 = vadd.f32 0.0, %v8763
      %8765 = vmatmul.bf16.gmra.mxu0 %v8697
      %v8766 = vpop.f32.mrf.mxu0
      %v8767 = vadd.f32 0.0, %v8766
      %v8768 = vpop.f32.mrf.mxu0
      %v8769 = vadd.f32 0.0, %v8768
      %8770 = vmatmul.bf16.gmra.mxu0 %v8700
      %v8771 = vpop.f32.mrf.mxu0
      %v8772 = vadd.f32 0.0, %v8771
      %v8773 = vpop.f32.mrf.mxu0
      %v8774 = vadd.f32 0.0, %v8773
      %8775 = vmatmul.bf16.gmra.mxu0 %v8703
      %v8776 = vpop.f32.mrf.mxu0
      %v8777 = vadd.f32 0.0, %v8776
      %v8778 = vpop.f32.mrf.mxu0
      %v8779 = vadd.f32 0.0, %v8778
      %8780 = vmatmul.bf16.gmra.mxu0 %v8706
      %v8781 = vpop.f32.mrf.mxu0
      %v8782 = vadd.f32 0.0, %v8781
      %v8783 = vpop.f32.mrf.mxu0
      %v8784 = vadd.f32 0.0, %v8783
      %8785 = vmatmul.bf16.gmra.mxu0 %v8709
      %v8786 = vpop.f32.mrf.mxu0
      %v8787 = vadd.f32 0.0, %v8786
      %v8788 = vpop.f32.mrf.mxu0
      %v8789 = vadd.f32 0.0, %v8788
      %8790 = vmatmul.bf16.gmra.mxu0 %v8712
      %v8791 = vpop.f32.mrf.mxu0
      %v8792 = vadd.f32 0.0, %v8791
      %v8793 = vpop.f32.mrf.mxu0
      %v8794 = vadd.f32 0.0, %v8793
      %8795 = vmatmul.bf16.gmra.mxu0 %v8715
      %v8796 = vpop.f32.mrf.mxu0
      %v8797 = vadd.f32 0.0, %v8796
      %v8798 = vpop.f32.mrf.mxu0
      %v8799 = vadd.f32 0.0, %v8798
      %8800 = vmatmul.bf16.gmra.mxu0 %v8718
      %v8801 = vpop.f32.mrf.mxu0
      %v8802 = vadd.f32 0.0, %v8801
      %v8803 = vpop.f32.mrf.mxu0
      %v8804 = vadd.f32 0.0, %v8803
      %8805 = vmatmul.bf16.gmra.mxu0 %v8721
      %v8806 = vpop.f32.mrf.mxu0
      %v8807 = vadd.f32 0.0, %v8806
      %v8808 = vpop.f32.mrf.mxu0
      %v8809 = vadd.f32 0.0, %v8808
      %8810 = vmatmul.bf16.gmra.mxu0 %v8724
      %v8811 = vpop.f32.mrf.mxu0
      %v8812 = vadd.f32 0.0, %v8811
      %v8813 = vpop.f32.mrf.mxu0
      %v8814 = vadd.f32 0.0, %v8813
      %8815 = vmatmul.bf16.gmra.mxu0 %v8727
      %v8816 = vpop.f32.mrf.mxu0
      %v8817 = vadd.f32 0.0, %v8816
      %v8818 = vpop.f32.mrf.mxu0
      %v8819 = vadd.f32 0.0, %v8818
      %8820 = vmatmul.bf16.gmra.mxu0 %v8730
      %v8821 = vpop.f32.mrf.mxu0
      %v8822 = vadd.f32 0.0, %v8821
      %v8823 = vpop.f32.mrf.mxu0
      %v8824 = vadd.f32 0.0, %v8823
      %8825 = vmatmul.bf16.gmra.mxu0 %v8733
      %v8826 = vpop.f32.mrf.mxu0
      %v8827 = vadd.f32 0.0, %v8826
      %v8828 = vpop.f32.mrf.mxu0
      %v8829 = vadd.f32 0.0, %v8828
      %8830 = vmatmul.bf16.gmra.mxu0 %v8736
      %v8831 = vpop.f32.mrf.mxu0
      %v8832 = vadd.f32 0.0, %v8831
      %v8833 = vpop.f32.mrf.mxu0
      %v8834 = vadd.f32 0.0, %v8833
      %8835 = vmatmul.bf16.gmra.mxu0 %v8739
      %v8836 = vpop.f32.mrf.mxu0
      %v8837 = vadd.f32 0.0, %v8836
      %v8838 = vpop.f32.mrf.mxu0
      %v8839 = vadd.f32 0.0, %v8838
      %8840 = vmatmul.bf16.gmra.mxu0 %v8742
      %v8841 = vpop.f32.mrf.mxu0
      %v8842 = vadd.f32 0.0, %v8841
      %v8843 = vpop.f32.mrf.mxu0
      %v8844 = vadd.f32 0.0, %v8843
      %8845 = vdwg.mxu0
      %v8846 = vld [vmem:[#allocation3] sm:$0xff]
      %v8847 = vld [vmem:[#allocation3 + $0x8] sm:$0xff]
      %v8848 = vld [vmem:[#allocation3 + $0x10] sm:$0xff]
      %v8849 = vld [vmem:[#allocation3 + $0x18] sm:$0xff]
      %v8850 = vld [vmem:[#allocation3 + $0x20] sm:$0xff]
      %v8851 = vld [vmem:[#allocation3 + $0x28] sm:$0xff]
      %v8852 = vld [vmem:[#allocation3 + $0x30] sm:$0xff]
      %v8853 = vld [vmem:[#allocation3 + $0x38] sm:$0xff]
      %v8854 = vld [vmem:[#allocation3 + $0x40] sm:$0xff]
      %v8855 = vld [vmem:[#allocation3 + $0x48] sm:$0xff]
      %v8856 = vld [vmem:[#allocation3 + $0x50] sm:$0xff]
      %v8857 = vld [vmem:[#allocation3 + $0x58] sm:$0xff]
      %v8858 = vld [vmem:[#allocation3 + $0x60] sm:$0xff]
      %v8859 = vld [vmem:[#allocation3 + $0x68] sm:$0xff]
      %v8860 = vld [vmem:[#allocation3 + $0x70] sm:$0xff]
      %v8861 = vld [vmem:[#allocation3 + $0x78] sm:$0xff]
      %v8862 = vld [vmem:[#allocation3 + $0x80] sm:$0xff]
      %v8863 = vld [vmem:[#allocation3 + $0x88] sm:$0xff]
      %v8864 = vld [vmem:[#allocation3 + $0x90] sm:$0xff]
      %v8865 = vld [vmem:[#allocation3 + $0x98] sm:$0xff]
      %v8866 = vld [vmem:[#allocation3 + $0xa0] sm:$0xff]
      %v8867 = vld [vmem:[#allocation3 + $0xa8] sm:$0xff]
      %v8868 = vld [vmem:[#allocation3 + $0xb0] sm:$0xff]
      %v8869 = vld [vmem:[#allocation3 + $0xb8] sm:$0xff]
      %v8870 = vld [vmem:[#allocation3 + $0xc0] sm:$0xff]
      %v8871 = vld [vmem:[#allocation3 + $0xc8] sm:$0xff]
      %v8872 = vld [vmem:[#allocation3 + $0xd0] sm:$0xff]
      %v8873 = vld [vmem:[#allocation3 + $0xd8] sm:$0xff]
      %v8874 = vld [vmem:[#allocation3 + $0xe0] sm:$0xff]
      %v8875 = vld [vmem:[#allocation3 + $0xe8] sm:$0xff]
      %v8876 = vld [vmem:[#allocation3 + $0xf0] sm:$0xff]
      %v8877 = vld [vmem:[#allocation3 + $0xf8] sm:$0xff]
      %v8878 = vld [vmem:[#allocation3 + $0x100] sm:$0xff]
      %v8879 = vld [vmem:[#allocation3 + $0x108] sm:$0xff]
      %v8880 = vld [vmem:[#allocation3 + $0x110] sm:$0xff]
      %v8881 = vld [vmem:[#allocation3 + $0x118] sm:$0xff]
      %v8882 = vadd.f32 %v8846, %v8757
      %v8883 = vadd.f32 %v8847, %v8759
      %v8884 = vadd.f32 %v8848, %v8762
      %v8885 = vadd.f32 %v8849, %v8764
      %v8886 = vadd.f32 %v8850, %v8767
      %v8887 = vadd.f32 %v8851, %v8769
      %v8888 = vadd.f32 %v8852, %v8772
      %v8889 = vadd.f32 %v8853, %v8774
      %v8890 = vadd.f32 %v8854, %v8777
      %v8891 = vadd.f32 %v8855, %v8779
      %v8892 = vadd.f32 %v8856, %v8782
      %v8893 = vadd.f32 %v8857, %v8784
      %v8894 = vadd.f32 %v8858, %v8787
      %v8895 = vadd.f32 %v8859, %v8789
      %v8896 = vadd.f32 %v8860, %v8792
      %v8897 = vadd.f32 %v8861, %v8794
      %v8898 = vadd.f32 %v8862, %v8797
      %v8899 = vadd.f32 %v8863, %v8799
      %v8900 = vadd.f32 %v8864, %v8802
      %v8901 = vadd.f32 %v8865, %v8804
      %v8902 = vadd.f32 %v8866, %v8807
      %v8903 = vadd.f32 %v8867, %v8809
      %v8904 = vadd.f32 %v8868, %v8812
      %v8905 = vadd.f32 %v8869, %v8814
      %v8906 = vadd.f32 %v8870, %v8817
      %v8907 = vadd.f32 %v8871, %v8819
      %v8908 = vadd.f32 %v8872, %v8822
      %v8909 = vadd.f32 %v8873, %v8824
      %v8910 = vadd.f32 %v8874, %v8827
      %v8911 = vadd.f32 %v8875, %v8829
      %v8912 = vadd.f32 %v8876, %v8832
      %v8913 = vadd.f32 %v8877, %v8834
      %v8914 = vadd.f32 %v8878, %v8837
      %v8915 = vadd.f32 %v8879, %v8839
      %v8916 = vadd.f32 %v8880, %v8842
      %v8917 = vadd.f32 %v8881, %v8844
      %8918 = vst.msk [vmem:[#allocation3] sm:$0xff] %vm2199, %v8882
      %8919 = vst.msk [vmem:[#allocation3 + $0x8] sm:$0xff] %vm2199, %v8883
      %8920 = vst.msk [vmem:[#allocation3 + $0x10] sm:$0xff] %vm2199, %v8884
      %8921 = vst.msk [vmem:[#allocation3 + $0x18] sm:$0xff] %vm2199, %v8885
      %8922 = vst.msk [vmem:[#allocation3 + $0x20] sm:$0xff] %vm2199, %v8886
      %8923 = vst.msk [vmem:[#allocation3 + $0x28] sm:$0xff] %vm2199, %v8887
      %8924 = vst.msk [vmem:[#allocation3 + $0x30] sm:$0xff] %vm2199, %v8888
      %8925 = vst.msk [vmem:[#allocation3 + $0x38] sm:$0xff] %vm2199, %v8889
      %8926 = vst.msk [vmem:[#allocation3 + $0x40] sm:$0xff] %vm2199, %v8890
      %8927 = vst.msk [vmem:[#allocation3 + $0x48] sm:$0xff] %vm2199, %v8891
      %8928 = vst.msk [vmem:[#allocation3 + $0x50] sm:$0xff] %vm2199, %v8892
      %8929 = vst.msk [vmem:[#allocation3 + $0x58] sm:$0xff] %vm2199, %v8893
      %8930 = vst.msk [vmem:[#allocation3 + $0x60] sm:$0xff] %vm2199, %v8894
      %8931 = vst.msk [vmem:[#allocation3 + $0x68] sm:$0xff] %vm2199, %v8895
      %8932 = vst.msk [vmem:[#allocation3 + $0x70] sm:$0xff] %vm2199, %v8896
      %8933 = vst.msk [vmem:[#allocation3 + $0x78] sm:$0xff] %vm2199, %v8897
      %8934 = vst.msk [vmem:[#allocation3 + $0x80] sm:$0xff] %vm2199, %v8898
      %8935 = vst.msk [vmem:[#allocation3 + $0x88] sm:$0xff] %vm2199, %v8899
      %8936 = vst.msk [vmem:[#allocation3 + $0x90] sm:$0xff] %vm2199, %v8900
      %8937 = vst.msk [vmem:[#allocation3 + $0x98] sm:$0xff] %vm2199, %v8901
      %8938 = vst.msk [vmem:[#allocation3 + $0xa0] sm:$0xff] %vm2199, %v8902
      %8939 = vst.msk [vmem:[#allocation3 + $0xa8] sm:$0xff] %vm2199, %v8903
      %8940 = vst.msk [vmem:[#allocation3 + $0xb0] sm:$0xff] %vm2199, %v8904
      %8941 = vst.msk [vmem:[#allocation3 + $0xb8] sm:$0xff] %vm2199, %v8905
      %8942 = vst.msk [vmem:[#allocation3 + $0xc0] sm:$0xff] %vm2199, %v8906
      %8943 = vst.msk [vmem:[#allocation3 + $0xc8] sm:$0xff] %vm2199, %v8907
      %8944 = vst.msk [vmem:[#allocation3 + $0xd0] sm:$0xff] %vm2199, %v8908
      %8945 = vst.msk [vmem:[#allocation3 + $0xd8] sm:$0xff] %vm2199, %v8909
      %8946 = vst.msk [vmem:[#allocation3 + $0xe0] sm:$0xff] %vm2199, %v8910
      %8947 = vst.msk [vmem:[#allocation3 + $0xe8] sm:$0xff] %vm2199, %v8911
      %8948 = vst.msk [vmem:[#allocation3 + $0xf0] sm:$0xff] %vm2199, %v8912
      %8949 = vst.msk [vmem:[#allocation3 + $0xf8] sm:$0xff] %vm2199, %v8913
      %8950 = vst.msk [vmem:[#allocation3 + $0x100] sm:$0xff] %vm2199, %v8914
      %8951 = vst.msk [vmem:[#allocation3 + $0x108] sm:$0xff] %vm2199, %v8915
      %8952 = vst.msk [vmem:[#allocation3 + $0x110] sm:$0xff] %vm2199, %v8916
      %8953 = vst.msk [vmem:[#allocation3 + $0x118] sm:$0xff] %vm2199, %v8917
      %v8954 = vld [vmem:[#allocation2 + $0x8] sm:$0xe]
      %v8955 = vld [vmem:[#allocation2 + $0xc] sm:$0xf]
      %v8956 = vld [vmem:[#allocation2 + $0x10] sm:$0xf]
      %v8957 = vld [vmem:[#allocation2 + $0x14] sm:$0xf]
      %v8958 = vld [vmem:[#allocation2 + $0x18] sm:$0xf]
      %v8959 = vld [vmem:[#allocation2 + $0x1c] sm:$0xf]
      %v8960 = vld [vmem:[#allocation2 + $0x20] sm:$0xf]
      %v8961 = vld [vmem:[#allocation2 + $0x24] sm:$0xf]
      %v8962 = vld [vmem:[#allocation2 + $0x28] sm:$0xf]
      %v8963 = vld [vmem:[#allocation2 + $0x2c] sm:$0xf]
      %v8964 = vld [vmem:[#allocation2 + $0x30] sm:$0xf]
      %v8965 = vld [vmem:[#allocation2 + $0x34] sm:$0xf]
      %v8966 = vld [vmem:[#allocation2 + $0x38] sm:$0xf]
      %v8967 = vld [vmem:[#allocation2 + $0x3c] sm:$0xf]
      %v8968 = vld [vmem:[#allocation2 + $0x40] sm:$0xf]
      %v8969 = vld [vmem:[#allocation2 + $0x44] sm:$0xf]
      %v8970 = vld [vmem:[#allocation2 + $0x48] sm:$0xf]
      %v8971 = vld [vmem:[#allocation2 + $0x4c] sm:$0xf]
      %v8972 = vld [vmem:[#allocation2 + $0x50] sm:$0xf]
      %v8973 = vld [vmem:[#allocation2 + $0x54] sm:$0xf]
      %v8974 = vld [vmem:[#allocation2 + $0x58] sm:$0xf]
      %v8975 = vld [vmem:[#allocation2 + $0x5c] sm:$0xf]
      %v8976 = vld [vmem:[#allocation2 + $0x60] sm:$0xf]
      %v8977 = vld [vmem:[#allocation2 + $0x64] sm:$0xf]
      %v8978 = vld [vmem:[#allocation2 + $0x68] sm:$0xf]
      %v8979 = vld [vmem:[#allocation2 + $0x6c] sm:$0xf]
      %v8980 = vld [vmem:[#allocation2 + $0x70] sm:$0xf]
      %v8981 = vld [vmem:[#allocation2 + $0x74] sm:$0xf]
      %v8982 = vld [vmem:[#allocation2 + $0x78] sm:$0xf]
      %v8983 = vld [vmem:[#allocation2 + $0x7c] sm:$0xf]
      %v8984 = vld [vmem:[#allocation2 + $0x80] sm:$0xf]
      %v8985 = vld [vmem:[#allocation2 + $0x84] sm:$0xf]
      %v8986 = vld [vmem:[#allocation2 + $0x88] sm:$0xf]
      %v8987 = vld [vmem:[#allocation2 + $0x8c] sm:$0xf]
      %v8988 = vld [vmem:[#allocation2 + $0x90] sm:$0xf]
      %v8989 = vld [vmem:[#allocation2 + $0x94] sm:$0xf]
      %v8990 = vld [vmem:[#allocation2 + $0x98] sm:$0x3]
      %s8991 = scalar_lea.vmem %s4, 8
      %v8992 = vld [vmem:[%s8991] sm:$0x3]
      %v9030 = vunpack.c.l.b16 %v8954
      %v9031 = vunpack.c.l.b16 %v8955
      %v9032 = vunpack.c.l.b16 %v8956
      %v9033 = vunpack.c.l.b16 %v8957
      %v9034 = vunpack.c.l.b16 %v8958
      %v9035 = vunpack.c.l.b16 %v8959
      %v9036 = vunpack.c.l.b16 %v8960
      %v9037 = vunpack.c.l.b16 %v8961
      %v9038 = vunpack.c.l.b16 %v8962
      %v9039 = vunpack.c.l.b16 %v8963
      %v9040 = vunpack.c.l.b16 %v8964
      %v9041 = vunpack.c.l.b16 %v8965
      %v9042 = vunpack.c.l.b16 %v8966
      %v9043 = vunpack.c.l.b16 %v8967
      %v9044 = vunpack.c.l.b16 %v8968
      %v9045 = vunpack.c.l.b16 %v8969
      %v9046 = vunpack.c.l.b16 %v8970
      %v9047 = vunpack.c.l.b16 %v8971
      %v9048 = vunpack.c.l.b16 %v8972
      %v9049 = vunpack.c.l.b16 %v8973
      %v9050 = vunpack.c.l.b16 %v8974
      %v9051 = vunpack.c.l.b16 %v8975
      %v9052 = vunpack.c.l.b16 %v8976
      %v9053 = vunpack.c.l.b16 %v8977
      %v9054 = vunpack.c.l.b16 %v8978
      %v9055 = vunpack.c.l.b16 %v8979
      %v9056 = vunpack.c.l.b16 %v8980
      %v9057 = vunpack.c.l.b16 %v8981
      %v9058 = vunpack.c.l.b16 %v8982
      %v9059 = vunpack.c.l.b16 %v8983
      %v9060 = vunpack.c.l.b16 %v8984
      %v9061 = vunpack.c.l.b16 %v8985
      %v9062 = vunpack.c.l.b16 %v8986
      %v9063 = vunpack.c.l.b16 %v8987
      %v9064 = vunpack.c.l.b16 %v8988
      %v9065 = vunpack.c.l.b16 %v8989
      %v9066 = vunpack.c.l.b16 %v8990
      %v9067 = vpack.c.b16 %v9031, %v9030
      %v9068 = vpack.c.b16 %v9033, %v9032
      %v9069 = vpack.c.b16 %v9035, %v9034
      %v9070 = vpack.c.b16 %v9037, %v9036
      %v9071 = vpack.c.b16 %v9039, %v9038
      %v9072 = vpack.c.b16 %v9041, %v9040
      %v9073 = vpack.c.b16 %v9043, %v9042
      %v9074 = vpack.c.b16 %v9045, %v9044
      %v9075 = vpack.c.b16 %v9047, %v9046
      %v9076 = vpack.c.b16 %v9049, %v9048
      %v9077 = vpack.c.b16 %v9051, %v9050
      %v9078 = vpack.c.b16 %v9053, %v9052
      %v9079 = vpack.c.b16 %v9055, %v9054
      %v9080 = vpack.c.b16 %v9057, %v9056
      %v9081 = vpack.c.b16 %v9059, %v9058
      %v9082 = vpack.c.b16 %v9061, %v9060
      %v9083 = vpack.c.b16 %v9063, %v9062
      %v9084 = vpack.c.b16 %v9065, %v9064
      %v9085 = vpack.c.b16 %v9066, %v9066
      %v9087 = vshrl.u32 %v9067, 16
      %v9089 = vrot.slane %v9087, 1
      %v9090 = vshll.u32 %v9067, 16
      %v9092 = vrot.slane %v9090, 2
      %v9093 = vor.u32 %v9089, %v9092
      %v9095 = vshrl.u32 %v9068, 16
      %v9097 = vrot.slane %v9095, 1
      %v9098 = vshll.u32 %v9068, 16
      %v9100 = vrot.slane %v9098, 2
      %v9101 = vor.u32 %v9097, %v9100
      %v9102 = vsel %vm3937, %v9093, %v9101
      %v9104 = vshrl.u32 %v9069, 16
      %v9106 = vrot.slane %v9104, 1
      %v9107 = vshll.u32 %v9069, 16
      %v9109 = vrot.slane %v9107, 2
      %v9110 = vor.u32 %v9106, %v9109
      %v9111 = vsel %vm3937, %v9101, %v9110
      %v9113 = vshrl.u32 %v9070, 16
      %v9115 = vrot.slane %v9113, 1
      %v9116 = vshll.u32 %v9070, 16
      %v9118 = vrot.slane %v9116, 2
      %v9119 = vor.u32 %v9115, %v9118
      %v9120 = vsel %vm3937, %v9110, %v9119
      %v9122 = vshrl.u32 %v9071, 16
      %v9124 = vrot.slane %v9122, 1
      %v9125 = vshll.u32 %v9071, 16
      %v9127 = vrot.slane %v9125, 2
      %v9128 = vor.u32 %v9124, %v9127
      %v9129 = vsel %vm3937, %v9119, %v9128
      %v9131 = vshrl.u32 %v9072, 16
      %v9133 = vrot.slane %v9131, 1
      %v9134 = vshll.u32 %v9072, 16
      %v9136 = vrot.slane %v9134, 2
      %v9137 = vor.u32 %v9133, %v9136
      %v9138 = vsel %vm3937, %v9128, %v9137
      %v9140 = vshrl.u32 %v9073, 16
      %v9142 = vrot.slane %v9140, 1
      %v9143 = vshll.u32 %v9073, 16
      %v9145 = vrot.slane %v9143, 2
      %v9146 = vor.u32 %v9142, %v9145
      %v9147 = vsel %vm3937, %v9137, %v9146
      %v9149 = vshrl.u32 %v9074, 16
      %v9151 = vrot.slane %v9149, 1
      %v9152 = vshll.u32 %v9074, 16
      %v9154 = vrot.slane %v9152, 2
      %v9155 = vor.u32 %v9151, %v9154
      %v9156 = vsel %vm3937, %v9146, %v9155
      %v9158 = vshrl.u32 %v9075, 16
      %v9160 = vrot.slane %v9158, 1
      %v9161 = vshll.u32 %v9075, 16
      %v9163 = vrot.slane %v9161, 2
      %v9164 = vor.u32 %v9160, %v9163
      %v9165 = vsel %vm3937, %v9155, %v9164
      %v9167 = vshrl.u32 %v9076, 16
      %v9169 = vrot.slane %v9167, 1
      %v9170 = vshll.u32 %v9076, 16
      %v9172 = vrot.slane %v9170, 2
      %v9173 = vor.u32 %v9169, %v9172
      %v9174 = vsel %vm3937, %v9164, %v9173
      %v9176 = vshrl.u32 %v9077, 16
      %v9178 = vrot.slane %v9176, 1
      %v9179 = vshll.u32 %v9077, 16
      %v9181 = vrot.slane %v9179, 2
      %v9182 = vor.u32 %v9178, %v9181
      %v9183 = vsel %vm3937, %v9173, %v9182
      %v9185 = vshrl.u32 %v9078, 16
      %v9187 = vrot.slane %v9185, 1
      %v9188 = vshll.u32 %v9078, 16
      %v9190 = vrot.slane %v9188, 2
      %v9191 = vor.u32 %v9187, %v9190
      %v9192 = vsel %vm3937, %v9182, %v9191
      %v9194 = vshrl.u32 %v9079, 16
      %v9196 = vrot.slane %v9194, 1
      %v9197 = vshll.u32 %v9079, 16
      %v9199 = vrot.slane %v9197, 2
      %v9200 = vor.u32 %v9196, %v9199
      %v9201 = vsel %vm3937, %v9191, %v9200
      %v9203 = vshrl.u32 %v9080, 16
      %v9205 = vrot.slane %v9203, 1
      %v9206 = vshll.u32 %v9080, 16
      %v9208 = vrot.slane %v9206, 2
      %v9209 = vor.u32 %v9205, %v9208
      %v9210 = vsel %vm3937, %v9200, %v9209
      %v9212 = vshrl.u32 %v9081, 16
      %v9214 = vrot.slane %v9212, 1
      %v9215 = vshll.u32 %v9081, 16
      %v9217 = vrot.slane %v9215, 2
      %v9218 = vor.u32 %v9214, %v9217
      %v9219 = vsel %vm3937, %v9209, %v9218
      %v9221 = vshrl.u32 %v9082, 16
      %v9223 = vrot.slane %v9221, 1
      %v9224 = vshll.u32 %v9082, 16
      %v9226 = vrot.slane %v9224, 2
      %v9227 = vor.u32 %v9223, %v9226
      %v9228 = vsel %vm3937, %v9218, %v9227
      %v9230 = vshrl.u32 %v9083, 16
      %v9232 = vrot.slane %v9230, 1
      %v9233 = vshll.u32 %v9083, 16
      %v9235 = vrot.slane %v9233, 2
      %v9236 = vor.u32 %v9232, %v9235
      %v9237 = vsel %vm3937, %v9227, %v9236
      %v9239 = vshrl.u32 %v9084, 16
      %v9241 = vrot.slane %v9239, 1
      %v9242 = vshll.u32 %v9084, 16
      %v9244 = vrot.slane %v9242, 2
      %v9245 = vor.u32 %v9241, %v9244
      %v9246 = vsel %vm3937, %v9236, %v9245
      %v9248 = vshrl.u32 %v9085, 16
      %v9250 = vrot.slane %v9248, 1
      %v9251 = vshll.u32 %v9085, 16
      %v9253 = vrot.slane %v9251, 2
      %v9254 = vor.u32 %v9250, %v9253
      %v9255 = vsel %vm3937, %v9245, %v9254
      %v9257 = vsel %vm2199, %v9102, 0
      %v9260 = vsel %vm2199, %v9111, 0
      %v9263 = vsel %vm2199, %v9120, 0
      %v9266 = vsel %vm2199, %v9129, 0
      %v9269 = vsel %vm2199, %v9138, 0
      %v9272 = vsel %vm2199, %v9147, 0
      %v9275 = vsel %vm2199, %v9156, 0
      %v9278 = vsel %vm2199, %v9165, 0
      %v9281 = vsel %vm2199, %v9174, 0
      %v9284 = vsel %vm2199, %v9183, 0
      %v9287 = vsel %vm2199, %v9192, 0
      %v9290 = vsel %vm2199, %v9201, 0
      %v9293 = vsel %vm2199, %v9210, 0
      %v9296 = vsel %vm2199, %v9219, 0
      %v9299 = vsel %vm2199, %v9228, 0
      %v9302 = vsel %vm2199, %v9237, 0
      %v9305 = vsel %vm2199, %v9246, 0
      %v9308 = vsel %vm2199, %v9255, 0
      %v9311 = vsel %vm2254, %v8992, 0
      %9313 = vmatpush.bf16.msra.mxu0 0
      %9314 = vmatpush.bf16.msra.mxu0 0
      %9315 = vmatpush.bf16.msra.mxu0 0
      %9316 = vmatpush.bf16.msra.mxu0 0
      %9317 = vmatpush.bf16.msra.mxu0 0
      %9318 = vmatpush.bf16.msra.mxu0 0
      %9319 = vmatpush.bf16.msra.mxu0 0
      %9320 = vmatpush.bf16.msra.mxu0 %v9311
      %9321 = vmatmul.bf16.gmra.mxu0 %v9257
      %v9322 = vpop.f32.mrf.mxu0
      %v9323 = vadd.f32 0.0, %v9322
      %v9324 = vpop.f32.mrf.mxu0
      %v9325 = vadd.f32 0.0, %v9324
      %9326 = vmatmul.bf16.gmra.mxu0 %v9260
      %v9327 = vpop.f32.mrf.mxu0
      %v9328 = vadd.f32 0.0, %v9327
      %v9329 = vpop.f32.mrf.mxu0
      %v9330 = vadd.f32 0.0, %v9329
      %9331 = vmatmul.bf16.gmra.mxu0 %v9263
      %v9332 = vpop.f32.mrf.mxu0
      %v9333 = vadd.f32 0.0, %v9332
      %v9334 = vpop.f32.mrf.mxu0
      %v9335 = vadd.f32 0.0, %v9334
      %9336 = vmatmul.bf16.gmra.mxu0 %v9266
      %v9337 = vpop.f32.mrf.mxu0
      %v9338 = vadd.f32 0.0, %v9337
      %v9339 = vpop.f32.mrf.mxu0
      %v9340 = vadd.f32 0.0, %v9339
      %9341 = vmatmul.bf16.gmra.mxu0 %v9269
      %v9342 = vpop.f32.mrf.mxu0
      %v9343 = vadd.f32 0.0, %v9342
      %v9344 = vpop.f32.mrf.mxu0
      %v9345 = vadd.f32 0.0, %v9344
      %9346 = vmatmul.bf16.gmra.mxu0 %v9272
      %v9347 = vpop.f32.mrf.mxu0
      %v9348 = vadd.f32 0.0, %v9347
      %v9349 = vpop.f32.mrf.mxu0
      %v9350 = vadd.f32 0.0, %v9349
      %9351 = vmatmul.bf16.gmra.mxu0 %v9275
      %v9352 = vpop.f32.mrf.mxu0
      %v9353 = vadd.f32 0.0, %v9352
      %v9354 = vpop.f32.mrf.mxu0
      %v9355 = vadd.f32 0.0, %v9354
      %9356 = vmatmul.bf16.gmra.mxu0 %v9278
      %v9357 = vpop.f32.mrf.mxu0
      %v9358 = vadd.f32 0.0, %v9357
      %v9359 = vpop.f32.mrf.mxu0
      %v9360 = vadd.f32 0.0, %v9359
      %9361 = vmatmul.bf16.gmra.mxu0 %v9281
      %v9362 = vpop.f32.mrf.mxu0
      %v9363 = vadd.f32 0.0, %v9362
      %v9364 = vpop.f32.mrf.mxu0
      %v9365 = vadd.f32 0.0, %v9364
      %9366 = vmatmul.bf16.gmra.mxu0 %v9284
      %v9367 = vpop.f32.mrf.mxu0
      %v9368 = vadd.f32 0.0, %v9367
      %v9369 = vpop.f32.mrf.mxu0
      %v9370 = vadd.f32 0.0, %v9369
      %9371 = vmatmul.bf16.gmra.mxu0 %v9287
      %v9372 = vpop.f32.mrf.mxu0
      %v9373 = vadd.f32 0.0, %v9372
      %v9374 = vpop.f32.mrf.mxu0
      %v9375 = vadd.f32 0.0, %v9374
      %9376 = vmatmul.bf16.gmra.mxu0 %v9290
      %v9377 = vpop.f32.mrf.mxu0
      %v9378 = vadd.f32 0.0, %v9377
      %v9379 = vpop.f32.mrf.mxu0
      %v9380 = vadd.f32 0.0, %v9379
      %9381 = vmatmul.bf16.gmra.mxu0 %v9293
      %v9382 = vpop.f32.mrf.mxu0
      %v9383 = vadd.f32 0.0, %v9382
      %v9384 = vpop.f32.mrf.mxu0
      %v9385 = vadd.f32 0.0, %v9384
      %9386 = vmatmul.bf16.gmra.mxu0 %v9296
      %v9387 = vpop.f32.mrf.mxu0
      %v9388 = vadd.f32 0.0, %v9387
      %v9389 = vpop.f32.mrf.mxu0
      %v9390 = vadd.f32 0.0, %v9389
      %9391 = vmatmul.bf16.gmra.mxu0 %v9299
      %v9392 = vpop.f32.mrf.mxu0
      %v9393 = vadd.f32 0.0, %v9392
      %v9394 = vpop.f32.mrf.mxu0
      %v9395 = vadd.f32 0.0, %v9394
      %9396 = vmatmul.bf16.gmra.mxu0 %v9302
      %v9397 = vpop.f32.mrf.mxu0
      %v9398 = vadd.f32 0.0, %v9397
      %v9399 = vpop.f32.mrf.mxu0
      %v9400 = vadd.f32 0.0, %v9399
      %9401 = vmatmul.bf16.gmra.mxu0 %v9305
      %v9402 = vpop.f32.mrf.mxu0
      %v9403 = vadd.f32 0.0, %v9402
      %v9404 = vpop.f32.mrf.mxu0
      %v9405 = vadd.f32 0.0, %v9404
      %9406 = vmatmul.bf16.gmra.mxu0 %v9308
      %v9407 = vpop.f32.mrf.mxu0
      %v9408 = vadd.f32 0.0, %v9407
      %v9409 = vpop.f32.mrf.mxu0
      %v9410 = vadd.f32 0.0, %v9409
      %9411 = vdwg.mxu0
      %v9412 = vld [vmem:[#allocation3] sm:$0xff]
      %v9413 = vld [vmem:[#allocation3 + $0x8] sm:$0xff]
      %v9414 = vld [vmem:[#allocation3 + $0x10] sm:$0xff]
      %v9415 = vld [vmem:[#allocation3 + $0x18] sm:$0xff]
      %v9416 = vld [vmem:[#allocation3 + $0x20] sm:$0xff]
      %v9417 = vld [vmem:[#allocation3 + $0x28] sm:$0xff]
      %v9418 = vld [vmem:[#allocation3 + $0x30] sm:$0xff]
      %v9419 = vld [vmem:[#allocation3 + $0x38] sm:$0xff]
      %v9420 = vld [vmem:[#allocation3 + $0x40] sm:$0xff]
      %v9421 = vld [vmem:[#allocation3 + $0x48] sm:$0xff]
      %v9422 = vld [vmem:[#allocation3 + $0x50] sm:$0xff]
      %v9423 = vld [vmem:[#allocation3 + $0x58] sm:$0xff]
      %v9424 = vld [vmem:[#allocation3 + $0x60] sm:$0xff]
      %v9425 = vld [vmem:[#allocation3 + $0x68] sm:$0xff]
      %v9426 = vld [vmem:[#allocation3 + $0x70] sm:$0xff]
      %v9427 = vld [vmem:[#allocation3 + $0x78] sm:$0xff]
      %v9428 = vld [vmem:[#allocation3 + $0x80] sm:$0xff]
      %v9429 = vld [vmem:[#allocation3 + $0x88] sm:$0xff]
      %v9430 = vld [vmem:[#allocation3 + $0x90] sm:$0xff]
      %v9431 = vld [vmem:[#allocation3 + $0x98] sm:$0xff]
      %v9432 = vld [vmem:[#allocation3 + $0xa0] sm:$0xff]
      %v9433 = vld [vmem:[#allocation3 + $0xa8] sm:$0xff]
      %v9434 = vld [vmem:[#allocation3 + $0xb0] sm:$0xff]
      %v9435 = vld [vmem:[#allocation3 + $0xb8] sm:$0xff]
      %v9436 = vld [vmem:[#allocation3 + $0xc0] sm:$0xff]
      %v9437 = vld [vmem:[#allocation3 + $0xc8] sm:$0xff]
      %v9438 = vld [vmem:[#allocation3 + $0xd0] sm:$0xff]
      %v9439 = vld [vmem:[#allocation3 + $0xd8] sm:$0xff]
      %v9440 = vld [vmem:[#allocation3 + $0xe0] sm:$0xff]
      %v9441 = vld [vmem:[#allocation3 + $0xe8] sm:$0xff]
      %v9442 = vld [vmem:[#allocation3 + $0xf0] sm:$0xff]
      %v9443 = vld [vmem:[#allocation3 + $0xf8] sm:$0xff]
      %v9444 = vld [vmem:[#allocation3 + $0x100] sm:$0xff]
      %v9445 = vld [vmem:[#allocation3 + $0x108] sm:$0xff]
      %v9446 = vld [vmem:[#allocation3 + $0x110] sm:$0xff]
      %v9447 = vld [vmem:[#allocation3 + $0x118] sm:$0xff]
      %v9448 = vadd.f32 %v9412, %v9323
      %v9449 = vadd.f32 %v9413, %v9325
      %v9450 = vadd.f32 %v9414, %v9328
      %v9451 = vadd.f32 %v9415, %v9330
      %v9452 = vadd.f32 %v9416, %v9333
      %v9453 = vadd.f32 %v9417, %v9335
      %v9454 = vadd.f32 %v9418, %v9338
      %v9455 = vadd.f32 %v9419, %v9340
      %v9456 = vadd.f32 %v9420, %v9343
      %v9457 = vadd.f32 %v9421, %v9345
      %v9458 = vadd.f32 %v9422, %v9348
      %v9459 = vadd.f32 %v9423, %v9350
      %v9460 = vadd.f32 %v9424, %v9353
      %v9461 = vadd.f32 %v9425, %v9355
      %v9462 = vadd.f32 %v9426, %v9358
      %v9463 = vadd.f32 %v9427, %v9360
      %v9464 = vadd.f32 %v9428, %v9363
      %v9465 = vadd.f32 %v9429, %v9365
      %v9466 = vadd.f32 %v9430, %v9368
      %v9467 = vadd.f32 %v9431, %v9370
      %v9468 = vadd.f32 %v9432, %v9373
      %v9469 = vadd.f32 %v9433, %v9375
      %v9470 = vadd.f32 %v9434, %v9378
      %v9471 = vadd.f32 %v9435, %v9380
      %v9472 = vadd.f32 %v9436, %v9383
      %v9473 = vadd.f32 %v9437, %v9385
      %v9474 = vadd.f32 %v9438, %v9388
      %v9475 = vadd.f32 %v9439, %v9390
      %v9476 = vadd.f32 %v9440, %v9393
      %v9477 = vadd.f32 %v9441, %v9395
      %v9478 = vadd.f32 %v9442, %v9398
      %v9479 = vadd.f32 %v9443, %v9400
      %v9480 = vadd.f32 %v9444, %v9403
      %v9481 = vadd.f32 %v9445, %v9405
      %v9482 = vadd.f32 %v9446, %v9408
      %v9483 = vadd.f32 %v9447, %v9410
      %9484 = vst.msk [vmem:[#allocation3] sm:$0xff] %vm2199, %v9448
      %9485 = vst.msk [vmem:[#allocation3 + $0x8] sm:$0xff] %vm2199, %v9449
      %9486 = vst.msk [vmem:[#allocation3 + $0x10] sm:$0xff] %vm2199, %v9450
      %9487 = vst.msk [vmem:[#allocation3 + $0x18] sm:$0xff] %vm2199, %v9451
      %9488 = vst.msk [vmem:[#allocation3 + $0x20] sm:$0xff] %vm2199, %v9452
      %9489 = vst.msk [vmem:[#allocation3 + $0x28] sm:$0xff] %vm2199, %v9453
      %9490 = vst.msk [vmem:[#allocation3 + $0x30] sm:$0xff] %vm2199, %v9454
      %9491 = vst.msk [vmem:[#allocation3 + $0x38] sm:$0xff] %vm2199, %v9455
      %9492 = vst.msk [vmem:[#allocation3 + $0x40] sm:$0xff] %vm2199, %v9456
      %9493 = vst.msk [vmem:[#allocation3 + $0x48] sm:$0xff] %vm2199, %v9457
      %9494 = vst.msk [vmem:[#allocation3 + $0x50] sm:$0xff] %vm2199, %v9458
      %9495 = vst.msk [vmem:[#allocation3 + $0x58] sm:$0xff] %vm2199, %v9459
      %9496 = vst.msk [vmem:[#allocation3 + $0x60] sm:$0xff] %vm2199, %v9460
      %9497 = vst.msk [vmem:[#allocation3 + $0x68] sm:$0xff] %vm2199, %v9461
      %9498 = vst.msk [vmem:[#allocation3 + $0x70] sm:$0xff] %vm2199, %v9462
      %9499 = vst.msk [vmem:[#allocation3 + $0x78] sm:$0xff] %vm2199, %v9463
      %9500 = vst.msk [vmem:[#allocation3 + $0x80] sm:$0xff] %vm2199, %v9464
      %9501 = vst.msk [vmem:[#allocation3 + $0x88] sm:$0xff] %vm2199, %v9465
      %9502 = vst.msk [vmem:[#allocation3 + $0x90] sm:$0xff] %vm2199, %v9466
      %9503 = vst.msk [vmem:[#allocation3 + $0x98] sm:$0xff] %vm2199, %v9467
      %9504 = vst.msk [vmem:[#allocation3 + $0xa0] sm:$0xff] %vm2199, %v9468
      %9505 = vst.msk [vmem:[#allocation3 + $0xa8] sm:$0xff] %vm2199, %v9469
      %9506 = vst.msk [vmem:[#allocation3 + $0xb0] sm:$0xff] %vm2199, %v9470
      %9507 = vst.msk [vmem:[#allocation3 + $0xb8] sm:$0xff] %vm2199, %v9471
      %9508 = vst.msk [vmem:[#allocation3 + $0xc0] sm:$0xff] %vm2199, %v9472
      %9509 = vst.msk [vmem:[#allocation3 + $0xc8] sm:$0xff] %vm2199, %v9473
      %9510 = vst.msk [vmem:[#allocation3 + $0xd0] sm:$0xff] %vm2199, %v9474
      %9511 = vst.msk [vmem:[#allocation3 + $0xd8] sm:$0xff] %vm2199, %v9475
      %9512 = vst.msk [vmem:[#allocation3 + $0xe0] sm:$0xff] %vm2199, %v9476
      %9513 = vst.msk [vmem:[#allocation3 + $0xe8] sm:$0xff] %vm2199, %v9477
      %9514 = vst.msk [vmem:[#allocation3 + $0xf0] sm:$0xff] %vm2199, %v9478
      %9515 = vst.msk [vmem:[#allocation3 + $0xf8] sm:$0xff] %vm2199, %v9479
      %9516 = vst.msk [vmem:[#allocation3 + $0x100] sm:$0xff] %vm2199, %v9480
      %9517 = vst.msk [vmem:[#allocation3 + $0x108] sm:$0xff] %vm2199, %v9481
      %9518 = vst.msk [vmem:[#allocation3 + $0x110] sm:$0xff] %vm2199, %v9482
      %9519 = vst.msk [vmem:[#allocation3 + $0x118] sm:$0xff] %vm2199, %v9483
      %v9520 = vld [vmem:[#allocation2 + $0x8] sm:$0xc]
      %v9521 = vld [vmem:[#allocation2 + $0xc] sm:$0xf]
      %v9522 = vld [vmem:[#allocation2 + $0x10] sm:$0xf]
      %v9523 = vld [vmem:[#allocation2 + $0x14] sm:$0xf]
      %v9524 = vld [vmem:[#allocation2 + $0x18] sm:$0xf]
      %v9525 = vld [vmem:[#allocation2 + $0x1c] sm:$0xf]
      %v9526 = vld [vmem:[#allocation2 + $0x20] sm:$0xf]
      %v9527 = vld [vmem:[#allocation2 + $0x24] sm:$0xf]
      %v9528 = vld [vmem:[#allocation2 + $0x28] sm:$0xf]
      %v9529 = vld [vmem:[#allocation2 + $0x2c] sm:$0xf]
      %v9530 = vld [vmem:[#allocation2 + $0x30] sm:$0xf]
      %v9531 = vld [vmem:[#allocation2 + $0x34] sm:$0xf]
      %v9532 = vld [vmem:[#allocation2 + $0x38] sm:$0xf]
      %v9533 = vld [vmem:[#allocation2 + $0x3c] sm:$0xf]
      %v9534 = vld [vmem:[#allocation2 + $0x40] sm:$0xf]
      %v9535 = vld [vmem:[#allocation2 + $0x44] sm:$0xf]
      %v9536 = vld [vmem:[#allocation2 + $0x48] sm:$0xf]
      %v9537 = vld [vmem:[#allocation2 + $0x4c] sm:$0xf]
      %v9538 = vld [vmem:[#allocation2 + $0x50] sm:$0xf]
      %v9539 = vld [vmem:[#allocation2 + $0x54] sm:$0xf]
      %v9540 = vld [vmem:[#allocation2 + $0x58] sm:$0xf]
      %v9541 = vld [vmem:[#allocation2 + $0x5c] sm:$0xf]
      %v9542 = vld [vmem:[#allocation2 + $0x60] sm:$0xf]
      %v9543 = vld [vmem:[#allocation2 + $0x64] sm:$0xf]
      %v9544 = vld [vmem:[#allocation2 + $0x68] sm:$0xf]
      %v9545 = vld [vmem:[#allocation2 + $0x6c] sm:$0xf]
      %v9546 = vld [vmem:[#allocation2 + $0x70] sm:$0xf]
      %v9547 = vld [vmem:[#allocation2 + $0x74] sm:$0xf]
      %v9548 = vld [vmem:[#allocation2 + $0x78] sm:$0xf]
      %v9549 = vld [vmem:[#allocation2 + $0x7c] sm:$0xf]
      %v9550 = vld [vmem:[#allocation2 + $0x80] sm:$0xf]
      %v9551 = vld [vmem:[#allocation2 + $0x84] sm:$0xf]
      %v9552 = vld [vmem:[#allocation2 + $0x88] sm:$0xf]
      %v9553 = vld [vmem:[#allocation2 + $0x8c] sm:$0xf]
      %v9554 = vld [vmem:[#allocation2 + $0x90] sm:$0xf]
      %v9555 = vld [vmem:[#allocation2 + $0x94] sm:$0xf]
      %v9556 = vld [vmem:[#allocation2 + $0x98] sm:$0x3]
      %s9557 = scalar_lea.vmem %s4, 10
      %v9558 = vld [vmem:[%s9557] sm:$0x3]
      %v9596 = vunpack.c.l.b16 %v9520
      %v9597 = vunpack.c.l.b16 %v9521
      %v9598 = vunpack.c.l.b16 %v9522
      %v9599 = vunpack.c.l.b16 %v9523
      %v9600 = vunpack.c.l.b16 %v9524
      %v9601 = vunpack.c.l.b16 %v9525
      %v9602 = vunpack.c.l.b16 %v9526
      %v9603 = vunpack.c.l.b16 %v9527
      %v9604 = vunpack.c.l.b16 %v9528
      %v9605 = vunpack.c.l.b16 %v9529
      %v9606 = vunpack.c.l.b16 %v9530
      %v9607 = vunpack.c.l.b16 %v9531
      %v9608 = vunpack.c.l.b16 %v9532
      %v9609 = vunpack.c.l.b16 %v9533
      %v9610 = vunpack.c.l.b16 %v9534
      %v9611 = vunpack.c.l.b16 %v9535
      %v9612 = vunpack.c.l.b16 %v9536
      %v9613 = vunpack.c.l.b16 %v9537
      %v9614 = vunpack.c.l.b16 %v9538
      %v9615 = vunpack.c.l.b16 %v9539
      %v9616 = vunpack.c.l.b16 %v9540
      %v9617 = vunpack.c.l.b16 %v9541
      %v9618 = vunpack.c.l.b16 %v9542
      %v9619 = vunpack.c.l.b16 %v9543
      %v9620 = vunpack.c.l.b16 %v9544
      %v9621 = vunpack.c.l.b16 %v9545
      %v9622 = vunpack.c.l.b16 %v9546
      %v9623 = vunpack.c.l.b16 %v9547
      %v9624 = vunpack.c.l.b16 %v9548
      %v9625 = vunpack.c.l.b16 %v9549
      %v9626 = vunpack.c.l.b16 %v9550
      %v9627 = vunpack.c.l.b16 %v9551
      %v9628 = vunpack.c.l.b16 %v9552
      %v9629 = vunpack.c.l.b16 %v9553
      %v9630 = vunpack.c.l.b16 %v9554
      %v9631 = vunpack.c.l.b16 %v9555
      %v9632 = vunpack.c.l.b16 %v9556
      %v9633 = vpack.c.b16 %v9597, %v9596
      %v9634 = vpack.c.b16 %v9599, %v9598
      %v9635 = vpack.c.b16 %v9601, %v9600
      %v9636 = vpack.c.b16 %v9603, %v9602
      %v9637 = vpack.c.b16 %v9605, %v9604
      %v9638 = vpack.c.b16 %v9607, %v9606
      %v9639 = vpack.c.b16 %v9609, %v9608
      %v9640 = vpack.c.b16 %v9611, %v9610
      %v9641 = vpack.c.b16 %v9613, %v9612
      %v9642 = vpack.c.b16 %v9615, %v9614
      %v9643 = vpack.c.b16 %v9617, %v9616
      %v9644 = vpack.c.b16 %v9619, %v9618
      %v9645 = vpack.c.b16 %v9621, %v9620
      %v9646 = vpack.c.b16 %v9623, %v9622
      %v9647 = vpack.c.b16 %v9625, %v9624
      %v9648 = vpack.c.b16 %v9627, %v9626
      %v9649 = vpack.c.b16 %v9629, %v9628
      %v9650 = vpack.c.b16 %v9631, %v9630
      %v9651 = vpack.c.b16 %v9632, %v9632
      %v9652 = vrot.slane %v9633, 2
      %v9653 = vrot.slane %v9634, 2
      %v9654 = vsel %vm4504, %v9652, %v9653
      %v9655 = vrot.slane %v9635, 2
      %v9656 = vsel %vm4504, %v9653, %v9655
      %v9657 = vrot.slane %v9636, 2
      %v9658 = vsel %vm4504, %v9655, %v9657
      %v9659 = vrot.slane %v9637, 2
      %v9660 = vsel %vm4504, %v9657, %v9659
      %v9661 = vrot.slane %v9638, 2
      %v9662 = vsel %vm4504, %v9659, %v9661
      %v9663 = vrot.slane %v9639, 2
      %v9664 = vsel %vm4504, %v9661, %v9663
      %v9665 = vrot.slane %v9640, 2
      %v9666 = vsel %vm4504, %v9663, %v9665
      %v9667 = vrot.slane %v9641, 2
      %v9668 = vsel %vm4504, %v9665, %v9667
      %v9669 = vrot.slane %v9642, 2
      %v9670 = vsel %vm4504, %v9667, %v9669
      %v9671 = vrot.slane %v9643, 2
      %v9672 = vsel %vm4504, %v9669, %v9671
      %v9673 = vrot.slane %v9644, 2
      %v9674 = vsel %vm4504, %v9671, %v9673
      %v9675 = vrot.slane %v9645, 2
      %v9676 = vsel %vm4504, %v9673, %v9675
      %v9677 = vrot.slane %v9646, 2
      %v9678 = vsel %vm4504, %v9675, %v9677
      %v9679 = vrot.slane %v9647, 2
      %v9680 = vsel %vm4504, %v9677, %v9679
      %v9681 = vrot.slane %v9648, 2
      %v9682 = vsel %vm4504, %v9679, %v9681
      %v9683 = vrot.slane %v9649, 2
      %v9684 = vsel %vm4504, %v9681, %v9683
      %v9685 = vrot.slane %v9650, 2
      %v9686 = vsel %vm4504, %v9683, %v9685
      %v9687 = vrot.slane %v9651, 2
      %v9688 = vsel %vm4504, %v9685, %v9687
      %v9690 = vsel %vm2199, %v9654, 0
      %v9693 = vsel %vm2199, %v9656, 0
      %v9696 = vsel %vm2199, %v9658, 0
      %v9699 = vsel %vm2199, %v9660, 0
      %v9702 = vsel %vm2199, %v9662, 0
      %v9705 = vsel %vm2199, %v9664, 0
      %v9708 = vsel %vm2199, %v9666, 0
      %v9711 = vsel %vm2199, %v9668, 0
      %v9714 = vsel %vm2199, %v9670, 0
      %v9717 = vsel %vm2199, %v9672, 0
      %v9720 = vsel %vm2199, %v9674, 0
      %v9723 = vsel %vm2199, %v9676, 0
      %v9726 = vsel %vm2199, %v9678, 0
      %v9729 = vsel %vm2199, %v9680, 0
      %v9732 = vsel %vm2199, %v9682, 0
      %v9735 = vsel %vm2199, %v9684, 0
      %v9738 = vsel %vm2199, %v9686, 0
      %v9741 = vsel %vm2199, %v9688, 0
      %v9744 = vsel %vm2254, %v9558, 0
      %9746 = vmatpush.bf16.msra.mxu0 0
      %9747 = vmatpush.bf16.msra.mxu0 0
      %9748 = vmatpush.bf16.msra.mxu0 0
      %9749 = vmatpush.bf16.msra.mxu0 0
      %9750 = vmatpush.bf16.msra.mxu0 0
      %9751 = vmatpush.bf16.msra.mxu0 0
      %9752 = vmatpush.bf16.msra.mxu0 0
      %9753 = vmatpush.bf16.msra.mxu0 %v9744
      %9754 = vmatmul.bf16.gmra.mxu0 %v9690
      %v9755 = vpop.f32.mrf.mxu0
      %v9756 = vadd.f32 0.0, %v9755
      %v9757 = vpop.f32.mrf.mxu0
      %v9758 = vadd.f32 0.0, %v9757
      %9759 = vmatmul.bf16.gmra.mxu0 %v9693
      %v9760 = vpop.f32.mrf.mxu0
      %v9761 = vadd.f32 0.0, %v9760
      %v9762 = vpop.f32.mrf.mxu0
      %v9763 = vadd.f32 0.0, %v9762
      %9764 = vmatmul.bf16.gmra.mxu0 %v9696
      %v9765 = vpop.f32.mrf.mxu0
      %v9766 = vadd.f32 0.0, %v9765
      %v9767 = vpop.f32.mrf.mxu0
      %v9768 = vadd.f32 0.0, %v9767
      %9769 = vmatmul.bf16.gmra.mxu0 %v9699
      %v9770 = vpop.f32.mrf.mxu0
      %v9771 = vadd.f32 0.0, %v9770
      %v9772 = vpop.f32.mrf.mxu0
      %v9773 = vadd.f32 0.0, %v9772
      %9774 = vmatmul.bf16.gmra.mxu0 %v9702
      %v9775 = vpop.f32.mrf.mxu0
      %v9776 = vadd.f32 0.0, %v9775
      %v9777 = vpop.f32.mrf.mxu0
      %v9778 = vadd.f32 0.0, %v9777
      %9779 = vmatmul.bf16.gmra.mxu0 %v9705
      %v9780 = vpop.f32.mrf.mxu0
      %v9781 = vadd.f32 0.0, %v9780
      %v9782 = vpop.f32.mrf.mxu0
      %v9783 = vadd.f32 0.0, %v9782
      %9784 = vmatmul.bf16.gmra.mxu0 %v9708
      %v9785 = vpop.f32.mrf.mxu0
      %v9786 = vadd.f32 0.0, %v9785
      %v9787 = vpop.f32.mrf.mxu0
      %v9788 = vadd.f32 0.0, %v9787
      %9789 = vmatmul.bf16.gmra.mxu0 %v9711
      %v9790 = vpop.f32.mrf.mxu0
      %v9791 = vadd.f32 0.0, %v9790
      %v9792 = vpop.f32.mrf.mxu0
      %v9793 = vadd.f32 0.0, %v9792
      %9794 = vmatmul.bf16.gmra.mxu0 %v9714
      %v9795 = vpop.f32.mrf.mxu0
      %v9796 = vadd.f32 0.0, %v9795
      %v9797 = vpop.f32.mrf.mxu0
      %v9798 = vadd.f32 0.0, %v9797
      %9799 = vmatmul.bf16.gmra.mxu0 %v9717
      %v9800 = vpop.f32.mrf.mxu0
      %v9801 = vadd.f32 0.0, %v9800
      %v9802 = vpop.f32.mrf.mxu0
      %v9803 = vadd.f32 0.0, %v9802
      %9804 = vmatmul.bf16.gmra.mxu0 %v9720
      %v9805 = vpop.f32.mrf.mxu0
      %v9806 = vadd.f32 0.0, %v9805
      %v9807 = vpop.f32.mrf.mxu0
      %v9808 = vadd.f32 0.0, %v9807
      %9809 = vmatmul.bf16.gmra.mxu0 %v9723
      %v9810 = vpop.f32.mrf.mxu0
      %v9811 = vadd.f32 0.0, %v9810
      %v9812 = vpop.f32.mrf.mxu0
      %v9813 = vadd.f32 0.0, %v9812
      %9814 = vmatmul.bf16.gmra.mxu0 %v9726
      %v9815 = vpop.f32.mrf.mxu0
      %v9816 = vadd.f32 0.0, %v9815
      %v9817 = vpop.f32.mrf.mxu0
      %v9818 = vadd.f32 0.0, %v9817
      %9819 = vmatmul.bf16.gmra.mxu0 %v9729
      %v9820 = vpop.f32.mrf.mxu0
      %v9821 = vadd.f32 0.0, %v9820
      %v9822 = vpop.f32.mrf.mxu0
      %v9823 = vadd.f32 0.0, %v9822
      %9824 = vmatmul.bf16.gmra.mxu0 %v9732
      %v9825 = vpop.f32.mrf.mxu0
      %v9826 = vadd.f32 0.0, %v9825
      %v9827 = vpop.f32.mrf.mxu0
      %v9828 = vadd.f32 0.0, %v9827
      %9829 = vmatmul.bf16.gmra.mxu0 %v9735
      %v9830 = vpop.f32.mrf.mxu0
      %v9831 = vadd.f32 0.0, %v9830
      %v9832 = vpop.f32.mrf.mxu0
      %v9833 = vadd.f32 0.0, %v9832
      %9834 = vmatmul.bf16.gmra.mxu0 %v9738
      %v9835 = vpop.f32.mrf.mxu0
      %v9836 = vadd.f32 0.0, %v9835
      %v9837 = vpop.f32.mrf.mxu0
      %v9838 = vadd.f32 0.0, %v9837
      %9839 = vmatmul.bf16.gmra.mxu0 %v9741
      %v9840 = vpop.f32.mrf.mxu0
      %v9841 = vadd.f32 0.0, %v9840
      %v9842 = vpop.f32.mrf.mxu0
      %v9843 = vadd.f32 0.0, %v9842
      %9844 = vdwg.mxu0
      %v9845 = vld [vmem:[#allocation3] sm:$0xff]
      %v9846 = vld [vmem:[#allocation3 + $0x8] sm:$0xff]
      %v9847 = vld [vmem:[#allocation3 + $0x10] sm:$0xff]
      %v9848 = vld [vmem:[#allocation3 + $0x18] sm:$0xff]
      %v9849 = vld [vmem:[#allocation3 + $0x20] sm:$0xff]
      %v9850 = vld [vmem:[#allocation3 + $0x28] sm:$0xff]
      %v9851 = vld [vmem:[#allocation3 + $0x30] sm:$0xff]
      %v9852 = vld [vmem:[#allocation3 + $0x38] sm:$0xff]
      %v9853 = vld [vmem:[#allocation3 + $0x40] sm:$0xff]
      %v9854 = vld [vmem:[#allocation3 + $0x48] sm:$0xff]
      %v9855 = vld [vmem:[#allocation3 + $0x50] sm:$0xff]
      %v9856 = vld [vmem:[#allocation3 + $0x58] sm:$0xff]
      %v9857 = vld [vmem:[#allocation3 + $0x60] sm:$0xff]
      %v9858 = vld [vmem:[#allocation3 + $0x68] sm:$0xff]
      %v9859 = vld [vmem:[#allocation3 + $0x70] sm:$0xff]
      %v9860 = vld [vmem:[#allocation3 + $0x78] sm:$0xff]
      %v9861 = vld [vmem:[#allocation3 + $0x80] sm:$0xff]
      %v9862 = vld [vmem:[#allocation3 + $0x88] sm:$0xff]
      %v9863 = vld [vmem:[#allocation3 + $0x90] sm:$0xff]
      %v9864 = vld [vmem:[#allocation3 + $0x98] sm:$0xff]
      %v9865 = vld [vmem:[#allocation3 + $0xa0] sm:$0xff]
      %v9866 = vld [vmem:[#allocation3 + $0xa8] sm:$0xff]
      %v9867 = vld [vmem:[#allocation3 + $0xb0] sm:$0xff]
      %v9868 = vld [vmem:[#allocation3 + $0xb8] sm:$0xff]
      %v9869 = vld [vmem:[#allocation3 + $0xc0] sm:$0xff]
      %v9870 = vld [vmem:[#allocation3 + $0xc8] sm:$0xff]
      %v9871 = vld [vmem:[#allocation3 + $0xd0] sm:$0xff]
      %v9872 = vld [vmem:[#allocation3 + $0xd8] sm:$0xff]
      %v9873 = vld [vmem:[#allocation3 + $0xe0] sm:$0xff]
      %v9874 = vld [vmem:[#allocation3 + $0xe8] sm:$0xff]
      %v9875 = vld [vmem:[#allocation3 + $0xf0] sm:$0xff]
      %v9876 = vld [vmem:[#allocation3 + $0xf8] sm:$0xff]
      %v9877 = vld [vmem:[#allocation3 + $0x100] sm:$0xff]
      %v9878 = vld [vmem:[#allocation3 + $0x108] sm:$0xff]
      %v9879 = vld [vmem:[#allocation3 + $0x110] sm:$0xff]
      %v9880 = vld [vmem:[#allocation3 + $0x118] sm:$0xff]
      %v9881 = vadd.f32 %v9845, %v9756
      %v9882 = vadd.f32 %v9846, %v9758
      %v9883 = vadd.f32 %v9847, %v9761
      %v9884 = vadd.f32 %v9848, %v9763
      %v9885 = vadd.f32 %v9849, %v9766
      %v9886 = vadd.f32 %v9850, %v9768
      %v9887 = vadd.f32 %v9851, %v9771
      %v9888 = vadd.f32 %v9852, %v9773
      %v9889 = vadd.f32 %v9853, %v9776
      %v9890 = vadd.f32 %v9854, %v9778
      %v9891 = vadd.f32 %v9855, %v9781
      %v9892 = vadd.f32 %v9856, %v9783
      %v9893 = vadd.f32 %v9857, %v9786
      %v9894 = vadd.f32 %v9858, %v9788
      %v9895 = vadd.f32 %v9859, %v9791
      %v9896 = vadd.f32 %v9860, %v9793
      %v9897 = vadd.f32 %v9861, %v9796
      %v9898 = vadd.f32 %v9862, %v9798
      %v9899 = vadd.f32 %v9863, %v9801
      %v9900 = vadd.f32 %v9864, %v9803
      %v9901 = vadd.f32 %v9865, %v9806
      %v9902 = vadd.f32 %v9866, %v9808
      %v9903 = vadd.f32 %v9867, %v9811
      %v9904 = vadd.f32 %v9868, %v9813
      %v9905 = vadd.f32 %v9869, %v9816
      %v9906 = vadd.f32 %v9870, %v9818
      %v9907 = vadd.f32 %v9871, %v9821
      %v9908 = vadd.f32 %v9872, %v9823
      %v9909 = vadd.f32 %v9873, %v9826
      %v9910 = vadd.f32 %v9874, %v9828
      %v9911 = vadd.f32 %v9875, %v9831
      %v9912 = vadd.f32 %v9876, %v9833
      %v9913 = vadd.f32 %v9877, %v9836
      %v9914 = vadd.f32 %v9878, %v9838
      %v9915 = vadd.f32 %v9879, %v9841
      %v9916 = vadd.f32 %v9880, %v9843
      %9917 = vst.msk [vmem:[#allocation3] sm:$0xff] %vm2199, %v9881
      %9918 = vst.msk [vmem:[#allocation3 + $0x8] sm:$0xff] %vm2199, %v9882
      %9919 = vst.msk [vmem:[#allocation3 + $0x10] sm:$0xff] %vm2199, %v9883
      %9920 = vst.msk [vmem:[#allocation3 + $0x18] sm:$0xff] %vm2199, %v9884
      %9921 = vst.msk [vmem:[#allocation3 + $0x20] sm:$0xff] %vm2199, %v9885
      %9922 = vst.msk [vmem:[#allocation3 + $0x28] sm:$0xff] %vm2199, %v9886
      %9923 = vst.msk [vmem:[#allocation3 + $0x30] sm:$0xff] %vm2199, %v9887
      %9924 = vst.msk [vmem:[#allocation3 + $0x38] sm:$0xff] %vm2199, %v9888
      %9925 = vst.msk [vmem:[#allocation3 + $0x40] sm:$0xff] %vm2199, %v9889
      %9926 = vst.msk [vmem:[#allocation3 + $0x48] sm:$0xff] %vm2199, %v9890
      %9927 = vst.msk [vmem:[#allocation3 + $0x50] sm:$0xff] %vm2199, %v9891
      %9928 = vst.msk [vmem:[#allocation3 + $0x58] sm:$0xff] %vm2199, %v9892
      %9929 = vst.msk [vmem:[#allocation3 + $0x60] sm:$0xff] %vm2199, %v9893
      %9930 = vst.msk [vmem:[#allocation3 + $0x68] sm:$0xff] %vm2199, %v9894
      %9931 = vst.msk [vmem:[#allocation3 + $0x70] sm:$0xff] %vm2199, %v9895
      %9932 = vst.msk [vmem:[#allocation3 + $0x78] sm:$0xff] %vm2199, %v9896
      %9933 = vst.msk [vmem:[#allocation3 + $0x80] sm:$0xff] %vm2199, %v9897
      %9934 = vst.msk [vmem:[#allocation3 + $0x88] sm:$0xff] %vm2199, %v9898
      %9935 = vst.msk [vmem:[#allocation3 + $0x90] sm:$0xff] %vm2199, %v9899
      %9936 = vst.msk [vmem:[#allocation3 + $0x98] sm:$0xff] %vm2199, %v9900
      %9937 = vst.msk [vmem:[#allocation3 + $0xa0] sm:$0xff] %vm2199, %v9901
      %9938 = vst.msk [vmem:[#allocation3 + $0xa8] sm:$0xff] %vm2199, %v9902
      %9939 = vst.msk [vmem:[#allocation3 + $0xb0] sm:$0xff] %vm2199, %v9903
      %9940 = vst.msk [vmem:[#allocation3 + $0xb8] sm:$0xff] %vm2199, %v9904
      %9941 = vst.msk [vmem:[#allocation3 + $0xc0] sm:$0xff] %vm2199, %v9905
      %9942 = vst.msk [vmem:[#allocation3 + $0xc8] sm:$0xff] %vm2199, %v9906
      %9943 = vst.msk [vmem:[#allocation3 + $0xd0] sm:$0xff] %vm2199, %v9907
      %9944 = vst.msk [vmem:[#allocation3 + $0xd8] sm:$0xff] %vm2199, %v9908
      %9945 = vst.msk [vmem:[#allocation3 + $0xe0] sm:$0xff] %vm2199, %v9909
      %9946 = vst.msk [vmem:[#allocation3 + $0xe8] sm:$0xff] %vm2199, %v9910
      %9947 = vst.msk [vmem:[#allocation3 + $0xf0] sm:$0xff] %vm2199, %v9911
      %9948 = vst.msk [vmem:[#allocation3 + $0xf8] sm:$0xff] %vm2199, %v9912
      %9949 = vst.msk [vmem:[#allocation3 + $0x100] sm:$0xff] %vm2199, %v9913
      %9950 = vst.msk [vmem:[#allocation3 + $0x108] sm:$0xff] %vm2199, %v9914
      %9951 = vst.msk [vmem:[#allocation3 + $0x110] sm:$0xff] %vm2199, %v9915
      %9952 = vst.msk [vmem:[#allocation3 + $0x118] sm:$0xff] %vm2199, %v9916
      %v9953 = vld [vmem:[#allocation2 + $0x10] sm:$0xc]
      %v9954 = vld [vmem:[#allocation2 + $0x14] sm:$0xf]
      %v9955 = vld [vmem:[#allocation2 + $0x18] sm:$0xf]
      %v9956 = vld [vmem:[#allocation2 + $0x1c] sm:$0xf]
      %v9957 = vld [vmem:[#allocation2 + $0x20] sm:$0xf]
      %v9958 = vld [vmem:[#allocation2 + $0x24] sm:$0xf]
      %v9959 = vld [vmem:[#allocation2 + $0x28] sm:$0xf]
      %v9960 = vld [vmem:[#allocation2 + $0x2c] sm:$0xf]
      %v9961 = vld [vmem:[#allocation2 + $0x30] sm:$0xf]
      %v9962 = vld [vmem:[#allocation2 + $0x34] sm:$0xf]
      %v9963 = vld [vmem:[#allocation2 + $0x38] sm:$0xf]
      %v9964 = vld [vmem:[#allocation2 + $0x3c] sm:$0xf]
      %v9965 = vld [vmem:[#allocation2 + $0x40] sm:$0xf]
      %v9966 = vld [vmem:[#allocation2 + $0x44] sm:$0xf]
      %v9967 = vld [vmem:[#allocation2 + $0x48] sm:$0xf]
      %v9968 = vld [vmem:[#allocation2 + $0x4c] sm:$0xf]
      %v9969 = vld [vmem:[#allocation2 + $0x50] sm:$0xf]
      %v9970 = vld [vmem:[#allocation2 + $0x54] sm:$0xf]
      %v9971 = vld [vmem:[#allocation2 + $0x58] sm:$0xf]
      %v9972 = vld [vmem:[#allocation2 + $0x5c] sm:$0xf]
      %v9973 = vld [vmem:[#allocation2 + $0x60] sm:$0xf]
      %v9974 = vld [vmem:[#allocation2 + $0x64] sm:$0xf]
      %v9975 = vld [vmem:[#allocation2 + $0x68] sm:$0xf]
      %v9976 = vld [vmem:[#allocation2 + $0x6c] sm:$0xf]
      %v9977 = vld [vmem:[#allocation2 + $0x70] sm:$0xf]
      %v9978 = vld [vmem:[#allocation2 + $0x74] sm:$0xf]
      %v9979 = vld [vmem:[#allocation2 + $0x78] sm:$0xf]
      %v9980 = vld [vmem:[#allocation2 + $0x7c] sm:$0xf]
      %v9981 = vld [vmem:[#allocation2 + $0x80] sm:$0xf]
      %v9982 = vld [vmem:[#allocation2 + $0x84] sm:$0xf]
      %v9983 = vld [vmem:[#allocation2 + $0x88] sm:$0xf]
      %v9984 = vld [vmem:[#allocation2 + $0x8c] sm:$0xf]
      %v9985 = vld [vmem:[#allocation2 + $0x90] sm:$0xf]
      %v9986 = vld [vmem:[#allocation2 + $0x94] sm:$0xf]
      %v9987 = vld [vmem:[#allocation2 + $0x98] sm:$0xf]
      %v9988 = vld [vmem:[#allocation2 + $0x9c] sm:$0xf]
      %v9989 = vld [vmem:[#allocation2 + $0xa0] sm:$0x3]
      %s9990 = scalar_lea.vmem %s4, 12
      %v9991 = vld [vmem:[%s9990] sm:$0x3]
      %v10029 = vunpack.c.l.b16 %v9953
      %v10030 = vunpack.c.l.b16 %v9954
      %v10031 = vunpack.c.l.b16 %v9955
      %v10032 = vunpack.c.l.b16 %v9956
      %v10033 = vunpack.c.l.b16 %v9957
      %v10034 = vunpack.c.l.b16 %v9958
      %v10035 = vunpack.c.l.b16 %v9959
      %v10036 = vunpack.c.l.b16 %v9960
      %v10037 = vunpack.c.l.b16 %v9961
      %v10038 = vunpack.c.l.b16 %v9962
      %v10039 = vunpack.c.l.b16 %v9963
      %v10040 = vunpack.c.l.b16 %v9964
      %v10041 = vunpack.c.l.b16 %v9965
      %v10042 = vunpack.c.l.b16 %v9966
      %v10043 = vunpack.c.l.b16 %v9967
      %v10044 = vunpack.c.l.b16 %v9968
      %v10045 = vunpack.c.l.b16 %v9969
      %v10046 = vunpack.c.l.b16 %v9970
      %v10047 = vunpack.c.l.b16 %v9971
      %v10048 = vunpack.c.l.b16 %v9972
      %v10049 = vunpack.c.l.b16 %v9973
      %v10050 = vunpack.c.l.b16 %v9974
      %v10051 = vunpack.c.l.b16 %v9975
      %v10052 = vunpack.c.l.b16 %v9976
      %v10053 = vunpack.c.l.b16 %v9977
      %v10054 = vunpack.c.l.b16 %v9978
      %v10055 = vunpack.c.l.b16 %v9979
      %v10056 = vunpack.c.l.b16 %v9980
      %v10057 = vunpack.c.l.b16 %v9981
      %v10058 = vunpack.c.l.b16 %v9982
      %v10059 = vunpack.c.l.b16 %v9983
      %v10060 = vunpack.c.l.b16 %v9984
      %v10061 = vunpack.c.l.b16 %v9985
      %v10062 = vunpack.c.l.b16 %v9986
      %v10063 = vunpack.c.l.b16 %v9987
      %v10064 = vunpack.c.l.b16 %v9988
      %v10065 = vunpack.c.l.b16 %v9989
      %v10066 = vpack.c.b16 %v10030, %v10029
      %v10067 = vpack.c.b16 %v10032, %v10031
      %v10068 = vpack.c.b16 %v10034, %v10033
      %v10069 = vpack.c.b16 %v10036, %v10035
      %v10070 = vpack.c.b16 %v10038, %v10037
      %v10071 = vpack.c.b16 %v10040, %v10039
      %v10072 = vpack.c.b16 %v10042, %v10041
      %v10073 = vpack.c.b16 %v10044, %v10043
      %v10074 = vpack.c.b16 %v10046, %v10045
      %v10075 = vpack.c.b16 %v10048, %v10047
      %v10076 = vpack.c.b16 %v10050, %v10049
      %v10077 = vpack.c.b16 %v10052, %v10051
      %v10078 = vpack.c.b16 %v10054, %v10053
      %v10079 = vpack.c.b16 %v10056, %v10055
      %v10080 = vpack.c.b16 %v10058, %v10057
      %v10081 = vpack.c.b16 %v10060, %v10059
      %v10082 = vpack.c.b16 %v10062, %v10061
      %v10083 = vpack.c.b16 %v10064, %v10063
      %v10084 = vpack.c.b16 %v10065, %v10065
      %v10085 = vrot.slane %v10066, 2
      %v10086 = vrot.slane %v10067, 2
      %v10087 = vsel %vm4504, %v10085, %v10086
      %v10088 = vrot.slane %v10068, 2
      %v10089 = vsel %vm4504, %v10086, %v10088
      %v10090 = vrot.slane %v10069, 2
      %v10091 = vsel %vm4504, %v10088, %v10090
      %v10092 = vrot.slane %v10070, 2
      %v10093 = vsel %vm4504, %v10090, %v10092
      %v10094 = vrot.slane %v10071, 2
      %v10095 = vsel %vm4504, %v10092, %v10094
      %v10096 = vrot.slane %v10072, 2
      %v10097 = vsel %vm4504, %v10094, %v10096
      %v10098 = vrot.slane %v10073, 2
      %v10099 = vsel %vm4504, %v10096, %v10098
      %v10100 = vrot.slane %v10074, 2
      %v10101 = vsel %vm4504, %v10098, %v10100
      %v10102 = vrot.slane %v10075, 2
      %v10103 = vsel %vm4504, %v10100, %v10102
      %v10104 = vrot.slane %v10076, 2
      %v10105 = vsel %vm4504, %v10102, %v10104
      %v10106 = vrot.slane %v10077, 2
      %v10107 = vsel %vm4504, %v10104, %v10106
      %v10108 = vrot.slane %v10078, 2
      %v10109 = vsel %vm4504, %v10106, %v10108
      %v10110 = vrot.slane %v10079, 2
      %v10111 = vsel %vm4504, %v10108, %v10110
      %v10112 = vrot.slane %v10080, 2
      %v10113 = vsel %vm4504, %v10110, %v10112
      %v10114 = vrot.slane %v10081, 2
      %v10115 = vsel %vm4504, %v10112, %v10114
      %v10116 = vrot.slane %v10082, 2
      %v10117 = vsel %vm4504, %v10114, %v10116
      %v10118 = vrot.slane %v10083, 2
      %v10119 = vsel %vm4504, %v10116, %v10118
      %v10120 = vrot.slane %v10084, 2
      %v10121 = vsel %vm4504, %v10118, %v10120
      %v10123 = vsel %vm2199, %v10087, 0
      %v10126 = vsel %vm2199, %v10089, 0
      %v10129 = vsel %vm2199, %v10091, 0
      %v10132 = vsel %vm2199, %v10093, 0
      %v10135 = vsel %vm2199, %v10095, 0
      %v10138 = vsel %vm2199, %v10097, 0
      %v10141 = vsel %vm2199, %v10099, 0
      %v10144 = vsel %vm2199, %v10101, 0
      %v10147 = vsel %vm2199, %v10103, 0
      %v10150 = vsel %vm2199, %v10105, 0
      %v10153 = vsel %vm2199, %v10107, 0
      %v10156 = vsel %vm2199, %v10109, 0
      %v10159 = vsel %vm2199, %v10111, 0
      %v10162 = vsel %vm2199, %v10113, 0
      %v10165 = vsel %vm2199, %v10115, 0
      %v10168 = vsel %vm2199, %v10117, 0
      %v10171 = vsel %vm2199, %v10119, 0
      %v10174 = vsel %vm2199, %v10121, 0
      %v10177 = vsel %vm2254, %v9991, 0
      %10179 = vmatpush.bf16.msra.mxu0 0
      %10180 = vmatpush.bf16.msra.mxu0 0
      %10181 = vmatpush.bf16.msra.mxu0 0
      %10182 = vmatpush.bf16.msra.mxu0 0
      %10183 = vmatpush.bf16.msra.mxu0 0
      %10184 = vmatpush.bf16.msra.mxu0 0
      %10185 = vmatpush.bf16.msra.mxu0 0
      %10186 = vmatpush.bf16.msra.mxu0 %v10177
      %10187 = vmatmul.bf16.gmra.mxu0 %v10123
      %v10188 = vpop.f32.mrf.mxu0
      %v10189 = vadd.f32 0.0, %v10188
      %v10190 = vpop.f32.mrf.mxu0
      %v10191 = vadd.f32 0.0, %v10190
      %10192 = vmatmul.bf16.gmra.mxu0 %v10126
      %v10193 = vpop.f32.mrf.mxu0
      %v10194 = vadd.f32 0.0, %v10193
      %v10195 = vpop.f32.mrf.mxu0
      %v10196 = vadd.f32 0.0, %v10195
      %10197 = vmatmul.bf16.gmra.mxu0 %v10129
      %v10198 = vpop.f32.mrf.mxu0
      %v10199 = vadd.f32 0.0, %v10198
      %v10200 = vpop.f32.mrf.mxu0
      %v10201 = vadd.f32 0.0, %v10200
      %10202 = vmatmul.bf16.gmra.mxu0 %v10132
      %v10203 = vpop.f32.mrf.mxu0
      %v10204 = vadd.f32 0.0, %v10203
      %v10205 = vpop.f32.mrf.mxu0
      %v10206 = vadd.f32 0.0, %v10205
      %10207 = vmatmul.bf16.gmra.mxu0 %v10135
      %v10208 = vpop.f32.mrf.mxu0
      %v10209 = vadd.f32 0.0, %v10208
      %v10210 = vpop.f32.mrf.mxu0
      %v10211 = vadd.f32 0.0, %v10210
      %10212 = vmatmul.bf16.gmra.mxu0 %v10138
      %v10213 = vpop.f32.mrf.mxu0
      %v10214 = vadd.f32 0.0, %v10213
      %v10215 = vpop.f32.mrf.mxu0
      %v10216 = vadd.f32 0.0, %v10215
      %10217 = vmatmul.bf16.gmra.mxu0 %v10141
      %v10218 = vpop.f32.mrf.mxu0
      %v10219 = vadd.f32 0.0, %v10218
      %v10220 = vpop.f32.mrf.mxu0
      %v10221 = vadd.f32 0.0, %v10220
      %10222 = vmatmul.bf16.gmra.mxu0 %v10144
      %v10223 = vpop.f32.mrf.mxu0
      %v10224 = vadd.f32 0.0, %v10223
      %v10225 = vpop.f32.mrf.mxu0
      %v10226 = vadd.f32 0.0, %v10225
      %10227 = vmatmul.bf16.gmra.mxu0 %v10147
      %v10228 = vpop.f32.mrf.mxu0
      %v10229 = vadd.f32 0.0, %v10228
      %v10230 = vpop.f32.mrf.mxu0
      %v10231 = vadd.f32 0.0, %v10230
      %10232 = vmatmul.bf16.gmra.mxu0 %v10150
      %v10233 = vpop.f32.mrf.mxu0
      %v10234 = vadd.f32 0.0, %v10233
      %v10235 = vpop.f32.mrf.mxu0
      %v10236 = vadd.f32 0.0, %v10235
      %10237 = vmatmul.bf16.gmra.mxu0 %v10153
      %v10238 = vpop.f32.mrf.mxu0
      %v10239 = vadd.f32 0.0, %v10238
      %v10240 = vpop.f32.mrf.mxu0
      %v10241 = vadd.f32 0.0, %v10240
      %10242 = vmatmul.bf16.gmra.mxu0 %v10156
      %v10243 = vpop.f32.mrf.mxu0
      %v10244 = vadd.f32 0.0, %v10243
      %v10245 = vpop.f32.mrf.mxu0
      %v10246 = vadd.f32 0.0, %v10245
      %10247 = vmatmul.bf16.gmra.mxu0 %v10159
      %v10248 = vpop.f32.mrf.mxu0
      %v10249 = vadd.f32 0.0, %v10248
      %v10250 = vpop.f32.mrf.mxu0
      %v10251 = vadd.f32 0.0, %v10250
      %10252 = vmatmul.bf16.gmra.mxu0 %v10162
      %v10253 = vpop.f32.mrf.mxu0
      %v10254 = vadd.f32 0.0, %v10253
      %v10255 = vpop.f32.mrf.mxu0
      %v10256 = vadd.f32 0.0, %v10255
      %10257 = vmatmul.bf16.gmra.mxu0 %v10165
      %v10258 = vpop.f32.mrf.mxu0
      %v10259 = vadd.f32 0.0, %v10258
      %v10260 = vpop.f32.mrf.mxu0
      %v10261 = vadd.f32 0.0, %v10260
      %10262 = vmatmul.bf16.gmra.mxu0 %v10168
      %v10263 = vpop.f32.mrf.mxu0
      %v10264 = vadd.f32 0.0, %v10263
      %v10265 = vpop.f32.mrf.mxu0
      %v10266 = vadd.f32 0.0, %v10265
      %10267 = vmatmul.bf16.gmra.mxu0 %v10171
      %v10268 = vpop.f32.mrf.mxu0
      %v10269 = vadd.f32 0.0, %v10268
      %v10270 = vpop.f32.mrf.mxu0
      %v10271 = vadd.f32 0.0, %v10270
      %10272 = vmatmul.bf16.gmra.mxu0 %v10174
      %v10273 = vpop.f32.mrf.mxu0
      %v10274 = vadd.f32 0.0, %v10273
      %v10275 = vpop.f32.mrf.mxu0
      %v10276 = vadd.f32 0.0, %v10275
      %10277 = vdwg.mxu0
      %v10278 = vld [vmem:[#allocation3] sm:$0xff]
      %v10279 = vld [vmem:[#allocation3 + $0x8] sm:$0xff]
      %v10280 = vld [vmem:[#allocation3 + $0x10] sm:$0xff]
      %v10281 = vld [vmem:[#allocation3 + $0x18] sm:$0xff]
      %v10282 = vld [vmem:[#allocation3 + $0x20] sm:$0xff]
      %v10283 = vld [vmem:[#allocation3 + $0x28] sm:$0xff]
      %v10284 = vld [vmem:[#allocation3 + $0x30] sm:$0xff]
      %v10285 = vld [vmem:[#allocation3 + $0x38] sm:$0xff]
      %v10286 = vld [vmem:[#allocation3 + $0x40] sm:$0xff]
      %v10287 = vld [vmem:[#allocation3 + $0x48] sm:$0xff]
      %v10288 = vld [vmem:[#allocation3 + $0x50] sm:$0xff]
      %v10289 = vld [vmem:[#allocation3 + $0x58] sm:$0xff]
      %v10290 = vld [vmem:[#allocation3 + $0x60] sm:$0xff]
      %v10291 = vld [vmem:[#allocation3 + $0x68] sm:$0xff]
      %v10292 = vld [vmem:[#allocation3 + $0x70] sm:$0xff]
      %v10293 = vld [vmem:[#allocation3 + $0x78] sm:$0xff]
      %v10294 = vld [vmem:[#allocation3 + $0x80] sm:$0xff]
      %v10295 = vld [vmem:[#allocation3 + $0x88] sm:$0xff]
      %v10296 = vld [vmem:[#allocation3 + $0x90] sm:$0xff]
      %v10297 = vld [vmem:[#allocation3 + $0x98] sm:$0xff]
      %v10298 = vld [vmem:[#allocation3 + $0xa0] sm:$0xff]
      %v10299 = vld [vmem:[#allocation3 + $0xa8] sm:$0xff]
      %v10300 = vld [vmem:[#allocation3 + $0xb0] sm:$0xff]
      %v10301 = vld [vmem:[#allocation3 + $0xb8] sm:$0xff]
      %v10302 = vld [vmem:[#allocation3 + $0xc0] sm:$0xff]
      %v10303 = vld [vmem:[#allocation3 + $0xc8] sm:$0xff]
      %v10304 = vld [vmem:[#allocation3 + $0xd0] sm:$0xff]
      %v10305 = vld [vmem:[#allocation3 + $0xd8] sm:$0xff]
      %v10306 = vld [vmem:[#allocation3 + $0xe0] sm:$0xff]
      %v10307 = vld [vmem:[#allocation3 + $0xe8] sm:$0xff]
      %v10308 = vld [vmem:[#allocation3 + $0xf0] sm:$0xff]
      %v10309 = vld [vmem:[#allocation3 + $0xf8] sm:$0xff]
      %v10310 = vld [vmem:[#allocation3 + $0x100] sm:$0xff]
      %v10311 = vld [vmem:[#allocation3 + $0x108] sm:$0xff]
      %v10312 = vld [vmem:[#allocation3 + $0x110] sm:$0xff]
      %v10313 = vld [vmem:[#allocation3 + $0x118] sm:$0xff]
      %v10314 = vadd.f32 %v10278, %v10189
      %v10315 = vadd.f32 %v10279, %v10191
      %v10316 = vadd.f32 %v10280, %v10194
      %v10317 = vadd.f32 %v10281, %v10196
      %v10318 = vadd.f32 %v10282, %v10199
      %v10319 = vadd.f32 %v10283, %v10201
      %v10320 = vadd.f32 %v10284, %v10204
      %v10321 = vadd.f32 %v10285, %v10206
      %v10322 = vadd.f32 %v10286, %v10209
      %v10323 = vadd.f32 %v10287, %v10211
      %v10324 = vadd.f32 %v10288, %v10214
      %v10325 = vadd.f32 %v10289, %v10216
      %v10326 = vadd.f32 %v10290, %v10219
      %v10327 = vadd.f32 %v10291, %v10221
      %v10328 = vadd.f32 %v10292, %v10224
      %v10329 = vadd.f32 %v10293, %v10226
      %v10330 = vadd.f32 %v10294, %v10229
      %v10331 = vadd.f32 %v10295, %v10231
      %v10332 = vadd.f32 %v10296, %v10234
      %v10333 = vadd.f32 %v10297, %v10236
      %v10334 = vadd.f32 %v10298, %v10239
      %v10335 = vadd.f32 %v10299, %v10241
      %v10336 = vadd.f32 %v10300, %v10244
      %v10337 = vadd.f32 %v10301, %v10246
      %v10338 = vadd.f32 %v10302, %v10249
      %v10339 = vadd.f32 %v10303, %v10251
      %v10340 = vadd.f32 %v10304, %v10254
      %v10341 = vadd.f32 %v10305, %v10256
      %v10342 = vadd.f32 %v10306, %v10259
      %v10343 = vadd.f32 %v10307, %v10261
      %v10344 = vadd.f32 %v10308, %v10264
      %v10345 = vadd.f32 %v10309, %v10266
      %v10346 = vadd.f32 %v10310, %v10269
      %v10347 = vadd.f32 %v10311, %v10271
      %v10348 = vadd.f32 %v10312, %v10274
      %v10349 = vadd.f32 %v10313, %v10276
      %10350 = vst.msk [vmem:[#allocation3] sm:$0xff] %vm2199, %v10314
      %10351 = vst.msk [vmem:[#allocation3 + $0x8] sm:$0xff] %vm2199, %v10315
      %10352 = vst.msk [vmem:[#allocation3 + $0x10] sm:$0xff] %vm2199, %v10316
      %10353 = vst.msk [vmem:[#allocation3 + $0x18] sm:$0xff] %vm2199, %v10317
      %10354 = vst.msk [vmem:[#allocation3 + $0x20] sm:$0xff] %vm2199, %v10318
      %10355 = vst.msk [vmem:[#allocation3 + $0x28] sm:$0xff] %vm2199, %v10319
      %10356 = vst.msk [vmem:[#allocation3 + $0x30] sm:$0xff] %vm2199, %v10320
      %10357 = vst.msk [vmem:[#allocation3 + $0x38] sm:$0xff] %vm2199, %v10321
      %10358 = vst.msk [vmem:[#allocation3 + $0x40] sm:$0xff] %vm2199, %v10322
      %10359 = vst.msk [vmem:[#allocation3 + $0x48] sm:$0xff] %vm2199, %v10323
      %10360 = vst.msk [vmem:[#allocation3 + $0x50] sm:$0xff] %vm2199, %v10324
      %10361 = vst.msk [vmem:[#allocation3 + $0x58] sm:$0xff] %vm2199, %v10325
      %10362 = vst.msk [vmem:[#allocation3 + $0x60] sm:$0xff] %vm2199, %v10326
      %10363 = vst.msk [vmem:[#allocation3 + $0x68] sm:$0xff] %vm2199, %v10327
      %10364 = vst.msk [vmem:[#allocation3 + $0x70] sm:$0xff] %vm2199, %v10328
      %10365 = vst.msk [vmem:[#allocation3 + $0x78] sm:$0xff] %vm2199, %v10329
      %10366 = vst.msk [vmem:[#allocation3 + $0x80] sm:$0xff] %vm2199, %v10330
      %10367 = vst.msk [vmem:[#allocation3 + $0x88] sm:$0xff] %vm2199, %v10331
      %10368 = vst.msk [vmem:[#allocation3 + $0x90] sm:$0xff] %vm2199, %v10332
      %10369 = vst.msk [vmem:[#allocation3 + $0x98] sm:$0xff] %vm2199, %v10333
      %10370 = vst.msk [vmem:[#allocation3 + $0xa0] sm:$0xff] %vm2199, %v10334
      %10371 = vst.msk [vmem:[#allocation3 + $0xa8] sm:$0xff] %vm2199, %v10335
      %10372 = vst.msk [vmem:[#allocation3 + $0xb0] sm:$0xff] %vm2199, %v10336
      %10373 = vst.msk [vmem:[#allocation3 + $0xb8] sm:$0xff] %vm2199, %v10337
      %10374 = vst.msk [vmem:[#allocation3 + $0xc0] sm:$0xff] %vm2199, %v10338
      %10375 = vst.msk [vmem:[#allocation3 + $0xc8] sm:$0xff] %vm2199, %v10339
      %10376 = vst.msk [vmem:[#allocation3 + $0xd0] sm:$0xff] %vm2199, %v10340
      %10377 = vst.msk [vmem:[#allocation3 + $0xd8] sm:$0xff] %vm2199, %v10341
      %10378 = vst.msk [vmem:[#allocation3 + $0xe0] sm:$0xff] %vm2199, %v10342
      %10379 = vst.msk [vmem:[#allocation3 + $0xe8] sm:$0xff] %vm2199, %v10343
      %10380 = vst.msk [vmem:[#allocation3 + $0xf0] sm:$0xff] %vm2199, %v10344
      %10381 = vst.msk [vmem:[#allocation3 + $0xf8] sm:$0xff] %vm2199, %v10345
      %10382 = vst.msk [vmem:[#allocation3 + $0x100] sm:$0xff] %vm2199, %v10346
      %10383 = vst.msk [vmem:[#allocation3 + $0x108] sm:$0xff] %vm2199, %v10347
      %10384 = vst.msk [vmem:[#allocation3 + $0x110] sm:$0xff] %vm2199, %v10348
      %10385 = vst.msk [vmem:[#allocation3 + $0x118] sm:$0xff] %vm2199, %v10349
      %v10386 = vld [vmem:[#allocation2 + $0x10] sm:$0xc]
      %v10387 = vld [vmem:[#allocation2 + $0x14] sm:$0xf]
      %v10388 = vld [vmem:[#allocation2 + $0x18] sm:$0xf]
      %v10389 = vld [vmem:[#allocation2 + $0x1c] sm:$0xf]
      %v10390 = vld [vmem:[#allocation2 + $0x20] sm:$0xf]
      %v10391 = vld [vmem:[#allocation2 + $0x24] sm:$0xf]
      %v10392 = vld [vmem:[#allocation2 + $0x28] sm:$0xf]
      %v10393 = vld [vmem:[#allocation2 + $0x2c] sm:$0xf]
      %v10394 = vld [vmem:[#allocation2 + $0x30] sm:$0xf]
      %v10395 = vld [vmem:[#allocation2 + $0x34] sm:$0xf]
      %v10396 = vld [vmem:[#allocation2 + $0x38] sm:$0xf]
      %v10397 = vld [vmem:[#allocation2 + $0x3c] sm:$0xf]
      %v10398 = vld [vmem:[#allocation2 + $0x40] sm:$0xf]
      %v10399 = vld [vmem:[#allocation2 + $0x44] sm:$0xf]
      %v10400 = vld [vmem:[#allocation2 + $0x48] sm:$0xf]
      %v10401 = vld [vmem:[#allocation2 + $0x4c] sm:$0xf]
      %v10402 = vld [vmem:[#allocation2 + $0x50] sm:$0xf]
      %v10403 = vld [vmem:[#allocation2 + $0x54] sm:$0xf]
      %v10404 = vld [vmem:[#allocation2 + $0x58] sm:$0xf]
      %v10405 = vld [vmem:[#allocation2 + $0x5c] sm:$0xf]
      %v10406 = vld [vmem:[#allocation2 + $0x60] sm:$0xf]
      %v10407 = vld [vmem:[#allocation2 + $0x64] sm:$0xf]
      %v10408 = vld [vmem:[#allocation2 + $0x68] sm:$0xf]
      %v10409 = vld [vmem:[#allocation2 + $0x6c] sm:$0xf]
      %v10410 = vld [vmem:[#allocation2 + $0x70] sm:$0xf]
      %v10411 = vld [vmem:[#allocation2 + $0x74] sm:$0xf]
      %v10412 = vld [vmem:[#allocation2 + $0x78] sm:$0xf]
      %v10413 = vld [vmem:[#allocation2 + $0x7c] sm:$0xf]
      %v10414 = vld [vmem:[#allocation2 + $0x80] sm:$0xf]
      %v10415 = vld [vmem:[#allocation2 + $0x84] sm:$0xf]
      %v10416 = vld [vmem:[#allocation2 + $0x88] sm:$0xf]
      %v10417 = vld [vmem:[#allocation2 + $0x8c] sm:$0xf]
      %v10418 = vld [vmem:[#allocation2 + $0x90] sm:$0xf]
      %v10419 = vld [vmem:[#allocation2 + $0x94] sm:$0xf]
      %v10420 = vld [vmem:[#allocation2 + $0x98] sm:$0xf]
      %v10421 = vld [vmem:[#allocation2 + $0x9c] sm:$0xf]
      %v10422 = vld [vmem:[#allocation2 + $0xa0] sm:$0x7]
      %s10423 = scalar_lea.vmem %s4, 14
      %v10424 = vld [vmem:[%s10423] sm:$0x3]
      %v10462 = vunpack.c.l.b16 %v10386
      %v10463 = vunpack.c.l.b16 %v10387
      %v10464 = vunpack.c.l.b16 %v10388
      %v10465 = vunpack.c.l.b16 %v10389
      %v10466 = vunpack.c.l.b16 %v10390
      %v10467 = vunpack.c.l.b16 %v10391
      %v10468 = vunpack.c.l.b16 %v10392
      %v10469 = vunpack.c.l.b16 %v10393
      %v10470 = vunpack.c.l.b16 %v10394
      %v10471 = vunpack.c.l.b16 %v10395
      %v10472 = vunpack.c.l.b16 %v10396
      %v10473 = vunpack.c.l.b16 %v10397
      %v10474 = vunpack.c.l.b16 %v10398
      %v10475 = vunpack.c.l.b16 %v10399
      %v10476 = vunpack.c.l.b16 %v10400
      %v10477 = vunpack.c.l.b16 %v10401
      %v10478 = vunpack.c.l.b16 %v10402
      %v10479 = vunpack.c.l.b16 %v10403
      %v10480 = vunpack.c.l.b16 %v10404
      %v10481 = vunpack.c.l.b16 %v10405
      %v10482 = vunpack.c.l.b16 %v10406
      %v10483 = vunpack.c.l.b16 %v10407
      %v10484 = vunpack.c.l.b16 %v10408
      %v10485 = vunpack.c.l.b16 %v10409
      %v10486 = vunpack.c.l.b16 %v10410
      %v10487 = vunpack.c.l.b16 %v10411
      %v10488 = vunpack.c.l.b16 %v10412
      %v10489 = vunpack.c.l.b16 %v10413
      %v10490 = vunpack.c.l.b16 %v10414
      %v10491 = vunpack.c.l.b16 %v10415
      %v10492 = vunpack.c.l.b16 %v10416
      %v10493 = vunpack.c.l.b16 %v10417
      %v10494 = vunpack.c.l.b16 %v10418
      %v10495 = vunpack.c.l.b16 %v10419
      %v10496 = vunpack.c.l.b16 %v10420
      %v10497 = vunpack.c.l.b16 %v10421
      %v10498 = vunpack.c.l.b16 %v10422
      %v10499 = vpack.c.b16 %v10463, %v10462
      %v10500 = vpack.c.b16 %v10465, %v10464
      %v10501 = vpack.c.b16 %v10467, %v10466
      %v10502 = vpack.c.b16 %v10469, %v10468
      %v10503 = vpack.c.b16 %v10471, %v10470
      %v10504 = vpack.c.b16 %v10473, %v10472
      %v10505 = vpack.c.b16 %v10475, %v10474
      %v10506 = vpack.c.b16 %v10477, %v10476
      %v10507 = vpack.c.b16 %v10479, %v10478
      %v10508 = vpack.c.b16 %v10481, %v10480
      %v10509 = vpack.c.b16 %v10483, %v10482
      %v10510 = vpack.c.b16 %v10485, %v10484
      %v10511 = vpack.c.b16 %v10487, %v10486
      %v10512 = vpack.c.b16 %v10489, %v10488
      %v10513 = vpack.c.b16 %v10491, %v10490
      %v10514 = vpack.c.b16 %v10493, %v10492
      %v10515 = vpack.c.b16 %v10495, %v10494
      %v10516 = vpack.c.b16 %v10497, %v10496
      %v10517 = vpack.c.b16 %v10498, %v10498
      %v10519 = vshrl.u32 %v10499, 16
      %v10521 = vrot.slane %v10519, 2
      %v10522 = vshll.u32 %v10499, 16
      %v10524 = vrot.slane %v10522, 3
      %v10525 = vor.u32 %v10521, %v10524
      %v10527 = vshrl.u32 %v10500, 16
      %v10529 = vrot.slane %v10527, 2
      %v10530 = vshll.u32 %v10500, 16
      %v10532 = vrot.slane %v10530, 3
      %v10533 = vor.u32 %v10529, %v10532
      %v10534 = vsel %vm5371, %v10525, %v10533
      %v10536 = vshrl.u32 %v10501, 16
      %v10538 = vrot.slane %v10536, 2
      %v10539 = vshll.u32 %v10501, 16
      %v10541 = vrot.slane %v10539, 3
      %v10542 = vor.u32 %v10538, %v10541
      %v10543 = vsel %vm5371, %v10533, %v10542
      %v10545 = vshrl.u32 %v10502, 16
      %v10547 = vrot.slane %v10545, 2
      %v10548 = vshll.u32 %v10502, 16
      %v10550 = vrot.slane %v10548, 3
      %v10551 = vor.u32 %v10547, %v10550
      %v10552 = vsel %vm5371, %v10542, %v10551
      %v10554 = vshrl.u32 %v10503, 16
      %v10556 = vrot.slane %v10554, 2
      %v10557 = vshll.u32 %v10503, 16
      %v10559 = vrot.slane %v10557, 3
      %v10560 = vor.u32 %v10556, %v10559
      %v10561 = vsel %vm5371, %v10551, %v10560
      %v10563 = vshrl.u32 %v10504, 16
      %v10565 = vrot.slane %v10563, 2
      %v10566 = vshll.u32 %v10504, 16
      %v10568 = vrot.slane %v10566, 3
      %v10569 = vor.u32 %v10565, %v10568
      %v10570 = vsel %vm5371, %v10560, %v10569
      %v10572 = vshrl.u32 %v10505, 16
      %v10574 = vrot.slane %v10572, 2
      %v10575 = vshll.u32 %v10505, 16
      %v10577 = vrot.slane %v10575, 3
      %v10578 = vor.u32 %v10574, %v10577
      %v10579 = vsel %vm5371, %v10569, %v10578
      %v10581 = vshrl.u32 %v10506, 16
      %v10583 = vrot.slane %v10581, 2
      %v10584 = vshll.u32 %v10506, 16
      %v10586 = vrot.slane %v10584, 3
      %v10587 = vor.u32 %v10583, %v10586
      %v10588 = vsel %vm5371, %v10578, %v10587
      %v10590 = vshrl.u32 %v10507, 16
      %v10592 = vrot.slane %v10590, 2
      %v10593 = vshll.u32 %v10507, 16
      %v10595 = vrot.slane %v10593, 3
      %v10596 = vor.u32 %v10592, %v10595
      %v10597 = vsel %vm5371, %v10587, %v10596
      %v10599 = vshrl.u32 %v10508, 16
      %v10601 = vrot.slane %v10599, 2
      %v10602 = vshll.u32 %v10508, 16
      %v10604 = vrot.slane %v10602, 3
      %v10605 = vor.u32 %v10601, %v10604
      %v10606 = vsel %vm5371, %v10596, %v10605
      %v10608 = vshrl.u32 %v10509, 16
      %v10610 = vrot.slane %v10608, 2
      %v10611 = vshll.u32 %v10509, 16
      %v10613 = vrot.slane %v10611, 3
      %v10614 = vor.u32 %v10610, %v10613
      %v10615 = vsel %vm5371, %v10605, %v10614
      %v10617 = vshrl.u32 %v10510, 16
      %v10619 = vrot.slane %v10617, 2
      %v10620 = vshll.u32 %v10510, 16
      %v10622 = vrot.slane %v10620, 3
      %v10623 = vor.u32 %v10619, %v10622
      %v10624 = vsel %vm5371, %v10614, %v10623
      %v10626 = vshrl.u32 %v10511, 16
      %v10628 = vrot.slane %v10626, 2
      %v10629 = vshll.u32 %v10511, 16
      %v10631 = vrot.slane %v10629, 3
      %v10632 = vor.u32 %v10628, %v10631
      %v10633 = vsel %vm5371, %v10623, %v10632
      %v10635 = vshrl.u32 %v10512, 16
      %v10637 = vrot.slane %v10635, 2
      %v10638 = vshll.u32 %v10512, 16
      %v10640 = vrot.slane %v10638, 3
      %v10641 = vor.u32 %v10637, %v10640
      %v10642 = vsel %vm5371, %v10632, %v10641
      %v10644 = vshrl.u32 %v10513, 16
      %v10646 = vrot.slane %v10644, 2
      %v10647 = vshll.u32 %v10513, 16
      %v10649 = vrot.slane %v10647, 3
      %v10650 = vor.u32 %v10646, %v10649
      %v10651 = vsel %vm5371, %v10641, %v10650
      %v10653 = vshrl.u32 %v10514, 16
      %v10655 = vrot.slane %v10653, 2
      %v10656 = vshll.u32 %v10514, 16
      %v10658 = vrot.slane %v10656, 3
      %v10659 = vor.u32 %v10655, %v10658
      %v10660 = vsel %vm5371, %v10650, %v10659
      %v10662 = vshrl.u32 %v10515, 16
      %v10664 = vrot.slane %v10662, 2
      %v10665 = vshll.u32 %v10515, 16
      %v10667 = vrot.slane %v10665, 3
      %v10668 = vor.u32 %v10664, %v10667
      %v10669 = vsel %vm5371, %v10659, %v10668
      %v10671 = vshrl.u32 %v10516, 16
      %v10673 = vrot.slane %v10671, 2
      %v10674 = vshll.u32 %v10516, 16
      %v10676 = vrot.slane %v10674, 3
      %v10677 = vor.u32 %v10673, %v10676
      %v10678 = vsel %vm5371, %v10668, %v10677
      %v10680 = vshrl.u32 %v10517, 16
      %v10682 = vrot.slane %v10680, 2
      %v10683 = vshll.u32 %v10517, 16
      %v10685 = vrot.slane %v10683, 3
      %v10686 = vor.u32 %v10682, %v10685
      %v10687 = vsel %vm5371, %v10677, %v10686
      %v10689 = vsel %vm2199, %v10534, 0
      %v10692 = vsel %vm2199, %v10543, 0
      %v10695 = vsel %vm2199, %v10552, 0
      %v10698 = vsel %vm2199, %v10561, 0
      %v10701 = vsel %vm2199, %v10570, 0
      %v10704 = vsel %vm2199, %v10579, 0
      %v10707 = vsel %vm2199, %v10588, 0
      %v10710 = vsel %vm2199, %v10597, 0
      %v10713 = vsel %vm2199, %v10606, 0
      %v10716 = vsel %vm2199, %v10615, 0
      %v10719 = vsel %vm2199, %v10624, 0
      %v10722 = vsel %vm2199, %v10633, 0
      %v10725 = vsel %vm2199, %v10642, 0
      %v10728 = vsel %vm2199, %v10651, 0
      %v10731 = vsel %vm2199, %v10660, 0
      %v10734 = vsel %vm2199, %v10669, 0
      %v10737 = vsel %vm2199, %v10678, 0
      %v10740 = vsel %vm2199, %v10687, 0
      %v10743 = vsel %vm2254, %v10424, 0
      %10745 = vmatpush.bf16.msra.mxu0 0
      %10746 = vmatpush.bf16.msra.mxu0 0
      %10747 = vmatpush.bf16.msra.mxu0 0
      %10748 = vmatpush.bf16.msra.mxu0 0
      %10749 = vmatpush.bf16.msra.mxu0 0
      %10750 = vmatpush.bf16.msra.mxu0 0
      %10751 = vmatpush.bf16.msra.mxu0 0
      %10752 = vmatpush.bf16.msra.mxu0 %v10743
      %10753 = vmatmul.bf16.gmra.mxu0 %v10689
      %v10754 = vpop.f32.mrf.mxu0
      %v10755 = vadd.f32 0.0, %v10754
      %v10756 = vpop.f32.mrf.mxu0
      %v10757 = vadd.f32 0.0, %v10756
      %10758 = vmatmul.bf16.gmra.mxu0 %v10692
      %v10759 = vpop.f32.mrf.mxu0
      %v10760 = vadd.f32 0.0, %v10759
      %v10761 = vpop.f32.mrf.mxu0
      %v10762 = vadd.f32 0.0, %v10761
      %10763 = vmatmul.bf16.gmra.mxu0 %v10695
      %v10764 = vpop.f32.mrf.mxu0
      %v10765 = vadd.f32 0.0, %v10764
      %v10766 = vpop.f32.mrf.mxu0
      %v10767 = vadd.f32 0.0, %v10766
      %10768 = vmatmul.bf16.gmra.mxu0 %v10698
      %v10769 = vpop.f32.mrf.mxu0
      %v10770 = vadd.f32 0.0, %v10769
      %v10771 = vpop.f32.mrf.mxu0
      %v10772 = vadd.f32 0.0, %v10771
      %10773 = vmatmul.bf16.gmra.mxu0 %v10701
      %v10774 = vpop.f32.mrf.mxu0
      %v10775 = vadd.f32 0.0, %v10774
      %v10776 = vpop.f32.mrf.mxu0
      %v10777 = vadd.f32 0.0, %v10776
      %10778 = vmatmul.bf16.gmra.mxu0 %v10704
      %v10779 = vpop.f32.mrf.mxu0
      %v10780 = vadd.f32 0.0, %v10779
      %v10781 = vpop.f32.mrf.mxu0
      %v10782 = vadd.f32 0.0, %v10781
      %10783 = vmatmul.bf16.gmra.mxu0 %v10707
      %v10784 = vpop.f32.mrf.mxu0
      %v10785 = vadd.f32 0.0, %v10784
      %v10786 = vpop.f32.mrf.mxu0
      %v10787 = vadd.f32 0.0, %v10786
      %10788 = vmatmul.bf16.gmra.mxu0 %v10710
      %v10789 = vpop.f32.mrf.mxu0
      %v10790 = vadd.f32 0.0, %v10789
      %v10791 = vpop.f32.mrf.mxu0
      %v10792 = vadd.f32 0.0, %v10791
      %10793 = vmatmul.bf16.gmra.mxu0 %v10713
      %v10794 = vpop.f32.mrf.mxu0
      %v10795 = vadd.f32 0.0, %v10794
      %v10796 = vpop.f32.mrf.mxu0
      %v10797 = vadd.f32 0.0, %v10796
      %10798 = vmatmul.bf16.gmra.mxu0 %v10716
      %v10799 = vpop.f32.mrf.mxu0
      %v10800 = vadd.f32 0.0, %v10799
      %v10801 = vpop.f32.mrf.mxu0
      %v10802 = vadd.f32 0.0, %v10801
      %10803 = vmatmul.bf16.gmra.mxu0 %v10719
      %v10804 = vpop.f32.mrf.mxu0
      %v10805 = vadd.f32 0.0, %v10804
      %v10806 = vpop.f32.mrf.mxu0
      %v10807 = vadd.f32 0.0, %v10806
      %10808 = vmatmul.bf16.gmra.mxu0 %v10722
      %v10809 = vpop.f32.mrf.mxu0
      %v10810 = vadd.f32 0.0, %v10809
      %v10811 = vpop.f32.mrf.mxu0
      %v10812 = vadd.f32 0.0, %v10811
      %10813 = vmatmul.bf16.gmra.mxu0 %v10725
      %v10814 = vpop.f32.mrf.mxu0
      %v10815 = vadd.f32 0.0, %v10814
      %v10816 = vpop.f32.mrf.mxu0
      %v10817 = vadd.f32 0.0, %v10816
      %10818 = vmatmul.bf16.gmra.mxu0 %v10728
      %v10819 = vpop.f32.mrf.mxu0
      %v10820 = vadd.f32 0.0, %v10819
      %v10821 = vpop.f32.mrf.mxu0
      %v10822 = vadd.f32 0.0, %v10821
      %10823 = vmatmul.bf16.gmra.mxu0 %v10731
      %v10824 = vpop.f32.mrf.mxu0
      %v10825 = vadd.f32 0.0, %v10824
      %v10826 = vpop.f32.mrf.mxu0
      %v10827 = vadd.f32 0.0, %v10826
      %10828 = vmatmul.bf16.gmra.mxu0 %v10734
      %v10829 = vpop.f32.mrf.mxu0
      %v10830 = vadd.f32 0.0, %v10829
      %v10831 = vpop.f32.mrf.mxu0
      %v10832 = vadd.f32 0.0, %v10831
      %10833 = vmatmul.bf16.gmra.mxu0 %v10737
      %v10834 = vpop.f32.mrf.mxu0
      %v10835 = vadd.f32 0.0, %v10834
      %v10836 = vpop.f32.mrf.mxu0
      %v10837 = vadd.f32 0.0, %v10836
      %10838 = vmatmul.bf16.gmra.mxu0 %v10740
      %v10839 = vpop.f32.mrf.mxu0
      %v10840 = vadd.f32 0.0, %v10839
      %v10841 = vpop.f32.mrf.mxu0
      %v10842 = vadd.f32 0.0, %v10841
      %10843 = vdwg.mxu0
      %v10844 = vld [vmem:[#allocation3] sm:$0xff]
      %v10845 = vld [vmem:[#allocation3 + $0x8] sm:$0xff]
      %v10846 = vld [vmem:[#allocation3 + $0x10] sm:$0xff]
      %v10847 = vld [vmem:[#allocation3 + $0x18] sm:$0xff]
      %v10848 = vld [vmem:[#allocation3 + $0x20] sm:$0xff]
      %v10849 = vld [vmem:[#allocation3 + $0x28] sm:$0xff]
      %v10850 = vld [vmem:[#allocation3 + $0x30] sm:$0xff]
      %v10851 = vld [vmem:[#allocation3 + $0x38] sm:$0xff]
      %v10852 = vld [vmem:[#allocation3 + $0x40] sm:$0xff]
      %v10853 = vld [vmem:[#allocation3 + $0x48] sm:$0xff]
      %v10854 = vld [vmem:[#allocation3 + $0x50] sm:$0xff]
      %v10855 = vld [vmem:[#allocation3 + $0x58] sm:$0xff]
      %v10856 = vld [vmem:[#allocation3 + $0x60] sm:$0xff]
      %v10857 = vld [vmem:[#allocation3 + $0x68] sm:$0xff]
      %v10858 = vld [vmem:[#allocation3 + $0x70] sm:$0xff]
      %v10859 = vld [vmem:[#allocation3 + $0x78] sm:$0xff]
      %v10860 = vld [vmem:[#allocation3 + $0x80] sm:$0xff]
      %v10861 = vld [vmem:[#allocation3 + $0x88] sm:$0xff]
      %v10862 = vld [vmem:[#allocation3 + $0x90] sm:$0xff]
      %v10863 = vld [vmem:[#allocation3 + $0x98] sm:$0xff]
      %v10864 = vld [vmem:[#allocation3 + $0xa0] sm:$0xff]
      %v10865 = vld [vmem:[#allocation3 + $0xa8] sm:$0xff]
      %v10866 = vld [vmem:[#allocation3 + $0xb0] sm:$0xff]
      %v10867 = vld [vmem:[#allocation3 + $0xb8] sm:$0xff]
      %v10868 = vld [vmem:[#allocation3 + $0xc0] sm:$0xff]
      %v10869 = vld [vmem:[#allocation3 + $0xc8] sm:$0xff]
      %v10870 = vld [vmem:[#allocation3 + $0xd0] sm:$0xff]
      %v10871 = vld [vmem:[#allocation3 + $0xd8] sm:$0xff]
      %v10872 = vld [vmem:[#allocation3 + $0xe0] sm:$0xff]
      %v10873 = vld [vmem:[#allocation3 + $0xe8] sm:$0xff]
      %v10874 = vld [vmem:[#allocation3 + $0xf0] sm:$0xff]
      %v10875 = vld [vmem:[#allocation3 + $0xf8] sm:$0xff]
      %v10876 = vld [vmem:[#allocation3 + $0x100] sm:$0xff]
      %v10877 = vld [vmem:[#allocation3 + $0x108] sm:$0xff]
      %v10878 = vld [vmem:[#allocation3 + $0x110] sm:$0xff]
      %v10879 = vld [vmem:[#allocation3 + $0x118] sm:$0xff]
      %v10880 = vadd.f32 %v10844, %v10755
      %v10881 = vadd.f32 %v10845, %v10757
      %v10882 = vadd.f32 %v10846, %v10760
      %v10883 = vadd.f32 %v10847, %v10762
      %v10884 = vadd.f32 %v10848, %v10765
      %v10885 = vadd.f32 %v10849, %v10767
      %v10886 = vadd.f32 %v10850, %v10770
      %v10887 = vadd.f32 %v10851, %v10772
      %v10888 = vadd.f32 %v10852, %v10775
      %v10889 = vadd.f32 %v10853, %v10777
      %v10890 = vadd.f32 %v10854, %v10780
      %v10891 = vadd.f32 %v10855, %v10782
      %v10892 = vadd.f32 %v10856, %v10785
      %v10893 = vadd.f32 %v10857, %v10787
      %v10894 = vadd.f32 %v10858, %v10790
      %v10895 = vadd.f32 %v10859, %v10792
      %v10896 = vadd.f32 %v10860, %v10795
      %v10897 = vadd.f32 %v10861, %v10797
      %v10898 = vadd.f32 %v10862, %v10800
      %v10899 = vadd.f32 %v10863, %v10802
      %v10900 = vadd.f32 %v10864, %v10805
      %v10901 = vadd.f32 %v10865, %v10807
      %v10902 = vadd.f32 %v10866, %v10810
      %v10903 = vadd.f32 %v10867, %v10812
      %v10904 = vadd.f32 %v10868, %v10815
      %v10905 = vadd.f32 %v10869, %v10817
      %v10906 = vadd.f32 %v10870, %v10820
      %v10907 = vadd.f32 %v10871, %v10822
      %v10908 = vadd.f32 %v10872, %v10825
      %v10909 = vadd.f32 %v10873, %v10827
      %v10910 = vadd.f32 %v10874, %v10830
      %v10911 = vadd.f32 %v10875, %v10832
      %v10912 = vadd.f32 %v10876, %v10835
      %v10913 = vadd.f32 %v10877, %v10837
      %v10914 = vadd.f32 %v10878, %v10840
      %v10915 = vadd.f32 %v10879, %v10842
      %10916 = vst.msk [vmem:[#allocation3] sm:$0xff] %vm2199, %v10880
      %10917 = vst.msk [vmem:[#allocation3 + $0x8] sm:$0xff] %vm2199, %v10881
      %10918 = vst.msk [vmem:[#allocation3 + $0x10] sm:$0xff] %vm2199, %v10882
      %10919 = vst.msk [vmem:[#allocation3 + $0x18] sm:$0xff] %vm2199, %v10883
      %10920 = vst.msk [vmem:[#allocation3 + $0x20] sm:$0xff] %vm2199, %v10884
      %10921 = vst.msk [vmem:[#allocation3 + $0x28] sm:$0xff] %vm2199, %v10885
      %10922 = vst.msk [vmem:[#allocation3 + $0x30] sm:$0xff] %vm2199, %v10886
      %10923 = vst.msk [vmem:[#allocation3 + $0x38] sm:$0xff] %vm2199, %v10887
      %10924 = vst.msk [vmem:[#allocation3 + $0x40] sm:$0xff] %vm2199, %v10888
      %10925 = vst.msk [vmem:[#allocation3 + $0x48] sm:$0xff] %vm2199, %v10889
      %10926 = vst.msk [vmem:[#allocation3 + $0x50] sm:$0xff] %vm2199, %v10890
      %10927 = vst.msk [vmem:[#allocation3 + $0x58] sm:$0xff] %vm2199, %v10891
      %10928 = vst.msk [vmem:[#allocation3 + $0x60] sm:$0xff] %vm2199, %v10892
      %10929 = vst.msk [vmem:[#allocation3 + $0x68] sm:$0xff] %vm2199, %v10893
      %10930 = vst.msk [vmem:[#allocation3 + $0x70] sm:$0xff] %vm2199, %v10894
      %10931 = vst.msk [vmem:[#allocation3 + $0x78] sm:$0xff] %vm2199, %v10895
      %10932 = vst.msk [vmem:[#allocation3 + $0x80] sm:$0xff] %vm2199, %v10896
      %10933 = vst.msk [vmem:[#allocation3 + $0x88] sm:$0xff] %vm2199, %v10897
      %10934 = vst.msk [vmem:[#allocation3 + $0x90] sm:$0xff] %vm2199, %v10898
      %10935 = vst.msk [vmem:[#allocation3 + $0x98] sm:$0xff] %vm2199, %v10899
      %10936 = vst.msk [vmem:[#allocation3 + $0xa0] sm:$0xff] %vm2199, %v10900
      %10937 = vst.msk [vmem:[#allocation3 + $0xa8] sm:$0xff] %vm2199, %v10901
      %10938 = vst.msk [vmem:[#allocation3 + $0xb0] sm:$0xff] %vm2199, %v10902
      %10939 = vst.msk [vmem:[#allocation3 + $0xb8] sm:$0xff] %vm2199, %v10903
      %10940 = vst.msk [vmem:[#allocation3 + $0xc0] sm:$0xff] %vm2199, %v10904
      %10941 = vst.msk [vmem:[#allocation3 + $0xc8] sm:$0xff] %vm2199, %v10905
      %10942 = vst.msk [vmem:[#allocation3 + $0xd0] sm:$0xff] %vm2199, %v10906
      %10943 = vst.msk [vmem:[#allocation3 + $0xd8] sm:$0xff] %vm2199, %v10907
      %10944 = vst.msk [vmem:[#allocation3 + $0xe0] sm:$0xff] %vm2199, %v10908
      %10945 = vst.msk [vmem:[#allocation3 + $0xe8] sm:$0xff] %vm2199, %v10909
      %10946 = vst.msk [vmem:[#allocation3 + $0xf0] sm:$0xff] %vm2199, %v10910
      %10947 = vst.msk [vmem:[#allocation3 + $0xf8] sm:$0xff] %vm2199, %v10911
      %10948 = vst.msk [vmem:[#allocation3 + $0x100] sm:$0xff] %vm2199, %v10912
      %10949 = vst.msk [vmem:[#allocation3 + $0x108] sm:$0xff] %vm2199, %v10913
      %10950 = vst.msk [vmem:[#allocation3 + $0x110] sm:$0xff] %vm2199, %v10914
      %10951 = vst.msk [vmem:[#allocation3 + $0x118] sm:$0xff] %vm2199, %v10915
      %v10952 = vld [vmem:[#allocation2 + $0x10] sm:$0x8]
      %v10953 = vld [vmem:[#allocation2 + $0x14] sm:$0xf]
      %v10954 = vld [vmem:[#allocation2 + $0x18] sm:$0xf]
      %v10955 = vld [vmem:[#allocation2 + $0x1c] sm:$0xf]
      %v10956 = vld [vmem:[#allocation2 + $0x20] sm:$0xf]
      %v10957 = vld [vmem:[#allocation2 + $0x24] sm:$0xf]
      %v10958 = vld [vmem:[#allocation2 + $0x28] sm:$0xf]
      %v10959 = vld [vmem:[#allocation2 + $0x2c] sm:$0xf]
      %v10960 = vld [vmem:[#allocation2 + $0x30] sm:$0xf]
      %v10961 = vld [vmem:[#allocation2 + $0x34] sm:$0xf]
      %v10962 = vld [vmem:[#allocation2 + $0x38] sm:$0xf]
      %v10963 = vld [vmem:[#allocation2 + $0x3c] sm:$0xf]
      %v10964 = vld [vmem:[#allocation2 + $0x40] sm:$0xf]
      %v10965 = vld [vmem:[#allocation2 + $0x44] sm:$0xf]
      %v10966 = vld [vmem:[#allocation2 + $0x48] sm:$0xf]
      %v10967 = vld [vmem:[#allocation2 + $0x4c] sm:$0xf]
      %v10968 = vld [vmem:[#allocation2 + $0x50] sm:$0xf]
      %v10969 = vld [vmem:[#allocation2 + $0x54] sm:$0xf]
      %v10970 = vld [vmem:[#allocation2 + $0x58] sm:$0xf]
      %v10971 = vld [vmem:[#allocation2 + $0x5c] sm:$0xf]
      %v10972 = vld [vmem:[#allocation2 + $0x60] sm:$0xf]
      %v10973 = vld [vmem:[#allocation2 + $0x64] sm:$0xf]
      %v10974 = vld [vmem:[#allocation2 + $0x68] sm:$0xf]
      %v10975 = vld [vmem:[#allocation2 + $0x6c] sm:$0xf]
      %v10976 = vld [vmem:[#allocation2 + $0x70] sm:$0xf]
      %v10977 = vld [vmem:[#allocation2 + $0x74] sm:$0xf]
      %v10978 = vld [vmem:[#allocation2 + $0x78] sm:$0xf]
      %v10979 = vld [vmem:[#allocation2 + $0x7c] sm:$0xf]
      %v10980 = vld [vmem:[#allocation2 + $0x80] sm:$0xf]
      %v10981 = vld [vmem:[#allocation2 + $0x84] sm:$0xf]
      %v10982 = vld [vmem:[#allocation2 + $0x88] sm:$0xf]
      %v10983 = vld [vmem:[#allocation2 + $0x8c] sm:$0xf]
      %v10984 = vld [vmem:[#allocation2 + $0x90] sm:$0xf]
      %v10985 = vld [vmem:[#allocation2 + $0x94] sm:$0xf]
      %v10986 = vld [vmem:[#allocation2 + $0x98] sm:$0xf]
      %v10987 = vld [vmem:[#allocation2 + $0x9c] sm:$0xf]
      %v10988 = vld [vmem:[#allocation2 + $0xa0] sm:$0x7]
      %s10989 = scalar_lea.vmem %s4, 16
      %v10990 = vld [vmem:[%s10989] sm:$0x3]
      %v11028 = vunpack.c.l.b16 %v10952
      %v11029 = vunpack.c.l.b16 %v10953
      %v11030 = vunpack.c.l.b16 %v10954
      %v11031 = vunpack.c.l.b16 %v10955
      %v11032 = vunpack.c.l.b16 %v10956
      %v11033 = vunpack.c.l.b16 %v10957
      %v11034 = vunpack.c.l.b16 %v10958
      %v11035 = vunpack.c.l.b16 %v10959
      %v11036 = vunpack.c.l.b16 %v10960
      %v11037 = vunpack.c.l.b16 %v10961
      %v11038 = vunpack.c.l.b16 %v10962
      %v11039 = vunpack.c.l.b16 %v10963
      %v11040 = vunpack.c.l.b16 %v10964
      %v11041 = vunpack.c.l.b16 %v10965
      %v11042 = vunpack.c.l.b16 %v10966
      %v11043 = vunpack.c.l.b16 %v10967
      %v11044 = vunpack.c.l.b16 %v10968
      %v11045 = vunpack.c.l.b16 %v10969
      %v11046 = vunpack.c.l.b16 %v10970
      %v11047 = vunpack.c.l.b16 %v10971
      %v11048 = vunpack.c.l.b16 %v10972
      %v11049 = vunpack.c.l.b16 %v10973
      %v11050 = vunpack.c.l.b16 %v10974
      %v11051 = vunpack.c.l.b16 %v10975
      %v11052 = vunpack.c.l.b16 %v10976
      %v11053 = vunpack.c.l.b16 %v10977
      %v11054 = vunpack.c.l.b16 %v10978
      %v11055 = vunpack.c.l.b16 %v10979
      %v11056 = vunpack.c.l.b16 %v10980
      %v11057 = vunpack.c.l.b16 %v10981
      %v11058 = vunpack.c.l.b16 %v10982
      %v11059 = vunpack.c.l.b16 %v10983
      %v11060 = vunpack.c.l.b16 %v10984
      %v11061 = vunpack.c.l.b16 %v10985
      %v11062 = vunpack.c.l.b16 %v10986
      %v11063 = vunpack.c.l.b16 %v10987
      %v11064 = vunpack.c.l.b16 %v10988
      %v11065 = vpack.c.b16 %v11029, %v11028
      %v11066 = vpack.c.b16 %v11031, %v11030
      %v11067 = vpack.c.b16 %v11033, %v11032
      %v11068 = vpack.c.b16 %v11035, %v11034
      %v11069 = vpack.c.b16 %v11037, %v11036
      %v11070 = vpack.c.b16 %v11039, %v11038
      %v11071 = vpack.c.b16 %v11041, %v11040
      %v11072 = vpack.c.b16 %v11043, %v11042
      %v11073 = vpack.c.b16 %v11045, %v11044
      %v11074 = vpack.c.b16 %v11047, %v11046
      %v11075 = vpack.c.b16 %v11049, %v11048
      %v11076 = vpack.c.b16 %v11051, %v11050
      %v11077 = vpack.c.b16 %v11053, %v11052
      %v11078 = vpack.c.b16 %v11055, %v11054
      %v11079 = vpack.c.b16 %v11057, %v11056
      %v11080 = vpack.c.b16 %v11059, %v11058
      %v11081 = vpack.c.b16 %v11061, %v11060
      %v11082 = vpack.c.b16 %v11063, %v11062
      %v11083 = vpack.c.b16 %v11064, %v11064
      %v11084 = vrot.slane %v11065, 3
      %v11085 = vrot.slane %v11066, 3
      %v11086 = vsel %vm5938, %v11084, %v11085
      %v11087 = vrot.slane %v11067, 3
      %v11088 = vsel %vm5938, %v11085, %v11087
      %v11089 = vrot.slane %v11068, 3
      %v11090 = vsel %vm5938, %v11087, %v11089
      %v11091 = vrot.slane %v11069, 3
      %v11092 = vsel %vm5938, %v11089, %v11091
      %v11093 = vrot.slane %v11070, 3
      %v11094 = vsel %vm5938, %v11091, %v11093
      %v11095 = vrot.slane %v11071, 3
      %v11096 = vsel %vm5938, %v11093, %v11095
      %v11097 = vrot.slane %v11072, 3
      %v11098 = vsel %vm5938, %v11095, %v11097
      %v11099 = vrot.slane %v11073, 3
      %v11100 = vsel %vm5938, %v11097, %v11099
      %v11101 = vrot.slane %v11074, 3
      %v11102 = vsel %vm5938, %v11099, %v11101
      %v11103 = vrot.slane %v11075, 3
      %v11104 = vsel %vm5938, %v11101, %v11103
      %v11105 = vrot.slane %v11076, 3
      %v11106 = vsel %vm5938, %v11103, %v11105
      %v11107 = vrot.slane %v11077, 3
      %v11108 = vsel %vm5938, %v11105, %v11107
      %v11109 = vrot.slane %v11078, 3
      %v11110 = vsel %vm5938, %v11107, %v11109
      %v11111 = vrot.slane %v11079, 3
      %v11112 = vsel %vm5938, %v11109, %v11111
      %v11113 = vrot.slane %v11080, 3
      %v11114 = vsel %vm5938, %v11111, %v11113
      %v11115 = vrot.slane %v11081, 3
      %v11116 = vsel %vm5938, %v11113, %v11115
      %v11117 = vrot.slane %v11082, 3
      %v11118 = vsel %vm5938, %v11115, %v11117
      %v11119 = vrot.slane %v11083, 3
      %v11120 = vsel %vm5938, %v11117, %v11119
      %v11122 = vsel %vm2199, %v11086, 0
      %v11125 = vsel %vm2199, %v11088, 0
      %v11128 = vsel %vm2199, %v11090, 0
      %v11131 = vsel %vm2199, %v11092, 0
      %v11134 = vsel %vm2199, %v11094, 0
      %v11137 = vsel %vm2199, %v11096, 0
      %v11140 = vsel %vm2199, %v11098, 0
      %v11143 = vsel %vm2199, %v11100, 0
      %v11146 = vsel %vm2199, %v11102, 0
      %v11149 = vsel %vm2199, %v11104, 0
      %v11152 = vsel %vm2199, %v11106, 0
      %v11155 = vsel %vm2199, %v11108, 0
      %v11158 = vsel %vm2199, %v11110, 0
      %v11161 = vsel %vm2199, %v11112, 0
      %v11164 = vsel %vm2199, %v11114, 0
      %v11167 = vsel %vm2199, %v11116, 0
      %v11170 = vsel %vm2199, %v11118, 0
      %v11173 = vsel %vm2199, %v11120, 0
      %v11176 = vsel %vm2254, %v10990, 0
      %11178 = vmatpush.bf16.msra.mxu0 0
      %11179 = vmatpush.bf16.msra.mxu0 0
      %11180 = vmatpush.bf16.msra.mxu0 0
      %11181 = vmatpush.bf16.msra.mxu0 0
      %11182 = vmatpush.bf16.msra.mxu0 0
      %11183 = vmatpush.bf16.msra.mxu0 0
      %11184 = vmatpush.bf16.msra.mxu0 0
      %11185 = vmatpush.bf16.msra.mxu0 %v11176
      %11186 = vmatmul.bf16.gmra.mxu0 %v11122
      %v11187 = vpop.f32.mrf.mxu0
      %v11188 = vadd.f32 0.0, %v11187
      %v11189 = vpop.f32.mrf.mxu0
      %v11190 = vadd.f32 0.0, %v11189
      %11191 = vmatmul.bf16.gmra.mxu0 %v11125
      %v11192 = vpop.f32.mrf.mxu0
      %v11193 = vadd.f32 0.0, %v11192
      %v11194 = vpop.f32.mrf.mxu0
      %v11195 = vadd.f32 0.0, %v11194
      %11196 = vmatmul.bf16.gmra.mxu0 %v11128
      %v11197 = vpop.f32.mrf.mxu0
      %v11198 = vadd.f32 0.0, %v11197
      %v11199 = vpop.f32.mrf.mxu0
      %v11200 = vadd.f32 0.0, %v11199
      %11201 = vmatmul.bf16.gmra.mxu0 %v11131
      %v11202 = vpop.f32.mrf.mxu0
      %v11203 = vadd.f32 0.0, %v11202
      %v11204 = vpop.f32.mrf.mxu0
      %v11205 = vadd.f32 0.0, %v11204
      %11206 = vmatmul.bf16.gmra.mxu0 %v11134
      %v11207 = vpop.f32.mrf.mxu0
      %v11208 = vadd.f32 0.0, %v11207
      %v11209 = vpop.f32.mrf.mxu0
      %v11210 = vadd.f32 0.0, %v11209
      %11211 = vmatmul.bf16.gmra.mxu0 %v11137
      %v11212 = vpop.f32.mrf.mxu0
      %v11213 = vadd.f32 0.0, %v11212
      %v11214 = vpop.f32.mrf.mxu0
      %v11215 = vadd.f32 0.0, %v11214
      %11216 = vmatmul.bf16.gmra.mxu0 %v11140
      %v11217 = vpop.f32.mrf.mxu0
      %v11218 = vadd.f32 0.0, %v11217
      %v11219 = vpop.f32.mrf.mxu0
      %v11220 = vadd.f32 0.0, %v11219
      %11221 = vmatmul.bf16.gmra.mxu0 %v11143
      %v11222 = vpop.f32.mrf.mxu0
      %v11223 = vadd.f32 0.0, %v11222
      %v11224 = vpop.f32.mrf.mxu0
      %v11225 = vadd.f32 0.0, %v11224
      %11226 = vmatmul.bf16.gmra.mxu0 %v11146
      %v11227 = vpop.f32.mrf.mxu0
      %v11228 = vadd.f32 0.0, %v11227
      %v11229 = vpop.f32.mrf.mxu0
      %v11230 = vadd.f32 0.0, %v11229
      %11231 = vmatmul.bf16.gmra.mxu0 %v11149
      %v11232 = vpop.f32.mrf.mxu0
      %v11233 = vadd.f32 0.0, %v11232
      %v11234 = vpop.f32.mrf.mxu0
      %v11235 = vadd.f32 0.0, %v11234
      %11236 = vmatmul.bf16.gmra.mxu0 %v11152
      %v11237 = vpop.f32.mrf.mxu0
      %v11238 = vadd.f32 0.0, %v11237
      %v11239 = vpop.f32.mrf.mxu0
      %v11240 = vadd.f32 0.0, %v11239
      %11241 = vmatmul.bf16.gmra.mxu0 %v11155
      %v11242 = vpop.f32.mrf.mxu0
      %v11243 = vadd.f32 0.0, %v11242
      %v11244 = vpop.f32.mrf.mxu0
      %v11245 = vadd.f32 0.0, %v11244
      %11246 = vmatmul.bf16.gmra.mxu0 %v11158
      %v11247 = vpop.f32.mrf.mxu0
      %v11248 = vadd.f32 0.0, %v11247
      %v11249 = vpop.f32.mrf.mxu0
      %v11250 = vadd.f32 0.0, %v11249
      %11251 = vmatmul.bf16.gmra.mxu0 %v11161
      %v11252 = vpop.f32.mrf.mxu0
      %v11253 = vadd.f32 0.0, %v11252
      %v11254 = vpop.f32.mrf.mxu0
      %v11255 = vadd.f32 0.0, %v11254
      %11256 = vmatmul.bf16.gmra.mxu0 %v11164
      %v11257 = vpop.f32.mrf.mxu0
      %v11258 = vadd.f32 0.0, %v11257
      %v11259 = vpop.f32.mrf.mxu0
      %v11260 = vadd.f32 0.0, %v11259
      %11261 = vmatmul.bf16.gmra.mxu0 %v11167
      %v11262 = vpop.f32.mrf.mxu0
      %v11263 = vadd.f32 0.0, %v11262
      %v11264 = vpop.f32.mrf.mxu0
      %v11265 = vadd.f32 0.0, %v11264
      %11266 = vmatmul.bf16.gmra.mxu0 %v11170
      %v11267 = vpop.f32.mrf.mxu0
      %v11268 = vadd.f32 0.0, %v11267
      %v11269 = vpop.f32.mrf.mxu0
      %v11270 = vadd.f32 0.0, %v11269
      %11271 = vmatmul.bf16.gmra.mxu0 %v11173
      %v11272 = vpop.f32.mrf.mxu0
      %v11273 = vadd.f32 0.0, %v11272
      %v11274 = vpop.f32.mrf.mxu0
      %v11275 = vadd.f32 0.0, %v11274
      %11276 = vdwg.mxu0
      %v11277 = vld [vmem:[#allocation3] sm:$0xff]
      %v11278 = vld [vmem:[#allocation3 + $0x8] sm:$0xff]
      %v11279 = vld [vmem:[#allocation3 + $0x10] sm:$0xff]
      %v11280 = vld [vmem:[#allocation3 + $0x18] sm:$0xff]
      %v11281 = vld [vmem:[#allocation3 + $0x20] sm:$0xff]
      %v11282 = vld [vmem:[#allocation3 + $0x28] sm:$0xff]
      %v11283 = vld [vmem:[#allocation3 + $0x30] sm:$0xff]
      %v11284 = vld [vmem:[#allocation3 + $0x38] sm:$0xff]
      %v11285 = vld [vmem:[#allocation3 + $0x40] sm:$0xff]
      %v11286 = vld [vmem:[#allocation3 + $0x48] sm:$0xff]
      %v11287 = vld [vmem:[#allocation3 + $0x50] sm:$0xff]
      %v11288 = vld [vmem:[#allocation3 + $0x58] sm:$0xff]
      %v11289 = vld [vmem:[#allocation3 + $0x60] sm:$0xff]
      %v11290 = vld [vmem:[#allocation3 + $0x68] sm:$0xff]
      %v11291 = vld [vmem:[#allocation3 + $0x70] sm:$0xff]
      %v11292 = vld [vmem:[#allocation3 + $0x78] sm:$0xff]
      %v11293 = vld [vmem:[#allocation3 + $0x80] sm:$0xff]
      %v11294 = vld [vmem:[#allocation3 + $0x88] sm:$0xff]
      %v11295 = vld [vmem:[#allocation3 + $0x90] sm:$0xff]
      %v11296 = vld [vmem:[#allocation3 + $0x98] sm:$0xff]
      %v11297 = vld [vmem:[#allocation3 + $0xa0] sm:$0xff]
      %v11298 = vld [vmem:[#allocation3 + $0xa8] sm:$0xff]
      %v11299 = vld [vmem:[#allocation3 + $0xb0] sm:$0xff]
      %v11300 = vld [vmem:[#allocation3 + $0xb8] sm:$0xff]
      %v11301 = vld [vmem:[#allocation3 + $0xc0] sm:$0xff]
      %v11302 = vld [vmem:[#allocation3 + $0xc8] sm:$0xff]
      %v11303 = vld [vmem:[#allocation3 + $0xd0] sm:$0xff]
      %v11304 = vld [vmem:[#allocation3 + $0xd8] sm:$0xff]
      %v11305 = vld [vmem:[#allocation3 + $0xe0] sm:$0xff]
      %v11306 = vld [vmem:[#allocation3 + $0xe8] sm:$0xff]
      %v11307 = vld [vmem:[#allocation3 + $0xf0] sm:$0xff]
      %v11308 = vld [vmem:[#allocation3 + $0xf8] sm:$0xff]
      %v11309 = vld [vmem:[#allocation3 + $0x100] sm:$0xff]
      %v11310 = vld [vmem:[#allocation3 + $0x108] sm:$0xff]
      %v11311 = vld [vmem:[#allocation3 + $0x110] sm:$0xff]
      %v11312 = vld [vmem:[#allocation3 + $0x118] sm:$0xff]
      %v11313 = vadd.f32 %v11277, %v11188
      %v11314 = vadd.f32 %v11278, %v11190
      %v11315 = vadd.f32 %v11279, %v11193
      %v11316 = vadd.f32 %v11280, %v11195
      %v11317 = vadd.f32 %v11281, %v11198
      %v11318 = vadd.f32 %v11282, %v11200
      %v11319 = vadd.f32 %v11283, %v11203
      %v11320 = vadd.f32 %v11284, %v11205
      %v11321 = vadd.f32 %v11285, %v11208
      %v11322 = vadd.f32 %v11286, %v11210
      %v11323 = vadd.f32 %v11287, %v11213
      %v11324 = vadd.f32 %v11288, %v11215
      %v11325 = vadd.f32 %v11289, %v11218
      %v11326 = vadd.f32 %v11290, %v11220
      %v11327 = vadd.f32 %v11291, %v11223
      %v11328 = vadd.f32 %v11292, %v11225
      %v11329 = vadd.f32 %v11293, %v11228
      %v11330 = vadd.f32 %v11294, %v11230
      %v11331 = vadd.f32 %v11295, %v11233
      %v11332 = vadd.f32 %v11296, %v11235
      %v11333 = vadd.f32 %v11297, %v11238
      %v11334 = vadd.f32 %v11298, %v11240
      %v11335 = vadd.f32 %v11299, %v11243
      %v11336 = vadd.f32 %v11300, %v11245
      %v11337 = vadd.f32 %v11301, %v11248
      %v11338 = vadd.f32 %v11302, %v11250
      %v11339 = vadd.f32 %v11303, %v11253
      %v11340 = vadd.f32 %v11304, %v11255
      %v11341 = vadd.f32 %v11305, %v11258
      %v11342 = vadd.f32 %v11306, %v11260
      %v11343 = vadd.f32 %v11307, %v11263
      %v11344 = vadd.f32 %v11308, %v11265
      %v11345 = vadd.f32 %v11309, %v11268
      %v11346 = vadd.f32 %v11310, %v11270
      %v11347 = vadd.f32 %v11311, %v11273
      %v11348 = vadd.f32 %v11312, %v11275
      %11349 = vst.msk [vmem:[#allocation3] sm:$0xff] %vm2199, %v11313
      %11350 = vst.msk [vmem:[#allocation3 + $0x8] sm:$0xff] %vm2199, %v11314
      %11351 = vst.msk [vmem:[#allocation3 + $0x10] sm:$0xff] %vm2199, %v11315
      %11352 = vst.msk [vmem:[#allocation3 + $0x18] sm:$0xff] %vm2199, %v11316
      %11353 = vst.msk [vmem:[#allocation3 + $0x20] sm:$0xff] %vm2199, %v11317
      %11354 = vst.msk [vmem:[#allocation3 + $0x28] sm:$0xff] %vm2199, %v11318
      %11355 = vst.msk [vmem:[#allocation3 + $0x30] sm:$0xff] %vm2199, %v11319
      %11356 = vst.msk [vmem:[#allocation3 + $0x38] sm:$0xff] %vm2199, %v11320
      %11357 = vst.msk [vmem:[#allocation3 + $0x40] sm:$0xff] %vm2199, %v11321
      %11358 = vst.msk [vmem:[#allocation3 + $0x48] sm:$0xff] %vm2199, %v11322
      %11359 = vst.msk [vmem:[#allocation3 + $0x50] sm:$0xff] %vm2199, %v11323
      %11360 = vst.msk [vmem:[#allocation3 + $0x58] sm:$0xff] %vm2199, %v11324
      %11361 = vst.msk [vmem:[#allocation3 + $0x60] sm:$0xff] %vm2199, %v11325
      %11362 = vst.msk [vmem:[#allocation3 + $0x68] sm:$0xff] %vm2199, %v11326
      %11363 = vst.msk [vmem:[#allocation3 + $0x70] sm:$0xff] %vm2199, %v11327
      %11364 = vst.msk [vmem:[#allocation3 + $0x78] sm:$0xff] %vm2199, %v11328
      %11365 = vst.msk [vmem:[#allocation3 + $0x80] sm:$0xff] %vm2199, %v11329
      %11366 = vst.msk [vmem:[#allocation3 + $0x88] sm:$0xff] %vm2199, %v11330
      %11367 = vst.msk [vmem:[#allocation3 + $0x90] sm:$0xff] %vm2199, %v11331
      %11368 = vst.msk [vmem:[#allocation3 + $0x98] sm:$0xff] %vm2199, %v11332
      %11369 = vst.msk [vmem:[#allocation3 + $0xa0] sm:$0xff] %vm2199, %v11333
      %11370 = vst.msk [vmem:[#allocation3 + $0xa8] sm:$0xff] %vm2199, %v11334
      %11371 = vst.msk [vmem:[#allocation3 + $0xb0] sm:$0xff] %vm2199, %v11335
      %11372 = vst.msk [vmem:[#allocation3 + $0xb8] sm:$0xff] %vm2199, %v11336
      %11373 = vst.msk [vmem:[#allocation3 + $0xc0] sm:$0xff] %vm2199, %v11337
      %11374 = vst.msk [vmem:[#allocation3 + $0xc8] sm:$0xff] %vm2199, %v11338
      %11375 = vst.msk [vmem:[#allocation3 + $0xd0] sm:$0xff] %vm2199, %v11339
      %11376 = vst.msk [vmem:[#allocation3 + $0xd8] sm:$0xff] %vm2199, %v11340
      %11377 = vst.msk [vmem:[#allocation3 + $0xe0] sm:$0xff] %vm2199, %v11341
      %11378 = vst.msk [vmem:[#allocation3 + $0xe8] sm:$0xff] %vm2199, %v11342
      %11379 = vst.msk [vmem:[#allocation3 + $0xf0] sm:$0xff] %vm2199, %v11343
      %11380 = vst.msk [vmem:[#allocation3 + $0xf8] sm:$0xff] %vm2199, %v11344
      %11381 = vst.msk [vmem:[#allocation3 + $0x100] sm:$0xff] %vm2199, %v11345
      %11382 = vst.msk [vmem:[#allocation3 + $0x108] sm:$0xff] %vm2199, %v11346
      %11383 = vst.msk [vmem:[#allocation3 + $0x110] sm:$0xff] %vm2199, %v11347
      %11384 = vst.msk [vmem:[#allocation3 + $0x118] sm:$0xff] %vm2199, %v11348
      %v11385 = vld [vmem:[#allocation3] sm:$0xff]
      %v11386 = vld [vmem:[#allocation3 + $0x8] sm:$0xff]
      %v11387 = vld [vmem:[#allocation3 + $0x10] sm:$0xff]
      %v11388 = vld [vmem:[#allocation3 + $0x18] sm:$0xff]
      %v11389 = vld [vmem:[#allocation3 + $0x20] sm:$0xff]
      %v11390 = vld [vmem:[#allocation3 + $0x28] sm:$0xff]
      %v11391 = vld [vmem:[#allocation3 + $0x30] sm:$0xff]
      %v11392 = vld [vmem:[#allocation3 + $0x38] sm:$0xff]
      %v11393 = vld [vmem:[#allocation3 + $0x40] sm:$0xff]
      %v11394 = vld [vmem:[#allocation3 + $0x48] sm:$0xff]
      %v11395 = vld [vmem:[#allocation3 + $0x50] sm:$0xff]
      %v11396 = vld [vmem:[#allocation3 + $0x58] sm:$0xff]
      %v11397 = vld [vmem:[#allocation3 + $0x60] sm:$0xff]
      %v11398 = vld [vmem:[#allocation3 + $0x68] sm:$0xff]
      %v11399 = vld [vmem:[#allocation3 + $0x70] sm:$0xff]
      %v11400 = vld [vmem:[#allocation3 + $0x78] sm:$0xff]
      %v11401 = vld [vmem:[#allocation3 + $0x80] sm:$0xff]
      %v11402 = vld [vmem:[#allocation3 + $0x88] sm:$0xff]
      %v11403 = vld [vmem:[#allocation3 + $0x90] sm:$0xff]
      %v11404 = vld [vmem:[#allocation3 + $0x98] sm:$0xff]
      %v11405 = vld [vmem:[#allocation3 + $0xa0] sm:$0xff]
      %v11406 = vld [vmem:[#allocation3 + $0xa8] sm:$0xff]
      %v11407 = vld [vmem:[#allocation3 + $0xb0] sm:$0xff]
      %v11408 = vld [vmem:[#allocation3 + $0xb8] sm:$0xff]
      %v11409 = vld [vmem:[#allocation3 + $0xc0] sm:$0xff]
      %v11410 = vld [vmem:[#allocation3 + $0xc8] sm:$0xff]
      %v11411 = vld [vmem:[#allocation3 + $0xd0] sm:$0xff]
      %v11412 = vld [vmem:[#allocation3 + $0xd8] sm:$0xff]
      %v11413 = vld [vmem:[#allocation3 + $0xe0] sm:$0xff]
      %v11414 = vld [vmem:[#allocation3 + $0xe8] sm:$0xff]
      %v11415 = vld [vmem:[#allocation3 + $0xf0] sm:$0xff]
      %v11416 = vld [vmem:[#allocation3 + $0xf8] sm:$0xff]
      %v11417 = vld [vmem:[#allocation3 + $0x100] sm:$0xff]
      %v11418 = vld [vmem:[#allocation3 + $0x108] sm:$0xff]
      %v11419 = vld [vmem:[#allocation3 + $0x110] sm:$0xff]
      %v11420 = vld [vmem:[#allocation3 + $0x118] sm:$0xff]
      %v11421 = vsel %vm6312, %v11385, 0.0
      %v11422 = vsel %vm6313, %v11386, 0.0
      %v11423 = vsel %vm6314, %v11387, 0.0
      %v11424 = vsel %vm6315, %v11388, 0.0
      %v11425 = vsel %vm6316, %v11389, 0.0
      %v11426 = vsel %vm6317, %v11390, 0.0
      %v11427 = vsel %vm6318, %v11391, 0.0
      %v11428 = vsel %vm6319, %v11392, 0.0
      %v11429 = vsel %vm6320, %v11393, 0.0
      %v11430 = vsel %vm6321, %v11394, 0.0
      %v11431 = vsel %vm6322, %v11395, 0.0
      %v11432 = vsel %vm6323, %v11396, 0.0
      %v11433 = vsel %vm6324, %v11397, 0.0
      %v11434 = vsel %vm6325, %v11398, 0.0
      %v11435 = vsel %vm6326, %v11399, 0.0
      %v11436 = vsel %vm6327, %v11400, 0.0
      %v11437 = vsel %vm6328, %v11401, 0.0
      %v11438 = vsel %vm6329, %v11402, 0.0
      %v11439 = vsel %vm6330, %v11403, 0.0
      %v11440 = vsel %vm6331, %v11404, 0.0
      %v11441 = vsel %vm6332, %v11405, 0.0
      %v11442 = vsel %vm6333, %v11406, 0.0
      %v11443 = vsel %vm6334, %v11407, 0.0
      %v11444 = vsel %vm6335, %v11408, 0.0
      %v11445 = vsel %vm6336, %v11409, 0.0
      %v11446 = vsel %vm6337, %v11410, 0.0
      %v11447 = vsel %vm6338, %v11411, 0.0
      %v11448 = vsel %vm6339, %v11412, 0.0
      %v11449 = vsel %vm6340, %v11413, 0.0
      %v11450 = vsel %vm6341, %v11414, 0.0
      %v11451 = vsel %vm6342, %v11415, 0.0
      %v11452 = vsel %vm6343, %v11416, 0.0
      %v11453 = vsel %vm6344, %v11417, 0.0
      %v11454 = vsel %vm6345, %v11418, 0.0
      %v11455 = vsel %vm6346, %v11419, 0.0
      %v11456 = vsel %vm6347, %v11420, 0.0
      %v11457 = vsel %vm2199, %v11421, 0.0
      %v11458 = vsel %vm2199, %v11422, 0.0
      %v11459 = vadd.f32 %v11457, %v11458
      %v11460 = vsel %vm2199, %v11423, 0.0
      %v11461 = vadd.f32 %v11459, %v11460
      %v11462 = vsel %vm2199, %v11424, 0.0
      %v11463 = vadd.f32 %v11461, %v11462
      %v11464 = vsel %vm2199, %v11425, 0.0
      %v11465 = vadd.f32 %v11463, %v11464
      %v11466 = vsel %vm2199, %v11426, 0.0
      %v11467 = vadd.f32 %v11465, %v11466
      %v11468 = vsel %vm2199, %v11427, 0.0
      %v11469 = vadd.f32 %v11467, %v11468
      %v11470 = vsel %vm2199, %v11428, 0.0
      %v11471 = vadd.f32 %v11469, %v11470
      %v11472 = vsel %vm2199, %v11429, 0.0
      %v11473 = vadd.f32 %v11471, %v11472
      %v11474 = vsel %vm2199, %v11430, 0.0
      %v11475 = vadd.f32 %v11473, %v11474
      %v11476 = vsel %vm2199, %v11431, 0.0
      %v11477 = vadd.f32 %v11475, %v11476
      %v11478 = vsel %vm2199, %v11432, 0.0
      %v11479 = vadd.f32 %v11477, %v11478
      %v11480 = vsel %vm2199, %v11433, 0.0
      %v11481 = vadd.f32 %v11479, %v11480
      %v11482 = vsel %vm2199, %v11434, 0.0
      %v11483 = vadd.f32 %v11481, %v11482
      %v11484 = vsel %vm2199, %v11435, 0.0
      %v11485 = vadd.f32 %v11483, %v11484
      %v11486 = vsel %vm2199, %v11436, 0.0
      %v11487 = vadd.f32 %v11485, %v11486
      %v11488 = vsel %vm2199, %v11437, 0.0
      %v11489 = vadd.f32 %v11487, %v11488
      %v11490 = vsel %vm2199, %v11438, 0.0
      %v11491 = vadd.f32 %v11489, %v11490
      %v11492 = vsel %vm2199, %v11439, 0.0
      %v11493 = vadd.f32 %v11491, %v11492
      %v11494 = vsel %vm2199, %v11440, 0.0
      %v11495 = vadd.f32 %v11493, %v11494
      %v11496 = vsel %vm2199, %v11441, 0.0
      %v11497 = vadd.f32 %v11495, %v11496
      %v11498 = vsel %vm2199, %v11442, 0.0
      %v11499 = vadd.f32 %v11497, %v11498
      %v11500 = vsel %vm2199, %v11443, 0.0
      %v11501 = vadd.f32 %v11499, %v11500
      %v11502 = vsel %vm2199, %v11444, 0.0
      %v11503 = vadd.f32 %v11501, %v11502
      %v11504 = vsel %vm2199, %v11445, 0.0
      %v11505 = vadd.f32 %v11503, %v11504
      %v11506 = vsel %vm2199, %v11446, 0.0
      %v11507 = vadd.f32 %v11505, %v11506
      %v11508 = vsel %vm2199, %v11447, 0.0
      %v11509 = vadd.f32 %v11507, %v11508
      %v11510 = vsel %vm2199, %v11448, 0.0
      %v11511 = vadd.f32 %v11509, %v11510
      %v11512 = vsel %vm2199, %v11449, 0.0
      %v11513 = vadd.f32 %v11511, %v11512
      %v11514 = vsel %vm2199, %v11450, 0.0
      %v11515 = vadd.f32 %v11513, %v11514
      %v11516 = vsel %vm2199, %v11451, 0.0
      %v11517 = vadd.f32 %v11515, %v11516
      %v11518 = vsel %vm2199, %v11452, 0.0
      %v11519 = vadd.f32 %v11517, %v11518
      %v11520 = vsel %vm2199, %v11453, 0.0
      %v11521 = vadd.f32 %v11519, %v11520
      %v11522 = vsel %vm2199, %v11454, 0.0
      %v11523 = vadd.f32 %v11521, %v11522
      %v11524 = vsel %vm2199, %v11455, 0.0
      %v11525 = vadd.f32 %v11523, %v11524
      %v11526 = vsel %vm2199, %v11456, 0.0
      %v11527 = vadd.f32 %v11525, %v11526
      %v11528 = vrot.slane %v11527, 4
      %v11529 = vadd.f32 %v11527, %v11528
      %v11530 = vrot.slane %v11529, 2
      %v11531 = vadd.f32 %v11529, %v11530
      %v11532 = vrot.slane %v11531, 1
      %v11533 = vadd.f32 %v11531, %v11532
      %v11534 = vmul.f32 %v11533, %v6467
      %v11535 = vmul.f32 %v11421, %v11421
      %v11536 = vmul.f32 %v11422, %v11422
      %v11537 = vmul.f32 %v11423, %v11423
      %v11538 = vmul.f32 %v11424, %v11424
      %v11539 = vmul.f32 %v11425, %v11425
      %v11540 = vmul.f32 %v11426, %v11426
      %v11541 = vmul.f32 %v11427, %v11427
      %v11542 = vmul.f32 %v11428, %v11428
      %v11543 = vmul.f32 %v11429, %v11429
      %v11544 = vmul.f32 %v11430, %v11430
      %v11545 = vmul.f32 %v11431, %v11431
      %v11546 = vmul.f32 %v11432, %v11432
      %v11547 = vmul.f32 %v11433, %v11433
      %v11548 = vmul.f32 %v11434, %v11434
      %v11549 = vmul.f32 %v11435, %v11435
      %v11550 = vmul.f32 %v11436, %v11436
      %v11551 = vmul.f32 %v11437, %v11437
      %v11552 = vmul.f32 %v11438, %v11438
      %v11553 = vmul.f32 %v11439, %v11439
      %v11554 = vmul.f32 %v11440, %v11440
      %v11555 = vmul.f32 %v11441, %v11441
      %v11556 = vmul.f32 %v11442, %v11442
      %v11557 = vmul.f32 %v11443, %v11443
      %v11558 = vmul.f32 %v11444, %v11444
      %v11559 = vmul.f32 %v11445, %v11445
      %v11560 = vmul.f32 %v11446, %v11446
      %v11561 = vmul.f32 %v11447, %v11447
      %v11562 = vmul.f32 %v11448, %v11448
      %v11563 = vmul.f32 %v11449, %v11449
      %v11564 = vmul.f32 %v11450, %v11450
      %v11565 = vmul.f32 %v11451, %v11451
      %v11566 = vmul.f32 %v11452, %v11452
      %v11567 = vmul.f32 %v11453, %v11453
      %v11568 = vmul.f32 %v11454, %v11454
      %v11569 = vmul.f32 %v11455, %v11455
      %v11570 = vmul.f32 %v11456, %v11456
      %v11571 = vsel %vm2199, %v11535, 0.0
      %v11572 = vsel %vm2199, %v11536, 0.0
      %v11573 = vadd.f32 %v11571, %v11572
      %v11574 = vsel %vm2199, %v11537, 0.0
      %v11575 = vadd.f32 %v11573, %v11574
      %v11576 = vsel %vm2199, %v11538, 0.0
      %v11577 = vadd.f32 %v11575, %v11576
      %v11578 = vsel %vm2199, %v11539, 0.0
      %v11579 = vadd.f32 %v11577, %v11578
      %v11580 = vsel %vm2199, %v11540, 0.0
      %v11581 = vadd.f32 %v11579, %v11580
      %v11582 = vsel %vm2199, %v11541, 0.0
      %v11583 = vadd.f32 %v11581, %v11582
      %v11584 = vsel %vm2199, %v11542, 0.0
      %v11585 = vadd.f32 %v11583, %v11584
      %v11586 = vsel %vm2199, %v11543, 0.0
      %v11587 = vadd.f32 %v11585, %v11586
      %v11588 = vsel %vm2199, %v11544, 0.0
      %v11589 = vadd.f32 %v11587, %v11588
      %v11590 = vsel %vm2199, %v11545, 0.0
      %v11591 = vadd.f32 %v11589, %v11590
      %v11592 = vsel %vm2199, %v11546, 0.0
      %v11593 = vadd.f32 %v11591, %v11592
      %v11594 = vsel %vm2199, %v11547, 0.0
      %v11595 = vadd.f32 %v11593, %v11594
      %v11596 = vsel %vm2199, %v11548, 0.0
      %v11597 = vadd.f32 %v11595, %v11596
      %v11598 = vsel %vm2199, %v11549, 0.0
      %v11599 = vadd.f32 %v11597, %v11598
      %v11600 = vsel %vm2199, %v11550, 0.0
      %v11601 = vadd.f32 %v11599, %v11600
      %v11602 = vsel %vm2199, %v11551, 0.0
      %v11603 = vadd.f32 %v11601, %v11602
      %v11604 = vsel %vm2199, %v11552, 0.0
      %v11605 = vadd.f32 %v11603, %v11604
      %v11606 = vsel %vm2199, %v11553, 0.0
      %v11607 = vadd.f32 %v11605, %v11606
      %v11608 = vsel %vm2199, %v11554, 0.0
      %v11609 = vadd.f32 %v11607, %v11608
      %v11610 = vsel %vm2199, %v11555, 0.0
      %v11611 = vadd.f32 %v11609, %v11610
      %v11612 = vsel %vm2199, %v11556, 0.0
      %v11613 = vadd.f32 %v11611, %v11612
      %v11614 = vsel %vm2199, %v11557, 0.0
      %v11615 = vadd.f32 %v11613, %v11614
      %v11616 = vsel %vm2199, %v11558, 0.0
      %v11617 = vadd.f32 %v11615, %v11616
      %v11618 = vsel %vm2199, %v11559, 0.0
      %v11619 = vadd.f32 %v11617, %v11618
      %v11620 = vsel %vm2199, %v11560, 0.0
      %v11621 = vadd.f32 %v11619, %v11620
      %v11622 = vsel %vm2199, %v11561, 0.0
      %v11623 = vadd.f32 %v11621, %v11622
      %v11624 = vsel %vm2199, %v11562, 0.0
      %v11625 = vadd.f32 %v11623, %v11624
      %v11626 = vsel %vm2199, %v11563, 0.0
      %v11627 = vadd.f32 %v11625, %v11626
      %v11628 = vsel %vm2199, %v11564, 0.0
      %v11629 = vadd.f32 %v11627, %v11628
      %v11630 = vsel %vm2199, %v11565, 0.0
      %v11631 = vadd.f32 %v11629, %v11630
      %v11632 = vsel %vm2199, %v11566, 0.0
      %v11633 = vadd.f32 %v11631, %v11632
      %v11634 = vsel %vm2199, %v11567, 0.0
      %v11635 = vadd.f32 %v11633, %v11634
      %v11636 = vsel %vm2199, %v11568, 0.0
      %v11637 = vadd.f32 %v11635, %v11636
      %v11638 = vsel %vm2199, %v11569, 0.0
      %v11639 = vadd.f32 %v11637, %v11638
      %v11640 = vsel %vm2199, %v11570, 0.0
      %v11641 = vadd.f32 %v11639, %v11640
      %v11642 = vrot.slane %v11641, 4
      %v11643 = vadd.f32 %v11641, %v11642
      %v11644 = vrot.slane %v11643, 2
      %v11645 = vadd.f32 %v11643, %v11644
      %v11646 = vrot.slane %v11645, 1
      %v11647 = vadd.f32 %v11645, %v11646
      %v11648 = vmul.f32 %v11647, %v6467
      %v11649 = vmul.f32 %v11534, %v11534
      %v11650 = vsub.f32 %v11648, %v11649
      %v11651 = vmax.f32 %v11650, 0.0
      %v11652 = vld [vmem:[%s5] sm:$0x1]
      %v11653 = vadd.f32 %v11651, 1e-05
      %v11654 = vrsqrt.pop %v11653
      %v11655 = vmul.f32 %v11654, %v11653
      %v11656 = vmul.f32 %v11655, %v11654
      %v11657 = vmul.f32 0.5, %v11656
      %v11658 = vsub.f32 1.5, %v11657
      %v11659 = vmul.f32 %v11654, %v11658
      %vm11660 = vweird.f32 %v11653
      %vm11661 = vweird.f32 %v11654
      %vm11662 = vmor %vm11660, %vm11661
      %v11663 = vsel %vm11662, %v11654, %v11659
      %v11664 = vmul.f32 %v11652, %v11663
      %v11665 = vld [vmem:[%s6] sm:$0x1]
      %v11666 = vmul.f32 %v11534, %v11664
      %v11667 = vsub.f32 %v11665, %v11666
      %v11669 = vperm.slane %v11664, 0
      %v11671 = vmul.f32 %v11421, %v11669
      %v11672 = vmul.f32 %v11422, %v11669
      %v11673 = vmul.f32 %v11423, %v11669
      %v11674 = vmul.f32 %v11424, %v11669
      %v11675 = vmul.f32 %v11425, %v11669
      %v11676 = vmul.f32 %v11426, %v11669
      %v11677 = vmul.f32 %v11427, %v11669
      %v11678 = vmul.f32 %v11428, %v11669
      %v11679 = vmul.f32 %v11429, %v11669
      %v11680 = vmul.f32 %v11430, %v11669
      %v11681 = vmul.f32 %v11431, %v11669
      %v11682 = vmul.f32 %v11432, %v11669
      %v11683 = vmul.f32 %v11433, %v11669
      %v11684 = vmul.f32 %v11434, %v11669
      %v11685 = vmul.f32 %v11435, %v11669
      %v11686 = vmul.f32 %v11436, %v11669
      %v11687 = vmul.f32 %v11437, %v11669
      %v11688 = vmul.f32 %v11438, %v11669
      %v11689 = vmul.f32 %v11439, %v11669
      %v11690 = vmul.f32 %v11440, %v11669
      %v11691 = vmul.f32 %v11441, %v11669
      %v11692 = vmul.f32 %v11442, %v11669
      %v11693 = vmul.f32 %v11443, %v11669
      %v11694 = vmul.f32 %v11444, %v11669
      %v11695 = vmul.f32 %v11445, %v11669
      %v11696 = vmul.f32 %v11446, %v11669
      %v11697 = vmul.f32 %v11447, %v11669
      %v11698 = vmul.f32 %v11448, %v11669
      %v11699 = vmul.f32 %v11449, %v11669
      %v11700 = vmul.f32 %v11450, %v11669
      %v11701 = vmul.f32 %v11451, %v11669
      %v11702 = vmul.f32 %v11452, %v11669
      %v11703 = vmul.f32 %v11453, %v11669
      %v11704 = vmul.f32 %v11454, %v11669
      %v11705 = vmul.f32 %v11455, %v11669
      %v11706 = vmul.f32 %v11456, %v11669
      %v11708 = vperm.slane %v11667, 0
      %v11710 = vadd.f32 %v11671, %v11708
      %v11711 = vadd.f32 %v11672, %v11708
      %v11712 = vadd.f32 %v11673, %v11708
      %v11713 = vadd.f32 %v11674, %v11708
      %v11714 = vadd.f32 %v11675, %v11708
      %v11715 = vadd.f32 %v11676, %v11708
      %v11716 = vadd.f32 %v11677, %v11708
      %v11717 = vadd.f32 %v11678, %v11708
      %v11718 = vadd.f32 %v11679, %v11708
      %v11719 = vadd.f32 %v11680, %v11708
      %v11720 = vadd.f32 %v11681, %v11708
      %v11721 = vadd.f32 %v11682, %v11708
      %v11722 = vadd.f32 %v11683, %v11708
      %v11723 = vadd.f32 %v11684, %v11708
      %v11724 = vadd.f32 %v11685, %v11708
      %v11725 = vadd.f32 %v11686, %v11708
      %v11726 = vadd.f32 %v11687, %v11708
      %v11727 = vadd.f32 %v11688, %v11708
      %v11728 = vadd.f32 %v11689, %v11708
      %v11729 = vadd.f32 %v11690, %v11708
      %v11730 = vadd.f32 %v11691, %v11708
      %v11731 = vadd.f32 %v11692, %v11708
      %v11732 = vadd.f32 %v11693, %v11708
      %v11733 = vadd.f32 %v11694, %v11708
      %v11734 = vadd.f32 %v11695, %v11708
      %v11735 = vadd.f32 %v11696, %v11708
      %v11736 = vadd.f32 %v11697, %v11708
      %v11737 = vadd.f32 %v11698, %v11708
      %v11738 = vadd.f32 %v11699, %v11708
      %v11739 = vadd.f32 %v11700, %v11708
      %v11740 = vadd.f32 %v11701, %v11708
      %v11741 = vadd.f32 %v11702, %v11708
      %v11742 = vadd.f32 %v11703, %v11708
      %v11743 = vadd.f32 %v11704, %v11708
      %v11744 = vadd.f32 %v11705, %v11708
      %v11745 = vadd.f32 %v11706, %v11708
      %v11746 = vunpack.c.l.bf16 %v1597
      %v11747 = vunpack.c.l.bf16 %v1598
      %v11748 = vunpack.c.l.bf16 %v1599
      %v11749 = vunpack.c.l.bf16 %v1600
      %v11750 = vunpack.c.l.bf16 %v1601
      %v11751 = vunpack.c.l.bf16 %v1602
      %v11752 = vunpack.c.l.bf16 %v1603
      %v11753 = vunpack.c.l.bf16 %v1604
      %v11754 = vunpack.c.l.bf16 %v1605
      %v11755 = vunpack.c.l.bf16 %v1606
      %v11756 = vunpack.c.l.bf16 %v1607
      %v11757 = vunpack.c.l.bf16 %v1608
      %v11758 = vunpack.c.l.bf16 %v1609
      %v11759 = vunpack.c.l.bf16 %v1610
      %v11760 = vunpack.c.l.bf16 %v1611
      %v11761 = vunpack.c.l.bf16 %v1612
      %v11762 = vunpack.c.l.bf16 %v1613
      %v11763 = vunpack.c.l.bf16 %v1614
      %v11764 = vunpack.c.l.bf16 %v1615
      %v11765 = vunpack.c.l.bf16 %v1616
      %v11766 = vunpack.c.l.bf16 %v1617
      %v11767 = vunpack.c.l.bf16 %v1618
      %v11768 = vunpack.c.l.bf16 %v1619
      %v11769 = vunpack.c.l.bf16 %v1620
      %v11770 = vunpack.c.l.bf16 %v1621
      %v11771 = vunpack.c.l.bf16 %v1622
      %v11772 = vunpack.c.l.bf16 %v1623
      %v11773 = vunpack.c.l.bf16 %v1624
      %v11774 = vunpack.c.l.bf16 %v1625
      %v11775 = vunpack.c.l.bf16 %v1626
      %v11776 = vunpack.c.l.bf16 %v1627
      %v11777 = vunpack.c.l.bf16 %v1628
      %v11778 = vunpack.c.l.bf16 %v1629
      %v11779 = vunpack.c.l.bf16 %v1630
      %v11780 = vunpack.c.l.bf16 %v1631
      %v11781 = vunpack.c.l.bf16 %v1632
      %v11782 = vadd.f32 %v11710, %v11746
      %v11783 = vadd.f32 %v11711, %v11747
      %v11784 = vadd.f32 %v11712, %v11748
      %v11785 = vadd.f32 %v11713, %v11749
      %v11786 = vadd.f32 %v11714, %v11750
      %v11787 = vadd.f32 %v11715, %v11751
      %v11788 = vadd.f32 %v11716, %v11752
      %v11789 = vadd.f32 %v11717, %v11753
      %v11790 = vadd.f32 %v11718, %v11754
      %v11791 = vadd.f32 %v11719, %v11755
      %v11792 = vadd.f32 %v11720, %v11756
      %v11793 = vadd.f32 %v11721, %v11757
      %v11794 = vadd.f32 %v11722, %v11758
      %v11795 = vadd.f32 %v11723, %v11759
      %v11796 = vadd.f32 %v11724, %v11760
      %v11797 = vadd.f32 %v11725, %v11761
      %v11798 = vadd.f32 %v11726, %v11762
      %v11799 = vadd.f32 %v11727, %v11763
      %v11800 = vadd.f32 %v11728, %v11764
      %v11801 = vadd.f32 %v11729, %v11765
      %v11802 = vadd.f32 %v11730, %v11766
      %v11803 = vadd.f32 %v11731, %v11767
      %v11804 = vadd.f32 %v11732, %v11768
      %v11805 = vadd.f32 %v11733, %v11769
      %v11806 = vadd.f32 %v11734, %v11770
      %v11807 = vadd.f32 %v11735, %v11771
      %v11808 = vadd.f32 %v11736, %v11772
      %v11809 = vadd.f32 %v11737, %v11773
      %v11810 = vadd.f32 %v11738, %v11774
      %v11811 = vadd.f32 %v11739, %v11775
      %v11812 = vadd.f32 %v11740, %v11776
      %v11813 = vadd.f32 %v11741, %v11777
      %v11814 = vadd.f32 %v11742, %v11778
      %v11815 = vadd.f32 %v11743, %v11779
      %v11816 = vadd.f32 %v11744, %v11780
      %v11817 = vadd.f32 %v11745, %v11781
      %v11818 = vpack.c.bf16 %v11782, %v11782
      %v11819 = vpack.c.bf16 %v11783, %v11783
      %v11820 = vpack.c.bf16 %v11784, %v11784
      %v11821 = vpack.c.bf16 %v11785, %v11785
      %v11822 = vpack.c.bf16 %v11786, %v11786
      %v11823 = vpack.c.bf16 %v11787, %v11787
      %v11824 = vpack.c.bf16 %v11788, %v11788
      %v11825 = vpack.c.bf16 %v11789, %v11789
      %v11826 = vpack.c.bf16 %v11790, %v11790
      %v11827 = vpack.c.bf16 %v11791, %v11791
      %v11828 = vpack.c.bf16 %v11792, %v11792
      %v11829 = vpack.c.bf16 %v11793, %v11793
      %v11830 = vpack.c.bf16 %v11794, %v11794
      %v11831 = vpack.c.bf16 %v11795, %v11795
      %v11832 = vpack.c.bf16 %v11796, %v11796
      %v11833 = vpack.c.bf16 %v11797, %v11797
      %v11834 = vpack.c.bf16 %v11798, %v11798
      %v11835 = vpack.c.bf16 %v11799, %v11799
      %v11836 = vpack.c.bf16 %v11800, %v11800
      %v11837 = vpack.c.bf16 %v11801, %v11801
      %v11838 = vpack.c.bf16 %v11802, %v11802
      %v11839 = vpack.c.bf16 %v11803, %v11803
      %v11840 = vpack.c.bf16 %v11804, %v11804
      %v11841 = vpack.c.bf16 %v11805, %v11805
      %v11842 = vpack.c.bf16 %v11806, %v11806
      %v11843 = vpack.c.bf16 %v11807, %v11807
      %v11844 = vpack.c.bf16 %v11808, %v11808
      %v11845 = vpack.c.bf16 %v11809, %v11809
      %v11846 = vpack.c.bf16 %v11810, %v11810
      %v11847 = vpack.c.bf16 %v11811, %v11811
      %v11848 = vpack.c.bf16 %v11812, %v11812
      %v11849 = vpack.c.bf16 %v11813, %v11813
      %v11850 = vpack.c.bf16 %v11814, %v11814
      %v11851 = vpack.c.bf16 %v11815, %v11815
      %v11852 = vpack.c.bf16 %v11816, %v11816
      %v11853 = vpack.c.bf16 %v11817, %v11817
      %11854 = vst.msk [vmem:[%s278] sm:$0xf] %vm1577, %v11818
      %11855 = vst.msk [vmem:[%s278 + $0x4] sm:$0xf] %vm1577, %v11819
      %11856 = vst.msk [vmem:[%s278 + $0x8] sm:$0xf] %vm1577, %v11820
      %11857 = vst.msk [vmem:[%s278 + $0xc] sm:$0xf] %vm1577, %v11821
      %11858 = vst.msk [vmem:[%s278 + $0x10] sm:$0xf] %vm1577, %v11822
      %11859 = vst.msk [vmem:[%s278 + $0x14] sm:$0xf] %vm1577, %v11823
      %11860 = vst.msk [vmem:[%s278 + $0x18] sm:$0xf] %vm1577, %v11824
      %11861 = vst.msk [vmem:[%s278 + $0x1c] sm:$0xf] %vm1577, %v11825
      %11862 = vst.msk [vmem:[%s278 + $0x20] sm:$0xf] %vm1577, %v11826
      %11863 = vst.msk [vmem:[%s278 + $0x24] sm:$0xf] %vm1577, %v11827
      %11864 = vst.msk [vmem:[%s278 + $0x28] sm:$0xf] %vm1577, %v11828
      %11865 = vst.msk [vmem:[%s278 + $0x2c] sm:$0xf] %vm1577, %v11829
      %11866 = vst.msk [vmem:[%s278 + $0x30] sm:$0xf] %vm1577, %v11830
      %11867 = vst.msk [vmem:[%s278 + $0x34] sm:$0xf] %vm1577, %v11831
      %11868 = vst.msk [vmem:[%s278 + $0x38] sm:$0xf] %vm1577, %v11832
      %11869 = vst.msk [vmem:[%s278 + $0x3c] sm:$0xf] %vm1577, %v11833
      %11870 = vst.msk [vmem:[%s278 + $0x40] sm:$0xf] %vm1577, %v11834
      %11871 = vst.msk [vmem:[%s278 + $0x44] sm:$0xf] %vm1577, %v11835
      %11872 = vst.msk [vmem:[%s278 + $0x48] sm:$0xf] %vm1577, %v11836
      %11873 = vst.msk [vmem:[%s278 + $0x4c] sm:$0xf] %vm1577, %v11837
      %11874 = vst.msk [vmem:[%s278 + $0x50] sm:$0xf] %vm1577, %v11838
      %11875 = vst.msk [vmem:[%s278 + $0x54] sm:$0xf] %vm1577, %v11839
      %11876 = vst.msk [vmem:[%s278 + $0x58] sm:$0xf] %vm1577, %v11840
      %11877 = vst.msk [vmem:[%s278 + $0x5c] sm:$0xf] %vm1577, %v11841
      %11878 = vst.msk [vmem:[%s278 + $0x60] sm:$0xf] %vm1577, %v11842
      %11879 = vst.msk [vmem:[%s278 + $0x64] sm:$0xf] %vm1577, %v11843
      %11880 = vst.msk [vmem:[%s278 + $0x68] sm:$0xf] %vm1577, %v11844
      %11881 = vst.msk [vmem:[%s278 + $0x6c] sm:$0xf] %vm1577, %v11845
      %11882 = vst.msk [vmem:[%s278 + $0x70] sm:$0xf] %vm1577, %v11846
      %11883 = vst.msk [vmem:[%s278 + $0x74] sm:$0xf] %vm1577, %v11847
      %11884 = vst.msk [vmem:[%s278 + $0x78] sm:$0xf] %vm1577, %v11848
      %11885 = vst.msk [vmem:[%s278 + $0x7c] sm:$0xf] %vm1577, %v11849
      %11886 = vst.msk [vmem:[%s278 + $0x80] sm:$0xf] %vm1577, %v11850
      %11887 = vst.msk [vmem:[%s278 + $0x84] sm:$0xf] %vm1577, %v11851
      %11888 = vst.msk [vmem:[%s278 + $0x88] sm:$0xf] %vm1577, %v11852
      %11889 = vst.msk [vmem:[%s278 + $0x8c] sm:$0xf] %vm1577, %v11853
      %p11890 = scmp.lt.s32.totalorder %s18, 1
      %s11891 = scalar_select %p11890, %s18, 1
      %s11892 = smul.addr %s11891, 36
      %s11893 = smul.addr %s11892, 4
      %s11894 = scalar_lea.vmem %s7, %s11893
      // Predicated region
      $region49: #{tpu_custom_call.1} parent=47 // pred_check
        %p11895 = pneg %p188
      $region50: #{tpu_custom_call.1} parent=47 // pred_check_branch
        %11897 = sbr.rel (%p11895) target = $region52
      $region51: #{tpu_custom_call.1} parent=47 // pred_region
        _
      $region52: #{tpu_custom_call.1} parent=47 // pred_fallthru
        _
    $region48: #{tpu_custom_call.1} parent=5 // pred_fallthru
      _
    %p11898 = scmp.le.s32.totalorder 2, %s13
    // Predicated region
    $region53: #{tpu_custom_call.1} parent=5 // pred_check
      %p11899 = pneg %p11898
    $region54: #{tpu_custom_call.1} parent=5 // pred_check_branch
      %11901 = sbr.rel (%p11899) target = $region56
    $region55: #{tpu_custom_call.1} parent=5 // pred_region
      %s11902 = ssub.s32 %s13, 2
      // Predicated region
      $region57: #{tpu_custom_call.1} parent=55 // pred_check
        %p11903 = pneg %p194
      $region58: #{tpu_custom_call.1} parent=55 // pred_check_branch
        %11905 = sbr.rel (%p11903) target = $region60
      $region59: #{tpu_custom_call.1} parent=55 // pred_region
        %p11906 = scmp.lt.s32.totalorder %s19, 1
        %s11907 = scalar_select %p11906, %s19, 1
        %s11908 = smul.addr %s11907, 36
        %s11909 = smul.addr %s11908, 4
        %s11910 = scalar_lea.vmem %s7, %s11909
      $region60: #{tpu_custom_call.1} parent=55 // pred_fallthru
        _
    $region56: #{tpu_custom_call.1} parent=5 // pred_fallthru
      _
  $region6: #{tpu_custom_call.1} parent=0 // loop_footer
    %s17 = sadd.s32 1, %s13
  $region7: #{tpu_custom_call.1} parent=0 // loop_footer_branch
    %12 = sbr.rel target = $region3
  $region8: #{tpu_custom_call.1} parent=0 // loop_exit
    _

</llo_original>
